<compile_context>
chip_gen: v7x
topology: tpu7x:2x2x1
jax: 0.10.0
libtpu: 0.0.40
codegen_flags: <defaults>
</compile_context>

<pallas_src>
import functools

import numpy as np
import jax
import jax.numpy as jnp
from jax.experimental import pallas as pl
from jax.experimental.pallas import tpu as pltpu


# --------------------------- host-side helpers -----------------------------

def _interp_matrix(dst, src):
    """Rows of align_corners=True linear interpolation weights (dst x src)."""
    r = np.zeros((dst, src), np.float32)
    if src == 1:
        r[:, 0] = 1.0
        return r
    scale = (src - 1) / (dst - 1) if dst > 1 else 0.0
    for i in range(dst):
        pos = scale * i
        i0 = min(int(np.floor(pos)), src - 1)
        i1 = min(i0 + 1, src - 1)
        f = pos - i0
        r[i, i0] += 1.0 - f
        r[i, i1] += f
    return r


def _upmat(stride, d, w):
    """stride-s subsample + trilinear(align_corners) upsample as one (dw,dw)."""
    dw = d * w
    hs_ = (d + 4 - 5) // stride + 1
    ws_ = (w + 4 - 5) // stride + 1
    r = np.kron(_interp_matrix(d, hs_), _interp_matrix(w, ws_))   # (dw, hs*ws)
    sel = np.zeros((hs_ * ws_, dw), np.float32)
    for i in range(hs_):
        for j in range(ws_):
            sel[i * ws_ + j, (i * stride) * w + j * stride] = 1.0
    return (r @ sel).T.astype(np.float32)                         # (dw, dw)


def _fold_params(params, d, w, gating, cpd, copd):
    """Fold PyTorch-style params into 4 packed, kernel-ready f32 slabs."""
    f32 = np.float32
    comp = params['comp']
    ng = params['num_groups']
    c3 = 3 * comp
    br = [params['dyn_x'], params['dyn_z'], params['dyn_xz']]
    c_in = int(np.asarray(br[0]['pw_w']).shape[0])
    c_out = int(np.asarray(params['out_w']).shape[1])
    dw = d * w
    K = 25 * cpd
    A = lambda t: np.asarray(t, f32)

    # vec slab: per-channel columns
    #   0 pw_b | 1 sconv_b | 2 gn1_g | 3 gn1_b | 4 tconv_b | 5 gn2_g
    #   6 gn2_b | 7 total out bias | 8 fg_b
    vec = np.zeros((cpd, 16), f32)

    pw_w = np.zeros((cpd, cpd), f32)
    wbig_s = np.zeros((cpd, K), f32)
    wbig_t = np.zeros((2, cpd, K), f32)
    for i, b in enumerate(br):
        lo = i * comp
        pw_w[lo:lo + comp, :c_in] = A(b['pw_w']).T
        vec[lo:lo + comp, 0] = A(b['pw_b'])
        vec[lo:lo + comp, 1] = A(b['sconv_b'])
        vec[lo:lo + comp, 2] = A(b['gn1_g'])
        vec[lo:lo + comp, 3] = A(b['gn1_b'])
        vec[lo:lo + comp, 4] = A(b['tconv_b'])
        vec[lo:lo + comp, 5] = A(b['gn2_g'])
        vec[lo:lo + comp, 6] = A(b['gn2_b'])
        sw = A(b['sconv_w'])                       # (5,5,ci,co)
        tw = A(b['tconv_w'])                       # (2,kh,kw,ci,co)
        kh, kw_ = tw.shape[1], tw.shape[2]
        oy, ox = 2 - (kh - 1) // 2, 2 - (kw_ - 1) // 2
        for dy in range(5):
            for dx in range(5):
                col = (dy * 5 + dx) * cpd + lo
                wbig_s[lo:lo + comp, col:col + comp] = sw[dy, dx].T
                iy, ix = dy - oy, dx - ox
                if 0 <= iy < kh and 0 <= ix < kw_:
                    for t in range(2):
                        wbig_t[t, lo:lo + comp, col:col + comp] = tw[t, iy, ix].T

    # context (avgpool/50 + 1x1) folded with its compress_out slice
    wout_T = A(params['out_w']).T                  # (c_out, 6*comp)
    wout_m = np.zeros((copd, cpd), f32)
    wout_m[:c_out, :c3] = wout_T[:, :c3]
    b_total = A(params['out_b']).copy()
    cw_all = np.zeros((3 * copd, K), f32)
    for si, (gk, gbk) in enumerate([('g1_w', 'g1_b'), ('g2_w', 'g2_b'),
                                    ('g4_w', 'g4_b')]):
        woc = wout_T[:, (3 + si) * comp:(4 + si) * comp]   # (c_out, comp)
        cw = woc @ (A(params[gk]).T / 50.0)                # (c_out, c_in)
        for tap in range(25):
            cw_all[si * copd:si * copd + c_out,
                   tap * cpd:tap * cpd + c_in] = cw
        b_total = b_total + woc @ A(params[gbk])           # upsample is row-stochastic
    vec[:c_out, 7] = b_total
    if gating:
        vec[:c_out, 8] = A(params['fg_b'])

    # small-matrix slab: pw_w | group indicator | wout_motion | fg_w^T
    cgw = comp // ng
    gidx = np.arange(cpd) // cgw
    gmat = (gidx[:, None] == gidx[None, :]).astype(f32)
    small = np.zeros((2 * cpd + 2 * copd, cpd), f32)
    small[0:cpd] = pw_w
    small[cpd:2 * cpd] = gmat
    small[2 * cpd:2 * cpd + copd] = wout_m
    if gating:
        small[2 * cpd + copd:2 * cpd + copd + c_out, :c_out] = A(params['fg_w']).T

    # K=25*cpd weight slab: spatial | temporal t0 | temporal t1 | ctx-x-compress
    w400 = np.concatenate([wbig_s, wbig_t[0], wbig_t[1], cw_all], axis=0)

    # lane-wide slab: 8 rows of W-boundary masks, then u2t, u4t
    wm = np.zeros((8, dw), f32)
    col = np.arange(dw) % w
    for dx in range(5):
        wm[dx] = ((col + dx - 2 >= 0) & (col + dx - 2 < w)).astype(f32)
    uslab = np.concatenate([wm, _upmat(2, d, w), _upmat(4, d, w)], axis=0)

    return (jnp.asarray(vec), jnp.asarray(w400), jnp.asarray(small),
            jnp.asarray(uslab))


# ------------------------------ fused kernel --------------------------------

def _s3d_fused_kernel(x_ref, vec_ref, w400_ref, small_ref, u_ref, o_ref,
                      pad_ref, hs_ref, *,
                      comp, num_groups, c_out, cpd, copd, d, w, gating, eps):
    dw = d * w
    padlen = (d + 4) * w + 4
    goff = 2 * w + 2
    cgw = comp // num_groups

    def dot(a, b):
        return jnp.dot(a, b, preferred_element_type=jnp.float32)

    # -- zero only the guard lanes; interiors are overwritten by every im2col --
    pad_ref[:, 0:goff] = jnp.zeros((cpd, goff), jnp.float32)
    pad_ref[:, goff + dw:goff + dw + 2 * goff] = jnp.zeros((cpd, 2 * goff),
                                                           jnp.float32)
    pad_ref[:, padlen + goff + dw:2 * padlen] = jnp.zeros((cpd, goff),
                                                          jnp.float32)

    # -- W-boundary masks, broadcast once to full channel height --------------
    wmask = [None if dx == 2 else
             jnp.broadcast_to(u_ref[dx:dx + 1, :], (cpd, dw))
             for dx in range(5)]

    def im2col(src, nf):
        """src (cpd, nf*dw) -> hs_ref[:, :nf*dw] holds 25 stacked 5x5 taps."""
        for f in range(nf):
            pad_ref[:, f * padlen + goff:f * padlen + goff + dw] = (
                src[:, f * dw:(f + 1) * dw])
        for dy in range(5):
            for dx in range(5):
                tap = dy * 5 + dx
                start = dy * w + dx
                for f in range(nf):
                    win = pad_ref[:, f * padlen + start:
                                  f * padlen + start + dw]
                    if dx != 2:
                        win = win * wmask[dx]
                    hs_ref[tap * cpd:(tap + 1) * cpd,
                           f * dw:(f + 1) * dw] = win

    def group_norm_relu(h, gcol, bcol, count):
        """Two-pass GroupNorm (lane-reduce first, then group pooling) + ReLU."""
        gmat = small_ref[cpd:2 * cpd, :]
        inv = 1.0 / count
        mean = dot(gmat, jnp.sum(h, axis=1, keepdims=True)) * inv
        cen = h - mean
        var = dot(gmat, jnp.sum(cen * cen, axis=1, keepdims=True)) * inv
        scale = jax.lax.rsqrt(var + eps) * gcol
        return jnp.maximum(cen * scale + bcol, 0.0)

    xcat = x_ref[0]                                 # (cpd, 2*dw), both frames

    # ---- dynamics: one 1x1x1 compression for 3 branches x 2 frames ----------
    h0 = dot(small_ref[0:cpd, :], xcat) + vec_ref[:, 0:1]

    # ---- block-diagonal [1,5,5] spatial conv, both frames in ONE matmul -----
    im2col(h0, 2)
    s = dot(w400_ref[0:cpd, :], hs_ref[:, 0:2 * dw]) + vec_ref[:, 1:2]
    h1 = group_norm_relu(s, vec_ref[:, 2:3], vec_ref[:, 3:4],
                         float(cgw * 2 * dw))

    # ---- zero-embedded [2,5,5] temporal conv, T: 2 -> 1 ----------------------
    im2col(h1, 2)
    tacc = dot(w400_ref[cpd:2 * cpd, :], hs_ref[:, 0:dw])
    tacc = tacc + dot(w400_ref[2 * cpd:3 * cpd, :], hs_ref[:, dw:2 * dw])
    tacc = tacc + vec_ref[:, 4:5]
    motion = group_norm_relu(tacc, vec_ref[:, 5:6], vec_ref[:, 6:7],
                             float(cgw * dw))

    # ---- global context: avgpool(2,5,5)/50 + 1x1 conv + compress_out slice
    #      all folded into ONE matmul over the shared im2col of (x0 + x1) -----
    im2col(xcat[:, 0:dw] + xcat[:, dw:2 * dw], 1)
    pcs = dot(w400_ref[3 * cpd:3 * cpd + 3 * copd, :], hs_ref[:, 0:dw])

    # ---- compress_out: motion part + ctx parts (s2/s4 via upsample matmuls) --
    out = dot(small_ref[2 * cpd:2 * cpd + c_out, :], motion)
    out = out + pcs[0:c_out, :]
    out = out + dot(pcs[copd:copd + c_out, :], u_ref[8:8 + dw, :])
    out = out + dot(pcs[2 * copd:2 * copd + c_out, :],
                    u_ref[8 + dw:8 + 2 * dw, :])
    out = out + vec_ref[0:c_out, 7:8]

    # ---- optional S3D-G feature gating: reduce first, then tiny matvec -------
    if gating:
        gate = jax.nn.sigmoid(
            dot(small_ref[2 * cpd + copd:2 * cpd + copd + c_out, 0:c_out],
                jnp.mean(out, axis=1, keepdims=True))
            + vec_ref[0:c_out, 8:9])
        out = out * gate

    # ---- residual with frame t=1 ---------------------------------------------
    o_ref[0] = (out + xcat[0:c_out, dw:2 * dw]).astype(o_ref.dtype)


# ------------------------------ public wrapper -------------------------------

def s3d_temporal_block_comp(x, params, gating=False):
    """Input [N, C, 2, D, W] -> output [N, C_out, 1, D, W] (PyTorch layout)."""
    n, c_in, t, d, w = x.shape
    assert t == 2
    comp = params['comp']
    ng = params['num_groups']
    c3 = 3 * comp
    c_out = int(params['out_w'].shape[1])
    assert c_out == c_in, "residual add requires out_channels == in_channels"
    dw = d * w
    cpd = -(-max(c_in, c3) // 8) * 8        # 8-aligned channel padding
    copd = -(-c_out // 8) * 8
    padlen = (d + 4) * w + 4

    vec, w400, small, uslab = _fold_params(params, d, w, gating, cpd, copd)

    # channels-major, frames + flattened spatial on the lane axis: [N, cpd, 2*dw]
    x3 = jnp.pad(x.reshape(n, c_in, 2 * dw).astype(jnp.float32),
                 ((0, 0), (0, cpd - c_in), (0, 0)))

    kernel = functools.partial(
        _s3d_fused_kernel, comp=comp, num_groups=ng, c_out=c_out,
        cpd=cpd, copd=copd, d=d, w=w, gating=gating, eps=1e-5)

    out3 = pl.pallas_call(
        kernel,
        out_shape=jax.ShapeDtypeStruct((n, c_out, dw), jnp.float32),
        grid=(n,),
        in_specs=[pl.BlockSpec((1, cpd, 2 * dw), lambda i: (i, 0, 0)),
                  pl.BlockSpec(vec.shape, lambda i: (0, 0)),
                  pl.BlockSpec(w400.shape, lambda i: (0, 0)),
                  pl.BlockSpec(small.shape, lambda i: (0, 0)),
                  pl.BlockSpec(uslab.shape, lambda i: (0, 0))],
        out_specs=pl.BlockSpec((1, c_out, dw), lambda i: (i, 0, 0)),
        scratch_shapes=[pltpu.VMEM((cpd, 2 * padlen), jnp.float32),
                        pltpu.VMEM((25 * cpd, 2 * dw), jnp.float32)],
        compiler_params=pltpu.CompilerParams(
            dimension_semantics=("parallel",)),
    )(x3, vec, w400, small, uslab)
    return out3.reshape(n, c_out, 1, d, w)


# ----------------------- plain-JAX reference (for checking) ------------------

_HI = jax.lax.Precision.HIGHEST


def _pconv_ref(x, w, b):
    return (jnp.einsum('nctdw,co->notdw', x, w, precision=_HI)
            + b[None, :, None, None, None])


def _conv3d_ref(x, w, pad):
    kt, kh, kw, _, cout = w.shape
    pt, ph, pw = pad
    xp = jnp.pad(x, ((0, 0), (0, 0), (pt, pt), (ph, ph), (pw, pw)))
    to = xp.shape[2] - kt + 1
    do = xp.shape[3] - kh + 1
    wo = xp.shape[4] - kw + 1
    out = jnp.zeros((x.shape[0], cout, to, do, wo), jnp.float32)
    for a in range(kt):
        for dy in range(kh):
            for dx in range(kw):
                out = out + jnp.einsum(
                    'nctdw,co->notdw',
                    xp[:, :, a:a + to, dy:dy + do, dx:dx + wo], w[a, dy, dx],
                    precision=_HI)
    return out


def _gn_relu_ref(h, gamma, beta, groups, eps=1e-5):
    n, c, t, d, w = h.shape
    cg = c // groups
    hg = h.reshape(n, groups, cg, t, d, w)
    mu = jnp.mean(hg, axis=(2, 3, 4, 5), keepdims=True)
    var = jnp.mean((hg - mu) ** 2, axis=(2, 3, 4, 5), keepdims=True)
    y = ((hg - mu) / jnp.sqrt(var + eps)).reshape(n, c, t, d, w)
    y = y * gamma[None, :, None, None, None] + beta[None, :, None, None, None]
    return jnp.maximum(y, 0.0)


def _avgpool_ref(x, s):
    n, c, t, d, w = x.shape
    xp = jnp.pad(x, ((0, 0), (0, 0), (0, 0), (2, 2), (2, 2)))
    do = (d + 4 - 5) // s + 1
    wo = (w + 4 - 5) // s + 1
    out = jnp.zeros((n, c, 1, do, wo), jnp.float32)
    for a in range(2):
        for dy in range(5):
            for dx in range(5):
                out = out + xp[:, :, a:a + 1,
                               dy:dy + (do - 1) * s + 1:s,
                               dx:dx + (wo - 1) * s + 1:s]
    return out / 50.0


def _upsample_ref(p, do, wo):
    rd = jnp.asarray(_interp_matrix(do, p.shape[3]))
    rw = jnp.asarray(_interp_matrix(wo, p.shape[4]))
    p = jnp.einsum('ab,nctbw->nctaw', rd, p, precision=_HI)
    p = jnp.einsum('ab,nctdb->nctda', rw, p, precision=_HI)
    return p


def s3d_reference(x, params, gating=False):
    ng = params['num_groups']
    d, w = x.shape[3], x.shape[4]

    def branch(p):
        h = _pconv_ref(x, p['pw_w'], p['pw_b'])
        h = (_conv3d_ref(h, p['sconv_w'][None], (0, 2, 2))
             + p['sconv_b'][None, :, None, None, None])
        h = _gn_relu_ref(h, p['gn1_g'], p['gn1_b'], ng)
        kh, kw = p['tconv_w'].shape[1], p['tconv_w'].shape[2]
        h = (_conv3d_ref(h, p['tconv_w'], (0, (kh - 1) // 2, (kw - 1) // 2))
             + p['tconv_b'][None, :, None, None, None])
        h = _gn_relu_ref(h, p['gn2_g'], p['gn2_b'], ng)
        return h

    mx = branch(params['dyn_x'])
    mz = branch(params['dyn_z'])
    mxz = branch(params['dyn_xz'])

    def ctx(wk, bk, s):
        p = _pconv_ref(_avgpool_ref(x, s), wk, bk)
        if s > 1:
            p = _upsample_ref(p, d, w)
        return p

    c1 = ctx(params['g1_w'], params['g1_b'], 1)
    c2 = ctx(params['g2_w'], params['g2_b'], 2)
    c4 = ctx(params['g4_w'], params['g4_b'], 4)

    cat = jnp.concatenate([mx, mz, mxz, c1, c2, c4], axis=1)
    out = _pconv_ref(cat, params['out_w'], params['out_b'])
    if gating:
        sa = jnp.mean(out, axis=(2, 3, 4))
        gate = jax.nn.sigmoid(sa @ params['fg_w'] + params['fg_b'][None, :])
        out = out * gate[:, :, None, None, None]
    return out + x[:, :, 1:2]


# --------------------------------- params ------------------------------------

def init_params(key, in_channels, out_channels, num_groups, gating):
    comp = in_channels // 3
    keys = iter(jax.random.split(key, 64))

    def rnd(shape, s=0.1):
        return jax.random.normal(next(keys), shape, jnp.float32) * s

    def branch(kt_shape):
        kh, kw = kt_shape[1], kt_shape[2]
        return dict(
            pw_w=rnd((in_channels, comp)), pw_b=rnd((comp,)),
            sconv_w=rnd((5, 5, comp, comp)), sconv_b=rnd((comp,)),
            gn1_g=1.0 + rnd((comp,)), gn1_b=rnd((comp,)),
            tconv_w=rnd((2, kh, kw, comp, comp)), tconv_b=rnd((comp,)),
            gn2_g=1.0 + rnd((comp,)), gn2_b=rnd((comp,)))

    params = dict(
        comp=comp, num_groups=num_groups,
        dyn_x=branch((2, 1, 5)), dyn_z=branch((2, 5, 1)),
        dyn_xz=branch((2, 5, 5)),
        g1_w=rnd((in_channels, comp)), g1_b=rnd((comp,)),
        g2_w=rnd((in_channels, comp)), g2_b=rnd((comp,)),
        g4_w=rnd((in_channels, comp)), g4_b=rnd((comp,)),
        out_w=rnd((6 * comp, out_channels)), out_b=rnd((out_channels,)))
    if gating:
        params['fg_w'] = rnd((out_channels, out_channels))
        params['fg_b'] = rnd((out_channels,))
    return params


# ----------------------------------- main -------------------------------------

if __name__ == "__main__":
    key = jax.random.PRNGKey(0)
    kx, kp = jax.random.split(key)

    # Small shapes consistent with the module: [N, C, 2, D, W].
    N, C, D, W = 2, 12, 16, 16
    NUM_GROUPS = 2          # must divide comp_channels = C // 3 = 4
    GATING = True           # exercise the fused gating epilogue

    x = jax.random.normal(kx, (N, C, 2, D, W), jnp.float32)
    params = init_params(kp, C, C, NUM_GROUPS, GATING)

    out = s3d_temporal_block_comp(x, params, gating=GATING)
    out = jax.block_until_ready(out)
    assert out.shape == (N, C, 1, D, W), out.shape
    assert bool(jnp.all(jnp.isfinite(out)))

    # numerical check against a plain-JAX reference of the PyTorch forward
    p_arr = {k: v for k, v in params.items() if k not in ('comp', 'num_groups')}
    ref_fn = jax.jit(lambda xx, pp: s3d_reference(
        xx, {**pp, 'comp': params['comp'], 'num_groups': params['num_groups']},
        gating=GATING))
    out_ref = jax.block_until_ready(ref_fn(x, p_arr))
    err = float(jnp.max(jnp.abs(out - out_ref)))
    assert err < 5e-2, f"mismatch vs reference: max abs diff = {err}"

    print("KERNEL_OK")
</pallas_src>

<mosaic_0001>
module attributes {stable_mosaic.version = 11 : i64} {
  func.func @_s3d_fused_kernel(%arg0: i32, %arg1: memref<1x16x512xf32, #tpu.memory_space<vmem>>, %arg2: memref<16x16xf32, #tpu.memory_space<vmem>>, %arg3: memref<96x400xf32, #tpu.memory_space<vmem>>, %arg4: memref<64x16xf32, #tpu.memory_space<vmem>>, %arg5: memref<520x256xf32, #tpu.memory_space<vmem>>, %arg6: memref<1x12x256xf32, #tpu.memory_space<vmem>>, %arg7: memref<16x648xf32, #tpu.memory_space<vmem>>, %arg8: memref<400x512xf32, #tpu.memory_space<vmem>>) attributes {dimension_semantics = [#tpu.dimension_semantics<parallel>], iteration_bounds = array<i64: 2>, scalar_prefetch = 0 : i64, scratch_operands = 2 : i64, tpu.core_type = #tpu.core_type<tc>, window_params = [{transform_indices = @transform_0, window_bounds = array<i64: 1, 16, 512>}, {pipeline_mode = #tpu.pipeline_mode<synchronous>, transform_indices = @transform_1, window_bounds = array<i64: 16, 16>}, {pipeline_mode = #tpu.pipeline_mode<synchronous>, transform_indices = @transform_2, window_bounds = array<i64: 96, 400>}, {pipeline_mode = #tpu.pipeline_mode<synchronous>, transform_indices = @transform_3, window_bounds = array<i64: 64, 16>}, {pipeline_mode = #tpu.pipeline_mode<synchronous>, transform_indices = @transform_4, window_bounds = array<i64: 520, 256>}, {transform_indices = @transform_5, window_bounds = array<i64: 1, 12, 256>}]} {
    %cst = arith.constant 0.000000e+00 : f32
    %0 = vector.broadcast %cst : f32 to vector<16x34xf32>
    %c0 = arith.constant 0 : index
    %c0_0 = arith.constant 0 : index
    %1 = vector.load %arg7[%c0, %c0_0] : memref<16x648xf32, #tpu.memory_space<vmem>>, vector<16x34xf32>
    tpu.vector_store %arg7[%c0, %c0_0], %0 {strides = array<i32>} : memref<16x648xf32, #tpu.memory_space<vmem>>, vector<16x34xf32>,
    %cst_1 = arith.constant 0.000000e+00 : f32
    %2 = vector.broadcast %cst_1 : f32 to vector<16x68xf32>
    %c0_2 = arith.constant 0 : index
    %c290 = arith.constant 290 : index
    %3 = vector.load %arg7[%c0_2, %c290] : memref<16x648xf32, #tpu.memory_space<vmem>>, vector<16x68xf32>
    tpu.vector_store %arg7[%c0_2, %c290], %2 {strides = array<i32>} : memref<16x648xf32, #tpu.memory_space<vmem>>, vector<16x68xf32>,
    %cst_3 = arith.constant 0.000000e+00 : f32
    %4 = vector.broadcast %cst_3 : f32 to vector<16x34xf32>
    %c0_4 = arith.constant 0 : index
    %c614 = arith.constant 614 : index
    %5 = vector.load %arg7[%c0_4, %c614] : memref<16x648xf32, #tpu.memory_space<vmem>>, vector<16x34xf32>
    tpu.vector_store %arg7[%c0_4, %c614], %4 {strides = array<i32>} : memref<16x648xf32, #tpu.memory_space<vmem>>, vector<16x34xf32>,
    %c0_5 = arith.constant 0 : index
    %c0_6 = arith.constant 0 : index
    %6 = vector.load %arg5[%c0_5, %c0_6] : memref<520x256xf32, #tpu.memory_space<vmem>>, vector<1x256xf32>
    %7 = vector.shape_cast %6 : vector<1x256xf32> to vector<1x256xf32>
    %8 = vector.broadcast %7 : vector<1x256xf32> to vector<16x256xf32>
    %c1 = arith.constant 1 : index
    %c0_7 = arith.constant 0 : index
    %9 = vector.load %arg5[%c1, %c0_7] : memref<520x256xf32, #tpu.memory_space<vmem>>, vector<1x256xf32>
    %10 = vector.shape_cast %9 : vector<1x256xf32> to vector<1x256xf32>
    %11 = vector.broadcast %10 : vector<1x256xf32> to vector<16x256xf32>
    %c3 = arith.constant 3 : index
    %c0_8 = arith.constant 0 : index
    %12 = vector.load %arg5[%c3, %c0_8] : memref<520x256xf32, #tpu.memory_space<vmem>>, vector<1x256xf32>
    %13 = vector.shape_cast %12 : vector<1x256xf32> to vector<1x256xf32>
    %14 = vector.broadcast %13 : vector<1x256xf32> to vector<16x256xf32>
    %c4 = arith.constant 4 : index
    %c0_9 = arith.constant 0 : index
    %15 = vector.load %arg5[%c4, %c0_9] : memref<520x256xf32, #tpu.memory_space<vmem>>, vector<1x256xf32>
    %16 = vector.shape_cast %15 : vector<1x256xf32> to vector<1x256xf32>
    %17 = vector.broadcast %16 : vector<1x256xf32> to vector<16x256xf32>
    %c0_10 = arith.constant 0 : index
    %c0_11 = arith.constant 0 : index
    %c0_12 = arith.constant 0 : index
    %18 = vector.load %arg1[%c0_10, %c0_11, %c0_12] : memref<1x16x512xf32, #tpu.memory_space<vmem>>, vector<1x16x512xf32>
    %19 = vector.shape_cast %18 : vector<1x16x512xf32> to vector<16x512xf32>
    %c0_13 = arith.constant 0 : index
    %c0_14 = arith.constant 0 : index
    %20 = vector.load %arg4[%c0_13, %c0_14] : memref<64x16xf32, #tpu.memory_space<vmem>>, vector<16x16xf32>
    %cst_15 = arith.constant dense<0.000000e+00> : vector<16x512xf32>
    %21 = tpu.matmul %20, %19, %cst_15 {dimension_numbers = #tpu.dot_dimension_numbers<[1], [0], [0], [1], [0, 0, 1, 1], [], []>} : vector<16x16xf32>, vector<16x512xf32>, vector<16x512xf32> -> vector<16x512xf32>
    %c0_16 = arith.constant 0 : index
    %c0_17 = arith.constant 0 : index
    %22 = vector.load %arg2[%c0_16, %c0_17] : memref<16x16xf32, #tpu.memory_space<vmem>>, vector<16x1xf32>
    %23 = vector.broadcast %22 : vector<16x1xf32> to vector<16x512xf32>
    %24 = arith.addf %21, %23 : vector<16x512xf32>
    %25 = vector.extract_strided_slice %24 {offsets = [0, 0], sizes = [16, 256], strides = [1, 1]} : vector<16x512xf32> to vector<16x256xf32>
    %c0_18 = arith.constant 0 : index
    %c34 = arith.constant 34 : index
    %26 = vector.load %arg7[%c0_18, %c34] : memref<16x648xf32, #tpu.memory_space<vmem>>, vector<16x256xf32>
    tpu.vector_store %arg7[%c0_18, %c34], %25 {strides = array<i32>} : memref<16x648xf32, #tpu.memory_space<vmem>>, vector<16x256xf32>,
    %27 = vector.extract_strided_slice %24 {offsets = [0, 256], sizes = [16, 256], strides = [1, 1]} : vector<16x512xf32> to vector<16x256xf32>
    %c0_19 = arith.constant 0 : index
    %c358 = arith.constant 358 : index
    %28 = vector.load %arg7[%c0_19, %c358] : memref<16x648xf32, #tpu.memory_space<vmem>>, vector<16x256xf32>
    tpu.vector_store %arg7[%c0_19, %c358], %27 {strides = array<i32>} : memref<16x648xf32, #tpu.memory_space<vmem>>, vector<16x256xf32>,
    %c0_20 = arith.constant 0 : index
    %c0_21 = arith.constant 0 : index
    %29 = vector.load %arg7[%c0_20, %c0_21] : memref<16x648xf32, #tpu.memory_space<vmem>>, vector<16x256xf32>
    %30 = arith.mulf %29, %8 : vector<16x256xf32>
    %c0_22 = arith.constant 0 : index
    %c0_23 = arith.constant 0 : index
    %31 = vector.load %arg8[%c0_22, %c0_23] : memref<400x512xf32, #tpu.memory_space<vmem>>, vector<16x256xf32>
    tpu.vector_store %arg8[%c0_22, %c0_23], %30 {strides = array<i32>} : memref<400x512xf32, #tpu.memory_space<vmem>>, vector<16x256xf32>,
    %c0_24 = arith.constant 0 : index
    %c324 = arith.constant 324 : index
    %32 = vector.load %arg7[%c0_24, %c324] : memref<16x648xf32, #tpu.memory_space<vmem>>, vector<16x256xf32>
    %33 = arith.mulf %32, %8 : vector<16x256xf32>
    %c0_25 = arith.constant 0 : index
    %c256 = arith.constant 256 : index
    %34 = vector.load %arg8[%c0_25, %c256] : memref<400x512xf32, #tpu.memory_space<vmem>>, vector<16x256xf32>
    tpu.vector_store %arg8[%c0_25, %c256], %33 {strides = array<i32>} : memref<400x512xf32, #tpu.memory_space<vmem>>, vector<16x256xf32>,
    %c0_26 = arith.constant 0 : index
    %c1_27 = arith.constant 1 : index
    %35 = vector.load %arg7[%c0_26, %c1_27] : memref<16x648xf32, #tpu.memory_space<vmem>>, vector<16x256xf32>
    %36 = arith.mulf %35, %11 : vector<16x256xf32>
    %c16 = arith.constant 16 : index
    %c0_28 = arith.constant 0 : index
    %37 = vector.load %arg8[%c16, %c0_28] : memref<400x512xf32, #tpu.memory_space<vmem>>, vector<16x256xf32>
    tpu.vector_store %arg8[%c16, %c0_28], %36 {strides = array<i32>} : memref<400x512xf32, #tpu.memory_space<vmem>>, vector<16x256xf32>,
    %c0_29 = arith.constant 0 : index
    %c325 = arith.constant 325 : index
    %38 = vector.load %arg7[%c0_29, %c325] : memref<16x648xf32, #tpu.memory_space<vmem>>, vector<16x256xf32>
    %39 = arith.mulf %38, %11 : vector<16x256xf32>
    %c16_30 = arith.constant 16 : index
    %c256_31 = arith.constant 256 : index
    %40 = vector.load %arg8[%c16_30, %c256_31] : memref<400x512xf32, #tpu.memory_space<vmem>>, vector<16x256xf32>
    tpu.vector_store %arg8[%c16_30, %c256_31], %39 {strides = array<i32>} : memref<400x512xf32, #tpu.memory_space<vmem>>, vector<16x256xf32>,
    %c0_32 = arith.constant 0 : index
    %c2 = arith.constant 2 : index
    %41 = vector.load %arg7[%c0_32, %c2] : memref<16x648xf32, #tpu.memory_space<vmem>>, vector<16x256xf32>
    %c32 = arith.constant 32 : index
    %c0_33 = arith.constant 0 : index
    %42 = vector.load %arg8[%c32, %c0_33] : memref<400x512xf32, #tpu.memory_space<vmem>>, vector<16x256xf32>
    tpu.vector_store %arg8[%c32, %c0_33], %41 {strides = array<i32>} : memref<400x512xf32, #tpu.memory_space<vmem>>, vector<16x256xf32>,
    %c0_34 = arith.constant 0 : index
    %c326 = arith.constant 326 : index
    %43 = vector.load %arg7[%c0_34, %c326] : memref<16x648xf32, #tpu.memory_space<vmem>>, vector<16x256xf32>
    %c32_35 = arith.constant 32 : index
    %c256_36 = arith.constant 256 : index
    %44 = vector.load %arg8[%c32_35, %c256_36] : memref<400x512xf32, #tpu.memory_space<vmem>>, vector<16x256xf32>
    tpu.vector_store %arg8[%c32_35, %c256_36], %43 {strides = array<i32>} : memref<400x512xf32, #tpu.memory_space<vmem>>, vector<16x256xf32>,
    %c0_37 = arith.constant 0 : index
    %c3_38 = arith.constant 3 : index
    %45 = vector.load %arg7[%c0_37, %c3_38] : memref<16x648xf32, #tpu.memory_space<vmem>>, vector<16x256xf32>
    %46 = arith.mulf %45, %14 : vector<16x256xf32>
    %c48 = arith.constant 48 : index
    %c0_39 = arith.constant 0 : index
    %47 = vector.load %arg8[%c48, %c0_39] : memref<400x512xf32, #tpu.memory_space<vmem>>, vector<16x256xf32>
    tpu.vector_store %arg8[%c48, %c0_39], %46 {strides = array<i32>} : memref<400x512xf32, #tpu.memory_space<vmem>>, vector<16x256xf32>,
    %c0_40 = arith.constant 0 : index
    %c327 = arith.constant 327 : index
    %48 = vector.load %arg7[%c0_40, %c327] : memref<16x648xf32, #tpu.memory_space<vmem>>, vector<16x256xf32>
    %49 = arith.mulf %48, %14 : vector<16x256xf32>
    %c48_41 = arith.constant 48 : index
    %c256_42 = arith.constant 256 : index
    %50 = vector.load %arg8[%c48_41, %c256_42] : memref<400x512xf32, #tpu.memory_space<vmem>>, vector<16x256xf32>
    tpu.vector_store %arg8[%c48_41, %c256_42], %49 {strides = array<i32>} : memref<400x512xf32, #tpu.memory_space<vmem>>, vector<16x256xf32>,
    %c0_43 = arith.constant 0 : index
    %c4_44 = arith.constant 4 : index
    %51 = vector.load %arg7[%c0_43, %c4_44] : memref<16x648xf32, #tpu.memory_space<vmem>>, vector<16x256xf32>
    %52 = arith.mulf %51, %17 : vector<16x256xf32>
    %c64 = arith.constant 64 : index
    %c0_45 = arith.constant 0 : index
    %53 = vector.load %arg8[%c64, %c0_45] : memref<400x512xf32, #tpu.memory_space<vmem>>, vector<16x256xf32>
    tpu.vector_store %arg8[%c64, %c0_45], %52 {strides = array<i32>} : memref<400x512xf32, #tpu.memory_space<vmem>>, vector<16x256xf32>,
    %c0_46 = arith.constant 0 : index
    %c328 = arith.constant 328 : index
    %54 = vector.load %arg7[%c0_46, %c328] : memref<16x648xf32, #tpu.memory_space<vmem>>, vector<16x256xf32>
    %55 = arith.mulf %54, %17 : vector<16x256xf32>
    %c64_47 = arith.constant 64 : index
    %c256_48 = arith.constant 256 : index
    %56 = vector.load %arg8[%c64_47, %c256_48] : memref<400x512xf32, #tpu.memory_space<vmem>>, vector<16x256xf32>
    tpu.vector_store %arg8[%c64_47, %c256_48], %55 {strides = array<i32>} : memref<400x512xf32, #tpu.memory_space<vmem>>, vector<16x256xf32>,
    %c0_49 = arith.constant 0 : index
    %c16_50 = arith.constant 16 : index
    %57 = vector.load %arg7[%c0_49, %c16_50] : memref<16x648xf32, #tpu.memory_space<vmem>>, vector<16x256xf32>
    %58 = arith.mulf %57, %8 : vector<16x256xf32>
    %c80 = arith.constant 80 : index
    %c0_51 = arith.constant 0 : index
    %59 = vector.load %arg8[%c80, %c0_51] : memref<400x512xf32, #tpu.memory_space<vmem>>, vector<16x256xf32>
    tpu.vector_store %arg8[%c80, %c0_51], %58 {strides = array<i32>} : memref<400x512xf32, #tpu.memory_space<vmem>>, vector<16x256xf32>,
    %c0_52 = arith.constant 0 : index
    %c340 = arith.constant 340 : index
    %60 = vector.load %arg7[%c0_52, %c340] : memref<16x648xf32, #tpu.memory_space<vmem>>, vector<16x256xf32>
    %61 = arith.mulf %60, %8 : vector<16x256xf32>
    %c80_53 = arith.constant 80 : index
    %c256_54 = arith.constant 256 : index
    %62 = vector.load %arg8[%c80_53, %c256_54] : memref<400x512xf32, #tpu.memory_space<vmem>>, vector<16x256xf32>
    tpu.vector_store %arg8[%c80_53, %c256_54], %61 {strides = array<i32>} : memref<400x512xf32, #tpu.memory_space<vmem>>, vector<16x256xf32>,
    %c0_55 = arith.constant 0 : index
    %c17 = arith.constant 17 : index
    %63 = vector.load %arg7[%c0_55, %c17] : memref<16x648xf32, #tpu.memory_space<vmem>>, vector<16x256xf32>
    %64 = arith.mulf %63, %11 : vector<16x256xf32>
    %c96 = arith.constant 96 : index
    %c0_56 = arith.constant 0 : index
    %65 = vector.load %arg8[%c96, %c0_56] : memref<400x512xf32, #tpu.memory_space<vmem>>, vector<16x256xf32>
    tpu.vector_store %arg8[%c96, %c0_56], %64 {strides = array<i32>} : memref<400x512xf32, #tpu.memory_space<vmem>>, vector<16x256xf32>,
    %c0_57 = arith.constant 0 : index
    %c341 = arith.constant 341 : index
    %66 = vector.load %arg7[%c0_57, %c341] : memref<16x648xf32, #tpu.memory_space<vmem>>, vector<16x256xf32>
    %67 = arith.mulf %66, %11 : vector<16x256xf32>
    %c96_58 = arith.constant 96 : index
    %c256_59 = arith.constant 256 : index
    %68 = vector.load %arg8[%c96_58, %c256_59] : memref<400x512xf32, #tpu.memory_space<vmem>>, vector<16x256xf32>
    tpu.vector_store %arg8[%c96_58, %c256_59], %67 {strides = array<i32>} : memref<400x512xf32, #tpu.memory_space<vmem>>, vector<16x256xf32>,
    %c0_60 = arith.constant 0 : index
    %c18 = arith.constant 18 : index
    %69 = vector.load %arg7[%c0_60, %c18] : memref<16x648xf32, #tpu.memory_space<vmem>>, vector<16x256xf32>
    %c112 = arith.constant 112 : index
    %c0_61 = arith.constant 0 : index
    %70 = vector.load %arg8[%c112, %c0_61] : memref<400x512xf32, #tpu.memory_space<vmem>>, vector<16x256xf32>
    tpu.vector_store %arg8[%c112, %c0_61], %69 {strides = array<i32>} : memref<400x512xf32, #tpu.memory_space<vmem>>, vector<16x256xf32>,
    %c0_62 = arith.constant 0 : index
    %c342 = arith.constant 342 : index
    %71 = vector.load %arg7[%c0_62, %c342] : memref<16x648xf32, #tpu.memory_space<vmem>>, vector<16x256xf32>
    %c112_63 = arith.constant 112 : index
    %c256_64 = arith.constant 256 : index
    %72 = vector.load %arg8[%c112_63, %c256_64] : memref<400x512xf32, #tpu.memory_space<vmem>>, vector<16x256xf32>
    tpu.vector_store %arg8[%c112_63, %c256_64], %71 {strides = array<i32>} : memref<400x512xf32, #tpu.memory_space<vmem>>, vector<16x256xf32>,
    %c0_65 = arith.constant 0 : index
    %c19 = arith.constant 19 : index
    %73 = vector.load %arg7[%c0_65, %c19] : memref<16x648xf32, #tpu.memory_space<vmem>>, vector<16x256xf32>
    %74 = arith.mulf %73, %14 : vector<16x256xf32>
    %c128 = arith.constant 128 : index
    %c0_66 = arith.constant 0 : index
    %75 = vector.load %arg8[%c128, %c0_66] : memref<400x512xf32, #tpu.memory_space<vmem>>, vector<16x256xf32>
    tpu.vector_store %arg8[%c128, %c0_66], %74 {strides = array<i32>} : memref<400x512xf32, #tpu.memory_space<vmem>>, vector<16x256xf32>,
    %c0_67 = arith.constant 0 : index
    %c343 = arith.constant 343 : index
    %76 = vector.load %arg7[%c0_67, %c343] : memref<16x648xf32, #tpu.memory_space<vmem>>, vector<16x256xf32>
    %77 = arith.mulf %76, %14 : vector<16x256xf32>
    %c128_68 = arith.constant 128 : index
    %c256_69 = arith.constant 256 : index
    %78 = vector.load %arg8[%c128_68, %c256_69] : memref<400x512xf32, #tpu.memory_space<vmem>>, vector<16x256xf32>
    tpu.vector_store %arg8[%c128_68, %c256_69], %77 {strides = array<i32>} : memref<400x512xf32, #tpu.memory_space<vmem>>, vector<16x256xf32>,
    %c0_70 = arith.constant 0 : index
    %c20 = arith.constant 20 : index
    %79 = vector.load %arg7[%c0_70, %c20] : memref<16x648xf32, #tpu.memory_space<vmem>>, vector<16x256xf32>
    %80 = arith.mulf %79, %17 : vector<16x256xf32>
    %c144 = arith.constant 144 : index
    %c0_71 = arith.constant 0 : index
    %81 = vector.load %arg8[%c144, %c0_71] : memref<400x512xf32, #tpu.memory_space<vmem>>, vector<16x256xf32>
    tpu.vector_store %arg8[%c144, %c0_71], %80 {strides = array<i32>} : memref<400x512xf32, #tpu.memory_space<vmem>>, vector<16x256xf32>,
    %c0_72 = arith.constant 0 : index
    %c344 = arith.constant 344 : index
    %82 = vector.load %arg7[%c0_72, %c344] : memref<16x648xf32, #tpu.memory_space<vmem>>, vector<16x256xf32>
    %83 = arith.mulf %82, %17 : vector<16x256xf32>
    %c144_73 = arith.constant 144 : index
    %c256_74 = arith.constant 256 : index
    %84 = vector.load %arg8[%c144_73, %c256_74] : memref<400x512xf32, #tpu.memory_space<vmem>>, vector<16x256xf32>
    tpu.vector_store %arg8[%c144_73, %c256_74], %83 {strides = array<i32>} : memref<400x512xf32, #tpu.memory_space<vmem>>, vector<16x256xf32>,
    %c0_75 = arith.constant 0 : index
    %c32_76 = arith.constant 32 : index
    %85 = vector.load %arg7[%c0_75, %c32_76] : memref<16x648xf32, #tpu.memory_space<vmem>>, vector<16x256xf32>
    %86 = arith.mulf %85, %8 : vector<16x256xf32>
    %c160 = arith.constant 160 : index
    %c0_77 = arith.constant 0 : index
    %87 = vector.load %arg8[%c160, %c0_77] : memref<400x512xf32, #tpu.memory_space<vmem>>, vector<16x256xf32>
    tpu.vector_store %arg8[%c160, %c0_77], %86 {strides = array<i32>} : memref<400x512xf32, #tpu.memory_space<vmem>>, vector<16x256xf32>,
    %c0_78 = arith.constant 0 : index
    %c356 = arith.constant 356 : index
    %88 = vector.load %arg7[%c0_78, %c356] : memref<16x648xf32, #tpu.memory_space<vmem>>, vector<16x256xf32>
    %89 = arith.mulf %88, %8 : vector<16x256xf32>
    %c160_79 = arith.constant 160 : index
    %c256_80 = arith.constant 256 : index
    %90 = vector.load %arg8[%c160_79, %c256_80] : memref<400x512xf32, #tpu.memory_space<vmem>>, vector<16x256xf32>
    tpu.vector_store %arg8[%c160_79, %c256_80], %89 {strides = array<i32>} : memref<400x512xf32, #tpu.memory_space<vmem>>, vector<16x256xf32>,
    %c0_81 = arith.constant 0 : index
    %c33 = arith.constant 33 : index
    %91 = vector.load %arg7[%c0_81, %c33] : memref<16x648xf32, #tpu.memory_space<vmem>>, vector<16x256xf32>
    %92 = arith.mulf %91, %11 : vector<16x256xf32>
    %c176 = arith.constant 176 : index
    %c0_82 = arith.constant 0 : index
    %93 = vector.load %arg8[%c176, %c0_82] : memref<400x512xf32, #tpu.memory_space<vmem>>, vector<16x256xf32>
    tpu.vector_store %arg8[%c176, %c0_82], %92 {strides = array<i32>} : memref<400x512xf32, #tpu.memory_space<vmem>>, vector<16x256xf32>,
    %c0_83 = arith.constant 0 : index
    %c357 = arith.constant 357 : index
    %94 = vector.load %arg7[%c0_83, %c357] : memref<16x648xf32, #tpu.memory_space<vmem>>, vector<16x256xf32>
    %95 = arith.mulf %94, %11 : vector<16x256xf32>
    %c176_84 = arith.constant 176 : index
    %c256_85 = arith.constant 256 : index
    %96 = vector.load %arg8[%c176_84, %c256_85] : memref<400x512xf32, #tpu.memory_space<vmem>>, vector<16x256xf32>
    tpu.vector_store %arg8[%c176_84, %c256_85], %95 {strides = array<i32>} : memref<400x512xf32, #tpu.memory_space<vmem>>, vector<16x256xf32>,
    %c0_86 = arith.constant 0 : index
    %c34_87 = arith.constant 34 : index
    %97 = vector.load %arg7[%c0_86, %c34_87] : memref<16x648xf32, #tpu.memory_space<vmem>>, vector<16x256xf32>
    %c192 = arith.constant 192 : index
    %c0_88 = arith.constant 0 : index
    %98 = vector.load %arg8[%c192, %c0_88] : memref<400x512xf32, #tpu.memory_space<vmem>>, vector<16x256xf32>
    tpu.vector_store %arg8[%c192, %c0_88], %97 {strides = array<i32>} : memref<400x512xf32, #tpu.memory_space<vmem>>, vector<16x256xf32>,
    %c0_89 = arith.constant 0 : index
    %c358_90 = arith.constant 358 : index
    %99 = vector.load %arg7[%c0_89, %c358_90] : memref<16x648xf32, #tpu.memory_space<vmem>>, vector<16x256xf32>
    %c192_91 = arith.constant 192 : index
    %c256_92 = arith.constant 256 : index
    %100 = vector.load %arg8[%c192_91, %c256_92] : memref<400x512xf32, #tpu.memory_space<vmem>>, vector<16x256xf32>
    tpu.vector_store %arg8[%c192_91, %c256_92], %99 {strides = array<i32>} : memref<400x512xf32, #tpu.memory_space<vmem>>, vector<16x256xf32>,
    %c0_93 = arith.constant 0 : index
    %c35 = arith.constant 35 : index
    %101 = vector.load %arg7[%c0_93, %c35] : memref<16x648xf32, #tpu.memory_space<vmem>>, vector<16x256xf32>
    %102 = arith.mulf %101, %14 : vector<16x256xf32>
    %c208 = arith.constant 208 : index
    %c0_94 = arith.constant 0 : index
    %103 = vector.load %arg8[%c208, %c0_94] : memref<400x512xf32, #tpu.memory_space<vmem>>, vector<16x256xf32>
    tpu.vector_store %arg8[%c208, %c0_94], %102 {strides = array<i32>} : memref<400x512xf32, #tpu.memory_space<vmem>>, vector<16x256xf32>,
    %c0_95 = arith.constant 0 : index
    %c359 = arith.constant 359 : index
    %104 = vector.load %arg7[%c0_95, %c359] : memref<16x648xf32, #tpu.memory_space<vmem>>, vector<16x256xf32>
    %105 = arith.mulf %104, %14 : vector<16x256xf32>
    %c208_96 = arith.constant 208 : index
    %c256_97 = arith.constant 256 : index
    %106 = vector.load %arg8[%c208_96, %c256_97] : memref<400x512xf32, #tpu.memory_space<vmem>>, vector<16x256xf32>
    tpu.vector_store %arg8[%c208_96, %c256_97], %105 {strides = array<i32>} : memref<400x512xf32, #tpu.memory_space<vmem>>, vector<16x256xf32>,
    %c0_98 = arith.constant 0 : index
    %c36 = arith.constant 36 : index
    %107 = vector.load %arg7[%c0_98, %c36] : memref<16x648xf32, #tpu.memory_space<vmem>>, vector<16x256xf32>
    %108 = arith.mulf %107, %17 : vector<16x256xf32>
    %c224 = arith.constant 224 : index
    %c0_99 = arith.constant 0 : index
    %109 = vector.load %arg8[%c224, %c0_99] : memref<400x512xf32, #tpu.memory_space<vmem>>, vector<16x256xf32>
    tpu.vector_store %arg8[%c224, %c0_99], %108 {strides = array<i32>} : memref<400x512xf32, #tpu.memory_space<vmem>>, vector<16x256xf32>,
    %c0_100 = arith.constant 0 : index
    %c360 = arith.constant 360 : index
    %110 = vector.load %arg7[%c0_100, %c360] : memref<16x648xf32, #tpu.memory_space<vmem>>, vector<16x256xf32>
    %111 = arith.mulf %110, %17 : vector<16x256xf32>
    %c224_101 = arith.constant 224 : index
    %c256_102 = arith.constant 256 : index
    %112 = vector.load %arg8[%c224_101, %c256_102] : memref<400x512xf32, #tpu.memory_space<vmem>>, vector<16x256xf32>
    tpu.vector_store %arg8[%c224_101, %c256_102], %111 {strides = array<i32>} : memref<400x512xf32, #tpu.memory_space<vmem>>, vector<16x256xf32>,
    %c0_103 = arith.constant 0 : index
    %c48_104 = arith.constant 48 : index
    %113 = vector.load %arg7[%c0_103, %c48_104] : memref<16x648xf32, #tpu.memory_space<vmem>>, vector<16x256xf32>
    %114 = arith.mulf %113, %8 : vector<16x256xf32>
    %c240 = arith.constant 240 : index
    %c0_105 = arith.constant 0 : index
    %115 = vector.load %arg8[%c240, %c0_105] : memref<400x512xf32, #tpu.memory_space<vmem>>, vector<16x256xf32>
    tpu.vector_store %arg8[%c240, %c0_105], %114 {strides = array<i32>} : memref<400x512xf32, #tpu.memory_space<vmem>>, vector<16x256xf32>,
    %c0_106 = arith.constant 0 : index
    %c372 = arith.constant 372 : index
    %116 = vector.load %arg7[%c0_106, %c372] : memref<16x648xf32, #tpu.memory_space<vmem>>, vector<16x256xf32>
    %117 = arith.mulf %116, %8 : vector<16x256xf32>
    %c240_107 = arith.constant 240 : index
    %c256_108 = arith.constant 256 : index
    %118 = vector.load %arg8[%c240_107, %c256_108] : memref<400x512xf32, #tpu.memory_space<vmem>>, vector<16x256xf32>
    tpu.vector_store %arg8[%c240_107, %c256_108], %117 {strides = array<i32>} : memref<400x512xf32, #tpu.memory_space<vmem>>, vector<16x256xf32>,
    %c0_109 = arith.constant 0 : index
    %c49 = arith.constant 49 : index
    %119 = vector.load %arg7[%c0_109, %c49] : memref<16x648xf32, #tpu.memory_space<vmem>>, vector<16x256xf32>
    %120 = arith.mulf %119, %11 : vector<16x256xf32>
    %c256_110 = arith.constant 256 : index
    %c0_111 = arith.constant 0 : index
    %121 = vector.load %arg8[%c256_110, %c0_111] : memref<400x512xf32, #tpu.memory_space<vmem>>, vector<16x256xf32>
    tpu.vector_store %arg8[%c256_110, %c0_111], %120 {strides = array<i32>} : memref<400x512xf32, #tpu.memory_space<vmem>>, vector<16x256xf32>,
    %c0_112 = arith.constant 0 : index
    %c373 = arith.constant 373 : index
    %122 = vector.load %arg7[%c0_112, %c373] : memref<16x648xf32, #tpu.memory_space<vmem>>, vector<16x256xf32>
    %123 = arith.mulf %122, %11 : vector<16x256xf32>
    %c256_113 = arith.constant 256 : index
    %c256_114 = arith.constant 256 : index
    %124 = vector.load %arg8[%c256_113, %c256_114] : memref<400x512xf32, #tpu.memory_space<vmem>>, vector<16x256xf32>
    tpu.vector_store %arg8[%c256_113, %c256_114], %123 {strides = array<i32>} : memref<400x512xf32, #tpu.memory_space<vmem>>, vector<16x256xf32>,
    %c0_115 = arith.constant 0 : index
    %c50 = arith.constant 50 : index
    %125 = vector.load %arg7[%c0_115, %c50] : memref<16x648xf32, #tpu.memory_space<vmem>>, vector<16x256xf32>
    %c272 = arith.constant 272 : index
    %c0_116 = arith.constant 0 : index
    %126 = vector.load %arg8[%c272, %c0_116] : memref<400x512xf32, #tpu.memory_space<vmem>>, vector<16x256xf32>
    tpu.vector_store %arg8[%c272, %c0_116], %125 {strides = array<i32>} : memref<400x512xf32, #tpu.memory_space<vmem>>, vector<16x256xf32>,
    %c0_117 = arith.constant 0 : index
    %c374 = arith.constant 374 : index
    %127 = vector.load %arg7[%c0_117, %c374] : memref<16x648xf32, #tpu.memory_space<vmem>>, vector<16x256xf32>
    %c272_118 = arith.constant 272 : index
    %c256_119 = arith.constant 256 : index
    %128 = vector.load %arg8[%c272_118, %c256_119] : memref<400x512xf32, #tpu.memory_space<vmem>>, vector<16x256xf32>
    tpu.vector_store %arg8[%c272_118, %c256_119], %127 {strides = array<i32>} : memref<400x512xf32, #tpu.memory_space<vmem>>, vector<16x256xf32>,
    %c0_120 = arith.constant 0 : index
    %c51 = arith.constant 51 : index
    %129 = vector.load %arg7[%c0_120, %c51] : memref<16x648xf32, #tpu.memory_space<vmem>>, vector<16x256xf32>
    %130 = arith.mulf %129, %14 : vector<16x256xf32>
    %c288 = arith.constant 288 : index
    %c0_121 = arith.constant 0 : index
    %131 = vector.load %arg8[%c288, %c0_121] : memref<400x512xf32, #tpu.memory_space<vmem>>, vector<16x256xf32>
    tpu.vector_store %arg8[%c288, %c0_121], %130 {strides = array<i32>} : memref<400x512xf32, #tpu.memory_space<vmem>>, vector<16x256xf32>,
    %c0_122 = arith.constant 0 : index
    %c375 = arith.constant 375 : index
    %132 = vector.load %arg7[%c0_122, %c375] : memref<16x648xf32, #tpu.memory_space<vmem>>, vector<16x256xf32>
    %133 = arith.mulf %132, %14 : vector<16x256xf32>
    %c288_123 = arith.constant 288 : index
    %c256_124 = arith.constant 256 : index
    %134 = vector.load %arg8[%c288_123, %c256_124] : memref<400x512xf32, #tpu.memory_space<vmem>>, vector<16x256xf32>
    tpu.vector_store %arg8[%c288_123, %c256_124], %133 {strides = array<i32>} : memref<400x512xf32, #tpu.memory_space<vmem>>, vector<16x256xf32>,
    %c0_125 = arith.constant 0 : index
    %c52 = arith.constant 52 : index
    %135 = vector.load %arg7[%c0_125, %c52] : memref<16x648xf32, #tpu.memory_space<vmem>>, vector<16x256xf32>
    %136 = arith.mulf %135, %17 : vector<16x256xf32>
    %c304 = arith.constant 304 : index
    %c0_126 = arith.constant 0 : index
    %137 = vector.load %arg8[%c304, %c0_126] : memref<400x512xf32, #tpu.memory_space<vmem>>, vector<16x256xf32>
    tpu.vector_store %arg8[%c304, %c0_126], %136 {strides = array<i32>} : memref<400x512xf32, #tpu.memory_space<vmem>>, vector<16x256xf32>,
    %c0_127 = arith.constant 0 : index
    %c376 = arith.constant 376 : index
    %138 = vector.load %arg7[%c0_127, %c376] : memref<16x648xf32, #tpu.memory_space<vmem>>, vector<16x256xf32>
    %139 = arith.mulf %138, %17 : vector<16x256xf32>
    %c304_128 = arith.constant 304 : index
    %c256_129 = arith.constant 256 : index
    %140 = vector.load %arg8[%c304_128, %c256_129] : memref<400x512xf32, #tpu.memory_space<vmem>>, vector<16x256xf32>
    tpu.vector_store %arg8[%c304_128, %c256_129], %139 {strides = array<i32>} : memref<400x512xf32, #tpu.memory_space<vmem>>, vector<16x256xf32>,
    %c0_130 = arith.constant 0 : index
    %c64_131 = arith.constant 64 : index
    %141 = vector.load %arg7[%c0_130, %c64_131] : memref<16x648xf32, #tpu.memory_space<vmem>>, vector<16x256xf32>
    %142 = arith.mulf %141, %8 : vector<16x256xf32>
    %c320 = arith.constant 320 : index
    %c0_132 = arith.constant 0 : index
    %143 = vector.load %arg8[%c320, %c0_132] : memref<400x512xf32, #tpu.memory_space<vmem>>, vector<16x256xf32>
    tpu.vector_store %arg8[%c320, %c0_132], %142 {strides = array<i32>} : memref<400x512xf32, #tpu.memory_space<vmem>>, vector<16x256xf32>,
    %c0_133 = arith.constant 0 : index
    %c388 = arith.constant 388 : index
    %144 = vector.load %arg7[%c0_133, %c388] : memref<16x648xf32, #tpu.memory_space<vmem>>, vector<16x256xf32>
    %145 = arith.mulf %144, %8 : vector<16x256xf32>
    %c320_134 = arith.constant 320 : index
    %c256_135 = arith.constant 256 : index
    %146 = vector.load %arg8[%c320_134, %c256_135] : memref<400x512xf32, #tpu.memory_space<vmem>>, vector<16x256xf32>
    tpu.vector_store %arg8[%c320_134, %c256_135], %145 {strides = array<i32>} : memref<400x512xf32, #tpu.memory_space<vmem>>, vector<16x256xf32>,
    %c0_136 = arith.constant 0 : index
    %c65 = arith.constant 65 : index
    %147 = vector.load %arg7[%c0_136, %c65] : memref<16x648xf32, #tpu.memory_space<vmem>>, vector<16x256xf32>
    %148 = arith.mulf %147, %11 : vector<16x256xf32>
    %c336 = arith.constant 336 : index
    %c0_137 = arith.constant 0 : index
    %149 = vector.load %arg8[%c336, %c0_137] : memref<400x512xf32, #tpu.memory_space<vmem>>, vector<16x256xf32>
    tpu.vector_store %arg8[%c336, %c0_137], %148 {strides = array<i32>} : memref<400x512xf32, #tpu.memory_space<vmem>>, vector<16x256xf32>,
    %c0_138 = arith.constant 0 : index
    %c389 = arith.constant 389 : index
    %150 = vector.load %arg7[%c0_138, %c389] : memref<16x648xf32, #tpu.memory_space<vmem>>, vector<16x256xf32>
    %151 = arith.mulf %150, %11 : vector<16x256xf32>
    %c336_139 = arith.constant 336 : index
    %c256_140 = arith.constant 256 : index
    %152 = vector.load %arg8[%c336_139, %c256_140] : memref<400x512xf32, #tpu.memory_space<vmem>>, vector<16x256xf32>
    tpu.vector_store %arg8[%c336_139, %c256_140], %151 {strides = array<i32>} : memref<400x512xf32, #tpu.memory_space<vmem>>, vector<16x256xf32>,
    %c0_141 = arith.constant 0 : index
    %c66 = arith.constant 66 : index
    %153 = vector.load %arg7[%c0_141, %c66] : memref<16x648xf32, #tpu.memory_space<vmem>>, vector<16x256xf32>
    %c352 = arith.constant 352 : index
    %c0_142 = arith.constant 0 : index
    %154 = vector.load %arg8[%c352, %c0_142] : memref<400x512xf32, #tpu.memory_space<vmem>>, vector<16x256xf32>
    tpu.vector_store %arg8[%c352, %c0_142], %153 {strides = array<i32>} : memref<400x512xf32, #tpu.memory_space<vmem>>, vector<16x256xf32>,
    %c0_143 = arith.constant 0 : index
    %c390 = arith.constant 390 : index
    %155 = vector.load %arg7[%c0_143, %c390] : memref<16x648xf32, #tpu.memory_space<vmem>>, vector<16x256xf32>
    %c352_144 = arith.constant 352 : index
    %c256_145 = arith.constant 256 : index
    %156 = vector.load %arg8[%c352_144, %c256_145] : memref<400x512xf32, #tpu.memory_space<vmem>>, vector<16x256xf32>
    tpu.vector_store %arg8[%c352_144, %c256_145], %155 {strides = array<i32>} : memref<400x512xf32, #tpu.memory_space<vmem>>, vector<16x256xf32>,
    %c0_146 = arith.constant 0 : index
    %c67 = arith.constant 67 : index
    %157 = vector.load %arg7[%c0_146, %c67] : memref<16x648xf32, #tpu.memory_space<vmem>>, vector<16x256xf32>
    %158 = arith.mulf %157, %14 : vector<16x256xf32>
    %c368 = arith.constant 368 : index
    %c0_147 = arith.constant 0 : index
    %159 = vector.load %arg8[%c368, %c0_147] : memref<400x512xf32, #tpu.memory_space<vmem>>, vector<16x256xf32>
    tpu.vector_store %arg8[%c368, %c0_147], %158 {strides = array<i32>} : memref<400x512xf32, #tpu.memory_space<vmem>>, vector<16x256xf32>,
    %c0_148 = arith.constant 0 : index
    %c391 = arith.constant 391 : index
    %160 = vector.load %arg7[%c0_148, %c391] : memref<16x648xf32, #tpu.memory_space<vmem>>, vector<16x256xf32>
    %161 = arith.mulf %160, %14 : vector<16x256xf32>
    %c368_149 = arith.constant 368 : index
    %c256_150 = arith.constant 256 : index
    %162 = vector.load %arg8[%c368_149, %c256_150] : memref<400x512xf32, #tpu.memory_space<vmem>>, vector<16x256xf32>
    tpu.vector_store %arg8[%c368_149, %c256_150], %161 {strides = array<i32>} : memref<400x512xf32, #tpu.memory_space<vmem>>, vector<16x256xf32>,
    %c0_151 = arith.constant 0 : index
    %c68 = arith.constant 68 : index
    %163 = vector.load %arg7[%c0_151, %c68] : memref<16x648xf32, #tpu.memory_space<vmem>>, vector<16x256xf32>
    %164 = arith.mulf %163, %17 : vector<16x256xf32>
    %c384 = arith.constant 384 : index
    %c0_152 = arith.constant 0 : index
    %165 = vector.load %arg8[%c384, %c0_152] : memref<400x512xf32, #tpu.memory_space<vmem>>, vector<16x256xf32>
    tpu.vector_store %arg8[%c384, %c0_152], %164 {strides = array<i32>} : memref<400x512xf32, #tpu.memory_space<vmem>>, vector<16x256xf32>,
    %c0_153 = arith.constant 0 : index
    %c392 = arith.constant 392 : index
    %166 = vector.load %arg7[%c0_153, %c392] : memref<16x648xf32, #tpu.memory_space<vmem>>, vector<16x256xf32>
    %167 = arith.mulf %166, %17 : vector<16x256xf32>
    %c384_154 = arith.constant 384 : index
    %c256_155 = arith.constant 256 : index
    %168 = vector.load %arg8[%c384_154, %c256_155] : memref<400x512xf32, #tpu.memory_space<vmem>>, vector<16x256xf32>
    tpu.vector_store %arg8[%c384_154, %c256_155], %167 {strides = array<i32>} : memref<400x512xf32, #tpu.memory_space<vmem>>, vector<16x256xf32>,
    %c0_156 = arith.constant 0 : index
    %c0_157 = arith.constant 0 : index
    %169 = vector.load %arg3[%c0_156, %c0_157] : memref<96x400xf32, #tpu.memory_space<vmem>>, vector<16x400xf32>
    %c0_158 = arith.constant 0 : index
    %c0_159 = arith.constant 0 : index
    %170 = vector.load %arg8[%c0_158, %c0_159] : memref<400x512xf32, #tpu.memory_space<vmem>>, vector<400x512xf32>
    %cst_160 = arith.constant dense<0.000000e+00> : vector<16x512xf32>
    %171 = tpu.matmul %169, %170, %cst_160 {dimension_numbers = #tpu.dot_dimension_numbers<[1], [0], [0], [1], [0, 0, 1, 1], [], []>} : vector<16x400xf32>, vector<400x512xf32>, vector<16x512xf32> -> vector<16x512xf32>
    %c0_161 = arith.constant 0 : index
    %c1_162 = arith.constant 1 : index
    %172 = vector.load %arg2[%c0_161, %c1_162] : memref<16x16xf32, #tpu.memory_space<vmem>>, vector<16x1xf32>
    %173 = vector.broadcast %172 : vector<16x1xf32> to vector<16x512xf32>
    %174 = arith.addf %171, %173 : vector<16x512xf32>
    %c0_163 = arith.constant 0 : index
    %c2_164 = arith.constant 2 : index
    %175 = vector.load %arg2[%c0_163, %c2_164] : memref<16x16xf32, #tpu.memory_space<vmem>>, vector<16x1xf32>
    %c0_165 = arith.constant 0 : index
    %c3_166 = arith.constant 3 : index
    %176 = vector.load %arg2[%c0_165, %c3_166] : memref<16x16xf32, #tpu.memory_space<vmem>>, vector<16x1xf32>
    %c16_167 = arith.constant 16 : index
    %c0_168 = arith.constant 0 : index
    %177 = vector.load %arg4[%c16_167, %c0_168] : memref<64x16xf32, #tpu.memory_space<vmem>>, vector<16x16xf32>
    %cst_169 = arith.constant dense<0.000000e+00> : vector<16xf32>
    %178 = vector.multi_reduction <add>, %174, %cst_169 [1] : vector<16x512xf32> to vector<16xf32>
    %179 = vector.shape_cast %178 : vector<16xf32> to vector<16x1xf32>
    %cst_170 = arith.constant dense<0.000000e+00> : vector<16x1xf32>
    %180 = tpu.matmul %177, %179, %cst_170 {dimension_numbers = #tpu.dot_dimension_numbers<[1], [0], [0], [1], [0, 0, 1, 1], [], []>} : vector<16x16xf32>, vector<16x1xf32>, vector<16x1xf32> -> vector<16x1xf32>
    %cst_171 = arith.constant 9.765625E-4 : f32
    %181 = vector.broadcast %cst_171 : f32 to vector<16x1xf32>
    %182 = arith.mulf %180, %181 : vector<16x1xf32>
    %183 = vector.broadcast %182 : vector<16x1xf32> to vector<16x512xf32>
    %184 = arith.subf %174, %183 : vector<16x512xf32>
    %185 = arith.mulf %184, %184 : vector<16x512xf32>
    %cst_172 = arith.constant dense<0.000000e+00> : vector<16xf32>
    %186 = vector.multi_reduction <add>, %185, %cst_172 [1] : vector<16x512xf32> to vector<16xf32>
    %187 = vector.shape_cast %186 : vector<16xf32> to vector<16x1xf32>
    %cst_173 = arith.constant dense<0.000000e+00> : vector<16x1xf32>
    %188 = tpu.matmul %177, %187, %cst_173 {dimension_numbers = #tpu.dot_dimension_numbers<[1], [0], [0], [1], [0, 0, 1, 1], [], []>} : vector<16x16xf32>, vector<16x1xf32>, vector<16x1xf32> -> vector<16x1xf32>
    %cst_174 = arith.constant 9.765625E-4 : f32
    %189 = vector.broadcast %cst_174 : f32 to vector<16x1xf32>
    %190 = arith.mulf %188, %189 : vector<16x1xf32>
    %cst_175 = arith.constant 9.99999974E-6 : f32
    %191 = vector.broadcast %cst_175 : f32 to vector<16x1xf32>
    %192 = arith.addf %190, %191 : vector<16x1xf32>
    %193 = math.rsqrt %192 : vector<16x1xf32>
    %194 = arith.mulf %193, %175 : vector<16x1xf32>
    %195 = vector.broadcast %194 : vector<16x1xf32> to vector<16x512xf32>
    %196 = arith.mulf %184, %195 : vector<16x512xf32>
    %197 = vector.broadcast %176 : vector<16x1xf32> to vector<16x512xf32>
    %198 = arith.addf %196, %197 : vector<16x512xf32>
    %cst_176 = arith.constant 0.000000e+00 : f32
    %199 = vector.broadcast %cst_176 : f32 to vector<16x512xf32>
    %200 = arith.maximumf %198, %199 : vector<16x512xf32>
    %201 = vector.extract_strided_slice %200 {offsets = [0, 0], sizes = [16, 256], strides = [1, 1]} : vector<16x512xf32> to vector<16x256xf32>
    %c0_177 = arith.constant 0 : index
    %c34_178 = arith.constant 34 : index
    %202 = vector.load %arg7[%c0_177, %c34_178] : memref<16x648xf32, #tpu.memory_space<vmem>>, vector<16x256xf32>
    tpu.vector_store %arg7[%c0_177, %c34_178], %201 {strides = array<i32>} : memref<16x648xf32, #tpu.memory_space<vmem>>, vector<16x256xf32>,
    %203 = vector.extract_strided_slice %200 {offsets = [0, 256], sizes = [16, 256], strides = [1, 1]} : vector<16x512xf32> to vector<16x256xf32>
    %c0_179 = arith.constant 0 : index
    %c358_180 = arith.constant 358 : index
    %204 = vector.load %arg7[%c0_179, %c358_180] : memref<16x648xf32, #tpu.memory_space<vmem>>, vector<16x256xf32>
    tpu.vector_store %arg7[%c0_179, %c358_180], %203 {strides = array<i32>} : memref<16x648xf32, #tpu.memory_space<vmem>>, vector<16x256xf32>,
    %c0_181 = arith.constant 0 : index
    %c0_182 = arith.constant 0 : index
    %205 = vector.load %arg7[%c0_181, %c0_182] : memref<16x648xf32, #tpu.memory_space<vmem>>, vector<16x256xf32>
    %206 = arith.mulf %205, %8 : vector<16x256xf32>
    %c0_183 = arith.constant 0 : index
    %c0_184 = arith.constant 0 : index
    %207 = vector.load %arg8[%c0_183, %c0_184] : memref<400x512xf32, #tpu.memory_space<vmem>>, vector<16x256xf32>
    tpu.vector_store %arg8[%c0_183, %c0_184], %206 {strides = array<i32>} : memref<400x512xf32, #tpu.memory_space<vmem>>, vector<16x256xf32>,
    %c0_185 = arith.constant 0 : index
    %c324_186 = arith.constant 324 : index
    %208 = vector.load %arg7[%c0_185, %c324_186] : memref<16x648xf32, #tpu.memory_space<vmem>>, vector<16x256xf32>
    %209 = arith.mulf %208, %8 : vector<16x256xf32>
    %c0_187 = arith.constant 0 : index
    %c256_188 = arith.constant 256 : index
    %210 = vector.load %arg8[%c0_187, %c256_188] : memref<400x512xf32, #tpu.memory_space<vmem>>, vector<16x256xf32>
    tpu.vector_store %arg8[%c0_187, %c256_188], %209 {strides = array<i32>} : memref<400x512xf32, #tpu.memory_space<vmem>>, vector<16x256xf32>,
    %c0_189 = arith.constant 0 : index
    %c1_190 = arith.constant 1 : index
    %211 = vector.load %arg7[%c0_189, %c1_190] : memref<16x648xf32, #tpu.memory_space<vmem>>, vector<16x256xf32>
    %212 = arith.mulf %211, %11 : vector<16x256xf32>
    %c16_191 = arith.constant 16 : index
    %c0_192 = arith.constant 0 : index
    %213 = vector.load %arg8[%c16_191, %c0_192] : memref<400x512xf32, #tpu.memory_space<vmem>>, vector<16x256xf32>
    tpu.vector_store %arg8[%c16_191, %c0_192], %212 {strides = array<i32>} : memref<400x512xf32, #tpu.memory_space<vmem>>, vector<16x256xf32>,
    %c0_193 = arith.constant 0 : index
    %c325_194 = arith.constant 325 : index
    %214 = vector.load %arg7[%c0_193, %c325_194] : memref<16x648xf32, #tpu.memory_space<vmem>>, vector<16x256xf32>
    %215 = arith.mulf %214, %11 : vector<16x256xf32>
    %c16_195 = arith.constant 16 : index
    %c256_196 = arith.constant 256 : index
    %216 = vector.load %arg8[%c16_195, %c256_196] : memref<400x512xf32, #tpu.memory_space<vmem>>, vector<16x256xf32>
    tpu.vector_store %arg8[%c16_195, %c256_196], %215 {strides = array<i32>} : memref<400x512xf32, #tpu.memory_space<vmem>>, vector<16x256xf32>,
    %c0_197 = arith.constant 0 : index
    %c2_198 = arith.constant 2 : index
    %217 = vector.load %arg7[%c0_197, %c2_198] : memref<16x648xf32, #tpu.memory_space<vmem>>, vector<16x256xf32>
    %c32_199 = arith.constant 32 : index
    %c0_200 = arith.constant 0 : index
    %218 = vector.load %arg8[%c32_199, %c0_200] : memref<400x512xf32, #tpu.memory_space<vmem>>, vector<16x256xf32>
    tpu.vector_store %arg8[%c32_199, %c0_200], %217 {strides = array<i32>} : memref<400x512xf32, #tpu.memory_space<vmem>>, vector<16x256xf32>,
    %c0_201 = arith.constant 0 : index
    %c326_202 = arith.constant 326 : index
    %219 = vector.load %arg7[%c0_201, %c326_202] : memref<16x648xf32, #tpu.memory_space<vmem>>, vector<16x256xf32>
    %c32_203 = arith.constant 32 : index
    %c256_204 = arith.constant 256 : index
    %220 = vector.load %arg8[%c32_203, %c256_204] : memref<400x512xf32, #tpu.memory_space<vmem>>, vector<16x256xf32>
    tpu.vector_store %arg8[%c32_203, %c256_204], %219 {strides = array<i32>} : memref<400x512xf32, #tpu.memory_space<vmem>>, vector<16x256xf32>,
    %c0_205 = arith.constant 0 : index
    %c3_206 = arith.constant 3 : index
    %221 = vector.load %arg7[%c0_205, %c3_206] : memref<16x648xf32, #tpu.memory_space<vmem>>, vector<16x256xf32>
    %222 = arith.mulf %221, %14 : vector<16x256xf32>
    %c48_207 = arith.constant 48 : index
    %c0_208 = arith.constant 0 : index
    %223 = vector.load %arg8[%c48_207, %c0_208] : memref<400x512xf32, #tpu.memory_space<vmem>>, vector<16x256xf32>
    tpu.vector_store %arg8[%c48_207, %c0_208], %222 {strides = array<i32>} : memref<400x512xf32, #tpu.memory_space<vmem>>, vector<16x256xf32>,
    %c0_209 = arith.constant 0 : index
    %c327_210 = arith.constant 327 : index
    %224 = vector.load %arg7[%c0_209, %c327_210] : memref<16x648xf32, #tpu.memory_space<vmem>>, vector<16x256xf32>
    %225 = arith.mulf %224, %14 : vector<16x256xf32>
    %c48_211 = arith.constant 48 : index
    %c256_212 = arith.constant 256 : index
    %226 = vector.load %arg8[%c48_211, %c256_212] : memref<400x512xf32, #tpu.memory_space<vmem>>, vector<16x256xf32>
    tpu.vector_store %arg8[%c48_211, %c256_212], %225 {strides = array<i32>} : memref<400x512xf32, #tpu.memory_space<vmem>>, vector<16x256xf32>,
    %c0_213 = arith.constant 0 : index
    %c4_214 = arith.constant 4 : index
    %227 = vector.load %arg7[%c0_213, %c4_214] : memref<16x648xf32, #tpu.memory_space<vmem>>, vector<16x256xf32>
    %228 = arith.mulf %227, %17 : vector<16x256xf32>
    %c64_215 = arith.constant 64 : index
    %c0_216 = arith.constant 0 : index
    %229 = vector.load %arg8[%c64_215, %c0_216] : memref<400x512xf32, #tpu.memory_space<vmem>>, vector<16x256xf32>
    tpu.vector_store %arg8[%c64_215, %c0_216], %228 {strides = array<i32>} : memref<400x512xf32, #tpu.memory_space<vmem>>, vector<16x256xf32>,
    %c0_217 = arith.constant 0 : index
    %c328_218 = arith.constant 328 : index
    %230 = vector.load %arg7[%c0_217, %c328_218] : memref<16x648xf32, #tpu.memory_space<vmem>>, vector<16x256xf32>
    %231 = arith.mulf %230, %17 : vector<16x256xf32>
    %c64_219 = arith.constant 64 : index
    %c256_220 = arith.constant 256 : index
    %232 = vector.load %arg8[%c64_219, %c256_220] : memref<400x512xf32, #tpu.memory_space<vmem>>, vector<16x256xf32>
    tpu.vector_store %arg8[%c64_219, %c256_220], %231 {strides = array<i32>} : memref<400x512xf32, #tpu.memory_space<vmem>>, vector<16x256xf32>,
    %c0_221 = arith.constant 0 : index
    %c16_222 = arith.constant 16 : index
    %233 = vector.load %arg7[%c0_221, %c16_222] : memref<16x648xf32, #tpu.memory_space<vmem>>, vector<16x256xf32>
    %234 = arith.mulf %233, %8 : vector<16x256xf32>
    %c80_223 = arith.constant 80 : index
    %c0_224 = arith.constant 0 : index
    %235 = vector.load %arg8[%c80_223, %c0_224] : memref<400x512xf32, #tpu.memory_space<vmem>>, vector<16x256xf32>
    tpu.vector_store %arg8[%c80_223, %c0_224], %234 {strides = array<i32>} : memref<400x512xf32, #tpu.memory_space<vmem>>, vector<16x256xf32>,
    %c0_225 = arith.constant 0 : index
    %c340_226 = arith.constant 340 : index
    %236 = vector.load %arg7[%c0_225, %c340_226] : memref<16x648xf32, #tpu.memory_space<vmem>>, vector<16x256xf32>
    %237 = arith.mulf %236, %8 : vector<16x256xf32>
    %c80_227 = arith.constant 80 : index
    %c256_228 = arith.constant 256 : index
    %238 = vector.load %arg8[%c80_227, %c256_228] : memref<400x512xf32, #tpu.memory_space<vmem>>, vector<16x256xf32>
    tpu.vector_store %arg8[%c80_227, %c256_228], %237 {strides = array<i32>} : memref<400x512xf32, #tpu.memory_space<vmem>>, vector<16x256xf32>,
    %c0_229 = arith.constant 0 : index
    %c17_230 = arith.constant 17 : index
    %239 = vector.load %arg7[%c0_229, %c17_230] : memref<16x648xf32, #tpu.memory_space<vmem>>, vector<16x256xf32>
    %240 = arith.mulf %239, %11 : vector<16x256xf32>
    %c96_231 = arith.constant 96 : index
    %c0_232 = arith.constant 0 : index
    %241 = vector.load %arg8[%c96_231, %c0_232] : memref<400x512xf32, #tpu.memory_space<vmem>>, vector<16x256xf32>
    tpu.vector_store %arg8[%c96_231, %c0_232], %240 {strides = array<i32>} : memref<400x512xf32, #tpu.memory_space<vmem>>, vector<16x256xf32>,
    %c0_233 = arith.constant 0 : index
    %c341_234 = arith.constant 341 : index
    %242 = vector.load %arg7[%c0_233, %c341_234] : memref<16x648xf32, #tpu.memory_space<vmem>>, vector<16x256xf32>
    %243 = arith.mulf %242, %11 : vector<16x256xf32>
    %c96_235 = arith.constant 96 : index
    %c256_236 = arith.constant 256 : index
    %244 = vector.load %arg8[%c96_235, %c256_236] : memref<400x512xf32, #tpu.memory_space<vmem>>, vector<16x256xf32>
    tpu.vector_store %arg8[%c96_235, %c256_236], %243 {strides = array<i32>} : memref<400x512xf32, #tpu.memory_space<vmem>>, vector<16x256xf32>,
    %c0_237 = arith.constant 0 : index
    %c18_238 = arith.constant 18 : index
    %245 = vector.load %arg7[%c0_237, %c18_238] : memref<16x648xf32, #tpu.memory_space<vmem>>, vector<16x256xf32>
    %c112_239 = arith.constant 112 : index
    %c0_240 = arith.constant 0 : index
    %246 = vector.load %arg8[%c112_239, %c0_240] : memref<400x512xf32, #tpu.memory_space<vmem>>, vector<16x256xf32>
    tpu.vector_store %arg8[%c112_239, %c0_240], %245 {strides = array<i32>} : memref<400x512xf32, #tpu.memory_space<vmem>>, vector<16x256xf32>,
    %c0_241 = arith.constant 0 : index
    %c342_242 = arith.constant 342 : index
    %247 = vector.load %arg7[%c0_241, %c342_242] : memref<16x648xf32, #tpu.memory_space<vmem>>, vector<16x256xf32>
    %c112_243 = arith.constant 112 : index
    %c256_244 = arith.constant 256 : index
    %248 = vector.load %arg8[%c112_243, %c256_244] : memref<400x512xf32, #tpu.memory_space<vmem>>, vector<16x256xf32>
    tpu.vector_store %arg8[%c112_243, %c256_244], %247 {strides = array<i32>} : memref<400x512xf32, #tpu.memory_space<vmem>>, vector<16x256xf32>,
    %c0_245 = arith.constant 0 : index
    %c19_246 = arith.constant 19 : index
    %249 = vector.load %arg7[%c0_245, %c19_246] : memref<16x648xf32, #tpu.memory_space<vmem>>, vector<16x256xf32>
    %250 = arith.mulf %249, %14 : vector<16x256xf32>
    %c128_247 = arith.constant 128 : index
    %c0_248 = arith.constant 0 : index
    %251 = vector.load %arg8[%c128_247, %c0_248] : memref<400x512xf32, #tpu.memory_space<vmem>>, vector<16x256xf32>
    tpu.vector_store %arg8[%c128_247, %c0_248], %250 {strides = array<i32>} : memref<400x512xf32, #tpu.memory_space<vmem>>, vector<16x256xf32>,
    %c0_249 = arith.constant 0 : index
    %c343_250 = arith.constant 343 : index
    %252 = vector.load %arg7[%c0_249, %c343_250] : memref<16x648xf32, #tpu.memory_space<vmem>>, vector<16x256xf32>
    %253 = arith.mulf %252, %14 : vector<16x256xf32>
    %c128_251 = arith.constant 128 : index
    %c256_252 = arith.constant 256 : index
    %254 = vector.load %arg8[%c128_251, %c256_252] : memref<400x512xf32, #tpu.memory_space<vmem>>, vector<16x256xf32>
    tpu.vector_store %arg8[%c128_251, %c256_252], %253 {strides = array<i32>} : memref<400x512xf32, #tpu.memory_space<vmem>>, vector<16x256xf32>,
    %c0_253 = arith.constant 0 : index
    %c20_254 = arith.constant 20 : index
    %255 = vector.load %arg7[%c0_253, %c20_254] : memref<16x648xf32, #tpu.memory_space<vmem>>, vector<16x256xf32>
    %256 = arith.mulf %255, %17 : vector<16x256xf32>
    %c144_255 = arith.constant 144 : index
    %c0_256 = arith.constant 0 : index
    %257 = vector.load %arg8[%c144_255, %c0_256] : memref<400x512xf32, #tpu.memory_space<vmem>>, vector<16x256xf32>
    tpu.vector_store %arg8[%c144_255, %c0_256], %256 {strides = array<i32>} : memref<400x512xf32, #tpu.memory_space<vmem>>, vector<16x256xf32>,
    %c0_257 = arith.constant 0 : index
    %c344_258 = arith.constant 344 : index
    %258 = vector.load %arg7[%c0_257, %c344_258] : memref<16x648xf32, #tpu.memory_space<vmem>>, vector<16x256xf32>
    %259 = arith.mulf %258, %17 : vector<16x256xf32>
    %c144_259 = arith.constant 144 : index
    %c256_260 = arith.constant 256 : index
    %260 = vector.load %arg8[%c144_259, %c256_260] : memref<400x512xf32, #tpu.memory_space<vmem>>, vector<16x256xf32>
    tpu.vector_store %arg8[%c144_259, %c256_260], %259 {strides = array<i32>} : memref<400x512xf32, #tpu.memory_space<vmem>>, vector<16x256xf32>,
    %c0_261 = arith.constant 0 : index
    %c32_262 = arith.constant 32 : index
    %261 = vector.load %arg7[%c0_261, %c32_262] : memref<16x648xf32, #tpu.memory_space<vmem>>, vector<16x256xf32>
    %262 = arith.mulf %261, %8 : vector<16x256xf32>
    %c160_263 = arith.constant 160 : index
    %c0_264 = arith.constant 0 : index
    %263 = vector.load %arg8[%c160_263, %c0_264] : memref<400x512xf32, #tpu.memory_space<vmem>>, vector<16x256xf32>
    tpu.vector_store %arg8[%c160_263, %c0_264], %262 {strides = array<i32>} : memref<400x512xf32, #tpu.memory_space<vmem>>, vector<16x256xf32>,
    %c0_265 = arith.constant 0 : index
    %c356_266 = arith.constant 356 : index
    %264 = vector.load %arg7[%c0_265, %c356_266] : memref<16x648xf32, #tpu.memory_space<vmem>>, vector<16x256xf32>
    %265 = arith.mulf %264, %8 : vector<16x256xf32>
    %c160_267 = arith.constant 160 : index
    %c256_268 = arith.constant 256 : index
    %266 = vector.load %arg8[%c160_267, %c256_268] : memref<400x512xf32, #tpu.memory_space<vmem>>, vector<16x256xf32>
    tpu.vector_store %arg8[%c160_267, %c256_268], %265 {strides = array<i32>} : memref<400x512xf32, #tpu.memory_space<vmem>>, vector<16x256xf32>,
    %c0_269 = arith.constant 0 : index
    %c33_270 = arith.constant 33 : index
    %267 = vector.load %arg7[%c0_269, %c33_270] : memref<16x648xf32, #tpu.memory_space<vmem>>, vector<16x256xf32>
    %268 = arith.mulf %267, %11 : vector<16x256xf32>
    %c176_271 = arith.constant 176 : index
    %c0_272 = arith.constant 0 : index
    %269 = vector.load %arg8[%c176_271, %c0_272] : memref<400x512xf32, #tpu.memory_space<vmem>>, vector<16x256xf32>
    tpu.vector_store %arg8[%c176_271, %c0_272], %268 {strides = array<i32>} : memref<400x512xf32, #tpu.memory_space<vmem>>, vector<16x256xf32>,
    %c0_273 = arith.constant 0 : index
    %c357_274 = arith.constant 357 : index
    %270 = vector.load %arg7[%c0_273, %c357_274] : memref<16x648xf32, #tpu.memory_space<vmem>>, vector<16x256xf32>
    %271 = arith.mulf %270, %11 : vector<16x256xf32>
    %c176_275 = arith.constant 176 : index
    %c256_276 = arith.constant 256 : index
    %272 = vector.load %arg8[%c176_275, %c256_276] : memref<400x512xf32, #tpu.memory_space<vmem>>, vector<16x256xf32>
    tpu.vector_store %arg8[%c176_275, %c256_276], %271 {strides = array<i32>} : memref<400x512xf32, #tpu.memory_space<vmem>>, vector<16x256xf32>,
    %c0_277 = arith.constant 0 : index
    %c34_278 = arith.constant 34 : index
    %273 = vector.load %arg7[%c0_277, %c34_278] : memref<16x648xf32, #tpu.memory_space<vmem>>, vector<16x256xf32>
    %c192_279 = arith.constant 192 : index
    %c0_280 = arith.constant 0 : index
    %274 = vector.load %arg8[%c192_279, %c0_280] : memref<400x512xf32, #tpu.memory_space<vmem>>, vector<16x256xf32>
    tpu.vector_store %arg8[%c192_279, %c0_280], %273 {strides = array<i32>} : memref<400x512xf32, #tpu.memory_space<vmem>>, vector<16x256xf32>,
    %c0_281 = arith.constant 0 : index
    %c358_282 = arith.constant 358 : index
    %275 = vector.load %arg7[%c0_281, %c358_282] : memref<16x648xf32, #tpu.memory_space<vmem>>, vector<16x256xf32>
    %c192_283 = arith.constant 192 : index
    %c256_284 = arith.constant 256 : index
    %276 = vector.load %arg8[%c192_283, %c256_284] : memref<400x512xf32, #tpu.memory_space<vmem>>, vector<16x256xf32>
    tpu.vector_store %arg8[%c192_283, %c256_284], %275 {strides = array<i32>} : memref<400x512xf32, #tpu.memory_space<vmem>>, vector<16x256xf32>,
    %c0_285 = arith.constant 0 : index
    %c35_286 = arith.constant 35 : index
    %277 = vector.load %arg7[%c0_285, %c35_286] : memref<16x648xf32, #tpu.memory_space<vmem>>, vector<16x256xf32>
    %278 = arith.mulf %277, %14 : vector<16x256xf32>
    %c208_287 = arith.constant 208 : index
    %c0_288 = arith.constant 0 : index
    %279 = vector.load %arg8[%c208_287, %c0_288] : memref<400x512xf32, #tpu.memory_space<vmem>>, vector<16x256xf32>
    tpu.vector_store %arg8[%c208_287, %c0_288], %278 {strides = array<i32>} : memref<400x512xf32, #tpu.memory_space<vmem>>, vector<16x256xf32>,
    %c0_289 = arith.constant 0 : index
    %c359_290 = arith.constant 359 : index
    %280 = vector.load %arg7[%c0_289, %c359_290] : memref<16x648xf32, #tpu.memory_space<vmem>>, vector<16x256xf32>
    %281 = arith.mulf %280, %14 : vector<16x256xf32>
    %c208_291 = arith.constant 208 : index
    %c256_292 = arith.constant 256 : index
    %282 = vector.load %arg8[%c208_291, %c256_292] : memref<400x512xf32, #tpu.memory_space<vmem>>, vector<16x256xf32>
    tpu.vector_store %arg8[%c208_291, %c256_292], %281 {strides = array<i32>} : memref<400x512xf32, #tpu.memory_space<vmem>>, vector<16x256xf32>,
    %c0_293 = arith.constant 0 : index
    %c36_294 = arith.constant 36 : index
    %283 = vector.load %arg7[%c0_293, %c36_294] : memref<16x648xf32, #tpu.memory_space<vmem>>, vector<16x256xf32>
    %284 = arith.mulf %283, %17 : vector<16x256xf32>
    %c224_295 = arith.constant 224 : index
    %c0_296 = arith.constant 0 : index
    %285 = vector.load %arg8[%c224_295, %c0_296] : memref<400x512xf32, #tpu.memory_space<vmem>>, vector<16x256xf32>
    tpu.vector_store %arg8[%c224_295, %c0_296], %284 {strides = array<i32>} : memref<400x512xf32, #tpu.memory_space<vmem>>, vector<16x256xf32>,
    %c0_297 = arith.constant 0 : index
    %c360_298 = arith.constant 360 : index
    %286 = vector.load %arg7[%c0_297, %c360_298] : memref<16x648xf32, #tpu.memory_space<vmem>>, vector<16x256xf32>
    %287 = arith.mulf %286, %17 : vector<16x256xf32>
    %c224_299 = arith.constant 224 : index
    %c256_300 = arith.constant 256 : index
    %288 = vector.load %arg8[%c224_299, %c256_300] : memref<400x512xf32, #tpu.memory_space<vmem>>, vector<16x256xf32>
    tpu.vector_store %arg8[%c224_299, %c256_300], %287 {strides = array<i32>} : memref<400x512xf32, #tpu.memory_space<vmem>>, vector<16x256xf32>,
    %c0_301 = arith.constant 0 : index
    %c48_302 = arith.constant 48 : index
    %289 = vector.load %arg7[%c0_301, %c48_302] : memref<16x648xf32, #tpu.memory_space<vmem>>, vector<16x256xf32>
    %290 = arith.mulf %289, %8 : vector<16x256xf32>
    %c240_303 = arith.constant 240 : index
    %c0_304 = arith.constant 0 : index
    %291 = vector.load %arg8[%c240_303, %c0_304] : memref<400x512xf32, #tpu.memory_space<vmem>>, vector<16x256xf32>
    tpu.vector_store %arg8[%c240_303, %c0_304], %290 {strides = array<i32>} : memref<400x512xf32, #tpu.memory_space<vmem>>, vector<16x256xf32>,
    %c0_305 = arith.constant 0 : index
    %c372_306 = arith.constant 372 : index
    %292 = vector.load %arg7[%c0_305, %c372_306] : memref<16x648xf32, #tpu.memory_space<vmem>>, vector<16x256xf32>
    %293 = arith.mulf %292, %8 : vector<16x256xf32>
    %c240_307 = arith.constant 240 : index
    %c256_308 = arith.constant 256 : index
    %294 = vector.load %arg8[%c240_307, %c256_308] : memref<400x512xf32, #tpu.memory_space<vmem>>, vector<16x256xf32>
    tpu.vector_store %arg8[%c240_307, %c256_308], %293 {strides = array<i32>} : memref<400x512xf32, #tpu.memory_space<vmem>>, vector<16x256xf32>,
    %c0_309 = arith.constant 0 : index
    %c49_310 = arith.constant 49 : index
    %295 = vector.load %arg7[%c0_309, %c49_310] : memref<16x648xf32, #tpu.memory_space<vmem>>, vector<16x256xf32>
    %296 = arith.mulf %295, %11 : vector<16x256xf32>
    %c256_311 = arith.constant 256 : index
    %c0_312 = arith.constant 0 : index
    %297 = vector.load %arg8[%c256_311, %c0_312] : memref<400x512xf32, #tpu.memory_space<vmem>>, vector<16x256xf32>
    tpu.vector_store %arg8[%c256_311, %c0_312], %296 {strides = array<i32>} : memref<400x512xf32, #tpu.memory_space<vmem>>, vector<16x256xf32>,
    %c0_313 = arith.constant 0 : index
    %c373_314 = arith.constant 373 : index
    %298 = vector.load %arg7[%c0_313, %c373_314] : memref<16x648xf32, #tpu.memory_space<vmem>>, vector<16x256xf32>
    %299 = arith.mulf %298, %11 : vector<16x256xf32>
    %c256_315 = arith.constant 256 : index
    %c256_316 = arith.constant 256 : index
    %300 = vector.load %arg8[%c256_315, %c256_316] : memref<400x512xf32, #tpu.memory_space<vmem>>, vector<16x256xf32>
    tpu.vector_store %arg8[%c256_315, %c256_316], %299 {strides = array<i32>} : memref<400x512xf32, #tpu.memory_space<vmem>>, vector<16x256xf32>,
    %c0_317 = arith.constant 0 : index
    %c50_318 = arith.constant 50 : index
    %301 = vector.load %arg7[%c0_317, %c50_318] : memref<16x648xf32, #tpu.memory_space<vmem>>, vector<16x256xf32>
    %c272_319 = arith.constant 272 : index
    %c0_320 = arith.constant 0 : index
    %302 = vector.load %arg8[%c272_319, %c0_320] : memref<400x512xf32, #tpu.memory_space<vmem>>, vector<16x256xf32>
    tpu.vector_store %arg8[%c272_319, %c0_320], %301 {strides = array<i32>} : memref<400x512xf32, #tpu.memory_space<vmem>>, vector<16x256xf32>,
    %c0_321 = arith.constant 0 : index
    %c374_322 = arith.constant 374 : index
    %303 = vector.load %arg7[%c0_321, %c374_322] : memref<16x648xf32, #tpu.memory_space<vmem>>, vector<16x256xf32>
    %c272_323 = arith.constant 272 : index
    %c256_324 = arith.constant 256 : index
    %304 = vector.load %arg8[%c272_323, %c256_324] : memref<400x512xf32, #tpu.memory_space<vmem>>, vector<16x256xf32>
    tpu.vector_store %arg8[%c272_323, %c256_324], %303 {strides = array<i32>} : memref<400x512xf32, #tpu.memory_space<vmem>>, vector<16x256xf32>,
    %c0_325 = arith.constant 0 : index
    %c51_326 = arith.constant 51 : index
    %305 = vector.load %arg7[%c0_325, %c51_326] : memref<16x648xf32, #tpu.memory_space<vmem>>, vector<16x256xf32>
    %306 = arith.mulf %305, %14 : vector<16x256xf32>
    %c288_327 = arith.constant 288 : index
    %c0_328 = arith.constant 0 : index
    %307 = vector.load %arg8[%c288_327, %c0_328] : memref<400x512xf32, #tpu.memory_space<vmem>>, vector<16x256xf32>
    tpu.vector_store %arg8[%c288_327, %c0_328], %306 {strides = array<i32>} : memref<400x512xf32, #tpu.memory_space<vmem>>, vector<16x256xf32>,
    %c0_329 = arith.constant 0 : index
    %c375_330 = arith.constant 375 : index
    %308 = vector.load %arg7[%c0_329, %c375_330] : memref<16x648xf32, #tpu.memory_space<vmem>>, vector<16x256xf32>
    %309 = arith.mulf %308, %14 : vector<16x256xf32>
    %c288_331 = arith.constant 288 : index
    %c256_332 = arith.constant 256 : index
    %310 = vector.load %arg8[%c288_331, %c256_332] : memref<400x512xf32, #tpu.memory_space<vmem>>, vector<16x256xf32>
    tpu.vector_store %arg8[%c288_331, %c256_332], %309 {strides = array<i32>} : memref<400x512xf32, #tpu.memory_space<vmem>>, vector<16x256xf32>,
    %c0_333 = arith.constant 0 : index
    %c52_334 = arith.constant 52 : index
    %311 = vector.load %arg7[%c0_333, %c52_334] : memref<16x648xf32, #tpu.memory_space<vmem>>, vector<16x256xf32>
    %312 = arith.mulf %311, %17 : vector<16x256xf32>
    %c304_335 = arith.constant 304 : index
    %c0_336 = arith.constant 0 : index
    %313 = vector.load %arg8[%c304_335, %c0_336] : memref<400x512xf32, #tpu.memory_space<vmem>>, vector<16x256xf32>
    tpu.vector_store %arg8[%c304_335, %c0_336], %312 {strides = array<i32>} : memref<400x512xf32, #tpu.memory_space<vmem>>, vector<16x256xf32>,
    %c0_337 = arith.constant 0 : index
    %c376_338 = arith.constant 376 : index
    %314 = vector.load %arg7[%c0_337, %c376_338] : memref<16x648xf32, #tpu.memory_space<vmem>>, vector<16x256xf32>
    %315 = arith.mulf %314, %17 : vector<16x256xf32>
    %c304_339 = arith.constant 304 : index
    %c256_340 = arith.constant 256 : index
    %316 = vector.load %arg8[%c304_339, %c256_340] : memref<400x512xf32, #tpu.memory_space<vmem>>, vector<16x256xf32>
    tpu.vector_store %arg8[%c304_339, %c256_340], %315 {strides = array<i32>} : memref<400x512xf32, #tpu.memory_space<vmem>>, vector<16x256xf32>,
    %c0_341 = arith.constant 0 : index
    %c64_342 = arith.constant 64 : index
    %317 = vector.load %arg7[%c0_341, %c64_342] : memref<16x648xf32, #tpu.memory_space<vmem>>, vector<16x256xf32>
    %318 = arith.mulf %317, %8 : vector<16x256xf32>
    %c320_343 = arith.constant 320 : index
    %c0_344 = arith.constant 0 : index
    %319 = vector.load %arg8[%c320_343, %c0_344] : memref<400x512xf32, #tpu.memory_space<vmem>>, vector<16x256xf32>
    tpu.vector_store %arg8[%c320_343, %c0_344], %318 {strides = array<i32>} : memref<400x512xf32, #tpu.memory_space<vmem>>, vector<16x256xf32>,
    %c0_345 = arith.constant 0 : index
    %c388_346 = arith.constant 388 : index
    %320 = vector.load %arg7[%c0_345, %c388_346] : memref<16x648xf32, #tpu.memory_space<vmem>>, vector<16x256xf32>
    %321 = arith.mulf %320, %8 : vector<16x256xf32>
    %c320_347 = arith.constant 320 : index
    %c256_348 = arith.constant 256 : index
    %322 = vector.load %arg8[%c320_347, %c256_348] : memref<400x512xf32, #tpu.memory_space<vmem>>, vector<16x256xf32>
    tpu.vector_store %arg8[%c320_347, %c256_348], %321 {strides = array<i32>} : memref<400x512xf32, #tpu.memory_space<vmem>>, vector<16x256xf32>,
    %c0_349 = arith.constant 0 : index
    %c65_350 = arith.constant 65 : index
    %323 = vector.load %arg7[%c0_349, %c65_350] : memref<16x648xf32, #tpu.memory_space<vmem>>, vector<16x256xf32>
    %324 = arith.mulf %323, %11 : vector<16x256xf32>
    %c336_351 = arith.constant 336 : index
    %c0_352 = arith.constant 0 : index
    %325 = vector.load %arg8[%c336_351, %c0_352] : memref<400x512xf32, #tpu.memory_space<vmem>>, vector<16x256xf32>
    tpu.vector_store %arg8[%c336_351, %c0_352], %324 {strides = array<i32>} : memref<400x512xf32, #tpu.memory_space<vmem>>, vector<16x256xf32>,
    %c0_353 = arith.constant 0 : index
    %c389_354 = arith.constant 389 : index
    %326 = vector.load %arg7[%c0_353, %c389_354] : memref<16x648xf32, #tpu.memory_space<vmem>>, vector<16x256xf32>
    %327 = arith.mulf %326, %11 : vector<16x256xf32>
    %c336_355 = arith.constant 336 : index
    %c256_356 = arith.constant 256 : index
    %328 = vector.load %arg8[%c336_355, %c256_356] : memref<400x512xf32, #tpu.memory_space<vmem>>, vector<16x256xf32>
    tpu.vector_store %arg8[%c336_355, %c256_356], %327 {strides = array<i32>} : memref<400x512xf32, #tpu.memory_space<vmem>>, vector<16x256xf32>,
    %c0_357 = arith.constant 0 : index
    %c66_358 = arith.constant 66 : index
    %329 = vector.load %arg7[%c0_357, %c66_358] : memref<16x648xf32, #tpu.memory_space<vmem>>, vector<16x256xf32>
    %c352_359 = arith.constant 352 : index
    %c0_360 = arith.constant 0 : index
    %330 = vector.load %arg8[%c352_359, %c0_360] : memref<400x512xf32, #tpu.memory_space<vmem>>, vector<16x256xf32>
    tpu.vector_store %arg8[%c352_359, %c0_360], %329 {strides = array<i32>} : memref<400x512xf32, #tpu.memory_space<vmem>>, vector<16x256xf32>,
    %c0_361 = arith.constant 0 : index
    %c390_362 = arith.constant 390 : index
    %331 = vector.load %arg7[%c0_361, %c390_362] : memref<16x648xf32, #tpu.memory_space<vmem>>, vector<16x256xf32>
    %c352_363 = arith.constant 352 : index
    %c256_364 = arith.constant 256 : index
    %332 = vector.load %arg8[%c352_363, %c256_364] : memref<400x512xf32, #tpu.memory_space<vmem>>, vector<16x256xf32>
    tpu.vector_store %arg8[%c352_363, %c256_364], %331 {strides = array<i32>} : memref<400x512xf32, #tpu.memory_space<vmem>>, vector<16x256xf32>,
    %c0_365 = arith.constant 0 : index
    %c67_366 = arith.constant 67 : index
    %333 = vector.load %arg7[%c0_365, %c67_366] : memref<16x648xf32, #tpu.memory_space<vmem>>, vector<16x256xf32>
    %334 = arith.mulf %333, %14 : vector<16x256xf32>
    %c368_367 = arith.constant 368 : index
    %c0_368 = arith.constant 0 : index
    %335 = vector.load %arg8[%c368_367, %c0_368] : memref<400x512xf32, #tpu.memory_space<vmem>>, vector<16x256xf32>
    tpu.vector_store %arg8[%c368_367, %c0_368], %334 {strides = array<i32>} : memref<400x512xf32, #tpu.memory_space<vmem>>, vector<16x256xf32>,
    %c0_369 = arith.constant 0 : index
    %c391_370 = arith.constant 391 : index
    %336 = vector.load %arg7[%c0_369, %c391_370] : memref<16x648xf32, #tpu.memory_space<vmem>>, vector<16x256xf32>
    %337 = arith.mulf %336, %14 : vector<16x256xf32>
    %c368_371 = arith.constant 368 : index
    %c256_372 = arith.constant 256 : index
    %338 = vector.load %arg8[%c368_371, %c256_372] : memref<400x512xf32, #tpu.memory_space<vmem>>, vector<16x256xf32>
    tpu.vector_store %arg8[%c368_371, %c256_372], %337 {strides = array<i32>} : memref<400x512xf32, #tpu.memory_space<vmem>>, vector<16x256xf32>,
    %c0_373 = arith.constant 0 : index
    %c68_374 = arith.constant 68 : index
    %339 = vector.load %arg7[%c0_373, %c68_374] : memref<16x648xf32, #tpu.memory_space<vmem>>, vector<16x256xf32>
    %340 = arith.mulf %339, %17 : vector<16x256xf32>
    %c384_375 = arith.constant 384 : index
    %c0_376 = arith.constant 0 : index
    %341 = vector.load %arg8[%c384_375, %c0_376] : memref<400x512xf32, #tpu.memory_space<vmem>>, vector<16x256xf32>
    tpu.vector_store %arg8[%c384_375, %c0_376], %340 {strides = array<i32>} : memref<400x512xf32, #tpu.memory_space<vmem>>, vector<16x256xf32>,
    %c0_377 = arith.constant 0 : index
    %c392_378 = arith.constant 392 : index
    %342 = vector.load %arg7[%c0_377, %c392_378] : memref<16x648xf32, #tpu.memory_space<vmem>>, vector<16x256xf32>
    %343 = arith.mulf %342, %17 : vector<16x256xf32>
    %c384_379 = arith.constant 384 : index
    %c256_380 = arith.constant 256 : index
    %344 = vector.load %arg8[%c384_379, %c256_380] : memref<400x512xf32, #tpu.memory_space<vmem>>, vector<16x256xf32>
    tpu.vector_store %arg8[%c384_379, %c256_380], %343 {strides = array<i32>} : memref<400x512xf32, #tpu.memory_space<vmem>>, vector<16x256xf32>,
    %c16_381 = arith.constant 16 : index
    %c0_382 = arith.constant 0 : index
    %345 = vector.load %arg3[%c16_381, %c0_382] : memref<96x400xf32, #tpu.memory_space<vmem>>, vector<16x400xf32>
    %c0_383 = arith.constant 0 : index
    %c0_384 = arith.constant 0 : index
    %346 = vector.load %arg8[%c0_383, %c0_384] : memref<400x512xf32, #tpu.memory_space<vmem>>, vector<400x256xf32>
    %cst_385 = arith.constant dense<0.000000e+00> : vector<16x256xf32>
    %347 = tpu.matmul %345, %346, %cst_385 {dimension_numbers = #tpu.dot_dimension_numbers<[1], [0], [0], [1], [0, 0, 1, 1], [], []>} : vector<16x400xf32>, vector<400x256xf32>, vector<16x256xf32> -> vector<16x256xf32>
    %c32_386 = arith.constant 32 : index
    %c0_387 = arith.constant 0 : index
    %348 = vector.load %arg3[%c32_386, %c0_387] : memref<96x400xf32, #tpu.memory_space<vmem>>, vector<16x400xf32>
    %c0_388 = arith.constant 0 : index
    %c256_389 = arith.constant 256 : index
    %349 = vector.load %arg8[%c0_388, %c256_389] : memref<400x512xf32, #tpu.memory_space<vmem>>, vector<400x256xf32>
    %cst_390 = arith.constant dense<0.000000e+00> : vector<16x256xf32>
    %350 = tpu.matmul %348, %349, %cst_390 {dimension_numbers = #tpu.dot_dimension_numbers<[1], [0], [0], [1], [0, 0, 1, 1], [], []>} : vector<16x400xf32>, vector<400x256xf32>, vector<16x256xf32> -> vector<16x256xf32>
    %351 = arith.addf %347, %350 : vector<16x256xf32>
    %c0_391 = arith.constant 0 : index
    %c4_392 = arith.constant 4 : index
    %352 = vector.load %arg2[%c0_391, %c4_392] : memref<16x16xf32, #tpu.memory_space<vmem>>, vector<16x1xf32>
    %353 = vector.broadcast %352 : vector<16x1xf32> to vector<16x256xf32>
    %354 = arith.addf %351, %353 : vector<16x256xf32>
    %c0_393 = arith.constant 0 : index
    %c5 = arith.constant 5 : index
    %355 = vector.load %arg2[%c0_393, %c5] : memref<16x16xf32, #tpu.memory_space<vmem>>, vector<16x1xf32>
    %c0_394 = arith.constant 0 : index
    %c6 = arith.constant 6 : index
    %356 = vector.load %arg2[%c0_394, %c6] : memref<16x16xf32, #tpu.memory_space<vmem>>, vector<16x1xf32>
    %c16_395 = arith.constant 16 : index
    %c0_396 = arith.constant 0 : index
    %357 = vector.load %arg4[%c16_395, %c0_396] : memref<64x16xf32, #tpu.memory_space<vmem>>, vector<16x16xf32>
    %cst_397 = arith.constant dense<0.000000e+00> : vector<16xf32>
    %358 = vector.multi_reduction <add>, %354, %cst_397 [1] : vector<16x256xf32> to vector<16xf32>
    %359 = vector.shape_cast %358 : vector<16xf32> to vector<16x1xf32>
    %cst_398 = arith.constant dense<0.000000e+00> : vector<16x1xf32>
    %360 = tpu.matmul %357, %359, %cst_398 {dimension_numbers = #tpu.dot_dimension_numbers<[1], [0], [0], [1], [0, 0, 1, 1], [], []>} : vector<16x16xf32>, vector<16x1xf32>, vector<16x1xf32> -> vector<16x1xf32>
    %cst_399 = arith.constant 0.001953125 : f32
    %361 = vector.broadcast %cst_399 : f32 to vector<16x1xf32>
    %362 = arith.mulf %360, %361 : vector<16x1xf32>
    %363 = vector.broadcast %362 : vector<16x1xf32> to vector<16x256xf32>
    %364 = arith.subf %354, %363 : vector<16x256xf32>
    %365 = arith.mulf %364, %364 : vector<16x256xf32>
    %cst_400 = arith.constant dense<0.000000e+00> : vector<16xf32>
    %366 = vector.multi_reduction <add>, %365, %cst_400 [1] : vector<16x256xf32> to vector<16xf32>
    %367 = vector.shape_cast %366 : vector<16xf32> to vector<16x1xf32>
    %cst_401 = arith.constant dense<0.000000e+00> : vector<16x1xf32>
    %368 = tpu.matmul %357, %367, %cst_401 {dimension_numbers = #tpu.dot_dimension_numbers<[1], [0], [0], [1], [0, 0, 1, 1], [], []>} : vector<16x16xf32>, vector<16x1xf32>, vector<16x1xf32> -> vector<16x1xf32>
    %cst_402 = arith.constant 0.001953125 : f32
    %369 = vector.broadcast %cst_402 : f32 to vector<16x1xf32>
    %370 = arith.mulf %368, %369 : vector<16x1xf32>
    %cst_403 = arith.constant 9.99999974E-6 : f32
    %371 = vector.broadcast %cst_403 : f32 to vector<16x1xf32>
    %372 = arith.addf %370, %371 : vector<16x1xf32>
    %373 = math.rsqrt %372 : vector<16x1xf32>
    %374 = arith.mulf %373, %355 : vector<16x1xf32>
    %375 = vector.broadcast %374 : vector<16x1xf32> to vector<16x256xf32>
    %376 = arith.mulf %364, %375 : vector<16x256xf32>
    %377 = vector.broadcast %356 : vector<16x1xf32> to vector<16x256xf32>
    %378 = arith.addf %376, %377 : vector<16x256xf32>
    %cst_404 = arith.constant 0.000000e+00 : f32
    %379 = vector.broadcast %cst_404 : f32 to vector<16x256xf32>
    %380 = arith.maximumf %378, %379 : vector<16x256xf32>
    %381 = vector.extract_strided_slice %19 {offsets = [0, 0], sizes = [16, 256], strides = [1, 1]} : vector<16x512xf32> to vector<16x256xf32>
    %382 = vector.extract_strided_slice %19 {offsets = [0, 256], sizes = [16, 256], strides = [1, 1]} : vector<16x512xf32> to vector<16x256xf32>
    %383 = arith.addf %381, %382 : vector<16x256xf32>
    %c0_405 = arith.constant 0 : index
    %c34_406 = arith.constant 34 : index
    %384 = vector.load %arg7[%c0_405, %c34_406] : memref<16x648xf32, #tpu.memory_space<vmem>>, vector<16x256xf32>
    tpu.vector_store %arg7[%c0_405, %c34_406], %383 {strides = array<i32>} : memref<16x648xf32, #tpu.memory_space<vmem>>, vector<16x256xf32>,
    %c0_407 = arith.constant 0 : index
    %c0_408 = arith.constant 0 : index
    %385 = vector.load %arg7[%c0_407, %c0_408] : memref<16x648xf32, #tpu.memory_space<vmem>>, vector<16x256xf32>
    %386 = arith.mulf %385, %8 : vector<16x256xf32>
    %c0_409 = arith.constant 0 : index
    %c0_410 = arith.constant 0 : index
    %387 = vector.load %arg8[%c0_409, %c0_410] : memref<400x512xf32, #tpu.memory_space<vmem>>, vector<16x256xf32>
    tpu.vector_store %arg8[%c0_409, %c0_410], %386 {strides = array<i32>} : memref<400x512xf32, #tpu.memory_space<vmem>>, vector<16x256xf32>,
    %c0_411 = arith.constant 0 : index
    %c1_412 = arith.constant 1 : index
    %388 = vector.load %arg7[%c0_411, %c1_412] : memref<16x648xf32, #tpu.memory_space<vmem>>, vector<16x256xf32>
    %389 = arith.mulf %388, %11 : vector<16x256xf32>
    %c16_413 = arith.constant 16 : index
    %c0_414 = arith.constant 0 : index
    %390 = vector.load %arg8[%c16_413, %c0_414] : memref<400x512xf32, #tpu.memory_space<vmem>>, vector<16x256xf32>
    tpu.vector_store %arg8[%c16_413, %c0_414], %389 {strides = array<i32>} : memref<400x512xf32, #tpu.memory_space<vmem>>, vector<16x256xf32>,
    %c0_415 = arith.constant 0 : index
    %c2_416 = arith.constant 2 : index
    %391 = vector.load %arg7[%c0_415, %c2_416] : memref<16x648xf32, #tpu.memory_space<vmem>>, vector<16x256xf32>
    %c32_417 = arith.constant 32 : index
    %c0_418 = arith.constant 0 : index
    %392 = vector.load %arg8[%c32_417, %c0_418] : memref<400x512xf32, #tpu.memory_space<vmem>>, vector<16x256xf32>
    tpu.vector_store %arg8[%c32_417, %c0_418], %391 {strides = array<i32>} : memref<400x512xf32, #tpu.memory_space<vmem>>, vector<16x256xf32>,
    %c0_419 = arith.constant 0 : index
    %c3_420 = arith.constant 3 : index
    %393 = vector.load %arg7[%c0_419, %c3_420] : memref<16x648xf32, #tpu.memory_space<vmem>>, vector<16x256xf32>
    %394 = arith.mulf %393, %14 : vector<16x256xf32>
    %c48_421 = arith.constant 48 : index
    %c0_422 = arith.constant 0 : index
    %395 = vector.load %arg8[%c48_421, %c0_422] : memref<400x512xf32, #tpu.memory_space<vmem>>, vector<16x256xf32>
    tpu.vector_store %arg8[%c48_421, %c0_422], %394 {strides = array<i32>} : memref<400x512xf32, #tpu.memory_space<vmem>>, vector<16x256xf32>,
    %c0_423 = arith.constant 0 : index
    %c4_424 = arith.constant 4 : index
    %396 = vector.load %arg7[%c0_423, %c4_424] : memref<16x648xf32, #tpu.memory_space<vmem>>, vector<16x256xf32>
    %397 = arith.mulf %396, %17 : vector<16x256xf32>
    %c64_425 = arith.constant 64 : index
    %c0_426 = arith.constant 0 : index
    %398 = vector.load %arg8[%c64_425, %c0_426] : memref<400x512xf32, #tpu.memory_space<vmem>>, vector<16x256xf32>
    tpu.vector_store %arg8[%c64_425, %c0_426], %397 {strides = array<i32>} : memref<400x512xf32, #tpu.memory_space<vmem>>, vector<16x256xf32>,
    %c0_427 = arith.constant 0 : index
    %c16_428 = arith.constant 16 : index
    %399 = vector.load %arg7[%c0_427, %c16_428] : memref<16x648xf32, #tpu.memory_space<vmem>>, vector<16x256xf32>
    %400 = arith.mulf %399, %8 : vector<16x256xf32>
    %c80_429 = arith.constant 80 : index
    %c0_430 = arith.constant 0 : index
    %401 = vector.load %arg8[%c80_429, %c0_430] : memref<400x512xf32, #tpu.memory_space<vmem>>, vector<16x256xf32>
    tpu.vector_store %arg8[%c80_429, %c0_430], %400 {strides = array<i32>} : memref<400x512xf32, #tpu.memory_space<vmem>>, vector<16x256xf32>,
    %c0_431 = arith.constant 0 : index
    %c17_432 = arith.constant 17 : index
    %402 = vector.load %arg7[%c0_431, %c17_432] : memref<16x648xf32, #tpu.memory_space<vmem>>, vector<16x256xf32>
    %403 = arith.mulf %402, %11 : vector<16x256xf32>
    %c96_433 = arith.constant 96 : index
    %c0_434 = arith.constant 0 : index
    %404 = vector.load %arg8[%c96_433, %c0_434] : memref<400x512xf32, #tpu.memory_space<vmem>>, vector<16x256xf32>
    tpu.vector_store %arg8[%c96_433, %c0_434], %403 {strides = array<i32>} : memref<400x512xf32, #tpu.memory_space<vmem>>, vector<16x256xf32>,
    %c0_435 = arith.constant 0 : index
    %c18_436 = arith.constant 18 : index
    %405 = vector.load %arg7[%c0_435, %c18_436] : memref<16x648xf32, #tpu.memory_space<vmem>>, vector<16x256xf32>
    %c112_437 = arith.constant 112 : index
    %c0_438 = arith.constant 0 : index
    %406 = vector.load %arg8[%c112_437, %c0_438] : memref<400x512xf32, #tpu.memory_space<vmem>>, vector<16x256xf32>
    tpu.vector_store %arg8[%c112_437, %c0_438], %405 {strides = array<i32>} : memref<400x512xf32, #tpu.memory_space<vmem>>, vector<16x256xf32>,
    %c0_439 = arith.constant 0 : index
    %c19_440 = arith.constant 19 : index
    %407 = vector.load %arg7[%c0_439, %c19_440] : memref<16x648xf32, #tpu.memory_space<vmem>>, vector<16x256xf32>
    %408 = arith.mulf %407, %14 : vector<16x256xf32>
    %c128_441 = arith.constant 128 : index
    %c0_442 = arith.constant 0 : index
    %409 = vector.load %arg8[%c128_441, %c0_442] : memref<400x512xf32, #tpu.memory_space<vmem>>, vector<16x256xf32>
    tpu.vector_store %arg8[%c128_441, %c0_442], %408 {strides = array<i32>} : memref<400x512xf32, #tpu.memory_space<vmem>>, vector<16x256xf32>,
    %c0_443 = arith.constant 0 : index
    %c20_444 = arith.constant 20 : index
    %410 = vector.load %arg7[%c0_443, %c20_444] : memref<16x648xf32, #tpu.memory_space<vmem>>, vector<16x256xf32>
    %411 = arith.mulf %410, %17 : vector<16x256xf32>
    %c144_445 = arith.constant 144 : index
    %c0_446 = arith.constant 0 : index
    %412 = vector.load %arg8[%c144_445, %c0_446] : memref<400x512xf32, #tpu.memory_space<vmem>>, vector<16x256xf32>
    tpu.vector_store %arg8[%c144_445, %c0_446], %411 {strides = array<i32>} : memref<400x512xf32, #tpu.memory_space<vmem>>, vector<16x256xf32>,
    %c0_447 = arith.constant 0 : index
    %c32_448 = arith.constant 32 : index
    %413 = vector.load %arg7[%c0_447, %c32_448] : memref<16x648xf32, #tpu.memory_space<vmem>>, vector<16x256xf32>
    %414 = arith.mulf %413, %8 : vector<16x256xf32>
    %c160_449 = arith.constant 160 : index
    %c0_450 = arith.constant 0 : index
    %415 = vector.load %arg8[%c160_449, %c0_450] : memref<400x512xf32, #tpu.memory_space<vmem>>, vector<16x256xf32>
    tpu.vector_store %arg8[%c160_449, %c0_450], %414 {strides = array<i32>} : memref<400x512xf32, #tpu.memory_space<vmem>>, vector<16x256xf32>,
    %c0_451 = arith.constant 0 : index
    %c33_452 = arith.constant 33 : index
    %416 = vector.load %arg7[%c0_451, %c33_452] : memref<16x648xf32, #tpu.memory_space<vmem>>, vector<16x256xf32>
    %417 = arith.mulf %416, %11 : vector<16x256xf32>
    %c176_453 = arith.constant 176 : index
    %c0_454 = arith.constant 0 : index
    %418 = vector.load %arg8[%c176_453, %c0_454] : memref<400x512xf32, #tpu.memory_space<vmem>>, vector<16x256xf32>
    tpu.vector_store %arg8[%c176_453, %c0_454], %417 {strides = array<i32>} : memref<400x512xf32, #tpu.memory_space<vmem>>, vector<16x256xf32>,
    %c0_455 = arith.constant 0 : index
    %c34_456 = arith.constant 34 : index
    %419 = vector.load %arg7[%c0_455, %c34_456] : memref<16x648xf32, #tpu.memory_space<vmem>>, vector<16x256xf32>
    %c192_457 = arith.constant 192 : index
    %c0_458 = arith.constant 0 : index
    %420 = vector.load %arg8[%c192_457, %c0_458] : memref<400x512xf32, #tpu.memory_space<vmem>>, vector<16x256xf32>
    tpu.vector_store %arg8[%c192_457, %c0_458], %419 {strides = array<i32>} : memref<400x512xf32, #tpu.memory_space<vmem>>, vector<16x256xf32>,
    %c0_459 = arith.constant 0 : index
    %c35_460 = arith.constant 35 : index
    %421 = vector.load %arg7[%c0_459, %c35_460] : memref<16x648xf32, #tpu.memory_space<vmem>>, vector<16x256xf32>
    %422 = arith.mulf %421, %14 : vector<16x256xf32>
    %c208_461 = arith.constant 208 : index
    %c0_462 = arith.constant 0 : index
    %423 = vector.load %arg8[%c208_461, %c0_462] : memref<400x512xf32, #tpu.memory_space<vmem>>, vector<16x256xf32>
    tpu.vector_store %arg8[%c208_461, %c0_462], %422 {strides = array<i32>} : memref<400x512xf32, #tpu.memory_space<vmem>>, vector<16x256xf32>,
    %c0_463 = arith.constant 0 : index
    %c36_464 = arith.constant 36 : index
    %424 = vector.load %arg7[%c0_463, %c36_464] : memref<16x648xf32, #tpu.memory_space<vmem>>, vector<16x256xf32>
    %425 = arith.mulf %424, %17 : vector<16x256xf32>
    %c224_465 = arith.constant 224 : index
    %c0_466 = arith.constant 0 : index
    %426 = vector.load %arg8[%c224_465, %c0_466] : memref<400x512xf32, #tpu.memory_space<vmem>>, vector<16x256xf32>
    tpu.vector_store %arg8[%c224_465, %c0_466], %425 {strides = array<i32>} : memref<400x512xf32, #tpu.memory_space<vmem>>, vector<16x256xf32>,
    %c0_467 = arith.constant 0 : index
    %c48_468 = arith.constant 48 : index
    %427 = vector.load %arg7[%c0_467, %c48_468] : memref<16x648xf32, #tpu.memory_space<vmem>>, vector<16x256xf32>
    %428 = arith.mulf %427, %8 : vector<16x256xf32>
    %c240_469 = arith.constant 240 : index
    %c0_470 = arith.constant 0 : index
    %429 = vector.load %arg8[%c240_469, %c0_470] : memref<400x512xf32, #tpu.memory_space<vmem>>, vector<16x256xf32>
    tpu.vector_store %arg8[%c240_469, %c0_470], %428 {strides = array<i32>} : memref<400x512xf32, #tpu.memory_space<vmem>>, vector<16x256xf32>,
    %c0_471 = arith.constant 0 : index
    %c49_472 = arith.constant 49 : index
    %430 = vector.load %arg7[%c0_471, %c49_472] : memref<16x648xf32, #tpu.memory_space<vmem>>, vector<16x256xf32>
    %431 = arith.mulf %430, %11 : vector<16x256xf32>
    %c256_473 = arith.constant 256 : index
    %c0_474 = arith.constant 0 : index
    %432 = vector.load %arg8[%c256_473, %c0_474] : memref<400x512xf32, #tpu.memory_space<vmem>>, vector<16x256xf32>
    tpu.vector_store %arg8[%c256_473, %c0_474], %431 {strides = array<i32>} : memref<400x512xf32, #tpu.memory_space<vmem>>, vector<16x256xf32>,
    %c0_475 = arith.constant 0 : index
    %c50_476 = arith.constant 50 : index
    %433 = vector.load %arg7[%c0_475, %c50_476] : memref<16x648xf32, #tpu.memory_space<vmem>>, vector<16x256xf32>
    %c272_477 = arith.constant 272 : index
    %c0_478 = arith.constant 0 : index
    %434 = vector.load %arg8[%c272_477, %c0_478] : memref<400x512xf32, #tpu.memory_space<vmem>>, vector<16x256xf32>
    tpu.vector_store %arg8[%c272_477, %c0_478], %433 {strides = array<i32>} : memref<400x512xf32, #tpu.memory_space<vmem>>, vector<16x256xf32>,
    %c0_479 = arith.constant 0 : index
    %c51_480 = arith.constant 51 : index
    %435 = vector.load %arg7[%c0_479, %c51_480] : memref<16x648xf32, #tpu.memory_space<vmem>>, vector<16x256xf32>
    %436 = arith.mulf %435, %14 : vector<16x256xf32>
    %c288_481 = arith.constant 288 : index
    %c0_482 = arith.constant 0 : index
    %437 = vector.load %arg8[%c288_481, %c0_482] : memref<400x512xf32, #tpu.memory_space<vmem>>, vector<16x256xf32>
    tpu.vector_store %arg8[%c288_481, %c0_482], %436 {strides = array<i32>} : memref<400x512xf32, #tpu.memory_space<vmem>>, vector<16x256xf32>,
    %c0_483 = arith.constant 0 : index
    %c52_484 = arith.constant 52 : index
    %438 = vector.load %arg7[%c0_483, %c52_484] : memref<16x648xf32, #tpu.memory_space<vmem>>, vector<16x256xf32>
    %439 = arith.mulf %438, %17 : vector<16x256xf32>
    %c304_485 = arith.constant 304 : index
    %c0_486 = arith.constant 0 : index
    %440 = vector.load %arg8[%c304_485, %c0_486] : memref<400x512xf32, #tpu.memory_space<vmem>>, vector<16x256xf32>
    tpu.vector_store %arg8[%c304_485, %c0_486], %439 {strides = array<i32>} : memref<400x512xf32, #tpu.memory_space<vmem>>, vector<16x256xf32>,
    %c0_487 = arith.constant 0 : index
    %c64_488 = arith.constant 64 : index
    %441 = vector.load %arg7[%c0_487, %c64_488] : memref<16x648xf32, #tpu.memory_space<vmem>>, vector<16x256xf32>
    %442 = arith.mulf %441, %8 : vector<16x256xf32>
    %c320_489 = arith.constant 320 : index
    %c0_490 = arith.constant 0 : index
    %443 = vector.load %arg8[%c320_489, %c0_490] : memref<400x512xf32, #tpu.memory_space<vmem>>, vector<16x256xf32>
    tpu.vector_store %arg8[%c320_489, %c0_490], %442 {strides = array<i32>} : memref<400x512xf32, #tpu.memory_space<vmem>>, vector<16x256xf32>,
    %c0_491 = arith.constant 0 : index
    %c65_492 = arith.constant 65 : index
    %444 = vector.load %arg7[%c0_491, %c65_492] : memref<16x648xf32, #tpu.memory_space<vmem>>, vector<16x256xf32>
    %445 = arith.mulf %444, %11 : vector<16x256xf32>
    %c336_493 = arith.constant 336 : index
    %c0_494 = arith.constant 0 : index
    %446 = vector.load %arg8[%c336_493, %c0_494] : memref<400x512xf32, #tpu.memory_space<vmem>>, vector<16x256xf32>
    tpu.vector_store %arg8[%c336_493, %c0_494], %445 {strides = array<i32>} : memref<400x512xf32, #tpu.memory_space<vmem>>, vector<16x256xf32>,
    %c0_495 = arith.constant 0 : index
    %c66_496 = arith.constant 66 : index
    %447 = vector.load %arg7[%c0_495, %c66_496] : memref<16x648xf32, #tpu.memory_space<vmem>>, vector<16x256xf32>
    %c352_497 = arith.constant 352 : index
    %c0_498 = arith.constant 0 : index
    %448 = vector.load %arg8[%c352_497, %c0_498] : memref<400x512xf32, #tpu.memory_space<vmem>>, vector<16x256xf32>
    tpu.vector_store %arg8[%c352_497, %c0_498], %447 {strides = array<i32>} : memref<400x512xf32, #tpu.memory_space<vmem>>, vector<16x256xf32>,
    %c0_499 = arith.constant 0 : index
    %c67_500 = arith.constant 67 : index
    %449 = vector.load %arg7[%c0_499, %c67_500] : memref<16x648xf32, #tpu.memory_space<vmem>>, vector<16x256xf32>
    %450 = arith.mulf %449, %14 : vector<16x256xf32>
    %c368_501 = arith.constant 368 : index
    %c0_502 = arith.constant 0 : index
    %451 = vector.load %arg8[%c368_501, %c0_502] : memref<400x512xf32, #tpu.memory_space<vmem>>, vector<16x256xf32>
    tpu.vector_store %arg8[%c368_501, %c0_502], %450 {strides = array<i32>} : memref<400x512xf32, #tpu.memory_space<vmem>>, vector<16x256xf32>,
    %c0_503 = arith.constant 0 : index
    %c68_504 = arith.constant 68 : index
    %452 = vector.load %arg7[%c0_503, %c68_504] : memref<16x648xf32, #tpu.memory_space<vmem>>, vector<16x256xf32>
    %453 = arith.mulf %452, %17 : vector<16x256xf32>
    %c384_505 = arith.constant 384 : index
    %c0_506 = arith.constant 0 : index
    %454 = vector.load %arg8[%c384_505, %c0_506] : memref<400x512xf32, #tpu.memory_space<vmem>>, vector<16x256xf32>
    tpu.vector_store %arg8[%c384_505, %c0_506], %453 {strides = array<i32>} : memref<400x512xf32, #tpu.memory_space<vmem>>, vector<16x256xf32>,
    %c48_507 = arith.constant 48 : index
    %c0_508 = arith.constant 0 : index
    %455 = vector.load %arg3[%c48_507, %c0_508] : memref<96x400xf32, #tpu.memory_space<vmem>>, vector<48x400xf32>
    %c0_509 = arith.constant 0 : index
    %c0_510 = arith.constant 0 : index
    %456 = vector.load %arg8[%c0_509, %c0_510] : memref<400x512xf32, #tpu.memory_space<vmem>>, vector<400x256xf32>
    %cst_511 = arith.constant dense<0.000000e+00> : vector<48x256xf32>
    %457 = tpu.matmul %455, %456, %cst_511 {dimension_numbers = #tpu.dot_dimension_numbers<[1], [0], [0], [1], [0, 0, 1, 1], [], []>} : vector<48x400xf32>, vector<400x256xf32>, vector<48x256xf32> -> vector<48x256xf32>
    %c32_512 = arith.constant 32 : index
    %c0_513 = arith.constant 0 : index
    %458 = vector.load %arg4[%c32_512, %c0_513] : memref<64x16xf32, #tpu.memory_space<vmem>>, vector<12x16xf32>
    %cst_514 = arith.constant dense<0.000000e+00> : vector<12x256xf32>
    %459 = tpu.matmul %458, %380, %cst_514 {dimension_numbers = #tpu.dot_dimension_numbers<[1], [0], [0], [1], [0, 0, 1, 1], [], []>} : vector<12x16xf32>, vector<16x256xf32>, vector<12x256xf32> -> vector<12x256xf32>
    %460 = vector.extract_strided_slice %457 {offsets = [0, 0], sizes = [12, 256], strides = [1, 1]} : vector<48x256xf32> to vector<12x256xf32>
    %461 = arith.addf %459, %460 : vector<12x256xf32>
    %462 = vector.extract_strided_slice %457 {offsets = [16, 0], sizes = [12, 256], strides = [1, 1]} : vector<48x256xf32> to vector<12x256xf32>
    %c8 = arith.constant 8 : index
    %c0_515 = arith.constant 0 : index
    %463 = vector.load %arg5[%c8, %c0_515] : memref<520x256xf32, #tpu.memory_space<vmem>>, vector<256x256xf32>
    %cst_516 = arith.constant dense<0.000000e+00> : vector<12x256xf32>
    %464 = tpu.matmul %462, %463, %cst_516 {dimension_numbers = #tpu.dot_dimension_numbers<[1], [0], [0], [1], [0, 0, 1, 1], [], []>} : vector<12x256xf32>, vector<256x256xf32>, vector<12x256xf32> -> vector<12x256xf32>
    %465 = arith.addf %461, %464 : vector<12x256xf32>
    %466 = vector.extract_strided_slice %457 {offsets = [32, 0], sizes = [12, 256], strides = [1, 1]} : vector<48x256xf32> to vector<12x256xf32>
    %c264 = arith.constant 264 : index
    %c0_517 = arith.constant 0 : index
    %467 = vector.load %arg5[%c264, %c0_517] : memref<520x256xf32, #tpu.memory_space<vmem>>, vector<256x256xf32>
    %cst_518 = arith.constant dense<0.000000e+00> : vector<12x256xf32>
    %468 = tpu.matmul %466, %467, %cst_518 {dimension_numbers = #tpu.dot_dimension_numbers<[1], [0], [0], [1], [0, 0, 1, 1], [], []>} : vector<12x256xf32>, vector<256x256xf32>, vector<12x256xf32> -> vector<12x256xf32>
    %469 = arith.addf %465, %468 : vector<12x256xf32>
    %c0_519 = arith.constant 0 : index
    %c7 = arith.constant 7 : index
    %470 = vector.load %arg2[%c0_519, %c7] : memref<16x16xf32, #tpu.memory_space<vmem>>, vector<12x1xf32>
    %471 = vector.broadcast %470 : vector<12x1xf32> to vector<12x256xf32>
    %472 = arith.addf %469, %471 : vector<12x256xf32>
    %c48_520 = arith.constant 48 : index
    %c0_521 = arith.constant 0 : index
    %473 = vector.load %arg4[%c48_520, %c0_521] : memref<64x16xf32, #tpu.memory_space<vmem>>, vector<12x12xf32>
    %cst_522 = arith.constant dense<0.000000e+00> : vector<12xf32>
    %474 = vector.multi_reduction <add>, %472, %cst_522 [1] : vector<12x256xf32> to vector<12xf32>
    %475 = vector.shape_cast %474 : vector<12xf32> to vector<12x1xf32>
    %cst_523 = arith.constant 2.560000e+02 : f32
    %476 = vector.broadcast %cst_523 : f32 to vector<12x1xf32>
    %477 = arith.divf %475, %476 : vector<12x1xf32>
    %cst_524 = arith.constant dense<0.000000e+00> : vector<12x1xf32>
    %478 = tpu.matmul %473, %477, %cst_524 {dimension_numbers = #tpu.dot_dimension_numbers<[1], [0], [0], [1], [0, 0, 1, 1], [], []>} : vector<12x12xf32>, vector<12x1xf32>, vector<12x1xf32> -> vector<12x1xf32>
    %c0_525 = arith.constant 0 : index
    %c8_526 = arith.constant 8 : index
    %479 = vector.load %arg2[%c0_525, %c8_526] : memref<16x16xf32, #tpu.memory_space<vmem>>, vector<12x1xf32>
    %480 = arith.addf %478, %479 : vector<12x1xf32>
    %481 = arith.negf %480 : vector<12x1xf32>
    %482 = math.exp %481 : vector<12x1xf32>
    %cst_527 = arith.constant 1.000000e+00 : f32
    %483 = vector.broadcast %cst_527 : f32 to vector<12x1xf32>
    %484 = arith.addf %483, %482 : vector<12x1xf32>
    %485 = arith.divf %483, %484 : vector<12x1xf32>
    %486 = vector.broadcast %485 : vector<12x1xf32> to vector<12x256xf32>
    %487 = arith.mulf %472, %486 : vector<12x256xf32>
    %488 = vector.extract_strided_slice %19 {offsets = [0, 256], sizes = [12, 256], strides = [1, 1]} : vector<16x512xf32> to vector<12x256xf32>
    %489 = arith.addf %487, %488 : vector<12x256xf32>
    %c0_528 = arith.constant 0 : index
    %c0_529 = arith.constant 0 : index
    %c0_530 = arith.constant 0 : index
    %490 = vector.load %arg6[%c0_528, %c0_529, %c0_530] : memref<1x12x256xf32, #tpu.memory_space<vmem>>, vector<1x12x256xf32>
    %491 = vector.shape_cast %490 : vector<1x12x256xf32> to vector<12x256xf32>
    %492 = vector.shape_cast %489 : vector<12x256xf32> to vector<1x12x256xf32>
    tpu.vector_store %arg6[%c0_528, %c0_529, %c0_530], %492 {strides = array<i32>} : memref<1x12x256xf32, #tpu.memory_space<vmem>>, vector<1x12x256xf32>,
    return
  }
  func.func @transform_0(%arg0: i32) -> (i32, i32, i32) {
    %c0_i32 = arith.constant 0 : i32
    %c0_i32_0 = arith.constant 0 : i32
    %c0_i32_1 = arith.constant 0 : i32
    return %arg0, %c0_i32, %c0_i32_0 : i32, i32, i32
  }
  func.func @transform_1(%arg0: i32) -> (i32, i32) {
    %c0_i32 = arith.constant 0 : i32
    %c0_i32_0 = arith.constant 0 : i32
    %c0_i32_1 = arith.constant 0 : i32
    return %c0_i32, %c0_i32_0 : i32, i32
  }
  func.func @transform_2(%arg0: i32) -> (i32, i32) {
    %c0_i32 = arith.constant 0 : i32
    %c0_i32_0 = arith.constant 0 : i32
    %c0_i32_1 = arith.constant 0 : i32
    return %c0_i32, %c0_i32_0 : i32, i32
  }
  func.func @transform_3(%arg0: i32) -> (i32, i32) {
    %c0_i32 = arith.constant 0 : i32
    %c0_i32_0 = arith.constant 0 : i32
    %c0_i32_1 = arith.constant 0 : i32
    return %c0_i32, %c0_i32_0 : i32, i32
  }
  func.func @transform_4(%arg0: i32) -> (i32, i32) {
    %c0_i32 = arith.constant 0 : i32
    %c0_i32_0 = arith.constant 0 : i32
    %c0_i32_1 = arith.constant 0 : i32
    return %c0_i32, %c0_i32_0 : i32, i32
  }
  func.func @transform_5(%arg0: i32) -> (i32, i32, i32) {
    %c0_i32 = arith.constant 0 : i32
    %c0_i32_0 = arith.constant 0 : i32
    %c0_i32_1 = arith.constant 0 : i32
    return %arg0, %c0_i32, %c0_i32_0 : i32, i32, i32
  }
}

</mosaic_0001>

<llo_original>
// kernel: tpu_custom_call.1
$region0: #{tpu_custom_call.1}
  #allocation0 [shape = 'u32[]', space=smem, size = 0x4, offset = 0x4, fixed_abs, tag = 'smem constant byte address 0x4 - core index']
  #allocation1 [shape = 'u32[144,128]{1,0:T(1,128)}', space=vmem, size = 0x12000, scoped, tag = 'internal scratch']
  #allocation2 [shape = 'f32[16,648]{1,0:T(8,128)}', space=vmem, size = 0xc000, scoped, tag = 'scratch operand']
  #allocation3 [shape = 'f32[400,512]{1,0:T(8,128)}', space=vmem, size = 0xc8000, scoped, tag = 'scratch operand']
  %s0 = inlined_call_operand.hbm [shape: f32[2,16,512], index: 0, kind: input, shape index: {}]
  %s1 = inlined_call_operand.vmem [shape: f32[16,16], index: 1, kind: input, shape index: {}]
  %s2 = inlined_call_operand.hbm [shape: f32[96,400], index: 2, kind: input, shape index: {}]
  %s3 = inlined_call_operand.vmem [shape: f32[64,16], index: 3, kind: input, shape index: {}]
  %s4 = inlined_call_operand.hbm [shape: f32[520,256], index: 4, kind: input, shape index: {}]
  %s5 = inlined_call_operand.vmem [shape: f32[2,12,256], index: 5, kind: output, shape index: {}]
  %s6 = sld [smem:[#allocation0]]
  $region65: #{tpu_custom_call.1} parent=0
    _
  %s8 = ssub.s32 1, %s6
  %s9 = scalar_select 0, %s8, %s6
  $region1: #{tpu_custom_call.1} parent=0
    #allocation4 [shape = 'u8[65536]{0}', space=vmem, size = 0x10000, scoped, tag = 'input window, operand 0']
    #allocation5 [shape = 's32[2]{0}', space=sflag, size = 0x8, scoped, tag = 'scoped memory for tpu_custom_call.1']
    #allocation6 [shape = 'u8[196608]{0}', space=vmem, size = 0x30000, scoped, tag = 'input window, operand 2, single buffered']
    #allocation7 [shape = 's32[1]{0}', space=sflag, size = 0x4, scoped, tag = 'scoped memory for tpu_custom_call.1']
    #allocation8 [shape = 'u8[532480]{0}', space=vmem, size = 0x82000, scoped, tag = 'input window, operand 4, single buffered']
    %10 = vsyncpa [#allocation5], 0
    %s11 = scalar_lea.sflag [#allocation5], 1
    %12 = vsyncpa %s11, 0
    %13 = vsyncpa [#allocation7], 0
    loop: start=0, step=1, limit=4
    $region2: #{tpu_custom_call.1} parent=1 // loop_pre_header
      _
    $region3: #{tpu_custom_call.1} parent=1 // loop_header
      %s15 = sphi 0, %s19
      %p16 = scmp.ge.s32.totalorder %s15, 4
      %s25 = sphi 0, %s27
      %s28 = sphi 0, %s25
      %s29 = sphi 0, %s28
      %s45 = sphi 0, %s29
      %s49 = sphi 0, %s49
      %s51 = sphi 0, %s49
      %s52 = sphi 0, %s51
      %s66 = sphi 0, %s52
      %s70 = sphi 0, %s70
      %s72 = sphi 0, %s70
      %s73 = sphi 0, %s72
      %s87 = sphi 0, %s73
      %s91 = sphi 0, %s91
      %s93 = sphi 0, %s91
      %s94 = sphi 0, %s93
      %s108 = sphi 0, %s94
      %s112 = sphi 0, %s112
      %s114 = sphi 0, %s112
      %s115 = sphi 0, %s114
      %s129 = sphi 0, %s115
      %s135 = sphi 0, %s137
      %s138 = sphi 0, %s135
      %s139 = sphi 0, %s138
      %s155 = sphi 0, %s139
    $region4: #{tpu_custom_call.1} parent=1 // loop_header_branch
      %18 = sbr.rel (%p16) target = $region8
    $region5: #{tpu_custom_call.1} parent=1 // loop_body
      %s20 = ssub.s32 %s15, 1
      %s21 = ssub.s32 %s15, 2
      %s22 = sadd.s32 %s15, 1
      %s23 = ssub.s32 %s15, %s22
      %p24 = scmp.eq.s32.totalorder %s23, 0
      %s26 = sadd.s32 %s25, 1
      %s27 = scalar_select %p24, %s25, %s26
      %p30 = pneg %p24
      %p31 = scmp.eq.s32.totalorder %s15, 1
      %p32 = por %p30, %p31
      %p33 = scmp.ne.s32.totalorder %s25, %s28
      %p34 = scmp.eq.s32.totalorder %s15, 0
      %p35 = por %p33, %p34
      %p36 = scmp.ne.s32.totalorder %s25, %s28
      %p37 = scmp.eq.s32.totalorder %s20, 1
      %p38 = por %p36, %p37
      %p39 = scmp.ne.s32.totalorder %s28, %s29
      %p40 = scmp.eq.s32.totalorder %s20, 0
      %p41 = por %p39, %p40
      %p42 = scmp.ne.s32.totalorder %s28, %s29
      %p43 = scmp.eq.s32.totalorder %s21, 1
      %p44 = por %p42, %p43
      %p46 = scmp.ne.s32.totalorder %s29, %s45
      %p47 = scmp.eq.s32.totalorder %s21, 0
      %p48 = por %p46, %p47
      %s50 = sadd.s32 %s49, 1
      %p53 = scmp.eq.s32.totalorder %s15, 1
      %p54 = scmp.ne.s32.totalorder %s49, %s51
      %p55 = scmp.eq.s32.totalorder %s15, 0
      %p56 = por %p54, %p55
      %p57 = scmp.ne.s32.totalorder %s49, %s51
      %p58 = scmp.eq.s32.totalorder %s20, 1
      %p59 = por %p57, %p58
      %p60 = scmp.ne.s32.totalorder %s51, %s52
      %p61 = scmp.eq.s32.totalorder %s20, 0
      %p62 = por %p60, %p61
      %p63 = scmp.ne.s32.totalorder %s51, %s52
      %p64 = scmp.eq.s32.totalorder %s21, 1
      %p65 = por %p63, %p64
      %p67 = scmp.ne.s32.totalorder %s52, %s66
      %p68 = scmp.eq.s32.totalorder %s21, 0
      %p69 = por %p67, %p68
      %s71 = sadd.s32 %s70, 1
      %p74 = scmp.eq.s32.totalorder %s15, 1
      %p75 = scmp.ne.s32.totalorder %s70, %s72
      %p76 = scmp.eq.s32.totalorder %s15, 0
      %p77 = por %p75, %p76
      %p78 = scmp.ne.s32.totalorder %s70, %s72
      %p79 = scmp.eq.s32.totalorder %s20, 1
      %p80 = por %p78, %p79
      %p81 = scmp.ne.s32.totalorder %s72, %s73
      %p82 = scmp.eq.s32.totalorder %s20, 0
      %p83 = por %p81, %p82
      %p84 = scmp.ne.s32.totalorder %s72, %s73
      %p85 = scmp.eq.s32.totalorder %s21, 1
      %p86 = por %p84, %p85
      %p88 = scmp.ne.s32.totalorder %s73, %s87
      %p89 = scmp.eq.s32.totalorder %s21, 0
      %p90 = por %p88, %p89
      %s92 = sadd.s32 %s91, 1
      %p95 = scmp.eq.s32.totalorder %s15, 1
      %p96 = scmp.ne.s32.totalorder %s91, %s93
      %p97 = scmp.eq.s32.totalorder %s15, 0
      %p98 = por %p96, %p97
      %p99 = scmp.ne.s32.totalorder %s91, %s93
      %p100 = scmp.eq.s32.totalorder %s20, 1
      %p101 = por %p99, %p100
      %p102 = scmp.ne.s32.totalorder %s93, %s94
      %p103 = scmp.eq.s32.totalorder %s20, 0
      %p104 = por %p102, %p103
      %p105 = scmp.ne.s32.totalorder %s93, %s94
      %p106 = scmp.eq.s32.totalorder %s21, 1
      %p107 = por %p105, %p106
      %p109 = scmp.ne.s32.totalorder %s94, %s108
      %p110 = scmp.eq.s32.totalorder %s21, 0
      %p111 = por %p109, %p110
      %s113 = sadd.s32 %s112, 1
      %p116 = scmp.eq.s32.totalorder %s15, 1
      %p117 = scmp.ne.s32.totalorder %s112, %s114
      %p118 = scmp.eq.s32.totalorder %s15, 0
      %p119 = por %p117, %p118
      %p120 = scmp.ne.s32.totalorder %s112, %s114
      %p121 = scmp.eq.s32.totalorder %s20, 1
      %p122 = por %p120, %p121
      %p123 = scmp.ne.s32.totalorder %s114, %s115
      %p124 = scmp.eq.s32.totalorder %s20, 0
      %p125 = por %p123, %p124
      %p126 = scmp.ne.s32.totalorder %s114, %s115
      %p127 = scmp.eq.s32.totalorder %s21, 1
      %p128 = por %p126, %p127
      %p130 = scmp.ne.s32.totalorder %s115, %s129
      %p131 = scmp.eq.s32.totalorder %s21, 0
      %p132 = por %p130, %p131
      %s133 = ssub.s32 %s15, %s22
      %p134 = scmp.eq.s32.totalorder %s133, 0
      %s136 = sadd.s32 %s135, 1
      %s137 = scalar_select %p134, %s135, %s136
      %p140 = pneg %p134
      %p141 = scmp.eq.s32.totalorder %s15, 1
      %p142 = por %p140, %p141
      %p143 = scmp.ne.s32.totalorder %s135, %s138
      %p144 = scmp.eq.s32.totalorder %s15, 0
      %p145 = por %p143, %p144
      %p146 = scmp.ne.s32.totalorder %s135, %s138
      %p147 = scmp.eq.s32.totalorder %s20, 1
      %p148 = por %p146, %p147
      %p149 = scmp.ne.s32.totalorder %s138, %s139
      %p150 = scmp.eq.s32.totalorder %s20, 0
      %p151 = por %p149, %p150
      %p152 = scmp.ne.s32.totalorder %s138, %s139
      %p153 = scmp.eq.s32.totalorder %s21, 1
      %p154 = por %p152, %p153
      %p156 = scmp.ne.s32.totalorder %s139, %s155
      %p157 = scmp.eq.s32.totalorder %s21, 0
      %p158 = por %p156, %p157
      %p159 = scmp.le.s32.totalorder 1, %s15
      %p160 = scmp.lt.s32.totalorder %s15, 3
      %p161 = pnand %p159, %p160
      %p162 = pneg %p161
      // Predicated region
      $region9: #{tpu_custom_call.1} parent=5 // pred_check
        _
      $region10: #{tpu_custom_call.1} parent=5 // pred_check_branch
        %164 = sbr.rel (%p161) target = $region12
      $region11: #{tpu_custom_call.1} parent=5 // pred_region
        %s165 = ssub.s32 %s15, 1
        // Predicated region
        $region13: #{tpu_custom_call.1} parent=11 // pred_check
          %p166 = pneg %p62
        $region14: #{tpu_custom_call.1} parent=11 // pred_check_branch
          %168 = sbr.rel (%p166) target = $region16
        $region15: #{tpu_custom_call.1} parent=11 // pred_region
          _
        $region16: #{tpu_custom_call.1} parent=11 // pred_fallthru
          _
        // Predicated region
        $region17: #{tpu_custom_call.1} parent=11 // pred_check
          %p169 = pneg %p83
        $region18: #{tpu_custom_call.1} parent=11 // pred_check_branch
          %171 = sbr.rel (%p169) target = $region20
        $region19: #{tpu_custom_call.1} parent=11 // pred_region
          %s173 = ssub.s32 6144, 6144
          %174 = vsyncadd [#allocation7], %s173
          %s175 = sshll.u32 [#allocation6], 4
          %s176 = int_to_ptr.vmem [resolvable:$true] %s175
          %181 = dma.hbm_to_vmem [thread:$0]  %s2, 6144, %s176, [#allocation7], 512, 512, 32
        $region20: #{tpu_custom_call.1} parent=11 // pred_fallthru
          _
        // Predicated region
        $region21: #{tpu_custom_call.1} parent=11 // pred_check
          %p182 = pneg %p104
        $region22: #{tpu_custom_call.1} parent=11 // pred_check_branch
          %184 = sbr.rel (%p182) target = $region24
        $region23: #{tpu_custom_call.1} parent=11 // pred_region
          _
        $region24: #{tpu_custom_call.1} parent=11 // pred_fallthru
          _
        // Predicated region
        $region25: #{tpu_custom_call.1} parent=11 // pred_check
          %p185 = pneg %p125
        $region26: #{tpu_custom_call.1} parent=11 // pred_check_branch
          %187 = sbr.rel (%p185) target = $region28
        $region27: #{tpu_custom_call.1} parent=11 // pred_region
          %s189 = ssub.s32 16640, 16640
          %190 = vsyncadd [#allocation7], %s189
          %s191 = sshll.u32 [#allocation8], 4
          %s192 = int_to_ptr.vmem [resolvable:$true] %s191
          %197 = dma.hbm_to_vmem [thread:$0]  %s4, 16640, %s192, [#allocation7], 256, 256, 16
        $region28: #{tpu_custom_call.1} parent=11 // pred_fallthru
          _
      $region12: #{tpu_custom_call.1} parent=5 // pred_fallthru
        _
      %p198 = scmp.lt.s32.totalorder %s15, 2
      // Predicated region
      $region29: #{tpu_custom_call.1} parent=5 // pred_check
        %p199 = pneg %p198
      $region30: #{tpu_custom_call.1} parent=5 // pred_check_branch
        %201 = sbr.rel (%p199) target = $region32
      $region31: #{tpu_custom_call.1} parent=5 // pred_region
        // Predicated region
        $region33: #{tpu_custom_call.1} parent=31 // pred_check
          %p202 = pneg %p35
        $region34: #{tpu_custom_call.1} parent=31 // pred_check_branch
          %204 = sbr.rel (%p202) target = $region36
        $region35: #{tpu_custom_call.1} parent=31 // pred_region
          %s205 = sand.u32 %s25, 1
          %s206 = scalar_lea.sflag [#allocation5], %s205
          %s207 = sand.u32 %s25, 1
          %s208 = smul.addr %s207, 64
          %s209 = scalar_lea.vmem [#allocation4], %s208
          %s211 = ssub.s32 1024, 1024
          %212 = vsyncadd %s206, %s211
          %s213 = smul.addr %s15, 8
          %s214 = smul.addr %s213, 128
          %s215 = scalar_lea.hbm %s0, %s214
          %s216 = sshll.u32 %s209, 4
          %s217 = int_to_ptr.vmem [resolvable:$true] %s216
          %222 = dma.hbm_to_vmem [thread:$0]  %s215, 1024, %s217, %s206, 512, 512, 32
        $region36: #{tpu_custom_call.1} parent=31 // pred_fallthru
          _
      $region32: #{tpu_custom_call.1} parent=5 // pred_fallthru
        _
      %p223 = scmp.le.s32.totalorder 1, %s15
      %p224 = scmp.lt.s32.totalorder %s15, 3
      %p225 = pnand %p223, %p224
      %p226 = pneg %p225
      // Predicated region
      $region37: #{tpu_custom_call.1} parent=5 // pred_check
        _
      $region38: #{tpu_custom_call.1} parent=5 // pred_check_branch
        %228 = sbr.rel (%p225) target = $region40
      $region39: #{tpu_custom_call.1} parent=5 // pred_region
        %s229 = ssub.s32 %s15, 1
        %s230 = sand.u32 %s28, 1
        %s231 = scalar_lea.sflag [#allocation5], %s230
        %s232 = sand.u32 %s28, 1
        %s233 = smul.addr %s232, 64
        %s234 = scalar_lea.vmem [#allocation4], %s233
        // Predicated region
        $region41: #{tpu_custom_call.1} parent=39 // pred_check
          %p235 = pneg %p41
        $region42: #{tpu_custom_call.1} parent=39 // pred_check_branch
          %237 = sbr.rel (%p235) target = $region44
        $region43: #{tpu_custom_call.1} parent=39 // pred_region
          %238 = dma.done %s231, 1024
        $region44: #{tpu_custom_call.1} parent=39 // pred_fallthru
          _
        // Predicated region
        $region45: #{tpu_custom_call.1} parent=39 // pred_check
          %p239 = pneg %p83
        $region46: #{tpu_custom_call.1} parent=39 // pred_check_branch
          %241 = sbr.rel (%p239) target = $region48
        $region47: #{tpu_custom_call.1} parent=39 // pred_region
          %242 = dma.done [#allocation7], 6144
        $region48: #{tpu_custom_call.1} parent=39 // pred_fallthru
          _
        // Predicated region
        $region49: #{tpu_custom_call.1} parent=39 // pred_check
          %p243 = pneg %p125
        $region50: #{tpu_custom_call.1} parent=39 // pred_check_branch
          %245 = sbr.rel (%p243) target = $region52
        $region51: #{tpu_custom_call.1} parent=39 // pred_region
          %246 = dma.done [#allocation7], 16640
        $region52: #{tpu_custom_call.1} parent=39 // pred_fallthru
          _
        %s247 = sand.u32 %s28, 1
        %s248 = scalar_lea.sflag [#allocation5], %s247
        %s249 = sand.u32 %s28, 1
        %s250 = smul.addr %s249, 64
        %s251 = scalar_lea.vmem [#allocation4], %s250
        %p252 = pneg %p41
        %p253 = pneg %p38
        %p254 = pneg %p62
        %p255 = pneg %p59
        %p256 = pneg %p83
        %p257 = pneg %p80
        %p258 = pneg %p104
        %p259 = pneg %p101
        %p260 = pneg %p125
        %p261 = pneg %p122
        %p262 = pneg %p151
        %p263 = pneg %p148
        %p264 = scmp.lt.s32.totalorder %s20, 1
        %s265 = scalar_select %p264, %s20, 1
        %s266 = smul.addr %s265, 4
        %s267 = smul.addr %s266, 8
        %s268 = scalar_lea.vmem %s5, %s267
        %p269 = scmp.lt.s32.totalorder %s20, 1
        %s270 = scalar_select %p269, %s20, 1
        %s271 = smul.addr %s270, 4
        %s272 = smul.addr %s271, 8
        %s273 = scalar_lea.vmem %s5, %s272
        %vm274 = vcmask 277504
        %275 = vst.msk [vmem:[#allocation2] sm:$0xff] %vm274, 0.0
        %276 = vst.msk [vmem:[#allocation2 + $0x30] sm:$0xff] %vm274, 0.0
        %vm277 = vcmask 834832
        %278 = vst.msk [vmem:[#allocation2 + $0x10] sm:$0xff] %vm277, 0.0
        %279 = vst.msk [vmem:[#allocation2 + $0x40] sm:$0xff] %vm277, 0.0
        %vm280 = vcmask 1048368
        %281 = vst.msk [vmem:[#allocation2 + $0x20] sm:$0xff] %vm280, 0.0
        %vm282 = vcmask 64512
        %283 = vst.msk [vmem:[#allocation2 + $0x28] sm:$0xff] %vm282, 0.0
        %284 = vst.msk [vmem:[#allocation2 + $0x50] sm:$0xff] %vm280, 0.0
        %285 = vst.msk [vmem:[#allocation2 + $0x58] sm:$0xff] %vm282, 0.0
        %v286 = vld [vmem:[#allocation8] ss:$8 sm:$0x3]
        %v288 = vlaneseq
        %v289 = vshrl.u32 %v288, 7
        %v290 = vsub.s32 0, %v289
        %v291 = vrot.slane %v286, %v290
        %v292 = vlaneseq
        %v293 = vshrl.u32 %v292, 7
        %v294 = vsub.s32 1, %v293
        %v295 = vrot.slane %v286, %v294
        %s298 = scalar_lea.vmem [#allocation8], 1
        %v299 = vld [vmem:[%s298] ss:$8 sm:$0x3]
        %v301 = vlaneseq
        %v302 = vshrl.u32 %v301, 7
        %v303 = vsub.s32 0, %v302
        %v304 = vrot.slane %v299, %v303
        %v305 = vlaneseq
        %v306 = vshrl.u32 %v305, 7
        %v307 = vsub.s32 1, %v306
        %v308 = vrot.slane %v299, %v307
        %s309 = scalar_lea.vmem [#allocation8], 3
        %v310 = vld [vmem:[%s309] ss:$8 sm:$0x3]
        %v312 = vlaneseq
        %v313 = vshrl.u32 %v312, 7
        %v314 = vsub.s32 0, %v313
        %v315 = vrot.slane %v310, %v314
        %v316 = vlaneseq
        %v317 = vshrl.u32 %v316, 7
        %v318 = vsub.s32 1, %v317
        %v319 = vrot.slane %v310, %v318
        %s320 = scalar_lea.vmem [#allocation8], 4
        %v321 = vld [vmem:[%s320] ss:$8 sm:$0x3]
        %v323 = vlaneseq
        %v324 = vshrl.u32 %v323, 7
        %v325 = vsub.s32 0, %v324
        %v326 = vrot.slane %v321, %v325
        %v327 = vlaneseq
        %v328 = vshrl.u32 %v327, 7
        %v329 = vsub.s32 1, %v328
        %v330 = vrot.slane %v321, %v329
        %v331 = vld [vmem:[%s234] sm:$0xff]
        %v332 = vld [vmem:[%s234 + $0x8] sm:$0xff]
        %v333 = vld [vmem:[%s234 + $0x10] sm:$0xff]
        %v334 = vld [vmem:[%s234 + $0x18] sm:$0xff]
        %v335 = vld [vmem:[%s234 + $0x20] sm:$0xff]
        %v336 = vld [vmem:[%s234 + $0x28] sm:$0xff]
        %v337 = vld [vmem:[%s234 + $0x30] sm:$0xff]
        %v338 = vld [vmem:[%s234 + $0x38] sm:$0xff]
        %v339 = vld [vmem:[%s3] sm:$0xff]
        %v340 = vld [vmem:[%s3 + $0x8] sm:$0xff]
        %v341 = vld [vmem:[%s1] sm:$0xff]
        %v342 = vld [vmem:[%s1 + $0x8] sm:$0xff]
        %344 = vset.pattern.permute.xlu0 0
        %345 = vperm.xlu0 %344, %v341
        %v346 = vpop.permute.xlu0 %345
        %349 = vset.pattern.permute.xlu0 0
        %350 = vperm.xlu0 %349, %v342
        %v351 = vpop.permute.xlu0 %350
        %vm353 = vcmask 130048
        %v355 = vsel %vm353, %v339, 0
        %v358 = vsel %vm353, %v340, 0
        %360 = vmatprep.subr.mxu0 %v332
        %361 = vmatpush1.msra.mxu0 %v331
        %362 = vmatprep.subr.mxu0 %v336
        %363 = vmatpush1.msra.mxu0 %v335
        %364 = vmatprep.subr.mxu0 0.0
        %365 = vmatpush1.msra.mxu0 0.0
        %366 = vmatprep.subr.mxu0 0.0
        %367 = vmatpush1.msra.mxu0 0.0
        %368 = vmatprep.subr.mxu0 0.0
        %369 = vmatpush1.msra.mxu0 0.0
        %370 = vmatprep.subr.mxu0 0.0
        %371 = vmatpush1.msra.mxu0 0.0
        %372 = vmatprep.subr.mxu0 0.0
        %373 = vmatpush1.msra.mxu0 0.0
        %374 = vmatprep.subr.mxu0 0.0
        %375 = vmatpush1.msra.mxu0 0.0
        %376 = vmatprep.subr.mxu0 0.0
        %377 = vmatpush1.msra.mxu0 0.0
        %378 = vmatprep.subr.mxu0 0.0
        %379 = vmatpush1.msra.mxu0 0.0
        %380 = vmatprep.subr.mxu0 0.0
        %381 = vmatpush1.msra.mxu0 0.0
        %382 = vmatprep.subr.mxu0 0.0
        %383 = vmatpush1.msra.mxu0 0.0
        %384 = vmatprep.subr.mxu0 0.0
        %385 = vmatpush1.msra.mxu0 0.0
        %386 = vmatprep.subr.mxu0 0.0
        %387 = vmatpush1.msra.mxu0 0.0
        %388 = vmatprep.subr.mxu0 0.0
        %389 = vmatpush1.msra.mxu0 0.0
        %390 = vmatprep.subr.mxu0 0.0
        %391 = vmatpush1.msra.mxu0 0.0
        %392 = vmatprep.subr.mxu0 0.0
        %393 = vmatpush1.msra.mxu0 0.0
        %394 = vmatprep.subr.mxu0 0.0
        %395 = vmatpush1.msra.mxu0 0.0
        %396 = vmatprep.subr.mxu0 0.0
        %397 = vmatpush1.msra.mxu0 0.0
        %398 = vmatprep.subr.mxu0 0.0
        %399 = vmatpush1.msra.mxu0 0.0
        %400 = vmatprep.subr.mxu0 0.0
        %401 = vmatpush1.msra.mxu0 0.0
        %402 = vmatprep.subr.mxu0 0.0
        %403 = vmatpush1.msra.mxu0 0.0
        %404 = vmatprep.subr.mxu0 0.0
        %405 = vmatpush1.msra.mxu0 0.0
        %406 = vmatprep.subr.mxu0 0.0
        %407 = vmatpush1.msra.mxu0 0.0
        %408 = vmatprep.subr.mxu0 0.0
        %409 = vmatpush1.msra.mxu0 0.0
        %410 = vmatprep.subr.mxu0 0.0
        %411 = vmatpush1.msra.mxu0 0.0
        %412 = vmatprep.subr.mxu0 0.0
        %413 = vmatpush1.msra.mxu0 0.0
        %414 = vmatprep.subr.mxu0 0.0
        %415 = vmatpush1.msra.mxu0 0.0
        %416 = vmatprep.subr.mxu0 0.0
        %417 = vmatpush1.msra.mxu0 0.0
        %418 = vmatprep.subr.mxu0 0.0
        %419 = vmatpush1.msra.mxu0 0.0
        %420 = vmatprep.subr.mxu0 0.0
        %421 = vmatpush1.msra.mxu0 0.0
        %422 = vmatprep.subr.mxu0 0.0
        %423 = vmatpush1.msra.mxu0 0.0
        %424 = vmatprep.mubr.f32.mxu0 0.0
        %425 = vmatmul.mubr.f32.gmra.mrb[0].mxu0 %v355
        %v426 = vpop.f32.mrb[0].mxu0
        %v427 = vadd.f32 %v346, %v426
        %v428 = vpop.f32.mrb[0].mxu0
        %v429 = vadd.f32 %v346, %v428
        %430 = vmatprep.mubr.f32.mxu0 0.0
        %431 = vmatmul.mubr.f32.gmra.mrb[0].mxu0 %v358
        %v432 = vpop.f32.mrb[0].mxu0
        %v433 = vadd.f32 %v351, %v432
        %v434 = vpop.f32.mrb[0].mxu0
        %v435 = vadd.f32 %v351, %v434
        %436 = vdwg.mxu0
        %437 = vmatprep.subr.mxu0 %v334
        %438 = vmatpush1.msra.mxu0 %v333
        %439 = vmatprep.subr.mxu0 %v338
        %440 = vmatpush1.msra.mxu0 %v337
        %441 = vmatprep.subr.mxu0 0.0
        %442 = vmatpush1.msra.mxu0 0.0
        %443 = vmatprep.subr.mxu0 0.0
        %444 = vmatpush1.msra.mxu0 0.0
        %445 = vmatprep.subr.mxu0 0.0
        %446 = vmatpush1.msra.mxu0 0.0
        %447 = vmatprep.subr.mxu0 0.0
        %448 = vmatpush1.msra.mxu0 0.0
        %449 = vmatprep.subr.mxu0 0.0
        %450 = vmatpush1.msra.mxu0 0.0
        %451 = vmatprep.subr.mxu0 0.0
        %452 = vmatpush1.msra.mxu0 0.0
        %453 = vmatprep.subr.mxu0 0.0
        %454 = vmatpush1.msra.mxu0 0.0
        %455 = vmatprep.subr.mxu0 0.0
        %456 = vmatpush1.msra.mxu0 0.0
        %457 = vmatprep.subr.mxu0 0.0
        %458 = vmatpush1.msra.mxu0 0.0
        %459 = vmatprep.subr.mxu0 0.0
        %460 = vmatpush1.msra.mxu0 0.0
        %461 = vmatprep.subr.mxu0 0.0
        %462 = vmatpush1.msra.mxu0 0.0
        %463 = vmatprep.subr.mxu0 0.0
        %464 = vmatpush1.msra.mxu0 0.0
        %465 = vmatprep.subr.mxu0 0.0
        %466 = vmatpush1.msra.mxu0 0.0
        %467 = vmatprep.subr.mxu0 0.0
        %468 = vmatpush1.msra.mxu0 0.0
        %469 = vmatprep.subr.mxu0 0.0
        %470 = vmatpush1.msra.mxu0 0.0
        %471 = vmatprep.subr.mxu0 0.0
        %472 = vmatpush1.msra.mxu0 0.0
        %473 = vmatprep.subr.mxu0 0.0
        %474 = vmatpush1.msra.mxu0 0.0
        %475 = vmatprep.subr.mxu0 0.0
        %476 = vmatpush1.msra.mxu0 0.0
        %477 = vmatprep.subr.mxu0 0.0
        %478 = vmatpush1.msra.mxu0 0.0
        %479 = vmatprep.subr.mxu0 0.0
        %480 = vmatpush1.msra.mxu0 0.0
        %481 = vmatprep.subr.mxu0 0.0
        %482 = vmatpush1.msra.mxu0 0.0
        %483 = vmatprep.subr.mxu0 0.0
        %484 = vmatpush1.msra.mxu0 0.0
        %485 = vmatprep.subr.mxu0 0.0
        %486 = vmatpush1.msra.mxu0 0.0
        %487 = vmatprep.subr.mxu0 0.0
        %488 = vmatpush1.msra.mxu0 0.0
        %489 = vmatprep.subr.mxu0 0.0
        %490 = vmatpush1.msra.mxu0 0.0
        %491 = vmatprep.subr.mxu0 0.0
        %492 = vmatpush1.msra.mxu0 0.0
        %493 = vmatprep.subr.mxu0 0.0
        %494 = vmatpush1.msra.mxu0 0.0
        %495 = vmatprep.subr.mxu0 0.0
        %496 = vmatpush1.msra.mxu0 0.0
        %497 = vmatprep.subr.mxu0 0.0
        %498 = vmatpush1.msra.mxu0 0.0
        %499 = vmatprep.subr.mxu0 0.0
        %500 = vmatpush1.msra.mxu0 0.0
        %501 = vmatprep.mubr.f32.mxu0 0.0
        %502 = vmatmul.mubr.f32.gmra.mrb[0].mxu0 %v355
        %v503 = vpop.f32.mrb[0].mxu0
        %v504 = vadd.f32 %v346, %v503
        %v505 = vpop.f32.mrb[0].mxu0
        %v506 = vadd.f32 %v346, %v505
        %507 = vmatprep.mubr.f32.mxu0 0.0
        %508 = vmatmul.mubr.f32.gmra.mrb[0].mxu0 %v358
        %v509 = vpop.f32.mrb[0].mxu0
        %v510 = vadd.f32 %v351, %v509
        %v511 = vpop.f32.mrb[0].mxu0
        %v512 = vadd.f32 %v351, %v511
        %513 = vdwg.mxu0
        %518 = vrot.lane.b32.xlu0 %v427, 34
        %v519 = vpop.permute.xlu0 %518
        %520 = vrot.lane.b32.xlu0 %v429, 34
        %v521 = vpop.permute.xlu0 %520
        %522 = vrot.lane.b32.xlu0 %v433, 34
        %v523 = vpop.permute.xlu0 %522
        %524 = vrot.lane.b32.xlu0 %v435, 34
        %v525 = vpop.permute.xlu0 %524
        %v526 = vsel %vm274, %v519, %v521
        %v527 = vsel %vm274, %v523, %v525
        %vm534 = vcmask 1047824
        %535 = vst.msk [vmem:[#allocation2] sm:$0xff] %vm534, %v519
        %536 = vst [vmem:[#allocation2 + $0x8] sm:$0xff] %v526
        %537 = vst.msk [vmem:[#allocation2 + $0x10] sm:$0xff] %vm274, %v521
        %538 = vst.msk [vmem:[#allocation2 + $0x30] sm:$0xff] %vm534, %v523
        %539 = vst [vmem:[#allocation2 + $0x38] sm:$0xff] %v527
        %540 = vst.msk [vmem:[#allocation2 + $0x40] sm:$0xff] %vm274, %v525
        %545 = vrot.lane.b32.xlu0 %v504, 102
        %v546 = vpop.permute.xlu0 %545
        %547 = vrot.lane.b32.xlu0 %v506, 102
        %v548 = vpop.permute.xlu0 %547
        %549 = vrot.lane.b32.xlu0 %v510, 102
        %v550 = vpop.permute.xlu0 %549
        %551 = vrot.lane.b32.xlu0 %v512, 102
        %v552 = vpop.permute.xlu0 %551
        %vm553 = vcmask 834560
        %v554 = vsel %vm553, %v546, %v548
        %v555 = vsel %vm553, %v550, %v552
        %562 = vst.msk [vmem:[#allocation2 + $0x10] sm:$0xff] %vm280, %v546
        %563 = vst [vmem:[#allocation2 + $0x18] sm:$0xff] %v554
        %564 = vst.msk [vmem:[#allocation2 + $0x20] sm:$0xff] %vm553, %v548
        %565 = vst.msk [vmem:[#allocation2 + $0x40] sm:$0xff] %vm280, %v550
        %566 = vst [vmem:[#allocation2 + $0x48] sm:$0xff] %v555
        %567 = vst.msk [vmem:[#allocation2 + $0x50] sm:$0xff] %vm553, %v552
        %v568 = vld [vmem:[#allocation2] sm:$0xff]
        %v569 = vld [vmem:[#allocation2 + $0x8] sm:$0xff]
        %v570 = vld [vmem:[#allocation2 + $0x30] sm:$0xff]
        %v571 = vld [vmem:[#allocation2 + $0x38] sm:$0xff]
        %v572 = vmul.f32 %v568, %v291
        %v573 = vmul.f32 %v569, %v295
        %v574 = vmul.f32 %v570, %v291
        %v575 = vmul.f32 %v571, %v295
        %576 = vst [vmem:[#allocation3] sm:$0xff] %v572
        %577 = vst [vmem:[#allocation3 + $0x8] sm:$0xff] %v573
        %578 = vst [vmem:[#allocation3 + $0x20] sm:$0xff] %v574
        %579 = vst [vmem:[#allocation3 + $0x28] sm:$0xff] %v575
        %v580 = vld [vmem:[#allocation2 + $0x10] sm:$0xff]
        %v581 = vld [vmem:[#allocation2 + $0x18] sm:$0xff]
        %v582 = vld [vmem:[#allocation2 + $0x20] sm:$0xff]
        %v583 = vld [vmem:[#allocation2 + $0x40] sm:$0xff]
        %v584 = vld [vmem:[#allocation2 + $0x48] sm:$0xff]
        %v585 = vld [vmem:[#allocation2 + $0x50] sm:$0xff]
        %586 = vrot.lane.b32.xlu0 %v291, 68
        %v587 = vpop.permute.xlu0 %586
        %588 = vrot.lane.b32.xlu0 %v295, 68
        %v589 = vpop.permute.xlu0 %588
        %vm590 = vcmask 556032
        %v591 = vsel %vm590, %v587, %v589
        %v595 = vmul.f32 %v580, %v587
        %v596 = vmul.f32 %v581, %v591
        %v597 = vmul.f32 %v582, %v589
        %v598 = vmul.f32 %v583, %v587
        %v599 = vmul.f32 %v584, %v591
        %v600 = vmul.f32 %v585, %v589
        %607 = vrot.lane.b32.xlu0 %v595, 60
        %v608 = vpop.permute.xlu0 %607
        %609 = vrot.lane.b32.xlu0 %v596, 60
        %v610 = vpop.permute.xlu0 %609
        %611 = vrot.lane.b32.xlu0 %v597, 60
        %v612 = vpop.permute.xlu0 %611
        %613 = vrot.lane.b32.xlu0 %v598, 60
        %v614 = vpop.permute.xlu0 %613
        %615 = vrot.lane.b32.xlu0 %v599, 60
        %v616 = vpop.permute.xlu0 %615
        %617 = vrot.lane.b32.xlu0 %v600, 60
        %v618 = vpop.permute.xlu0 %617
        %vm619 = vcmask 490496
        %v620 = vsel %vm619, %v608, %v610
        %v621 = vsel %vm619, %v610, %v612
        %v622 = vsel %vm619, %v614, %v616
        %v623 = vsel %vm619, %v616, %v618
        %628 = vst [vmem:[#allocation3 + $0x10] sm:$0xff] %v620
        %629 = vst [vmem:[#allocation3 + $0x18] sm:$0xff] %v621
        %630 = vst [vmem:[#allocation3 + $0x30] sm:$0xff] %v622
        %631 = vst [vmem:[#allocation3 + $0x38] sm:$0xff] %v623
        %v632 = vld [vmem:[#allocation2] sm:$0xff]
        %v633 = vld [vmem:[#allocation2 + $0x8] sm:$0xff]
        %v634 = vld [vmem:[#allocation2 + $0x10] sm:$0xff]
        %v635 = vld [vmem:[#allocation2 + $0x30] sm:$0xff]
        %v636 = vld [vmem:[#allocation2 + $0x38] sm:$0xff]
        %v637 = vld [vmem:[#allocation2 + $0x40] sm:$0xff]
        %638 = vrot.lane.b32.xlu0 %v304, 1
        %v639 = vpop.permute.xlu0 %638
        %640 = vrot.lane.b32.xlu0 %v308, 1
        %v641 = vpop.permute.xlu0 %640
        %vm642 = vcmask 7168
        %v643 = vsel %vm642, %v639, %v641
        %v647 = vmul.f32 %v632, %v639
        %v648 = vmul.f32 %v633, %v643
        %v649 = vmul.f32 %v634, %v641
        %v650 = vmul.f32 %v635, %v639
        %v651 = vmul.f32 %v636, %v643
        %v652 = vmul.f32 %v637, %v641
        %659 = vrot.lane.b32.xlu0 %v647, 127
        %v660 = vpop.permute.xlu0 %659
        %661 = vrot.lane.b32.xlu0 %v648, 127
        %v662 = vpop.permute.xlu0 %661
        %663 = vrot.lane.b32.xlu0 %v649, 127
        %v664 = vpop.permute.xlu0 %663
        %665 = vrot.lane.b32.xlu0 %v650, 127
        %v666 = vpop.permute.xlu0 %665
        %667 = vrot.lane.b32.xlu0 %v651, 127
        %v668 = vpop.permute.xlu0 %667
        %669 = vrot.lane.b32.xlu0 %v652, 127
        %v670 = vpop.permute.xlu0 %669
        %vm671 = vcmask 1039360
        %v672 = vsel %vm671, %v660, %v662
        %v673 = vsel %vm671, %v662, %v664
        %v674 = vsel %vm671, %v666, %v668
        %v675 = vsel %vm671, %v668, %v670
        %680 = vst [vmem:[#allocation3 + $0x40] sm:$0xff] %v672
        %681 = vst [vmem:[#allocation3 + $0x48] sm:$0xff] %v673
        %682 = vst [vmem:[#allocation3 + $0x60] sm:$0xff] %v674
        %683 = vst [vmem:[#allocation3 + $0x68] sm:$0xff] %v675
        %v684 = vld [vmem:[#allocation2 + $0x10] sm:$0xff]
        %v685 = vld [vmem:[#allocation2 + $0x18] sm:$0xff]
        %v686 = vld [vmem:[#allocation2 + $0x20] sm:$0xff]
        %v687 = vld [vmem:[#allocation2 + $0x40] sm:$0xff]
        %v688 = vld [vmem:[#allocation2 + $0x48] sm:$0xff]
        %v689 = vld [vmem:[#allocation2 + $0x50] sm:$0xff]
        %690 = vrot.lane.b32.xlu0 %v304, 69
        %v691 = vpop.permute.xlu0 %690
        %692 = vrot.lane.b32.xlu0 %v308, 69
        %v693 = vpop.permute.xlu0 %692
        %vm694 = vcmask 564224
        %v695 = vsel %vm694, %v691, %v693
        %v699 = vmul.f32 %v684, %v691
        %v700 = vmul.f32 %v685, %v695
        %v701 = vmul.f32 %v686, %v693
        %v702 = vmul.f32 %v687, %v691
        %v703 = vmul.f32 %v688, %v695
        %v704 = vmul.f32 %v689, %v693
        %711 = vrot.lane.b32.xlu0 %v699, 59
        %v712 = vpop.permute.xlu0 %711
        %713 = vrot.lane.b32.xlu0 %v700, 59
        %v714 = vpop.permute.xlu0 %713
        %715 = vrot.lane.b32.xlu0 %v701, 59
        %v716 = vpop.permute.xlu0 %715
        %717 = vrot.lane.b32.xlu0 %v702, 59
        %v718 = vpop.permute.xlu0 %717
        %719 = vrot.lane.b32.xlu0 %v703, 59
        %v720 = vpop.permute.xlu0 %719
        %721 = vrot.lane.b32.xlu0 %v704, 59
        %v722 = vpop.permute.xlu0 %721
        %vm723 = vcmask 482304
        %v724 = vsel %vm723, %v712, %v714
        %v725 = vsel %vm723, %v714, %v716
        %v726 = vsel %vm723, %v718, %v720
        %v727 = vsel %vm723, %v720, %v722
        %732 = vst [vmem:[#allocation3 + $0x50] sm:$0xff] %v724
        %733 = vst [vmem:[#allocation3 + $0x58] sm:$0xff] %v725
        %734 = vst [vmem:[#allocation3 + $0x70] sm:$0xff] %v726
        %735 = vst [vmem:[#allocation3 + $0x78] sm:$0xff] %v727
        %v736 = vld [vmem:[#allocation2] sm:$0xff]
        %v737 = vld [vmem:[#allocation2 + $0x8] sm:$0xff]
        %v738 = vld [vmem:[#allocation2 + $0x10] sm:$0xff]
        %v739 = vld [vmem:[#allocation2 + $0x30] sm:$0xff]
        %v740 = vld [vmem:[#allocation2 + $0x38] sm:$0xff]
        %v741 = vld [vmem:[#allocation2 + $0x40] sm:$0xff]
        %748 = vrot.lane.b32.xlu0 %v736, 126
        %v749 = vpop.permute.xlu0 %748
        %750 = vrot.lane.b32.xlu0 %v737, 126
        %v751 = vpop.permute.xlu0 %750
        %752 = vrot.lane.b32.xlu0 %v738, 126
        %v753 = vpop.permute.xlu0 %752
        %754 = vrot.lane.b32.xlu0 %v739, 126
        %v755 = vpop.permute.xlu0 %754
        %756 = vrot.lane.b32.xlu0 %v740, 126
        %v757 = vpop.permute.xlu0 %756
        %758 = vrot.lane.b32.xlu0 %v741, 126
        %v759 = vpop.permute.xlu0 %758
        %vm760 = vcmask 1031168
        %v761 = vsel %vm760, %v749, %v751
        %v762 = vsel %vm760, %v751, %v753
        %v763 = vsel %vm760, %v755, %v757
        %v764 = vsel %vm760, %v757, %v759
        %769 = vst [vmem:[#allocation3 + $0x80] sm:$0xff] %v761
        %770 = vst [vmem:[#allocation3 + $0x88] sm:$0xff] %v762
        %771 = vst [vmem:[#allocation3 + $0xa0] sm:$0xff] %v763
        %772 = vst [vmem:[#allocation3 + $0xa8] sm:$0xff] %v764
        %v773 = vld [vmem:[#allocation2 + $0x10] sm:$0xff]
        %v774 = vld [vmem:[#allocation2 + $0x18] sm:$0xff]
        %v775 = vld [vmem:[#allocation2 + $0x20] sm:$0xff]
        %v776 = vld [vmem:[#allocation2 + $0x40] sm:$0xff]
        %v777 = vld [vmem:[#allocation2 + $0x48] sm:$0xff]
        %v778 = vld [vmem:[#allocation2 + $0x50] sm:$0xff]
        %785 = vrot.lane.b32.xlu0 %v773, 58
        %v786 = vpop.permute.xlu0 %785
        %787 = vrot.lane.b32.xlu0 %v774, 58
        %v788 = vpop.permute.xlu0 %787
        %789 = vrot.lane.b32.xlu0 %v775, 58
        %v790 = vpop.permute.xlu0 %789
        %791 = vrot.lane.b32.xlu0 %v776, 58
        %v792 = vpop.permute.xlu0 %791
        %793 = vrot.lane.b32.xlu0 %v777, 58
        %v794 = vpop.permute.xlu0 %793
        %795 = vrot.lane.b32.xlu0 %v778, 58
        %v796 = vpop.permute.xlu0 %795
        %vm797 = vcmask 474112
        %v798 = vsel %vm797, %v786, %v788
        %v799 = vsel %vm797, %v788, %v790
        %v800 = vsel %vm797, %v792, %v794
        %v801 = vsel %vm797, %v794, %v796
        %806 = vst [vmem:[#allocation3 + $0x90] sm:$0xff] %v798
        %807 = vst [vmem:[#allocation3 + $0x98] sm:$0xff] %v799
        %808 = vst [vmem:[#allocation3 + $0xb0] sm:$0xff] %v800
        %809 = vst [vmem:[#allocation3 + $0xb8] sm:$0xff] %v801
        %v810 = vld [vmem:[#allocation2] sm:$0xff]
        %v811 = vld [vmem:[#allocation2 + $0x8] sm:$0xff]
        %v812 = vld [vmem:[#allocation2 + $0x10] sm:$0xff]
        %v813 = vld [vmem:[#allocation2 + $0x30] sm:$0xff]
        %v814 = vld [vmem:[#allocation2 + $0x38] sm:$0xff]
        %v815 = vld [vmem:[#allocation2 + $0x40] sm:$0xff]
        %816 = vrot.lane.b32.xlu0 %v315, 3
        %v817 = vpop.permute.xlu0 %816
        %818 = vrot.lane.b32.xlu0 %v319, 3
        %v819 = vpop.permute.xlu0 %818
        %vm820 = vcmask 23552
        %v821 = vsel %vm820, %v817, %v819
        %v825 = vmul.f32 %v810, %v817
        %v826 = vmul.f32 %v811, %v821
        %v827 = vmul.f32 %v812, %v819
        %v828 = vmul.f32 %v813, %v817
        %v829 = vmul.f32 %v814, %v821
        %v830 = vmul.f32 %v815, %v819
        %837 = vrot.lane.b32.xlu0 %v825, 125
        %v838 = vpop.permute.xlu0 %837
        %839 = vrot.lane.b32.xlu0 %v826, 125
        %v840 = vpop.permute.xlu0 %839
        %841 = vrot.lane.b32.xlu0 %v827, 125
        %v842 = vpop.permute.xlu0 %841
        %843 = vrot.lane.b32.xlu0 %v828, 125
        %v844 = vpop.permute.xlu0 %843
        %845 = vrot.lane.b32.xlu0 %v829, 125
        %v846 = vpop.permute.xlu0 %845
        %847 = vrot.lane.b32.xlu0 %v830, 125
        %v848 = vpop.permute.xlu0 %847
        %vm849 = vcmask 1022976
        %v850 = vsel %vm849, %v838, %v840
        %v851 = vsel %vm849, %v840, %v842
        %v852 = vsel %vm849, %v844, %v846
        %v853 = vsel %vm849, %v846, %v848
        %858 = vst [vmem:[#allocation3 + $0xc0] sm:$0xff] %v850
        %859 = vst [vmem:[#allocation3 + $0xc8] sm:$0xff] %v851
        %860 = vst [vmem:[#allocation3 + $0xe0] sm:$0xff] %v852
        %861 = vst [vmem:[#allocation3 + $0xe8] sm:$0xff] %v853
        %v862 = vld [vmem:[#allocation2 + $0x10] sm:$0xff]
        %v863 = vld [vmem:[#allocation2 + $0x18] sm:$0xff]
        %v864 = vld [vmem:[#allocation2 + $0x20] sm:$0xff]
        %v865 = vld [vmem:[#allocation2 + $0x40] sm:$0xff]
        %v866 = vld [vmem:[#allocation2 + $0x48] sm:$0xff]
        %v867 = vld [vmem:[#allocation2 + $0x50] sm:$0xff]
        %868 = vrot.lane.b32.xlu0 %v315, 71
        %v869 = vpop.permute.xlu0 %868
        %870 = vrot.lane.b32.xlu0 %v319, 71
        %v871 = vpop.permute.xlu0 %870
        %vm872 = vcmask 580608
        %v873 = vsel %vm872, %v869, %v871
        %v877 = vmul.f32 %v862, %v869
        %v878 = vmul.f32 %v863, %v873
        %v879 = vmul.f32 %v864, %v871
        %v880 = vmul.f32 %v865, %v869
        %v881 = vmul.f32 %v866, %v873
        %v882 = vmul.f32 %v867, %v871
        %889 = vrot.lane.b32.xlu0 %v877, 57
        %v890 = vpop.permute.xlu0 %889
        %891 = vrot.lane.b32.xlu0 %v878, 57
        %v892 = vpop.permute.xlu0 %891
        %893 = vrot.lane.b32.xlu0 %v879, 57
        %v894 = vpop.permute.xlu0 %893
        %895 = vrot.lane.b32.xlu0 %v880, 57
        %v896 = vpop.permute.xlu0 %895
        %897 = vrot.lane.b32.xlu0 %v881, 57
        %v898 = vpop.permute.xlu0 %897
        %899 = vrot.lane.b32.xlu0 %v882, 57
        %v900 = vpop.permute.xlu0 %899
        %vm901 = vcmask 465920
        %v902 = vsel %vm901, %v890, %v892
        %v903 = vsel %vm901, %v892, %v894
        %v904 = vsel %vm901, %v896, %v898
        %v905 = vsel %vm901, %v898, %v900
        %910 = vst [vmem:[#allocation3 + $0xd0] sm:$0xff] %v902
        %911 = vst [vmem:[#allocation3 + $0xd8] sm:$0xff] %v903
        %912 = vst [vmem:[#allocation3 + $0xf0] sm:$0xff] %v904
        %913 = vst [vmem:[#allocation3 + $0xf8] sm:$0xff] %v905
        %v914 = vld [vmem:[#allocation2] sm:$0xff]
        %v915 = vld [vmem:[#allocation2 + $0x8] sm:$0xff]
        %v916 = vld [vmem:[#allocation2 + $0x10] sm:$0xff]
        %v917 = vld [vmem:[#allocation2 + $0x30] sm:$0xff]
        %v918 = vld [vmem:[#allocation2 + $0x38] sm:$0xff]
        %v919 = vld [vmem:[#allocation2 + $0x40] sm:$0xff]
        %920 = vrot.lane.b32.xlu0 %v326, 4
        %v921 = vpop.permute.xlu0 %920
        %922 = vrot.lane.b32.xlu0 %v330, 4
        %v923 = vpop.permute.xlu0 %922
        %vm924 = vcmask 31744
        %v925 = vsel %vm924, %v921, %v923
        %v929 = vmul.f32 %v914, %v921
        %v930 = vmul.f32 %v915, %v925
        %v931 = vmul.f32 %v916, %v923
        %v932 = vmul.f32 %v917, %v921
        %v933 = vmul.f32 %v918, %v925
        %v934 = vmul.f32 %v919, %v923
        %941 = vrot.lane.b32.xlu0 %v929, 124
        %v942 = vpop.permute.xlu0 %941
        %943 = vrot.lane.b32.xlu0 %v930, 124
        %v944 = vpop.permute.xlu0 %943
        %945 = vrot.lane.b32.xlu0 %v931, 124
        %v946 = vpop.permute.xlu0 %945
        %947 = vrot.lane.b32.xlu0 %v932, 124
        %v948 = vpop.permute.xlu0 %947
        %949 = vrot.lane.b32.xlu0 %v933, 124
        %v950 = vpop.permute.xlu0 %949
        %951 = vrot.lane.b32.xlu0 %v934, 124
        %v952 = vpop.permute.xlu0 %951
        %vm953 = vcmask 1014784
        %v954 = vsel %vm953, %v942, %v944
        %v955 = vsel %vm953, %v944, %v946
        %v956 = vsel %vm953, %v948, %v950
        %v957 = vsel %vm953, %v950, %v952
        %962 = vst [vmem:[#allocation3 + $0x100] sm:$0xff] %v954
        %963 = vst [vmem:[#allocation3 + $0x108] sm:$0xff] %v955
        %964 = vst [vmem:[#allocation3 + $0x120] sm:$0xff] %v956
        %965 = vst [vmem:[#allocation3 + $0x128] sm:$0xff] %v957
        %v966 = vld [vmem:[#allocation2 + $0x10] sm:$0xff]
        %v967 = vld [vmem:[#allocation2 + $0x18] sm:$0xff]
        %v968 = vld [vmem:[#allocation2 + $0x20] sm:$0xff]
        %v969 = vld [vmem:[#allocation2 + $0x40] sm:$0xff]
        %v970 = vld [vmem:[#allocation2 + $0x48] sm:$0xff]
        %v971 = vld [vmem:[#allocation2 + $0x50] sm:$0xff]
        %972 = vrot.lane.b32.xlu0 %v326, 72
        %v973 = vpop.permute.xlu0 %972
        %974 = vrot.lane.b32.xlu0 %v330, 72
        %v975 = vpop.permute.xlu0 %974
        %vm976 = vcmask 588800
        %v977 = vsel %vm976, %v973, %v975
        %v981 = vmul.f32 %v966, %v973
        %v982 = vmul.f32 %v967, %v977
        %v983 = vmul.f32 %v968, %v975
        %v984 = vmul.f32 %v969, %v973
        %v985 = vmul.f32 %v970, %v977
        %v986 = vmul.f32 %v971, %v975
        %993 = vrot.lane.b32.xlu0 %v981, 56
        %v994 = vpop.permute.xlu0 %993
        %995 = vrot.lane.b32.xlu0 %v982, 56
        %v996 = vpop.permute.xlu0 %995
        %997 = vrot.lane.b32.xlu0 %v983, 56
        %v998 = vpop.permute.xlu0 %997
        %999 = vrot.lane.b32.xlu0 %v984, 56
        %v1000 = vpop.permute.xlu0 %999
        %1001 = vrot.lane.b32.xlu0 %v985, 56
        %v1002 = vpop.permute.xlu0 %1001
        %1003 = vrot.lane.b32.xlu0 %v986, 56
        %v1004 = vpop.permute.xlu0 %1003
        %vm1005 = vcmask 457728
        %v1006 = vsel %vm1005, %v994, %v996
        %v1007 = vsel %vm1005, %v996, %v998
        %v1008 = vsel %vm1005, %v1000, %v1002
        %v1009 = vsel %vm1005, %v1002, %v1004
        %1014 = vst [vmem:[#allocation3 + $0x110] sm:$0xff] %v1006
        %1015 = vst [vmem:[#allocation3 + $0x118] sm:$0xff] %v1007
        %1016 = vst [vmem:[#allocation3 + $0x130] sm:$0xff] %v1008
        %1017 = vst [vmem:[#allocation3 + $0x138] sm:$0xff] %v1009
        %v1018 = vld [vmem:[#allocation2] sm:$0xff]
        %v1019 = vld [vmem:[#allocation2 + $0x8] sm:$0xff]
        %v1020 = vld [vmem:[#allocation2 + $0x10] sm:$0xff]
        %v1021 = vld [vmem:[#allocation2 + $0x30] sm:$0xff]
        %v1022 = vld [vmem:[#allocation2 + $0x38] sm:$0xff]
        %v1023 = vld [vmem:[#allocation2 + $0x40] sm:$0xff]
        %1024 = vrot.lane.b32.xlu0 %v291, 16
        %v1025 = vpop.permute.xlu0 %1024
        %1026 = vrot.lane.b32.xlu0 %v295, 16
        %v1027 = vpop.permute.xlu0 %1026
        %v1028 = vsel %vm353, %v1025, %v1027
        %v1032 = vmul.f32 %v1018, %v1025
        %v1033 = vmul.f32 %v1019, %v1028
        %v1034 = vmul.f32 %v1020, %v1027
        %v1035 = vmul.f32 %v1021, %v1025
        %v1036 = vmul.f32 %v1022, %v1028
        %v1037 = vmul.f32 %v1023, %v1027
        %1044 = vrot.lane.b32.xlu0 %v1032, 112
        %v1045 = vpop.permute.xlu0 %1044
        %1046 = vrot.lane.b32.xlu0 %v1033, 112
        %v1047 = vpop.permute.xlu0 %1046
        %1048 = vrot.lane.b32.xlu0 %v1034, 112
        %v1049 = vpop.permute.xlu0 %1048
        %1050 = vrot.lane.b32.xlu0 %v1035, 112
        %v1051 = vpop.permute.xlu0 %1050
        %1052 = vrot.lane.b32.xlu0 %v1036, 112
        %v1053 = vpop.permute.xlu0 %1052
        %1054 = vrot.lane.b32.xlu0 %v1037, 112
        %v1055 = vpop.permute.xlu0 %1054
        %vm1056 = vcmask 916480
        %v1057 = vsel %vm1056, %v1045, %v1047
        %v1058 = vsel %vm1056, %v1047, %v1049
        %v1059 = vsel %vm1056, %v1051, %v1053
        %v1060 = vsel %vm1056, %v1053, %v1055
        %1065 = vst [vmem:[#allocation3 + $0x140] sm:$0xff] %v1057
        %1066 = vst [vmem:[#allocation3 + $0x148] sm:$0xff] %v1058
        %1067 = vst [vmem:[#allocation3 + $0x160] sm:$0xff] %v1059
        %1068 = vst [vmem:[#allocation3 + $0x168] sm:$0xff] %v1060
        %v1069 = vld [vmem:[#allocation2 + $0x10] sm:$0xff]
        %v1070 = vld [vmem:[#allocation2 + $0x18] sm:$0xff]
        %v1071 = vld [vmem:[#allocation2 + $0x20] sm:$0xff]
        %v1072 = vld [vmem:[#allocation2 + $0x40] sm:$0xff]
        %v1073 = vld [vmem:[#allocation2 + $0x48] sm:$0xff]
        %v1074 = vld [vmem:[#allocation2 + $0x50] sm:$0xff]
        %1075 = vrot.lane.b32.xlu0 %v291, 84
        %v1076 = vpop.permute.xlu0 %1075
        %1077 = vrot.lane.b32.xlu0 %v295, 84
        %v1078 = vpop.permute.xlu0 %1077
        %vm1079 = vcmask 687104
        %v1080 = vsel %vm1079, %v1076, %v1078
        %v1084 = vmul.f32 %v1069, %v1076
        %v1085 = vmul.f32 %v1070, %v1080
        %v1086 = vmul.f32 %v1071, %v1078
        %v1087 = vmul.f32 %v1072, %v1076
        %v1088 = vmul.f32 %v1073, %v1080
        %v1089 = vmul.f32 %v1074, %v1078
        %1096 = vrot.lane.b32.xlu0 %v1084, 44
        %v1097 = vpop.permute.xlu0 %1096
        %1098 = vrot.lane.b32.xlu0 %v1085, 44
        %v1099 = vpop.permute.xlu0 %1098
        %1100 = vrot.lane.b32.xlu0 %v1086, 44
        %v1101 = vpop.permute.xlu0 %1100
        %1102 = vrot.lane.b32.xlu0 %v1087, 44
        %v1103 = vpop.permute.xlu0 %1102
        %1104 = vrot.lane.b32.xlu0 %v1088, 44
        %v1105 = vpop.permute.xlu0 %1104
        %1106 = vrot.lane.b32.xlu0 %v1089, 44
        %v1107 = vpop.permute.xlu0 %1106
        %vm1108 = vcmask 359424
        %v1109 = vsel %vm1108, %v1097, %v1099
        %v1110 = vsel %vm1108, %v1099, %v1101
        %v1111 = vsel %vm1108, %v1103, %v1105
        %v1112 = vsel %vm1108, %v1105, %v1107
        %1117 = vst [vmem:[#allocation3 + $0x150] sm:$0xff] %v1109
        %1118 = vst [vmem:[#allocation3 + $0x158] sm:$0xff] %v1110
        %1119 = vst [vmem:[#allocation3 + $0x170] sm:$0xff] %v1111
        %1120 = vst [vmem:[#allocation3 + $0x178] sm:$0xff] %v1112
        %v1121 = vld [vmem:[#allocation2] sm:$0xff]
        %v1122 = vld [vmem:[#allocation2 + $0x8] sm:$0xff]
        %v1123 = vld [vmem:[#allocation2 + $0x10] sm:$0xff]
        %v1124 = vld [vmem:[#allocation2 + $0x30] sm:$0xff]
        %v1125 = vld [vmem:[#allocation2 + $0x38] sm:$0xff]
        %v1126 = vld [vmem:[#allocation2 + $0x40] sm:$0xff]
        %1127 = vrot.lane.b32.xlu0 %v304, 17
        %v1128 = vpop.permute.xlu0 %1127
        %1129 = vrot.lane.b32.xlu0 %v308, 17
        %v1130 = vpop.permute.xlu0 %1129
        %vm1131 = vcmask 138240
        %v1132 = vsel %vm1131, %v1128, %v1130
        %v1136 = vmul.f32 %v1121, %v1128
        %v1137 = vmul.f32 %v1122, %v1132
        %v1138 = vmul.f32 %v1123, %v1130
        %v1139 = vmul.f32 %v1124, %v1128
        %v1140 = vmul.f32 %v1125, %v1132
        %v1141 = vmul.f32 %v1126, %v1130
        %1148 = vrot.lane.b32.xlu0 %v1136, 111
        %v1149 = vpop.permute.xlu0 %1148
        %1150 = vrot.lane.b32.xlu0 %v1137, 111
        %v1151 = vpop.permute.xlu0 %1150
        %1152 = vrot.lane.b32.xlu0 %v1138, 111
        %v1153 = vpop.permute.xlu0 %1152
        %1154 = vrot.lane.b32.xlu0 %v1139, 111
        %v1155 = vpop.permute.xlu0 %1154
        %1156 = vrot.lane.b32.xlu0 %v1140, 111
        %v1157 = vpop.permute.xlu0 %1156
        %1158 = vrot.lane.b32.xlu0 %v1141, 111
        %v1159 = vpop.permute.xlu0 %1158
        %vm1160 = vcmask 908288
        %v1161 = vsel %vm1160, %v1149, %v1151
        %v1162 = vsel %vm1160, %v1151, %v1153
        %v1163 = vsel %vm1160, %v1155, %v1157
        %v1164 = vsel %vm1160, %v1157, %v1159
        %1169 = vst [vmem:[#allocation3 + $0x180] sm:$0xff] %v1161
        %1170 = vst [vmem:[#allocation3 + $0x188] sm:$0xff] %v1162
        %1171 = vst [vmem:[#allocation3 + $0x1a0] sm:$0xff] %v1163
        %1172 = vst [vmem:[#allocation3 + $0x1a8] sm:$0xff] %v1164
        %v1173 = vld [vmem:[#allocation2 + $0x10] sm:$0xff]
        %v1174 = vld [vmem:[#allocation2 + $0x18] sm:$0xff]
        %v1175 = vld [vmem:[#allocation2 + $0x20] sm:$0xff]
        %v1176 = vld [vmem:[#allocation2 + $0x40] sm:$0xff]
        %v1177 = vld [vmem:[#allocation2 + $0x48] sm:$0xff]
        %v1178 = vld [vmem:[#allocation2 + $0x50] sm:$0xff]
        %1179 = vrot.lane.b32.xlu0 %v304, 85
        %v1180 = vpop.permute.xlu0 %1179
        %1181 = vrot.lane.b32.xlu0 %v308, 85
        %v1182 = vpop.permute.xlu0 %1181
        %vm1183 = vcmask 695296
        %v1184 = vsel %vm1183, %v1180, %v1182
        %v1188 = vmul.f32 %v1173, %v1180
        %v1189 = vmul.f32 %v1174, %v1184
        %v1190 = vmul.f32 %v1175, %v1182
        %v1191 = vmul.f32 %v1176, %v1180
        %v1192 = vmul.f32 %v1177, %v1184
        %v1193 = vmul.f32 %v1178, %v1182
        %1200 = vrot.lane.b32.xlu0 %v1188, 43
        %v1201 = vpop.permute.xlu0 %1200
        %1202 = vrot.lane.b32.xlu0 %v1189, 43
        %v1203 = vpop.permute.xlu0 %1202
        %1204 = vrot.lane.b32.xlu0 %v1190, 43
        %v1205 = vpop.permute.xlu0 %1204
        %1206 = vrot.lane.b32.xlu0 %v1191, 43
        %v1207 = vpop.permute.xlu0 %1206
        %1208 = vrot.lane.b32.xlu0 %v1192, 43
        %v1209 = vpop.permute.xlu0 %1208
        %1210 = vrot.lane.b32.xlu0 %v1193, 43
        %v1211 = vpop.permute.xlu0 %1210
        %vm1212 = vcmask 351232
        %v1213 = vsel %vm1212, %v1201, %v1203
        %v1214 = vsel %vm1212, %v1203, %v1205
        %v1215 = vsel %vm1212, %v1207, %v1209
        %v1216 = vsel %vm1212, %v1209, %v1211
        %1221 = vst [vmem:[#allocation3 + $0x190] sm:$0xff] %v1213
        %1222 = vst [vmem:[#allocation3 + $0x198] sm:$0xff] %v1214
        %1223 = vst [vmem:[#allocation3 + $0x1b0] sm:$0xff] %v1215
        %1224 = vst [vmem:[#allocation3 + $0x1b8] sm:$0xff] %v1216
        %v1225 = vld [vmem:[#allocation2] sm:$0xff]
        %v1226 = vld [vmem:[#allocation2 + $0x8] sm:$0xff]
        %v1227 = vld [vmem:[#allocation2 + $0x10] sm:$0xff]
        %v1228 = vld [vmem:[#allocation2 + $0x30] sm:$0xff]
        %v1229 = vld [vmem:[#allocation2 + $0x38] sm:$0xff]
        %v1230 = vld [vmem:[#allocation2 + $0x40] sm:$0xff]
        %1237 = vrot.lane.b32.xlu0 %v1225, 110
        %v1238 = vpop.permute.xlu0 %1237
        %1239 = vrot.lane.b32.xlu0 %v1226, 110
        %v1240 = vpop.permute.xlu0 %1239
        %1241 = vrot.lane.b32.xlu0 %v1227, 110
        %v1242 = vpop.permute.xlu0 %1241
        %1243 = vrot.lane.b32.xlu0 %v1228, 110
        %v1244 = vpop.permute.xlu0 %1243
        %1245 = vrot.lane.b32.xlu0 %v1229, 110
        %v1246 = vpop.permute.xlu0 %1245
        %1247 = vrot.lane.b32.xlu0 %v1230, 110
        %v1248 = vpop.permute.xlu0 %1247
        %vm1249 = vcmask 900096
        %v1250 = vsel %vm1249, %v1238, %v1240
        %v1251 = vsel %vm1249, %v1240, %v1242
        %v1252 = vsel %vm1249, %v1244, %v1246
        %v1253 = vsel %vm1249, %v1246, %v1248
        %1258 = vst [vmem:[#allocation3 + $0x1c0] sm:$0xff] %v1250
        %1259 = vst [vmem:[#allocation3 + $0x1c8] sm:$0xff] %v1251
        %1260 = vst [vmem:[#allocation3 + $0x1e0] sm:$0xff] %v1252
        %1261 = vst [vmem:[#allocation3 + $0x1e8] sm:$0xff] %v1253
        %v1262 = vld [vmem:[#allocation2 + $0x10] sm:$0xff]
        %v1263 = vld [vmem:[#allocation2 + $0x18] sm:$0xff]
        %v1264 = vld [vmem:[#allocation2 + $0x20] sm:$0xff]
        %v1265 = vld [vmem:[#allocation2 + $0x40] sm:$0xff]
        %v1266 = vld [vmem:[#allocation2 + $0x48] sm:$0xff]
        %v1267 = vld [vmem:[#allocation2 + $0x50] sm:$0xff]
        %1274 = vrot.lane.b32.xlu0 %v1262, 42
        %v1275 = vpop.permute.xlu0 %1274
        %1276 = vrot.lane.b32.xlu0 %v1263, 42
        %v1277 = vpop.permute.xlu0 %1276
        %1278 = vrot.lane.b32.xlu0 %v1264, 42
        %v1279 = vpop.permute.xlu0 %1278
        %1280 = vrot.lane.b32.xlu0 %v1265, 42
        %v1281 = vpop.permute.xlu0 %1280
        %1282 = vrot.lane.b32.xlu0 %v1266, 42
        %v1283 = vpop.permute.xlu0 %1282
        %1284 = vrot.lane.b32.xlu0 %v1267, 42
        %v1285 = vpop.permute.xlu0 %1284
        %vm1286 = vcmask 343040
        %v1287 = vsel %vm1286, %v1275, %v1277
        %v1288 = vsel %vm1286, %v1277, %v1279
        %v1289 = vsel %vm1286, %v1281, %v1283
        %v1290 = vsel %vm1286, %v1283, %v1285
        %1295 = vst [vmem:[#allocation3 + $0x1d0] sm:$0xff] %v1287
        %1296 = vst [vmem:[#allocation3 + $0x1d8] sm:$0xff] %v1288
        %1297 = vst [vmem:[#allocation3 + $0x1f0] sm:$0xff] %v1289
        %1298 = vst [vmem:[#allocation3 + $0x1f8] sm:$0xff] %v1290
        %v1299 = vld [vmem:[#allocation2] sm:$0xff]
        %v1300 = vld [vmem:[#allocation2 + $0x8] sm:$0xff]
        %v1301 = vld [vmem:[#allocation2 + $0x10] sm:$0xff]
        %v1302 = vld [vmem:[#allocation2 + $0x30] sm:$0xff]
        %v1303 = vld [vmem:[#allocation2 + $0x38] sm:$0xff]
        %v1304 = vld [vmem:[#allocation2 + $0x40] sm:$0xff]
        %1305 = vrot.lane.b32.xlu0 %v315, 19
        %v1306 = vpop.permute.xlu0 %1305
        %1307 = vrot.lane.b32.xlu0 %v319, 19
        %v1308 = vpop.permute.xlu0 %1307
        %vm1309 = vcmask 154624
        %v1310 = vsel %vm1309, %v1306, %v1308
        %v1314 = vmul.f32 %v1299, %v1306
        %v1315 = vmul.f32 %v1300, %v1310
        %v1316 = vmul.f32 %v1301, %v1308
        %v1317 = vmul.f32 %v1302, %v1306
        %v1318 = vmul.f32 %v1303, %v1310
        %v1319 = vmul.f32 %v1304, %v1308
        %1326 = vrot.lane.b32.xlu0 %v1314, 109
        %v1327 = vpop.permute.xlu0 %1326
        %1328 = vrot.lane.b32.xlu0 %v1315, 109
        %v1329 = vpop.permute.xlu0 %1328
        %1330 = vrot.lane.b32.xlu0 %v1316, 109
        %v1331 = vpop.permute.xlu0 %1330
        %1332 = vrot.lane.b32.xlu0 %v1317, 109
        %v1333 = vpop.permute.xlu0 %1332
        %1334 = vrot.lane.b32.xlu0 %v1318, 109
        %v1335 = vpop.permute.xlu0 %1334
        %1336 = vrot.lane.b32.xlu0 %v1319, 109
        %v1337 = vpop.permute.xlu0 %1336
        %vm1338 = vcmask 891904
        %v1339 = vsel %vm1338, %v1327, %v1329
        %v1340 = vsel %vm1338, %v1329, %v1331
        %v1341 = vsel %vm1338, %v1333, %v1335
        %v1342 = vsel %vm1338, %v1335, %v1337
        %1347 = vst [vmem:[#allocation3 + $0x200] sm:$0xff] %v1339
        %1348 = vst [vmem:[#allocation3 + $0x208] sm:$0xff] %v1340
        %1349 = vst [vmem:[#allocation3 + $0x220] sm:$0xff] %v1341
        %1350 = vst [vmem:[#allocation3 + $0x228] sm:$0xff] %v1342
        %v1351 = vld [vmem:[#allocation2 + $0x10] sm:$0xff]
        %v1352 = vld [vmem:[#allocation2 + $0x18] sm:$0xff]
        %v1353 = vld [vmem:[#allocation2 + $0x20] sm:$0xff]
        %v1354 = vld [vmem:[#allocation2 + $0x40] sm:$0xff]
        %v1355 = vld [vmem:[#allocation2 + $0x48] sm:$0xff]
        %v1356 = vld [vmem:[#allocation2 + $0x50] sm:$0xff]
        %1357 = vrot.lane.b32.xlu0 %v315, 87
        %v1358 = vpop.permute.xlu0 %1357
        %1359 = vrot.lane.b32.xlu0 %v319, 87
        %v1360 = vpop.permute.xlu0 %1359
        %vm1361 = vcmask 711680
        %v1362 = vsel %vm1361, %v1358, %v1360
        %v1366 = vmul.f32 %v1351, %v1358
        %v1367 = vmul.f32 %v1352, %v1362
        %v1368 = vmul.f32 %v1353, %v1360
        %v1369 = vmul.f32 %v1354, %v1358
        %v1370 = vmul.f32 %v1355, %v1362
        %v1371 = vmul.f32 %v1356, %v1360
        %1378 = vrot.lane.b32.xlu0 %v1366, 41
        %v1379 = vpop.permute.xlu0 %1378
        %1380 = vrot.lane.b32.xlu0 %v1367, 41
        %v1381 = vpop.permute.xlu0 %1380
        %1382 = vrot.lane.b32.xlu0 %v1368, 41
        %v1383 = vpop.permute.xlu0 %1382
        %1384 = vrot.lane.b32.xlu0 %v1369, 41
        %v1385 = vpop.permute.xlu0 %1384
        %1386 = vrot.lane.b32.xlu0 %v1370, 41
        %v1387 = vpop.permute.xlu0 %1386
        %1388 = vrot.lane.b32.xlu0 %v1371, 41
        %v1389 = vpop.permute.xlu0 %1388
        %vm1390 = vcmask 334848
        %v1391 = vsel %vm1390, %v1379, %v1381
        %v1392 = vsel %vm1390, %v1381, %v1383
        %v1393 = vsel %vm1390, %v1385, %v1387
        %v1394 = vsel %vm1390, %v1387, %v1389
        %1399 = vst [vmem:[#allocation3 + $0x210] sm:$0xff] %v1391
        %1400 = vst [vmem:[#allocation3 + $0x218] sm:$0xff] %v1392
        %1401 = vst [vmem:[#allocation3 + $0x230] sm:$0xff] %v1393
        %1402 = vst [vmem:[#allocation3 + $0x238] sm:$0xff] %v1394
        %v1403 = vld [vmem:[#allocation2] sm:$0xff]
        %v1404 = vld [vmem:[#allocation2 + $0x8] sm:$0xff]
        %v1405 = vld [vmem:[#allocation2 + $0x10] sm:$0xff]
        %v1406 = vld [vmem:[#allocation2 + $0x30] sm:$0xff]
        %v1407 = vld [vmem:[#allocation2 + $0x38] sm:$0xff]
        %v1408 = vld [vmem:[#allocation2 + $0x40] sm:$0xff]
        %1409 = vrot.lane.b32.xlu0 %v326, 20
        %v1410 = vpop.permute.xlu0 %1409
        %1411 = vrot.lane.b32.xlu0 %v330, 20
        %v1412 = vpop.permute.xlu0 %1411
        %vm1413 = vcmask 162816
        %v1414 = vsel %vm1413, %v1410, %v1412
        %v1418 = vmul.f32 %v1403, %v1410
        %v1419 = vmul.f32 %v1404, %v1414
        %v1420 = vmul.f32 %v1405, %v1412
        %v1421 = vmul.f32 %v1406, %v1410
        %v1422 = vmul.f32 %v1407, %v1414
        %v1423 = vmul.f32 %v1408, %v1412
        %1430 = vrot.lane.b32.xlu0 %v1418, 108
        %v1431 = vpop.permute.xlu0 %1430
        %1432 = vrot.lane.b32.xlu0 %v1419, 108
        %v1433 = vpop.permute.xlu0 %1432
        %1434 = vrot.lane.b32.xlu0 %v1420, 108
        %v1435 = vpop.permute.xlu0 %1434
        %1436 = vrot.lane.b32.xlu0 %v1421, 108
        %v1437 = vpop.permute.xlu0 %1436
        %1438 = vrot.lane.b32.xlu0 %v1422, 108
        %v1439 = vpop.permute.xlu0 %1438
        %1440 = vrot.lane.b32.xlu0 %v1423, 108
        %v1441 = vpop.permute.xlu0 %1440
        %vm1442 = vcmask 883712
        %v1443 = vsel %vm1442, %v1431, %v1433
        %v1444 = vsel %vm1442, %v1433, %v1435
        %v1445 = vsel %vm1442, %v1437, %v1439
        %v1446 = vsel %vm1442, %v1439, %v1441
        %1451 = vst [vmem:[#allocation3 + $0x240] sm:$0xff] %v1443
        %1452 = vst [vmem:[#allocation3 + $0x248] sm:$0xff] %v1444
        %1453 = vst [vmem:[#allocation3 + $0x260] sm:$0xff] %v1445
        %1454 = vst [vmem:[#allocation3 + $0x268] sm:$0xff] %v1446
        %v1455 = vld [vmem:[#allocation2 + $0x10] sm:$0xff]
        %v1456 = vld [vmem:[#allocation2 + $0x18] sm:$0xff]
        %v1457 = vld [vmem:[#allocation2 + $0x20] sm:$0xff]
        %v1458 = vld [vmem:[#allocation2 + $0x40] sm:$0xff]
        %v1459 = vld [vmem:[#allocation2 + $0x48] sm:$0xff]
        %v1460 = vld [vmem:[#allocation2 + $0x50] sm:$0xff]
        %1461 = vrot.lane.b32.xlu0 %v326, 88
        %v1462 = vpop.permute.xlu0 %1461
        %1463 = vrot.lane.b32.xlu0 %v330, 88
        %v1464 = vpop.permute.xlu0 %1463
        %vm1465 = vcmask 719872
        %v1466 = vsel %vm1465, %v1462, %v1464
        %v1470 = vmul.f32 %v1455, %v1462
        %v1471 = vmul.f32 %v1456, %v1466
        %v1472 = vmul.f32 %v1457, %v1464
        %v1473 = vmul.f32 %v1458, %v1462
        %v1474 = vmul.f32 %v1459, %v1466
        %v1475 = vmul.f32 %v1460, %v1464
        %1482 = vrot.lane.b32.xlu0 %v1470, 40
        %v1483 = vpop.permute.xlu0 %1482
        %1484 = vrot.lane.b32.xlu0 %v1471, 40
        %v1485 = vpop.permute.xlu0 %1484
        %1486 = vrot.lane.b32.xlu0 %v1472, 40
        %v1487 = vpop.permute.xlu0 %1486
        %1488 = vrot.lane.b32.xlu0 %v1473, 40
        %v1489 = vpop.permute.xlu0 %1488
        %1490 = vrot.lane.b32.xlu0 %v1474, 40
        %v1491 = vpop.permute.xlu0 %1490
        %1492 = vrot.lane.b32.xlu0 %v1475, 40
        %v1493 = vpop.permute.xlu0 %1492
        %vm1494 = vcmask 326656
        %v1495 = vsel %vm1494, %v1483, %v1485
        %v1496 = vsel %vm1494, %v1485, %v1487
        %v1497 = vsel %vm1494, %v1489, %v1491
        %v1498 = vsel %vm1494, %v1491, %v1493
        %1503 = vst [vmem:[#allocation3 + $0x250] sm:$0xff] %v1495
        %1504 = vst [vmem:[#allocation3 + $0x258] sm:$0xff] %v1496
        %1505 = vst [vmem:[#allocation3 + $0x270] sm:$0xff] %v1497
        %1506 = vst [vmem:[#allocation3 + $0x278] sm:$0xff] %v1498
        %v1507 = vld [vmem:[#allocation2] sm:$0xff]
        %v1508 = vld [vmem:[#allocation2 + $0x8] sm:$0xff]
        %v1509 = vld [vmem:[#allocation2 + $0x10] sm:$0xff]
        %v1510 = vld [vmem:[#allocation2 + $0x30] sm:$0xff]
        %v1511 = vld [vmem:[#allocation2 + $0x38] sm:$0xff]
        %v1512 = vld [vmem:[#allocation2 + $0x40] sm:$0xff]
        %1513 = vrot.lane.b32.xlu0 %v291, 32
        %v1514 = vpop.permute.xlu0 %1513
        %1515 = vrot.lane.b32.xlu0 %v295, 32
        %v1516 = vpop.permute.xlu0 %1515
        %vm1517 = vcmask 261120
        %v1518 = vsel %vm1517, %v1514, %v1516
        %v1522 = vmul.f32 %v1507, %v1514
        %v1523 = vmul.f32 %v1508, %v1518
        %v1524 = vmul.f32 %v1509, %v1516
        %v1525 = vmul.f32 %v1510, %v1514
        %v1526 = vmul.f32 %v1511, %v1518
        %v1527 = vmul.f32 %v1512, %v1516
        %1534 = vrot.lane.b32.xlu0 %v1522, 96
        %v1535 = vpop.permute.xlu0 %1534
        %1536 = vrot.lane.b32.xlu0 %v1523, 96
        %v1537 = vpop.permute.xlu0 %1536
        %1538 = vrot.lane.b32.xlu0 %v1524, 96
        %v1539 = vpop.permute.xlu0 %1538
        %1540 = vrot.lane.b32.xlu0 %v1525, 96
        %v1541 = vpop.permute.xlu0 %1540
        %1542 = vrot.lane.b32.xlu0 %v1526, 96
        %v1543 = vpop.permute.xlu0 %1542
        %1544 = vrot.lane.b32.xlu0 %v1527, 96
        %v1545 = vpop.permute.xlu0 %1544
        %vm1546 = vcmask 785408
        %v1547 = vsel %vm1546, %v1535, %v1537
        %v1548 = vsel %vm1546, %v1537, %v1539
        %v1549 = vsel %vm1546, %v1541, %v1543
        %v1550 = vsel %vm1546, %v1543, %v1545
        %1555 = vst [vmem:[#allocation3 + $0x280] sm:$0xff] %v1547
        %1556 = vst [vmem:[#allocation3 + $0x288] sm:$0xff] %v1548
        %1557 = vst [vmem:[#allocation3 + $0x2a0] sm:$0xff] %v1549
        %1558 = vst [vmem:[#allocation3 + $0x2a8] sm:$0xff] %v1550
        %v1559 = vld [vmem:[#allocation2 + $0x10] sm:$0xff]
        %v1560 = vld [vmem:[#allocation2 + $0x18] sm:$0xff]
        %v1561 = vld [vmem:[#allocation2 + $0x20] sm:$0xff]
        %v1562 = vld [vmem:[#allocation2 + $0x40] sm:$0xff]
        %v1563 = vld [vmem:[#allocation2 + $0x48] sm:$0xff]
        %v1564 = vld [vmem:[#allocation2 + $0x50] sm:$0xff]
        %1565 = vrot.lane.b32.xlu0 %v291, 100
        %v1566 = vpop.permute.xlu0 %1565
        %1567 = vrot.lane.b32.xlu0 %v295, 100
        %v1568 = vpop.permute.xlu0 %1567
        %vm1569 = vcmask 818176
        %v1570 = vsel %vm1569, %v1566, %v1568
        %v1574 = vmul.f32 %v1559, %v1566
        %v1575 = vmul.f32 %v1560, %v1570
        %v1576 = vmul.f32 %v1561, %v1568
        %v1577 = vmul.f32 %v1562, %v1566
        %v1578 = vmul.f32 %v1563, %v1570
        %v1579 = vmul.f32 %v1564, %v1568
        %1586 = vrot.lane.b32.xlu0 %v1574, 28
        %v1587 = vpop.permute.xlu0 %1586
        %1588 = vrot.lane.b32.xlu0 %v1575, 28
        %v1589 = vpop.permute.xlu0 %1588
        %1590 = vrot.lane.b32.xlu0 %v1576, 28
        %v1591 = vpop.permute.xlu0 %1590
        %1592 = vrot.lane.b32.xlu0 %v1577, 28
        %v1593 = vpop.permute.xlu0 %1592
        %1594 = vrot.lane.b32.xlu0 %v1578, 28
        %v1595 = vpop.permute.xlu0 %1594
        %1596 = vrot.lane.b32.xlu0 %v1579, 28
        %v1597 = vpop.permute.xlu0 %1596
        %vm1598 = vcmask 228352
        %v1599 = vsel %vm1598, %v1587, %v1589
        %v1600 = vsel %vm1598, %v1589, %v1591
        %v1601 = vsel %vm1598, %v1593, %v1595
        %v1602 = vsel %vm1598, %v1595, %v1597
        %1607 = vst [vmem:[#allocation3 + $0x290] sm:$0xff] %v1599
        %1608 = vst [vmem:[#allocation3 + $0x298] sm:$0xff] %v1600
        %1609 = vst [vmem:[#allocation3 + $0x2b0] sm:$0xff] %v1601
        %1610 = vst [vmem:[#allocation3 + $0x2b8] sm:$0xff] %v1602
        %v1611 = vld [vmem:[#allocation2] sm:$0xff]
        %v1612 = vld [vmem:[#allocation2 + $0x8] sm:$0xff]
        %v1613 = vld [vmem:[#allocation2 + $0x10] sm:$0xff]
        %v1614 = vld [vmem:[#allocation2 + $0x30] sm:$0xff]
        %v1615 = vld [vmem:[#allocation2 + $0x38] sm:$0xff]
        %v1616 = vld [vmem:[#allocation2 + $0x40] sm:$0xff]
        %1617 = vrot.lane.b32.xlu0 %v304, 33
        %v1618 = vpop.permute.xlu0 %1617
        %1619 = vrot.lane.b32.xlu0 %v308, 33
        %v1620 = vpop.permute.xlu0 %1619
        %vm1621 = vcmask 269312
        %v1622 = vsel %vm1621, %v1618, %v1620
        %v1626 = vmul.f32 %v1611, %v1618
        %v1627 = vmul.f32 %v1612, %v1622
        %v1628 = vmul.f32 %v1613, %v1620
        %v1629 = vmul.f32 %v1614, %v1618
        %v1630 = vmul.f32 %v1615, %v1622
        %v1631 = vmul.f32 %v1616, %v1620
        %1638 = vrot.lane.b32.xlu0 %v1626, 95
        %v1639 = vpop.permute.xlu0 %1638
        %1640 = vrot.lane.b32.xlu0 %v1627, 95
        %v1641 = vpop.permute.xlu0 %1640
        %1642 = vrot.lane.b32.xlu0 %v1628, 95
        %v1643 = vpop.permute.xlu0 %1642
        %1644 = vrot.lane.b32.xlu0 %v1629, 95
        %v1645 = vpop.permute.xlu0 %1644
        %1646 = vrot.lane.b32.xlu0 %v1630, 95
        %v1647 = vpop.permute.xlu0 %1646
        %1648 = vrot.lane.b32.xlu0 %v1631, 95
        %v1649 = vpop.permute.xlu0 %1648
        %vm1650 = vcmask 777216
        %v1651 = vsel %vm1650, %v1639, %v1641
        %v1652 = vsel %vm1650, %v1641, %v1643
        %v1653 = vsel %vm1650, %v1645, %v1647
        %v1654 = vsel %vm1650, %v1647, %v1649
        %1659 = vst [vmem:[#allocation3 + $0x2c0] sm:$0xff] %v1651
        %1660 = vst [vmem:[#allocation3 + $0x2c8] sm:$0xff] %v1652
        %1661 = vst [vmem:[#allocation3 + $0x2e0] sm:$0xff] %v1653
        %1662 = vst [vmem:[#allocation3 + $0x2e8] sm:$0xff] %v1654
        %v1663 = vld [vmem:[#allocation2 + $0x10] sm:$0xff]
        %v1664 = vld [vmem:[#allocation2 + $0x18] sm:$0xff]
        %v1665 = vld [vmem:[#allocation2 + $0x20] sm:$0xff]
        %v1666 = vld [vmem:[#allocation2 + $0x40] sm:$0xff]
        %v1667 = vld [vmem:[#allocation2 + $0x48] sm:$0xff]
        %v1668 = vld [vmem:[#allocation2 + $0x50] sm:$0xff]
        %1669 = vrot.lane.b32.xlu0 %v304, 101
        %v1670 = vpop.permute.xlu0 %1669
        %1671 = vrot.lane.b32.xlu0 %v308, 101
        %v1672 = vpop.permute.xlu0 %1671
        %vm1673 = vcmask 826368
        %v1674 = vsel %vm1673, %v1670, %v1672
        %v1678 = vmul.f32 %v1663, %v1670
        %v1679 = vmul.f32 %v1664, %v1674
        %v1680 = vmul.f32 %v1665, %v1672
        %v1681 = vmul.f32 %v1666, %v1670
        %v1682 = vmul.f32 %v1667, %v1674
        %v1683 = vmul.f32 %v1668, %v1672
        %1690 = vrot.lane.b32.xlu0 %v1678, 27
        %v1691 = vpop.permute.xlu0 %1690
        %1692 = vrot.lane.b32.xlu0 %v1679, 27
        %v1693 = vpop.permute.xlu0 %1692
        %1694 = vrot.lane.b32.xlu0 %v1680, 27
        %v1695 = vpop.permute.xlu0 %1694
        %1696 = vrot.lane.b32.xlu0 %v1681, 27
        %v1697 = vpop.permute.xlu0 %1696
        %1698 = vrot.lane.b32.xlu0 %v1682, 27
        %v1699 = vpop.permute.xlu0 %1698
        %1700 = vrot.lane.b32.xlu0 %v1683, 27
        %v1701 = vpop.permute.xlu0 %1700
        %vm1702 = vcmask 220160
        %v1703 = vsel %vm1702, %v1691, %v1693
        %v1704 = vsel %vm1702, %v1693, %v1695
        %v1705 = vsel %vm1702, %v1697, %v1699
        %v1706 = vsel %vm1702, %v1699, %v1701
        %1711 = vst [vmem:[#allocation3 + $0x2d0] sm:$0xff] %v1703
        %1712 = vst [vmem:[#allocation3 + $0x2d8] sm:$0xff] %v1704
        %1713 = vst [vmem:[#allocation3 + $0x2f0] sm:$0xff] %v1705
        %1714 = vst [vmem:[#allocation3 + $0x2f8] sm:$0xff] %v1706
        %v1715 = vld [vmem:[#allocation2] sm:$0xff]
        %v1716 = vld [vmem:[#allocation2 + $0x8] sm:$0xff]
        %v1717 = vld [vmem:[#allocation2 + $0x10] sm:$0xff]
        %v1718 = vld [vmem:[#allocation2 + $0x30] sm:$0xff]
        %v1719 = vld [vmem:[#allocation2 + $0x38] sm:$0xff]
        %v1720 = vld [vmem:[#allocation2 + $0x40] sm:$0xff]
        %1727 = vrot.lane.b32.xlu0 %v1715, 94
        %v1728 = vpop.permute.xlu0 %1727
        %1729 = vrot.lane.b32.xlu0 %v1716, 94
        %v1730 = vpop.permute.xlu0 %1729
        %1731 = vrot.lane.b32.xlu0 %v1717, 94
        %v1732 = vpop.permute.xlu0 %1731
        %1733 = vrot.lane.b32.xlu0 %v1718, 94
        %v1734 = vpop.permute.xlu0 %1733
        %1735 = vrot.lane.b32.xlu0 %v1719, 94
        %v1736 = vpop.permute.xlu0 %1735
        %1737 = vrot.lane.b32.xlu0 %v1720, 94
        %v1738 = vpop.permute.xlu0 %1737
        %vm1739 = vcmask 769024
        %v1740 = vsel %vm1739, %v1728, %v1730
        %v1741 = vsel %vm1739, %v1730, %v1732
        %v1742 = vsel %vm1739, %v1734, %v1736
        %v1743 = vsel %vm1739, %v1736, %v1738
        %1748 = vst [vmem:[#allocation3 + $0x300] sm:$0xff] %v1740
        %1749 = vst [vmem:[#allocation3 + $0x308] sm:$0xff] %v1741
        %1750 = vst [vmem:[#allocation3 + $0x320] sm:$0xff] %v1742
        %1751 = vst [vmem:[#allocation3 + $0x328] sm:$0xff] %v1743
        %v1752 = vld [vmem:[#allocation2 + $0x10] sm:$0xff]
        %v1753 = vld [vmem:[#allocation2 + $0x18] sm:$0xff]
        %v1754 = vld [vmem:[#allocation2 + $0x20] sm:$0xff]
        %v1755 = vld [vmem:[#allocation2 + $0x40] sm:$0xff]
        %v1756 = vld [vmem:[#allocation2 + $0x48] sm:$0xff]
        %v1757 = vld [vmem:[#allocation2 + $0x50] sm:$0xff]
        %1764 = vrot.lane.b32.xlu0 %v1752, 26
        %v1765 = vpop.permute.xlu0 %1764
        %1766 = vrot.lane.b32.xlu0 %v1753, 26
        %v1767 = vpop.permute.xlu0 %1766
        %1768 = vrot.lane.b32.xlu0 %v1754, 26
        %v1769 = vpop.permute.xlu0 %1768
        %1770 = vrot.lane.b32.xlu0 %v1755, 26
        %v1771 = vpop.permute.xlu0 %1770
        %1772 = vrot.lane.b32.xlu0 %v1756, 26
        %v1773 = vpop.permute.xlu0 %1772
        %1774 = vrot.lane.b32.xlu0 %v1757, 26
        %v1775 = vpop.permute.xlu0 %1774
        %vm1776 = vcmask 211968
        %v1777 = vsel %vm1776, %v1765, %v1767
        %v1778 = vsel %vm1776, %v1767, %v1769
        %v1779 = vsel %vm1776, %v1771, %v1773
        %v1780 = vsel %vm1776, %v1773, %v1775
        %1785 = vst [vmem:[#allocation3 + $0x310] sm:$0xff] %v1777
        %1786 = vst [vmem:[#allocation3 + $0x318] sm:$0xff] %v1778
        %1787 = vst [vmem:[#allocation3 + $0x330] sm:$0xff] %v1779
        %1788 = vst [vmem:[#allocation3 + $0x338] sm:$0xff] %v1780
        %v1789 = vld [vmem:[#allocation2] sm:$0xff]
        %v1790 = vld [vmem:[#allocation2 + $0x8] sm:$0xff]
        %v1791 = vld [vmem:[#allocation2 + $0x10] sm:$0xff]
        %v1792 = vld [vmem:[#allocation2 + $0x30] sm:$0xff]
        %v1793 = vld [vmem:[#allocation2 + $0x38] sm:$0xff]
        %v1794 = vld [vmem:[#allocation2 + $0x40] sm:$0xff]
        %1795 = vrot.lane.b32.xlu0 %v315, 35
        %v1796 = vpop.permute.xlu0 %1795
        %1797 = vrot.lane.b32.xlu0 %v319, 35
        %v1798 = vpop.permute.xlu0 %1797
        %vm1799 = vcmask 285696
        %v1800 = vsel %vm1799, %v1796, %v1798
        %v1804 = vmul.f32 %v1789, %v1796
        %v1805 = vmul.f32 %v1790, %v1800
        %v1806 = vmul.f32 %v1791, %v1798
        %v1807 = vmul.f32 %v1792, %v1796
        %v1808 = vmul.f32 %v1793, %v1800
        %v1809 = vmul.f32 %v1794, %v1798
        %1816 = vrot.lane.b32.xlu0 %v1804, 93
        %v1817 = vpop.permute.xlu0 %1816
        %1818 = vrot.lane.b32.xlu0 %v1805, 93
        %v1819 = vpop.permute.xlu0 %1818
        %1820 = vrot.lane.b32.xlu0 %v1806, 93
        %v1821 = vpop.permute.xlu0 %1820
        %1822 = vrot.lane.b32.xlu0 %v1807, 93
        %v1823 = vpop.permute.xlu0 %1822
        %1824 = vrot.lane.b32.xlu0 %v1808, 93
        %v1825 = vpop.permute.xlu0 %1824
        %1826 = vrot.lane.b32.xlu0 %v1809, 93
        %v1827 = vpop.permute.xlu0 %1826
        %vm1828 = vcmask 760832
        %v1829 = vsel %vm1828, %v1817, %v1819
        %v1830 = vsel %vm1828, %v1819, %v1821
        %v1831 = vsel %vm1828, %v1823, %v1825
        %v1832 = vsel %vm1828, %v1825, %v1827
        %1837 = vst [vmem:[#allocation3 + $0x340] sm:$0xff] %v1829
        %1838 = vst [vmem:[#allocation3 + $0x348] sm:$0xff] %v1830
        %1839 = vst [vmem:[#allocation3 + $0x360] sm:$0xff] %v1831
        %1840 = vst [vmem:[#allocation3 + $0x368] sm:$0xff] %v1832
        %v1841 = vld [vmem:[#allocation2 + $0x10] sm:$0xff]
        %v1842 = vld [vmem:[#allocation2 + $0x18] sm:$0xff]
        %v1843 = vld [vmem:[#allocation2 + $0x20] sm:$0xff]
        %v1844 = vld [vmem:[#allocation2 + $0x40] sm:$0xff]
        %v1845 = vld [vmem:[#allocation2 + $0x48] sm:$0xff]
        %v1846 = vld [vmem:[#allocation2 + $0x50] sm:$0xff]
        %1847 = vrot.lane.b32.xlu0 %v315, 103
        %v1848 = vpop.permute.xlu0 %1847
        %1849 = vrot.lane.b32.xlu0 %v319, 103
        %v1850 = vpop.permute.xlu0 %1849
        %vm1851 = vcmask 842752
        %v1852 = vsel %vm1851, %v1848, %v1850
        %v1856 = vmul.f32 %v1841, %v1848
        %v1857 = vmul.f32 %v1842, %v1852
        %v1858 = vmul.f32 %v1843, %v1850
        %v1859 = vmul.f32 %v1844, %v1848
        %v1860 = vmul.f32 %v1845, %v1852
        %v1861 = vmul.f32 %v1846, %v1850
        %1868 = vrot.lane.b32.xlu0 %v1856, 25
        %v1869 = vpop.permute.xlu0 %1868
        %1870 = vrot.lane.b32.xlu0 %v1857, 25
        %v1871 = vpop.permute.xlu0 %1870
        %1872 = vrot.lane.b32.xlu0 %v1858, 25
        %v1873 = vpop.permute.xlu0 %1872
        %1874 = vrot.lane.b32.xlu0 %v1859, 25
        %v1875 = vpop.permute.xlu0 %1874
        %1876 = vrot.lane.b32.xlu0 %v1860, 25
        %v1877 = vpop.permute.xlu0 %1876
        %1878 = vrot.lane.b32.xlu0 %v1861, 25
        %v1879 = vpop.permute.xlu0 %1878
        %vm1880 = vcmask 203776
        %v1881 = vsel %vm1880, %v1869, %v1871
        %v1882 = vsel %vm1880, %v1871, %v1873
        %v1883 = vsel %vm1880, %v1875, %v1877
        %v1884 = vsel %vm1880, %v1877, %v1879
        %1889 = vst [vmem:[#allocation3 + $0x350] sm:$0xff] %v1881
        %1890 = vst [vmem:[#allocation3 + $0x358] sm:$0xff] %v1882
        %1891 = vst [vmem:[#allocation3 + $0x370] sm:$0xff] %v1883
        %1892 = vst [vmem:[#allocation3 + $0x378] sm:$0xff] %v1884
        %v1893 = vld [vmem:[#allocation2] sm:$0xff]
        %v1894 = vld [vmem:[#allocation2 + $0x8] sm:$0xff]
        %v1895 = vld [vmem:[#allocation2 + $0x10] sm:$0xff]
        %v1896 = vld [vmem:[#allocation2 + $0x30] sm:$0xff]
        %v1897 = vld [vmem:[#allocation2 + $0x38] sm:$0xff]
        %v1898 = vld [vmem:[#allocation2 + $0x40] sm:$0xff]
        %1899 = vrot.lane.b32.xlu0 %v326, 36
        %v1900 = vpop.permute.xlu0 %1899
        %1901 = vrot.lane.b32.xlu0 %v330, 36
        %v1902 = vpop.permute.xlu0 %1901
        %vm1903 = vcmask 293888
        %v1904 = vsel %vm1903, %v1900, %v1902
        %v1908 = vmul.f32 %v1893, %v1900
        %v1909 = vmul.f32 %v1894, %v1904
        %v1910 = vmul.f32 %v1895, %v1902
        %v1911 = vmul.f32 %v1896, %v1900
        %v1912 = vmul.f32 %v1897, %v1904
        %v1913 = vmul.f32 %v1898, %v1902
        %1920 = vrot.lane.b32.xlu0 %v1908, 92
        %v1921 = vpop.permute.xlu0 %1920
        %1922 = vrot.lane.b32.xlu0 %v1909, 92
        %v1923 = vpop.permute.xlu0 %1922
        %1924 = vrot.lane.b32.xlu0 %v1910, 92
        %v1925 = vpop.permute.xlu0 %1924
        %1926 = vrot.lane.b32.xlu0 %v1911, 92
        %v1927 = vpop.permute.xlu0 %1926
        %1928 = vrot.lane.b32.xlu0 %v1912, 92
        %v1929 = vpop.permute.xlu0 %1928
        %1930 = vrot.lane.b32.xlu0 %v1913, 92
        %v1931 = vpop.permute.xlu0 %1930
        %vm1932 = vcmask 752640
        %v1933 = vsel %vm1932, %v1921, %v1923
        %v1934 = vsel %vm1932, %v1923, %v1925
        %v1935 = vsel %vm1932, %v1927, %v1929
        %v1936 = vsel %vm1932, %v1929, %v1931
        %1941 = vst [vmem:[#allocation3 + $0x380] sm:$0xff] %v1933
        %1942 = vst [vmem:[#allocation3 + $0x388] sm:$0xff] %v1934
        %1943 = vst [vmem:[#allocation3 + $0x3a0] sm:$0xff] %v1935
        %1944 = vst [vmem:[#allocation3 + $0x3a8] sm:$0xff] %v1936
        %v1945 = vld [vmem:[#allocation2 + $0x10] sm:$0xff]
        %v1946 = vld [vmem:[#allocation2 + $0x18] sm:$0xff]
        %v1947 = vld [vmem:[#allocation2 + $0x20] sm:$0xff]
        %v1948 = vld [vmem:[#allocation2 + $0x40] sm:$0xff]
        %v1949 = vld [vmem:[#allocation2 + $0x48] sm:$0xff]
        %v1950 = vld [vmem:[#allocation2 + $0x50] sm:$0xff]
        %1951 = vrot.lane.b32.xlu0 %v326, 104
        %v1952 = vpop.permute.xlu0 %1951
        %1953 = vrot.lane.b32.xlu0 %v330, 104
        %v1954 = vpop.permute.xlu0 %1953
        %vm1955 = vcmask 850944
        %v1956 = vsel %vm1955, %v1952, %v1954
        %v1960 = vmul.f32 %v1945, %v1952
        %v1961 = vmul.f32 %v1946, %v1956
        %v1962 = vmul.f32 %v1947, %v1954
        %v1963 = vmul.f32 %v1948, %v1952
        %v1964 = vmul.f32 %v1949, %v1956
        %v1965 = vmul.f32 %v1950, %v1954
        %1972 = vrot.lane.b32.xlu0 %v1960, 24
        %v1973 = vpop.permute.xlu0 %1972
        %1974 = vrot.lane.b32.xlu0 %v1961, 24
        %v1975 = vpop.permute.xlu0 %1974
        %1976 = vrot.lane.b32.xlu0 %v1962, 24
        %v1977 = vpop.permute.xlu0 %1976
        %1978 = vrot.lane.b32.xlu0 %v1963, 24
        %v1979 = vpop.permute.xlu0 %1978
        %1980 = vrot.lane.b32.xlu0 %v1964, 24
        %v1981 = vpop.permute.xlu0 %1980
        %1982 = vrot.lane.b32.xlu0 %v1965, 24
        %v1983 = vpop.permute.xlu0 %1982
        %vm1984 = vcmask 195584
        %v1985 = vsel %vm1984, %v1973, %v1975
        %v1986 = vsel %vm1984, %v1975, %v1977
        %v1987 = vsel %vm1984, %v1979, %v1981
        %v1988 = vsel %vm1984, %v1981, %v1983
        %1993 = vst [vmem:[#allocation3 + $0x390] sm:$0xff] %v1985
        %1994 = vst [vmem:[#allocation3 + $0x398] sm:$0xff] %v1986
        %1995 = vst [vmem:[#allocation3 + $0x3b0] sm:$0xff] %v1987
        %1996 = vst [vmem:[#allocation3 + $0x3b8] sm:$0xff] %v1988
        %v1997 = vld [vmem:[#allocation2] sm:$0xff]
        %v1998 = vld [vmem:[#allocation2 + $0x8] sm:$0xff]
        %v1999 = vld [vmem:[#allocation2 + $0x10] sm:$0xff]
        %v2000 = vld [vmem:[#allocation2 + $0x30] sm:$0xff]
        %v2001 = vld [vmem:[#allocation2 + $0x38] sm:$0xff]
        %v2002 = vld [vmem:[#allocation2 + $0x40] sm:$0xff]
        %2003 = vrot.lane.b32.xlu0 %v291, 48
        %v2004 = vpop.permute.xlu0 %2003
        %2005 = vrot.lane.b32.xlu0 %v295, 48
        %v2006 = vpop.permute.xlu0 %2005
        %vm2007 = vcmask 392192
        %v2008 = vsel %vm2007, %v2004, %v2006
        %v2012 = vmul.f32 %v1997, %v2004
        %v2013 = vmul.f32 %v1998, %v2008
        %v2014 = vmul.f32 %v1999, %v2006
        %v2015 = vmul.f32 %v2000, %v2004
        %v2016 = vmul.f32 %v2001, %v2008
        %v2017 = vmul.f32 %v2002, %v2006
        %2024 = vrot.lane.b32.xlu0 %v2012, 80
        %v2025 = vpop.permute.xlu0 %2024
        %2026 = vrot.lane.b32.xlu0 %v2013, 80
        %v2027 = vpop.permute.xlu0 %2026
        %2028 = vrot.lane.b32.xlu0 %v2014, 80
        %v2029 = vpop.permute.xlu0 %2028
        %2030 = vrot.lane.b32.xlu0 %v2015, 80
        %v2031 = vpop.permute.xlu0 %2030
        %2032 = vrot.lane.b32.xlu0 %v2016, 80
        %v2033 = vpop.permute.xlu0 %2032
        %2034 = vrot.lane.b32.xlu0 %v2017, 80
        %v2035 = vpop.permute.xlu0 %2034
        %vm2036 = vcmask 654336
        %v2037 = vsel %vm2036, %v2025, %v2027
        %v2038 = vsel %vm2036, %v2027, %v2029
        %v2039 = vsel %vm2036, %v2031, %v2033
        %v2040 = vsel %vm2036, %v2033, %v2035
        %2045 = vst [vmem:[#allocation3 + $0x3c0] sm:$0xff] %v2037
        %2046 = vst [vmem:[#allocation3 + $0x3c8] sm:$0xff] %v2038
        %2047 = vst [vmem:[#allocation3 + $0x3e0] sm:$0xff] %v2039
        %2048 = vst [vmem:[#allocation3 + $0x3e8] sm:$0xff] %v2040
        %v2049 = vld [vmem:[#allocation2 + $0x10] sm:$0xff]
        %v2050 = vld [vmem:[#allocation2 + $0x18] sm:$0xff]
        %v2051 = vld [vmem:[#allocation2 + $0x20] sm:$0xff]
        %v2052 = vld [vmem:[#allocation2 + $0x40] sm:$0xff]
        %v2053 = vld [vmem:[#allocation2 + $0x48] sm:$0xff]
        %v2054 = vld [vmem:[#allocation2 + $0x50] sm:$0xff]
        %2055 = vrot.lane.b32.xlu0 %v291, 116
        %v2056 = vpop.permute.xlu0 %2055
        %2057 = vrot.lane.b32.xlu0 %v295, 116
        %v2058 = vpop.permute.xlu0 %2057
        %vm2059 = vcmask 949248
        %v2060 = vsel %vm2059, %v2056, %v2058
        %v2064 = vmul.f32 %v2049, %v2056
        %v2065 = vmul.f32 %v2050, %v2060
        %v2066 = vmul.f32 %v2051, %v2058
        %v2067 = vmul.f32 %v2052, %v2056
        %v2068 = vmul.f32 %v2053, %v2060
        %v2069 = vmul.f32 %v2054, %v2058
        %2076 = vrot.lane.b32.xlu0 %v2064, 12
        %v2077 = vpop.permute.xlu0 %2076
        %2078 = vrot.lane.b32.xlu0 %v2065, 12
        %v2079 = vpop.permute.xlu0 %2078
        %2080 = vrot.lane.b32.xlu0 %v2066, 12
        %v2081 = vpop.permute.xlu0 %2080
        %2082 = vrot.lane.b32.xlu0 %v2067, 12
        %v2083 = vpop.permute.xlu0 %2082
        %2084 = vrot.lane.b32.xlu0 %v2068, 12
        %v2085 = vpop.permute.xlu0 %2084
        %2086 = vrot.lane.b32.xlu0 %v2069, 12
        %v2087 = vpop.permute.xlu0 %2086
        %vm2088 = vcmask 97280
        %v2089 = vsel %vm2088, %v2077, %v2079
        %v2090 = vsel %vm2088, %v2079, %v2081
        %v2091 = vsel %vm2088, %v2083, %v2085
        %v2092 = vsel %vm2088, %v2085, %v2087
        %2097 = vst [vmem:[#allocation3 + $0x3d0] sm:$0xff] %v2089
        %2098 = vst [vmem:[#allocation3 + $0x3d8] sm:$0xff] %v2090
        %2099 = vst [vmem:[#allocation3 + $0x3f0] sm:$0xff] %v2091
        %2100 = vst [vmem:[#allocation3 + $0x3f8] sm:$0xff] %v2092
        %v2101 = vld [vmem:[#allocation2] sm:$0xff]
        %v2102 = vld [vmem:[#allocation2 + $0x8] sm:$0xff]
        %v2103 = vld [vmem:[#allocation2 + $0x10] sm:$0xff]
        %v2104 = vld [vmem:[#allocation2 + $0x30] sm:$0xff]
        %v2105 = vld [vmem:[#allocation2 + $0x38] sm:$0xff]
        %v2106 = vld [vmem:[#allocation2 + $0x40] sm:$0xff]
        %2107 = vrot.lane.b32.xlu0 %v304, 49
        %v2108 = vpop.permute.xlu0 %2107
        %2109 = vrot.lane.b32.xlu0 %v308, 49
        %v2110 = vpop.permute.xlu0 %2109
        %vm2111 = vcmask 400384
        %v2112 = vsel %vm2111, %v2108, %v2110
        %v2116 = vmul.f32 %v2101, %v2108
        %v2117 = vmul.f32 %v2102, %v2112
        %v2118 = vmul.f32 %v2103, %v2110
        %v2119 = vmul.f32 %v2104, %v2108
        %v2120 = vmul.f32 %v2105, %v2112
        %v2121 = vmul.f32 %v2106, %v2110
        %2128 = vrot.lane.b32.xlu0 %v2116, 79
        %v2129 = vpop.permute.xlu0 %2128
        %2130 = vrot.lane.b32.xlu0 %v2117, 79
        %v2131 = vpop.permute.xlu0 %2130
        %2132 = vrot.lane.b32.xlu0 %v2118, 79
        %v2133 = vpop.permute.xlu0 %2132
        %2134 = vrot.lane.b32.xlu0 %v2119, 79
        %v2135 = vpop.permute.xlu0 %2134
        %2136 = vrot.lane.b32.xlu0 %v2120, 79
        %v2137 = vpop.permute.xlu0 %2136
        %2138 = vrot.lane.b32.xlu0 %v2121, 79
        %v2139 = vpop.permute.xlu0 %2138
        %vm2140 = vcmask 646144
        %v2141 = vsel %vm2140, %v2129, %v2131
        %v2142 = vsel %vm2140, %v2131, %v2133
        %v2143 = vsel %vm2140, %v2135, %v2137
        %v2144 = vsel %vm2140, %v2137, %v2139
        %2149 = vst [vmem:[#allocation3 + $0x400] sm:$0xff] %v2141
        %2150 = vst [vmem:[#allocation3 + $0x408] sm:$0xff] %v2142
        %2151 = vst [vmem:[#allocation3 + $0x420] sm:$0xff] %v2143
        %2152 = vst [vmem:[#allocation3 + $0x428] sm:$0xff] %v2144
        %v2153 = vld [vmem:[#allocation2 + $0x10] sm:$0xff]
        %v2154 = vld [vmem:[#allocation2 + $0x18] sm:$0xff]
        %v2155 = vld [vmem:[#allocation2 + $0x20] sm:$0xff]
        %v2156 = vld [vmem:[#allocation2 + $0x40] sm:$0xff]
        %v2157 = vld [vmem:[#allocation2 + $0x48] sm:$0xff]
        %v2158 = vld [vmem:[#allocation2 + $0x50] sm:$0xff]
        %2159 = vrot.lane.b32.xlu0 %v304, 117
        %v2160 = vpop.permute.xlu0 %2159
        %2161 = vrot.lane.b32.xlu0 %v308, 117
        %v2162 = vpop.permute.xlu0 %2161
        %vm2163 = vcmask 957440
        %v2164 = vsel %vm2163, %v2160, %v2162
        %v2168 = vmul.f32 %v2153, %v2160
        %v2169 = vmul.f32 %v2154, %v2164
        %v2170 = vmul.f32 %v2155, %v2162
        %v2171 = vmul.f32 %v2156, %v2160
        %v2172 = vmul.f32 %v2157, %v2164
        %v2173 = vmul.f32 %v2158, %v2162
        %2180 = vrot.lane.b32.xlu0 %v2168, 11
        %v2181 = vpop.permute.xlu0 %2180
        %2182 = vrot.lane.b32.xlu0 %v2169, 11
        %v2183 = vpop.permute.xlu0 %2182
        %2184 = vrot.lane.b32.xlu0 %v2170, 11
        %v2185 = vpop.permute.xlu0 %2184
        %2186 = vrot.lane.b32.xlu0 %v2171, 11
        %v2187 = vpop.permute.xlu0 %2186
        %2188 = vrot.lane.b32.xlu0 %v2172, 11
        %v2189 = vpop.permute.xlu0 %2188
        %2190 = vrot.lane.b32.xlu0 %v2173, 11
        %v2191 = vpop.permute.xlu0 %2190
        %vm2192 = vcmask 89088
        %v2193 = vsel %vm2192, %v2181, %v2183
        %v2194 = vsel %vm2192, %v2183, %v2185
        %v2195 = vsel %vm2192, %v2187, %v2189
        %v2196 = vsel %vm2192, %v2189, %v2191
        %2201 = vst [vmem:[#allocation3 + $0x410] sm:$0xff] %v2193
        %2202 = vst [vmem:[#allocation3 + $0x418] sm:$0xff] %v2194
        %2203 = vst [vmem:[#allocation3 + $0x430] sm:$0xff] %v2195
        %2204 = vst [vmem:[#allocation3 + $0x438] sm:$0xff] %v2196
        %v2205 = vld [vmem:[#allocation2] sm:$0xff]
        %v2206 = vld [vmem:[#allocation2 + $0x8] sm:$0xff]
        %v2207 = vld [vmem:[#allocation2 + $0x10] sm:$0xff]
        %v2208 = vld [vmem:[#allocation2 + $0x30] sm:$0xff]
        %v2209 = vld [vmem:[#allocation2 + $0x38] sm:$0xff]
        %v2210 = vld [vmem:[#allocation2 + $0x40] sm:$0xff]
        %2217 = vrot.lane.b32.xlu0 %v2205, 78
        %v2218 = vpop.permute.xlu0 %2217
        %2219 = vrot.lane.b32.xlu0 %v2206, 78
        %v2220 = vpop.permute.xlu0 %2219
        %2221 = vrot.lane.b32.xlu0 %v2207, 78
        %v2222 = vpop.permute.xlu0 %2221
        %2223 = vrot.lane.b32.xlu0 %v2208, 78
        %v2224 = vpop.permute.xlu0 %2223
        %2225 = vrot.lane.b32.xlu0 %v2209, 78
        %v2226 = vpop.permute.xlu0 %2225
        %2227 = vrot.lane.b32.xlu0 %v2210, 78
        %v2228 = vpop.permute.xlu0 %2227
        %vm2229 = vcmask 637952
        %v2230 = vsel %vm2229, %v2218, %v2220
        %v2231 = vsel %vm2229, %v2220, %v2222
        %v2232 = vsel %vm2229, %v2224, %v2226
        %v2233 = vsel %vm2229, %v2226, %v2228
        %2238 = vst [vmem:[#allocation3 + $0x440] sm:$0xff] %v2230
        %2239 = vst [vmem:[#allocation3 + $0x448] sm:$0xff] %v2231
        %2240 = vst [vmem:[#allocation3 + $0x460] sm:$0xff] %v2232
        %2241 = vst [vmem:[#allocation3 + $0x468] sm:$0xff] %v2233
        %v2242 = vld [vmem:[#allocation2 + $0x10] sm:$0xff]
        %v2243 = vld [vmem:[#allocation2 + $0x18] sm:$0xff]
        %v2244 = vld [vmem:[#allocation2 + $0x20] sm:$0xff]
        %v2245 = vld [vmem:[#allocation2 + $0x40] sm:$0xff]
        %v2246 = vld [vmem:[#allocation2 + $0x48] sm:$0xff]
        %v2247 = vld [vmem:[#allocation2 + $0x50] sm:$0xff]
        %2254 = vrot.lane.b32.xlu0 %v2242, 10
        %v2255 = vpop.permute.xlu0 %2254
        %2256 = vrot.lane.b32.xlu0 %v2243, 10
        %v2257 = vpop.permute.xlu0 %2256
        %2258 = vrot.lane.b32.xlu0 %v2244, 10
        %v2259 = vpop.permute.xlu0 %2258
        %2260 = vrot.lane.b32.xlu0 %v2245, 10
        %v2261 = vpop.permute.xlu0 %2260
        %2262 = vrot.lane.b32.xlu0 %v2246, 10
        %v2263 = vpop.permute.xlu0 %2262
        %2264 = vrot.lane.b32.xlu0 %v2247, 10
        %v2265 = vpop.permute.xlu0 %2264
        %vm2266 = vcmask 80896
        %v2267 = vsel %vm2266, %v2255, %v2257
        %v2268 = vsel %vm2266, %v2257, %v2259
        %v2269 = vsel %vm2266, %v2261, %v2263
        %v2270 = vsel %vm2266, %v2263, %v2265
        %2275 = vst [vmem:[#allocation3 + $0x450] sm:$0xff] %v2267
        %2276 = vst [vmem:[#allocation3 + $0x458] sm:$0xff] %v2268
        %2277 = vst [vmem:[#allocation3 + $0x470] sm:$0xff] %v2269
        %2278 = vst [vmem:[#allocation3 + $0x478] sm:$0xff] %v2270
        %v2279 = vld [vmem:[#allocation2] sm:$0xff]
        %v2280 = vld [vmem:[#allocation2 + $0x8] sm:$0xff]
        %v2281 = vld [vmem:[#allocation2 + $0x10] sm:$0xff]
        %v2282 = vld [vmem:[#allocation2 + $0x30] sm:$0xff]
        %v2283 = vld [vmem:[#allocation2 + $0x38] sm:$0xff]
        %v2284 = vld [vmem:[#allocation2 + $0x40] sm:$0xff]
        %2285 = vrot.lane.b32.xlu0 %v315, 51
        %v2286 = vpop.permute.xlu0 %2285
        %2287 = vrot.lane.b32.xlu0 %v319, 51
        %v2288 = vpop.permute.xlu0 %2287
        %vm2289 = vcmask 416768
        %v2290 = vsel %vm2289, %v2286, %v2288
        %v2294 = vmul.f32 %v2279, %v2286
        %v2295 = vmul.f32 %v2280, %v2290
        %v2296 = vmul.f32 %v2281, %v2288
        %v2297 = vmul.f32 %v2282, %v2286
        %v2298 = vmul.f32 %v2283, %v2290
        %v2299 = vmul.f32 %v2284, %v2288
        %2306 = vrot.lane.b32.xlu0 %v2294, 77
        %v2307 = vpop.permute.xlu0 %2306
        %2308 = vrot.lane.b32.xlu0 %v2295, 77
        %v2309 = vpop.permute.xlu0 %2308
        %2310 = vrot.lane.b32.xlu0 %v2296, 77
        %v2311 = vpop.permute.xlu0 %2310
        %2312 = vrot.lane.b32.xlu0 %v2297, 77
        %v2313 = vpop.permute.xlu0 %2312
        %2314 = vrot.lane.b32.xlu0 %v2298, 77
        %v2315 = vpop.permute.xlu0 %2314
        %2316 = vrot.lane.b32.xlu0 %v2299, 77
        %v2317 = vpop.permute.xlu0 %2316
        %vm2318 = vcmask 629760
        %v2319 = vsel %vm2318, %v2307, %v2309
        %v2320 = vsel %vm2318, %v2309, %v2311
        %v2321 = vsel %vm2318, %v2313, %v2315
        %v2322 = vsel %vm2318, %v2315, %v2317
        %2327 = vst [vmem:[#allocation3 + $0x480] sm:$0xff] %v2319
        %2328 = vst [vmem:[#allocation3 + $0x488] sm:$0xff] %v2320
        %2329 = vst [vmem:[#allocation3 + $0x4a0] sm:$0xff] %v2321
        %2330 = vst [vmem:[#allocation3 + $0x4a8] sm:$0xff] %v2322
        %v2331 = vld [vmem:[#allocation2 + $0x10] sm:$0xff]
        %v2332 = vld [vmem:[#allocation2 + $0x18] sm:$0xff]
        %v2333 = vld [vmem:[#allocation2 + $0x20] sm:$0xff]
        %v2334 = vld [vmem:[#allocation2 + $0x40] sm:$0xff]
        %v2335 = vld [vmem:[#allocation2 + $0x48] sm:$0xff]
        %v2336 = vld [vmem:[#allocation2 + $0x50] sm:$0xff]
        %2337 = vrot.lane.b32.xlu0 %v315, 119
        %v2338 = vpop.permute.xlu0 %2337
        %2339 = vrot.lane.b32.xlu0 %v319, 119
        %v2340 = vpop.permute.xlu0 %2339
        %vm2341 = vcmask 973824
        %v2342 = vsel %vm2341, %v2338, %v2340
        %v2346 = vmul.f32 %v2331, %v2338
        %v2347 = vmul.f32 %v2332, %v2342
        %v2348 = vmul.f32 %v2333, %v2340
        %v2349 = vmul.f32 %v2334, %v2338
        %v2350 = vmul.f32 %v2335, %v2342
        %v2351 = vmul.f32 %v2336, %v2340
        %2358 = vrot.lane.b32.xlu0 %v2346, 9
        %v2359 = vpop.permute.xlu0 %2358
        %2360 = vrot.lane.b32.xlu0 %v2347, 9
        %v2361 = vpop.permute.xlu0 %2360
        %2362 = vrot.lane.b32.xlu0 %v2348, 9
        %v2363 = vpop.permute.xlu0 %2362
        %2364 = vrot.lane.b32.xlu0 %v2349, 9
        %v2365 = vpop.permute.xlu0 %2364
        %2366 = vrot.lane.b32.xlu0 %v2350, 9
        %v2367 = vpop.permute.xlu0 %2366
        %2368 = vrot.lane.b32.xlu0 %v2351, 9
        %v2369 = vpop.permute.xlu0 %2368
        %vm2370 = vcmask 72704
        %v2371 = vsel %vm2370, %v2359, %v2361
        %v2372 = vsel %vm2370, %v2361, %v2363
        %v2373 = vsel %vm2370, %v2365, %v2367
        %v2374 = vsel %vm2370, %v2367, %v2369
        %2379 = vst [vmem:[#allocation3 + $0x490] sm:$0xff] %v2371
        %2380 = vst [vmem:[#allocation3 + $0x498] sm:$0xff] %v2372
        %2381 = vst [vmem:[#allocation3 + $0x4b0] sm:$0xff] %v2373
        %2382 = vst [vmem:[#allocation3 + $0x4b8] sm:$0xff] %v2374
        %v2383 = vld [vmem:[#allocation2] sm:$0xff]
        %v2384 = vld [vmem:[#allocation2 + $0x8] sm:$0xff]
        %v2385 = vld [vmem:[#allocation2 + $0x10] sm:$0xff]
        %v2386 = vld [vmem:[#allocation2 + $0x30] sm:$0xff]
        %v2387 = vld [vmem:[#allocation2 + $0x38] sm:$0xff]
        %v2388 = vld [vmem:[#allocation2 + $0x40] sm:$0xff]
        %2389 = vrot.lane.b32.xlu0 %v326, 52
        %v2390 = vpop.permute.xlu0 %2389
        %2391 = vrot.lane.b32.xlu0 %v330, 52
        %v2392 = vpop.permute.xlu0 %2391
        %vm2393 = vcmask 424960
        %v2394 = vsel %vm2393, %v2390, %v2392
        %v2398 = vmul.f32 %v2383, %v2390
        %v2399 = vmul.f32 %v2384, %v2394
        %v2400 = vmul.f32 %v2385, %v2392
        %v2401 = vmul.f32 %v2386, %v2390
        %v2402 = vmul.f32 %v2387, %v2394
        %v2403 = vmul.f32 %v2388, %v2392
        %2410 = vrot.lane.b32.xlu0 %v2398, 76
        %v2411 = vpop.permute.xlu0 %2410
        %2412 = vrot.lane.b32.xlu0 %v2399, 76
        %v2413 = vpop.permute.xlu0 %2412
        %2414 = vrot.lane.b32.xlu0 %v2400, 76
        %v2415 = vpop.permute.xlu0 %2414
        %2416 = vrot.lane.b32.xlu0 %v2401, 76
        %v2417 = vpop.permute.xlu0 %2416
        %2418 = vrot.lane.b32.xlu0 %v2402, 76
        %v2419 = vpop.permute.xlu0 %2418
        %2420 = vrot.lane.b32.xlu0 %v2403, 76
        %v2421 = vpop.permute.xlu0 %2420
        %vm2422 = vcmask 621568
        %v2423 = vsel %vm2422, %v2411, %v2413
        %v2424 = vsel %vm2422, %v2413, %v2415
        %v2425 = vsel %vm2422, %v2417, %v2419
        %v2426 = vsel %vm2422, %v2419, %v2421
        %2431 = vst [vmem:[#allocation3 + $0x4c0] sm:$0xff] %v2423
        %2432 = vst [vmem:[#allocation3 + $0x4c8] sm:$0xff] %v2424
        %2433 = vst [vmem:[#allocation3 + $0x4e0] sm:$0xff] %v2425
        %2434 = vst [vmem:[#allocation3 + $0x4e8] sm:$0xff] %v2426
        %v2435 = vld [vmem:[#allocation2 + $0x10] sm:$0xff]
        %v2436 = vld [vmem:[#allocation2 + $0x18] sm:$0xff]
        %v2437 = vld [vmem:[#allocation2 + $0x20] sm:$0xff]
        %v2438 = vld [vmem:[#allocation2 + $0x40] sm:$0xff]
        %v2439 = vld [vmem:[#allocation2 + $0x48] sm:$0xff]
        %v2440 = vld [vmem:[#allocation2 + $0x50] sm:$0xff]
        %2441 = vrot.lane.b32.xlu0 %v326, 120
        %v2442 = vpop.permute.xlu0 %2441
        %2443 = vrot.lane.b32.xlu0 %v330, 120
        %v2444 = vpop.permute.xlu0 %2443
        %vm2445 = vcmask 982016
        %v2446 = vsel %vm2445, %v2442, %v2444
        %v2450 = vmul.f32 %v2435, %v2442
        %v2451 = vmul.f32 %v2436, %v2446
        %v2452 = vmul.f32 %v2437, %v2444
        %v2453 = vmul.f32 %v2438, %v2442
        %v2454 = vmul.f32 %v2439, %v2446
        %v2455 = vmul.f32 %v2440, %v2444
        %2462 = vrot.lane.b32.xlu0 %v2450, 8
        %v2463 = vpop.permute.xlu0 %2462
        %2464 = vrot.lane.b32.xlu0 %v2451, 8
        %v2465 = vpop.permute.xlu0 %2464
        %2466 = vrot.lane.b32.xlu0 %v2452, 8
        %v2467 = vpop.permute.xlu0 %2466
        %2468 = vrot.lane.b32.xlu0 %v2453, 8
        %v2469 = vpop.permute.xlu0 %2468
        %2470 = vrot.lane.b32.xlu0 %v2454, 8
        %v2471 = vpop.permute.xlu0 %2470
        %2472 = vrot.lane.b32.xlu0 %v2455, 8
        %v2473 = vpop.permute.xlu0 %2472
        %v2474 = vsel %vm282, %v2463, %v2465
        %v2475 = vsel %vm282, %v2465, %v2467
        %v2476 = vsel %vm282, %v2469, %v2471
        %v2477 = vsel %vm282, %v2471, %v2473
        %2482 = vst [vmem:[#allocation3 + $0x4d0] sm:$0xff] %v2474
        %2483 = vst [vmem:[#allocation3 + $0x4d8] sm:$0xff] %v2475
        %2484 = vst [vmem:[#allocation3 + $0x4f0] sm:$0xff] %v2476
        %2485 = vst [vmem:[#allocation3 + $0x4f8] sm:$0xff] %v2477
        %v2486 = vld [vmem:[#allocation2] sm:$0xff]
        %v2487 = vld [vmem:[#allocation2 + $0x8] sm:$0xff]
        %v2488 = vld [vmem:[#allocation2 + $0x10] sm:$0xff]
        %v2489 = vld [vmem:[#allocation2 + $0x30] sm:$0xff]
        %v2490 = vld [vmem:[#allocation2 + $0x38] sm:$0xff]
        %v2491 = vld [vmem:[#allocation2 + $0x40] sm:$0xff]
        %2492 = vrot.lane.b32.xlu0 %v291, 64
        %v2493 = vpop.permute.xlu0 %2492
        %2494 = vrot.lane.b32.xlu0 %v295, 64
        %v2495 = vpop.permute.xlu0 %2494
        %vm2496 = vcmask 523264
        %v2497 = vsel %vm2496, %v2493, %v2495
        %v2501 = vmul.f32 %v2486, %v2493
        %v2502 = vmul.f32 %v2487, %v2497
        %v2503 = vmul.f32 %v2488, %v2495
        %v2504 = vmul.f32 %v2489, %v2493
        %v2505 = vmul.f32 %v2490, %v2497
        %v2506 = vmul.f32 %v2491, %v2495
        %2513 = vrot.lane.b32.xlu0 %v2501, 64
        %v2514 = vpop.permute.xlu0 %2513
        %2515 = vrot.lane.b32.xlu0 %v2502, 64
        %v2516 = vpop.permute.xlu0 %2515
        %2517 = vrot.lane.b32.xlu0 %v2503, 64
        %v2518 = vpop.permute.xlu0 %2517
        %2519 = vrot.lane.b32.xlu0 %v2504, 64
        %v2520 = vpop.permute.xlu0 %2519
        %2521 = vrot.lane.b32.xlu0 %v2505, 64
        %v2522 = vpop.permute.xlu0 %2521
        %2523 = vrot.lane.b32.xlu0 %v2506, 64
        %v2524 = vpop.permute.xlu0 %2523
        %v2525 = vsel %vm2496, %v2514, %v2516
        %v2526 = vsel %vm2496, %v2516, %v2518
        %v2527 = vsel %vm2496, %v2520, %v2522
        %v2528 = vsel %vm2496, %v2522, %v2524
        %2533 = vst [vmem:[#allocation3 + $0x500] sm:$0xff] %v2525
        %2534 = vst [vmem:[#allocation3 + $0x508] sm:$0xff] %v2526
        %2535 = vst [vmem:[#allocation3 + $0x520] sm:$0xff] %v2527
        %2536 = vst [vmem:[#allocation3 + $0x528] sm:$0xff] %v2528
        %v2537 = vld [vmem:[#allocation2 + $0x18] sm:$0xff]
        %v2538 = vld [vmem:[#allocation2 + $0x20] sm:$0xff]
        %v2539 = vld [vmem:[#allocation2 + $0x28] sm:$0xff]
        %v2540 = vld [vmem:[#allocation2 + $0x48] sm:$0xff]
        %v2541 = vld [vmem:[#allocation2 + $0x50] sm:$0xff]
        %v2542 = vld [vmem:[#allocation2 + $0x58] sm:$0xff]
        %2543 = vrot.lane.b32.xlu0 %v291, 4
        %v2544 = vpop.permute.xlu0 %2543
        %2545 = vrot.lane.b32.xlu0 %v295, 4
        %v2546 = vpop.permute.xlu0 %2545
        %v2547 = vsel %vm924, %v2544, %v2546
        %v2551 = vmul.f32 %v2537, %v2544
        %v2552 = vmul.f32 %v2538, %v2547
        %v2553 = vmul.f32 %v2539, %v2546
        %v2554 = vmul.f32 %v2540, %v2544
        %v2555 = vmul.f32 %v2541, %v2547
        %v2556 = vmul.f32 %v2542, %v2546
        %2563 = vrot.lane.b32.xlu0 %v2551, 124
        %v2564 = vpop.permute.xlu0 %2563
        %2565 = vrot.lane.b32.xlu0 %v2552, 124
        %v2566 = vpop.permute.xlu0 %2565
        %2567 = vrot.lane.b32.xlu0 %v2553, 124
        %v2568 = vpop.permute.xlu0 %2567
        %2569 = vrot.lane.b32.xlu0 %v2554, 124
        %v2570 = vpop.permute.xlu0 %2569
        %2571 = vrot.lane.b32.xlu0 %v2555, 124
        %v2572 = vpop.permute.xlu0 %2571
        %2573 = vrot.lane.b32.xlu0 %v2556, 124
        %v2574 = vpop.permute.xlu0 %2573
        %v2575 = vsel %vm953, %v2564, %v2566
        %v2576 = vsel %vm953, %v2566, %v2568
        %v2577 = vsel %vm953, %v2570, %v2572
        %v2578 = vsel %vm953, %v2572, %v2574
        %2583 = vst [vmem:[#allocation3 + $0x510] sm:$0xff] %v2575
        %2584 = vst [vmem:[#allocation3 + $0x518] sm:$0xff] %v2576
        %2585 = vst [vmem:[#allocation3 + $0x530] sm:$0xff] %v2577
        %2586 = vst [vmem:[#allocation3 + $0x538] sm:$0xff] %v2578
        %v2587 = vld [vmem:[#allocation2] sm:$0xff]
        %v2588 = vld [vmem:[#allocation2 + $0x8] sm:$0xff]
        %v2589 = vld [vmem:[#allocation2 + $0x10] sm:$0xff]
        %v2590 = vld [vmem:[#allocation2 + $0x30] sm:$0xff]
        %v2591 = vld [vmem:[#allocation2 + $0x38] sm:$0xff]
        %v2592 = vld [vmem:[#allocation2 + $0x40] sm:$0xff]
        %2593 = vrot.lane.b32.xlu0 %v304, 65
        %v2594 = vpop.permute.xlu0 %2593
        %2595 = vrot.lane.b32.xlu0 %v308, 65
        %v2596 = vpop.permute.xlu0 %2595
        %vm2597 = vcmask 531456
        %v2598 = vsel %vm2597, %v2594, %v2596
        %v2602 = vmul.f32 %v2587, %v2594
        %v2603 = vmul.f32 %v2588, %v2598
        %v2604 = vmul.f32 %v2589, %v2596
        %v2605 = vmul.f32 %v2590, %v2594
        %v2606 = vmul.f32 %v2591, %v2598
        %v2607 = vmul.f32 %v2592, %v2596
        %2614 = vrot.lane.b32.xlu0 %v2602, 63
        %v2615 = vpop.permute.xlu0 %2614
        %2616 = vrot.lane.b32.xlu0 %v2603, 63
        %v2617 = vpop.permute.xlu0 %2616
        %2618 = vrot.lane.b32.xlu0 %v2604, 63
        %v2619 = vpop.permute.xlu0 %2618
        %2620 = vrot.lane.b32.xlu0 %v2605, 63
        %v2621 = vpop.permute.xlu0 %2620
        %2622 = vrot.lane.b32.xlu0 %v2606, 63
        %v2623 = vpop.permute.xlu0 %2622
        %2624 = vrot.lane.b32.xlu0 %v2607, 63
        %v2625 = vpop.permute.xlu0 %2624
        %vm2626 = vcmask 515072
        %v2627 = vsel %vm2626, %v2615, %v2617
        %v2628 = vsel %vm2626, %v2617, %v2619
        %v2629 = vsel %vm2626, %v2621, %v2623
        %v2630 = vsel %vm2626, %v2623, %v2625
        %2635 = vst [vmem:[#allocation3 + $0x540] sm:$0xff] %v2627
        %2636 = vst [vmem:[#allocation3 + $0x548] sm:$0xff] %v2628
        %2637 = vst [vmem:[#allocation3 + $0x560] sm:$0xff] %v2629
        %2638 = vst [vmem:[#allocation3 + $0x568] sm:$0xff] %v2630
        %v2639 = vld [vmem:[#allocation2 + $0x18] sm:$0xff]
        %v2640 = vld [vmem:[#allocation2 + $0x20] sm:$0xff]
        %v2641 = vld [vmem:[#allocation2 + $0x28] sm:$0xff]
        %v2642 = vld [vmem:[#allocation2 + $0x48] sm:$0xff]
        %v2643 = vld [vmem:[#allocation2 + $0x50] sm:$0xff]
        %v2644 = vld [vmem:[#allocation2 + $0x58] sm:$0xff]
        %2645 = vrot.lane.b32.xlu0 %v304, 5
        %v2646 = vpop.permute.xlu0 %2645
        %2647 = vrot.lane.b32.xlu0 %v308, 5
        %v2648 = vpop.permute.xlu0 %2647
        %vm2649 = vcmask 39936
        %v2650 = vsel %vm2649, %v2646, %v2648
        %v2654 = vmul.f32 %v2639, %v2646
        %v2655 = vmul.f32 %v2640, %v2650
        %v2656 = vmul.f32 %v2641, %v2648
        %v2657 = vmul.f32 %v2642, %v2646
        %v2658 = vmul.f32 %v2643, %v2650
        %v2659 = vmul.f32 %v2644, %v2648
        %2666 = vrot.lane.b32.xlu0 %v2654, 123
        %v2667 = vpop.permute.xlu0 %2666
        %2668 = vrot.lane.b32.xlu0 %v2655, 123
        %v2669 = vpop.permute.xlu0 %2668
        %2670 = vrot.lane.b32.xlu0 %v2656, 123
        %v2671 = vpop.permute.xlu0 %2670
        %2672 = vrot.lane.b32.xlu0 %v2657, 123
        %v2673 = vpop.permute.xlu0 %2672
        %2674 = vrot.lane.b32.xlu0 %v2658, 123
        %v2675 = vpop.permute.xlu0 %2674
        %2676 = vrot.lane.b32.xlu0 %v2659, 123
        %v2677 = vpop.permute.xlu0 %2676
        %vm2678 = vcmask 1006592
        %v2679 = vsel %vm2678, %v2667, %v2669
        %v2680 = vsel %vm2678, %v2669, %v2671
        %v2681 = vsel %vm2678, %v2673, %v2675
        %v2682 = vsel %vm2678, %v2675, %v2677
        %2687 = vst [vmem:[#allocation3 + $0x550] sm:$0xff] %v2679
        %2688 = vst [vmem:[#allocation3 + $0x558] sm:$0xff] %v2680
        %2689 = vst [vmem:[#allocation3 + $0x570] sm:$0xff] %v2681
        %2690 = vst [vmem:[#allocation3 + $0x578] sm:$0xff] %v2682
        %v2691 = vld [vmem:[#allocation2] sm:$0xff]
        %v2692 = vld [vmem:[#allocation2 + $0x8] sm:$0xff]
        %v2693 = vld [vmem:[#allocation2 + $0x10] sm:$0xff]
        %v2694 = vld [vmem:[#allocation2 + $0x30] sm:$0xff]
        %v2695 = vld [vmem:[#allocation2 + $0x38] sm:$0xff]
        %v2696 = vld [vmem:[#allocation2 + $0x40] sm:$0xff]
        %2703 = vrot.lane.b32.xlu0 %v2691, 62
        %v2704 = vpop.permute.xlu0 %2703
        %2705 = vrot.lane.b32.xlu0 %v2692, 62
        %v2706 = vpop.permute.xlu0 %2705
        %2707 = vrot.lane.b32.xlu0 %v2693, 62
        %v2708 = vpop.permute.xlu0 %2707
        %2709 = vrot.lane.b32.xlu0 %v2694, 62
        %v2710 = vpop.permute.xlu0 %2709
        %2711 = vrot.lane.b32.xlu0 %v2695, 62
        %v2712 = vpop.permute.xlu0 %2711
        %2713 = vrot.lane.b32.xlu0 %v2696, 62
        %v2714 = vpop.permute.xlu0 %2713
        %vm2715 = vcmask 506880
        %v2716 = vsel %vm2715, %v2704, %v2706
        %v2717 = vsel %vm2715, %v2706, %v2708
        %v2718 = vsel %vm2715, %v2710, %v2712
        %v2719 = vsel %vm2715, %v2712, %v2714
        %2724 = vst [vmem:[#allocation3 + $0x580] sm:$0xff] %v2716
        %2725 = vst [vmem:[#allocation3 + $0x588] sm:$0xff] %v2717
        %2726 = vst [vmem:[#allocation3 + $0x5a0] sm:$0xff] %v2718
        %2727 = vst [vmem:[#allocation3 + $0x5a8] sm:$0xff] %v2719
        %v2728 = vld [vmem:[#allocation2 + $0x18] sm:$0xff]
        %v2729 = vld [vmem:[#allocation2 + $0x20] sm:$0xff]
        %v2730 = vld [vmem:[#allocation2 + $0x28] sm:$0xff]
        %v2731 = vld [vmem:[#allocation2 + $0x48] sm:$0xff]
        %v2732 = vld [vmem:[#allocation2 + $0x50] sm:$0xff]
        %v2733 = vld [vmem:[#allocation2 + $0x58] sm:$0xff]
        %2740 = vrot.lane.b32.xlu0 %v2728, 122
        %v2741 = vpop.permute.xlu0 %2740
        %2742 = vrot.lane.b32.xlu0 %v2729, 122
        %v2743 = vpop.permute.xlu0 %2742
        %2744 = vrot.lane.b32.xlu0 %v2730, 122
        %v2745 = vpop.permute.xlu0 %2744
        %2746 = vrot.lane.b32.xlu0 %v2731, 122
        %v2747 = vpop.permute.xlu0 %2746
        %2748 = vrot.lane.b32.xlu0 %v2732, 122
        %v2749 = vpop.permute.xlu0 %2748
        %2750 = vrot.lane.b32.xlu0 %v2733, 122
        %v2751 = vpop.permute.xlu0 %2750
        %vm2752 = vcmask 998400
        %v2753 = vsel %vm2752, %v2741, %v2743
        %v2754 = vsel %vm2752, %v2743, %v2745
        %v2755 = vsel %vm2752, %v2747, %v2749
        %v2756 = vsel %vm2752, %v2749, %v2751
        %2761 = vst [vmem:[#allocation3 + $0x590] sm:$0xff] %v2753
        %2762 = vst [vmem:[#allocation3 + $0x598] sm:$0xff] %v2754
        %2763 = vst [vmem:[#allocation3 + $0x5b0] sm:$0xff] %v2755
        %2764 = vst [vmem:[#allocation3 + $0x5b8] sm:$0xff] %v2756
        %v2765 = vld [vmem:[#allocation2] sm:$0xff]
        %v2766 = vld [vmem:[#allocation2 + $0x8] sm:$0xff]
        %v2767 = vld [vmem:[#allocation2 + $0x10] sm:$0xff]
        %v2768 = vld [vmem:[#allocation2 + $0x30] sm:$0xff]
        %v2769 = vld [vmem:[#allocation2 + $0x38] sm:$0xff]
        %v2770 = vld [vmem:[#allocation2 + $0x40] sm:$0xff]
        %2771 = vrot.lane.b32.xlu0 %v315, 67
        %v2772 = vpop.permute.xlu0 %2771
        %2773 = vrot.lane.b32.xlu0 %v319, 67
        %v2774 = vpop.permute.xlu0 %2773
        %vm2775 = vcmask 547840
        %v2776 = vsel %vm2775, %v2772, %v2774
        %v2780 = vmul.f32 %v2765, %v2772
        %v2781 = vmul.f32 %v2766, %v2776
        %v2782 = vmul.f32 %v2767, %v2774
        %v2783 = vmul.f32 %v2768, %v2772
        %v2784 = vmul.f32 %v2769, %v2776
        %v2785 = vmul.f32 %v2770, %v2774
        %2792 = vrot.lane.b32.xlu0 %v2780, 61
        %v2793 = vpop.permute.xlu0 %2792
        %2794 = vrot.lane.b32.xlu0 %v2781, 61
        %v2795 = vpop.permute.xlu0 %2794
        %2796 = vrot.lane.b32.xlu0 %v2782, 61
        %v2797 = vpop.permute.xlu0 %2796
        %2798 = vrot.lane.b32.xlu0 %v2783, 61
        %v2799 = vpop.permute.xlu0 %2798
        %2800 = vrot.lane.b32.xlu0 %v2784, 61
        %v2801 = vpop.permute.xlu0 %2800
        %2802 = vrot.lane.b32.xlu0 %v2785, 61
        %v2803 = vpop.permute.xlu0 %2802
        %vm2804 = vcmask 498688
        %v2805 = vsel %vm2804, %v2793, %v2795
        %v2806 = vsel %vm2804, %v2795, %v2797
        %v2807 = vsel %vm2804, %v2799, %v2801
        %v2808 = vsel %vm2804, %v2801, %v2803
        %2813 = vst [vmem:[#allocation3 + $0x5c0] sm:$0xff] %v2805
        %2814 = vst [vmem:[#allocation3 + $0x5c8] sm:$0xff] %v2806
        %2815 = vst [vmem:[#allocation3 + $0x5e0] sm:$0xff] %v2807
        %2816 = vst [vmem:[#allocation3 + $0x5e8] sm:$0xff] %v2808
        %v2817 = vld [vmem:[#allocation2 + $0x18] sm:$0xff]
        %v2818 = vld [vmem:[#allocation2 + $0x20] sm:$0xff]
        %v2819 = vld [vmem:[#allocation2 + $0x28] sm:$0xff]
        %v2820 = vld [vmem:[#allocation2 + $0x48] sm:$0xff]
        %v2821 = vld [vmem:[#allocation2 + $0x50] sm:$0xff]
        %v2822 = vld [vmem:[#allocation2 + $0x58] sm:$0xff]
        %2823 = vrot.lane.b32.xlu0 %v315, 7
        %v2824 = vpop.permute.xlu0 %2823
        %2825 = vrot.lane.b32.xlu0 %v319, 7
        %v2826 = vpop.permute.xlu0 %2825
        %vm2827 = vcmask 56320
        %v2828 = vsel %vm2827, %v2824, %v2826
        %v2832 = vmul.f32 %v2817, %v2824
        %v2833 = vmul.f32 %v2818, %v2828
        %v2834 = vmul.f32 %v2819, %v2826
        %v2835 = vmul.f32 %v2820, %v2824
        %v2836 = vmul.f32 %v2821, %v2828
        %v2837 = vmul.f32 %v2822, %v2826
        %2844 = vrot.lane.b32.xlu0 %v2832, 121
        %v2845 = vpop.permute.xlu0 %2844
        %2846 = vrot.lane.b32.xlu0 %v2833, 121
        %v2847 = vpop.permute.xlu0 %2846
        %2848 = vrot.lane.b32.xlu0 %v2834, 121
        %v2849 = vpop.permute.xlu0 %2848
        %2850 = vrot.lane.b32.xlu0 %v2835, 121
        %v2851 = vpop.permute.xlu0 %2850
        %2852 = vrot.lane.b32.xlu0 %v2836, 121
        %v2853 = vpop.permute.xlu0 %2852
        %2854 = vrot.lane.b32.xlu0 %v2837, 121
        %v2855 = vpop.permute.xlu0 %2854
        %vm2856 = vcmask 990208
        %v2857 = vsel %vm2856, %v2845, %v2847
        %v2858 = vsel %vm2856, %v2847, %v2849
        %v2859 = vsel %vm2856, %v2851, %v2853
        %v2860 = vsel %vm2856, %v2853, %v2855
        %2865 = vst [vmem:[#allocation3 + $0x5d0] sm:$0xff] %v2857
        %2866 = vst [vmem:[#allocation3 + $0x5d8] sm:$0xff] %v2858
        %2867 = vst [vmem:[#allocation3 + $0x5f0] sm:$0xff] %v2859
        %2868 = vst [vmem:[#allocation3 + $0x5f8] sm:$0xff] %v2860
        %v2869 = vld [vmem:[#allocation2] sm:$0xff]
        %v2870 = vld [vmem:[#allocation2 + $0x8] sm:$0xff]
        %v2871 = vld [vmem:[#allocation2 + $0x10] sm:$0xff]
        %v2872 = vld [vmem:[#allocation2 + $0x30] sm:$0xff]
        %v2873 = vld [vmem:[#allocation2 + $0x38] sm:$0xff]
        %v2874 = vld [vmem:[#allocation2 + $0x40] sm:$0xff]
        %2875 = vrot.lane.b32.xlu0 %v326, 68
        %v2876 = vpop.permute.xlu0 %2875
        %2877 = vrot.lane.b32.xlu0 %v330, 68
        %v2878 = vpop.permute.xlu0 %2877
        %v2879 = vsel %vm590, %v2876, %v2878
        %v2883 = vmul.f32 %v2869, %v2876
        %v2884 = vmul.f32 %v2870, %v2879
        %v2885 = vmul.f32 %v2871, %v2878
        %v2886 = vmul.f32 %v2872, %v2876
        %v2887 = vmul.f32 %v2873, %v2879
        %v2888 = vmul.f32 %v2874, %v2878
        %2895 = vrot.lane.b32.xlu0 %v2883, 60
        %v2896 = vpop.permute.xlu0 %2895
        %2897 = vrot.lane.b32.xlu0 %v2884, 60
        %v2898 = vpop.permute.xlu0 %2897
        %2899 = vrot.lane.b32.xlu0 %v2885, 60
        %v2900 = vpop.permute.xlu0 %2899
        %2901 = vrot.lane.b32.xlu0 %v2886, 60
        %v2902 = vpop.permute.xlu0 %2901
        %2903 = vrot.lane.b32.xlu0 %v2887, 60
        %v2904 = vpop.permute.xlu0 %2903
        %2905 = vrot.lane.b32.xlu0 %v2888, 60
        %v2906 = vpop.permute.xlu0 %2905
        %v2907 = vsel %vm619, %v2896, %v2898
        %v2908 = vsel %vm619, %v2898, %v2900
        %v2909 = vsel %vm619, %v2902, %v2904
        %v2910 = vsel %vm619, %v2904, %v2906
        %2915 = vst [vmem:[#allocation3 + $0x600] sm:$0xff] %v2907
        %2916 = vst [vmem:[#allocation3 + $0x608] sm:$0xff] %v2908
        %2917 = vst [vmem:[#allocation3 + $0x620] sm:$0xff] %v2909
        %2918 = vst [vmem:[#allocation3 + $0x628] sm:$0xff] %v2910
        %v2919 = vld [vmem:[#allocation2 + $0x18] sm:$0xff]
        %v2920 = vld [vmem:[#allocation2 + $0x20] sm:$0xff]
        %v2921 = vld [vmem:[#allocation2 + $0x28] sm:$0xff]
        %v2922 = vld [vmem:[#allocation2 + $0x48] sm:$0xff]
        %v2923 = vld [vmem:[#allocation2 + $0x50] sm:$0xff]
        %v2924 = vld [vmem:[#allocation2 + $0x58] sm:$0xff]
        %2925 = vrot.lane.b32.xlu0 %v326, 8
        %v2926 = vpop.permute.xlu0 %2925
        %2927 = vrot.lane.b32.xlu0 %v330, 8
        %v2928 = vpop.permute.xlu0 %2927
        %v2929 = vsel %vm282, %v2926, %v2928
        %v2933 = vmul.f32 %v2919, %v2926
        %v2934 = vmul.f32 %v2920, %v2929
        %v2935 = vmul.f32 %v2921, %v2928
        %v2936 = vmul.f32 %v2922, %v2926
        %v2937 = vmul.f32 %v2923, %v2929
        %v2938 = vmul.f32 %v2924, %v2928
        %2945 = vrot.lane.b32.xlu0 %v2933, 120
        %v2946 = vpop.permute.xlu0 %2945
        %2947 = vrot.lane.b32.xlu0 %v2934, 120
        %v2948 = vpop.permute.xlu0 %2947
        %2949 = vrot.lane.b32.xlu0 %v2935, 120
        %v2950 = vpop.permute.xlu0 %2949
        %2951 = vrot.lane.b32.xlu0 %v2936, 120
        %v2952 = vpop.permute.xlu0 %2951
        %2953 = vrot.lane.b32.xlu0 %v2937, 120
        %v2954 = vpop.permute.xlu0 %2953
        %2955 = vrot.lane.b32.xlu0 %v2938, 120
        %v2956 = vpop.permute.xlu0 %2955
        %v2957 = vsel %vm2445, %v2946, %v2948
        %v2958 = vsel %vm2445, %v2948, %v2950
        %v2959 = vsel %vm2445, %v2952, %v2954
        %v2960 = vsel %vm2445, %v2954, %v2956
        %2965 = vst [vmem:[#allocation3 + $0x610] sm:$0xff] %v2957
        %2966 = vst [vmem:[#allocation3 + $0x618] sm:$0xff] %v2958
        %2967 = vst [vmem:[#allocation3 + $0x630] sm:$0xff] %v2959
        %2968 = vst [vmem:[#allocation3 + $0x638] sm:$0xff] %v2960
        %v2969 = vld [vmem:[#allocation6] sm:$0xff]
        %v2970 = vld [vmem:[#allocation6 + $0x8] sm:$0xff]
        %v2971 = vld [vmem:[#allocation6 + $0x10] sm:$0xff]
        %v2972 = vld [vmem:[#allocation6 + $0x18] sm:$0xff]
        %v2973 = vld [vmem:[#allocation6 + $0x20] sm:$0xff]
        %v2974 = vld [vmem:[#allocation6 + $0x28] sm:$0xff]
        %v2975 = vld [vmem:[#allocation6 + $0x30] sm:$0xff]
        %v2976 = vld [vmem:[#allocation6 + $0x38] sm:$0xff]
        %v2977 = vld [vmem:[#allocation3] sm:$0xff]
        %v2978 = vld [vmem:[#allocation3 + $0x8] sm:$0xff]
        %v2979 = vld [vmem:[#allocation3 + $0x10] sm:$0xff]
        %v2980 = vld [vmem:[#allocation3 + $0x18] sm:$0xff]
        %v2981 = vld [vmem:[#allocation3 + $0x20] sm:$0xff]
        %v2982 = vld [vmem:[#allocation3 + $0x28] sm:$0xff]
        %v2983 = vld [vmem:[#allocation3 + $0x30] sm:$0xff]
        %v2984 = vld [vmem:[#allocation3 + $0x38] sm:$0xff]
        %v2985 = vld [vmem:[#allocation3 + $0x40] sm:$0xff]
        %v2986 = vld [vmem:[#allocation3 + $0x48] sm:$0xff]
        %v2987 = vld [vmem:[#allocation3 + $0x50] sm:$0xff]
        %v2988 = vld [vmem:[#allocation3 + $0x58] sm:$0xff]
        %v2989 = vld [vmem:[#allocation3 + $0x60] sm:$0xff]
        %v2990 = vld [vmem:[#allocation3 + $0x68] sm:$0xff]
        %v2991 = vld [vmem:[#allocation3 + $0x70] sm:$0xff]
        %v2992 = vld [vmem:[#allocation3 + $0x78] sm:$0xff]
        %v2993 = vld [vmem:[#allocation3 + $0x80] sm:$0xff]
        %v2994 = vld [vmem:[#allocation3 + $0x88] sm:$0xff]
        %v2995 = vld [vmem:[#allocation3 + $0x90] sm:$0xff]
        %v2996 = vld [vmem:[#allocation3 + $0x98] sm:$0xff]
        %v2997 = vld [vmem:[#allocation3 + $0xa0] sm:$0xff]
        %v2998 = vld [vmem:[#allocation3 + $0xa8] sm:$0xff]
        %v2999 = vld [vmem:[#allocation3 + $0xb0] sm:$0xff]
        %v3000 = vld [vmem:[#allocation3 + $0xb8] sm:$0xff]
        %v3001 = vld [vmem:[#allocation3 + $0xc0] sm:$0xff]
        %v3002 = vld [vmem:[#allocation3 + $0xc8] sm:$0xff]
        %v3003 = vld [vmem:[#allocation3 + $0xd0] sm:$0xff]
        %v3004 = vld [vmem:[#allocation3 + $0xd8] sm:$0xff]
        %v3005 = vld [vmem:[#allocation3 + $0xe0] sm:$0xff]
        %v3006 = vld [vmem:[#allocation3 + $0xe8] sm:$0xff]
        %v3007 = vld [vmem:[#allocation3 + $0xf0] sm:$0xff]
        %v3008 = vld [vmem:[#allocation3 + $0xf8] sm:$0xff]
        %v3009 = vld [vmem:[#allocation3 + $0x100] sm:$0xff]
        %v3010 = vld [vmem:[#allocation3 + $0x108] sm:$0xff]
        %v3011 = vld [vmem:[#allocation3 + $0x110] sm:$0xff]
        %v3012 = vld [vmem:[#allocation3 + $0x118] sm:$0xff]
        %v3013 = vld [vmem:[#allocation3 + $0x120] sm:$0xff]
        %v3014 = vld [vmem:[#allocation3 + $0x128] sm:$0xff]
        %v3015 = vld [vmem:[#allocation3 + $0x130] sm:$0xff]
        %v3016 = vld [vmem:[#allocation3 + $0x138] sm:$0xff]
        %v3017 = vld [vmem:[#allocation3 + $0x140] sm:$0xff]
        %v3018 = vld [vmem:[#allocation3 + $0x148] sm:$0xff]
        %v3019 = vld [vmem:[#allocation3 + $0x150] sm:$0xff]
        %v3020 = vld [vmem:[#allocation3 + $0x158] sm:$0xff]
        %v3021 = vld [vmem:[#allocation3 + $0x160] sm:$0xff]
        %v3022 = vld [vmem:[#allocation3 + $0x168] sm:$0xff]
        %v3023 = vld [vmem:[#allocation3 + $0x170] sm:$0xff]
        %v3024 = vld [vmem:[#allocation3 + $0x178] sm:$0xff]
        %v3025 = vld [vmem:[#allocation3 + $0x180] sm:$0xff]
        %v3026 = vld [vmem:[#allocation3 + $0x188] sm:$0xff]
        %v3027 = vld [vmem:[#allocation3 + $0x190] sm:$0xff]
        %v3028 = vld [vmem:[#allocation3 + $0x198] sm:$0xff]
        %v3029 = vld [vmem:[#allocation3 + $0x1a0] sm:$0xff]
        %v3030 = vld [vmem:[#allocation3 + $0x1a8] sm:$0xff]
        %v3031 = vld [vmem:[#allocation3 + $0x1b0] sm:$0xff]
        %v3032 = vld [vmem:[#allocation3 + $0x1b8] sm:$0xff]
        %v3033 = vld [vmem:[#allocation3 + $0x1c0] sm:$0xff]
        %v3034 = vld [vmem:[#allocation3 + $0x1c8] sm:$0xff]
        %v3035 = vld [vmem:[#allocation3 + $0x1d0] sm:$0xff]
        %v3036 = vld [vmem:[#allocation3 + $0x1d8] sm:$0xff]
        %v3037 = vld [vmem:[#allocation3 + $0x1e0] sm:$0xff]
        %v3038 = vld [vmem:[#allocation3 + $0x1e8] sm:$0xff]
        %v3039 = vld [vmem:[#allocation3 + $0x1f0] sm:$0xff]
        %v3040 = vld [vmem:[#allocation3 + $0x1f8] sm:$0xff]
        %v3041 = vld [vmem:[#allocation3 + $0x200] sm:$0xff]
        %v3042 = vld [vmem:[#allocation3 + $0x208] sm:$0xff]
        %v3043 = vld [vmem:[#allocation3 + $0x210] sm:$0xff]
        %v3044 = vld [vmem:[#allocation3 + $0x218] sm:$0xff]
        %v3045 = vld [vmem:[#allocation3 + $0x220] sm:$0xff]
        %v3046 = vld [vmem:[#allocation3 + $0x228] sm:$0xff]
        %v3047 = vld [vmem:[#allocation3 + $0x230] sm:$0xff]
        %v3048 = vld [vmem:[#allocation3 + $0x238] sm:$0xff]
        %v3049 = vld [vmem:[#allocation3 + $0x240] sm:$0xff]
        %v3050 = vld [vmem:[#allocation3 + $0x248] sm:$0xff]
        %v3051 = vld [vmem:[#allocation3 + $0x250] sm:$0xff]
        %v3052 = vld [vmem:[#allocation3 + $0x258] sm:$0xff]
        %v3053 = vld [vmem:[#allocation3 + $0x260] sm:$0xff]
        %v3054 = vld [vmem:[#allocation3 + $0x268] sm:$0xff]
        %v3055 = vld [vmem:[#allocation3 + $0x270] sm:$0xff]
        %v3056 = vld [vmem:[#allocation3 + $0x278] sm:$0xff]
        %v3057 = vld [vmem:[#allocation3 + $0x280] sm:$0xff]
        %v3058 = vld [vmem:[#allocation3 + $0x288] sm:$0xff]
        %v3059 = vld [vmem:[#allocation3 + $0x290] sm:$0xff]
        %v3060 = vld [vmem:[#allocation3 + $0x298] sm:$0xff]
        %v3061 = vld [vmem:[#allocation3 + $0x2a0] sm:$0xff]
        %v3062 = vld [vmem:[#allocation3 + $0x2a8] sm:$0xff]
        %v3063 = vld [vmem:[#allocation3 + $0x2b0] sm:$0xff]
        %v3064 = vld [vmem:[#allocation3 + $0x2b8] sm:$0xff]
        %v3065 = vld [vmem:[#allocation3 + $0x2c0] sm:$0xff]
        %v3066 = vld [vmem:[#allocation3 + $0x2c8] sm:$0xff]
        %v3067 = vld [vmem:[#allocation3 + $0x2d0] sm:$0xff]
        %v3068 = vld [vmem:[#allocation3 + $0x2d8] sm:$0xff]
        %v3069 = vld [vmem:[#allocation3 + $0x2e0] sm:$0xff]
        %v3070 = vld [vmem:[#allocation3 + $0x2e8] sm:$0xff]
        %v3071 = vld [vmem:[#allocation3 + $0x2f0] sm:$0xff]
        %v3072 = vld [vmem:[#allocation3 + $0x2f8] sm:$0xff]
        %v3073 = vld [vmem:[#allocation3 + $0x300] sm:$0xff]
        %v3074 = vld [vmem:[#allocation3 + $0x308] sm:$0xff]
        %v3075 = vld [vmem:[#allocation3 + $0x310] sm:$0xff]
        %v3076 = vld [vmem:[#allocation3 + $0x318] sm:$0xff]
        %v3077 = vld [vmem:[#allocation3 + $0x320] sm:$0xff]
        %v3078 = vld [vmem:[#allocation3 + $0x328] sm:$0xff]
        %v3079 = vld [vmem:[#allocation3 + $0x330] sm:$0xff]
        %v3080 = vld [vmem:[#allocation3 + $0x338] sm:$0xff]
        %v3081 = vld [vmem:[#allocation3 + $0x340] sm:$0xff]
        %v3082 = vld [vmem:[#allocation3 + $0x348] sm:$0xff]
        %v3083 = vld [vmem:[#allocation3 + $0x350] sm:$0xff]
        %v3084 = vld [vmem:[#allocation3 + $0x358] sm:$0xff]
        %v3085 = vld [vmem:[#allocation3 + $0x360] sm:$0xff]
        %v3086 = vld [vmem:[#allocation3 + $0x368] sm:$0xff]
        %v3087 = vld [vmem:[#allocation3 + $0x370] sm:$0xff]
        %v3088 = vld [vmem:[#allocation3 + $0x378] sm:$0xff]
        %v3089 = vld [vmem:[#allocation3 + $0x380] sm:$0xff]
        %v3090 = vld [vmem:[#allocation3 + $0x388] sm:$0xff]
        %v3091 = vld [vmem:[#allocation3 + $0x390] sm:$0xff]
        %v3092 = vld [vmem:[#allocation3 + $0x398] sm:$0xff]
        %v3093 = vld [vmem:[#allocation3 + $0x3a0] sm:$0xff]
        %v3094 = vld [vmem:[#allocation3 + $0x3a8] sm:$0xff]
        %v3095 = vld [vmem:[#allocation3 + $0x3b0] sm:$0xff]
        %v3096 = vld [vmem:[#allocation3 + $0x3b8] sm:$0xff]
        %v3097 = vld [vmem:[#allocation3 + $0x3c0] sm:$0xff]
        %v3098 = vld [vmem:[#allocation3 + $0x3c8] sm:$0xff]
        %v3099 = vld [vmem:[#allocation3 + $0x3d0] sm:$0xff]
        %v3100 = vld [vmem:[#allocation3 + $0x3d8] sm:$0xff]
        %v3101 = vld [vmem:[#allocation3 + $0x3e0] sm:$0xff]
        %v3102 = vld [vmem:[#allocation3 + $0x3e8] sm:$0xff]
        %v3103 = vld [vmem:[#allocation3 + $0x3f0] sm:$0xff]
        %v3104 = vld [vmem:[#allocation3 + $0x3f8] sm:$0xff]
        %v3105 = vld [vmem:[#allocation3 + $0x400] sm:$0xff]
        %v3106 = vld [vmem:[#allocation3 + $0x408] sm:$0xff]
        %v3107 = vld [vmem:[#allocation3 + $0x410] sm:$0xff]
        %v3108 = vld [vmem:[#allocation3 + $0x418] sm:$0xff]
        %v3109 = vld [vmem:[#allocation3 + $0x420] sm:$0xff]
        %v3110 = vld [vmem:[#allocation3 + $0x428] sm:$0xff]
        %v3111 = vld [vmem:[#allocation3 + $0x430] sm:$0xff]
        %v3112 = vld [vmem:[#allocation3 + $0x438] sm:$0xff]
        %v3113 = vld [vmem:[#allocation3 + $0x440] sm:$0xff]
        %v3114 = vld [vmem:[#allocation3 + $0x448] sm:$0xff]
        %v3115 = vld [vmem:[#allocation3 + $0x450] sm:$0xff]
        %v3116 = vld [vmem:[#allocation3 + $0x458] sm:$0xff]
        %v3117 = vld [vmem:[#allocation3 + $0x460] sm:$0xff]
        %v3118 = vld [vmem:[#allocation3 + $0x468] sm:$0xff]
        %v3119 = vld [vmem:[#allocation3 + $0x470] sm:$0xff]
        %v3120 = vld [vmem:[#allocation3 + $0x478] sm:$0xff]
        %v3121 = vld [vmem:[#allocation3 + $0x480] sm:$0xff]
        %v3122 = vld [vmem:[#allocation3 + $0x488] sm:$0xff]
        %v3123 = vld [vmem:[#allocation3 + $0x490] sm:$0xff]
        %v3124 = vld [vmem:[#allocation3 + $0x498] sm:$0xff]
        %v3125 = vld [vmem:[#allocation3 + $0x4a0] sm:$0xff]
        %v3126 = vld [vmem:[#allocation3 + $0x4a8] sm:$0xff]
        %v3127 = vld [vmem:[#allocation3 + $0x4b0] sm:$0xff]
        %v3128 = vld [vmem:[#allocation3 + $0x4b8] sm:$0xff]
        %v3129 = vld [vmem:[#allocation3 + $0x4c0] sm:$0xff]
        %v3130 = vld [vmem:[#allocation3 + $0x4c8] sm:$0xff]
        %v3131 = vld [vmem:[#allocation3 + $0x4d0] sm:$0xff]
        %v3132 = vld [vmem:[#allocation3 + $0x4d8] sm:$0xff]
        %v3133 = vld [vmem:[#allocation3 + $0x4e0] sm:$0xff]
        %v3134 = vld [vmem:[#allocation3 + $0x4e8] sm:$0xff]
        %v3135 = vld [vmem:[#allocation3 + $0x4f0] sm:$0xff]
        %v3136 = vld [vmem:[#allocation3 + $0x4f8] sm:$0xff]
        %v3137 = vld [vmem:[#allocation3 + $0x500] sm:$0xff]
        %v3138 = vld [vmem:[#allocation3 + $0x508] sm:$0xff]
        %v3139 = vld [vmem:[#allocation3 + $0x510] sm:$0xff]
        %v3140 = vld [vmem:[#allocation3 + $0x518] sm:$0xff]
        %v3141 = vld [vmem:[#allocation3 + $0x520] sm:$0xff]
        %v3142 = vld [vmem:[#allocation3 + $0x528] sm:$0xff]
        %v3143 = vld [vmem:[#allocation3 + $0x530] sm:$0xff]
        %v3144 = vld [vmem:[#allocation3 + $0x538] sm:$0xff]
        %v3145 = vld [vmem:[#allocation3 + $0x540] sm:$0xff]
        %v3146 = vld [vmem:[#allocation3 + $0x548] sm:$0xff]
        %v3147 = vld [vmem:[#allocation3 + $0x550] sm:$0xff]
        %v3148 = vld [vmem:[#allocation3 + $0x558] sm:$0xff]
        %v3149 = vld [vmem:[#allocation3 + $0x560] sm:$0xff]
        %v3150 = vld [vmem:[#allocation3 + $0x568] sm:$0xff]
        %v3151 = vld [vmem:[#allocation3 + $0x570] sm:$0xff]
        %v3152 = vld [vmem:[#allocation3 + $0x578] sm:$0xff]
        %v3153 = vld [vmem:[#allocation3 + $0x580] sm:$0xff]
        %v3154 = vld [vmem:[#allocation3 + $0x588] sm:$0xff]
        %v3155 = vld [vmem:[#allocation3 + $0x590] sm:$0xff]
        %v3156 = vld [vmem:[#allocation3 + $0x598] sm:$0xff]
        %v3157 = vld [vmem:[#allocation3 + $0x5a0] sm:$0xff]
        %v3158 = vld [vmem:[#allocation3 + $0x5a8] sm:$0xff]
        %v3159 = vld [vmem:[#allocation3 + $0x5b0] sm:$0xff]
        %v3160 = vld [vmem:[#allocation3 + $0x5b8] sm:$0xff]
        %v3161 = vld [vmem:[#allocation3 + $0x5c0] sm:$0xff]
        %v3162 = vld [vmem:[#allocation3 + $0x5c8] sm:$0xff]
        %v3163 = vld [vmem:[#allocation3 + $0x5d0] sm:$0xff]
        %v3164 = vld [vmem:[#allocation3 + $0x5d8] sm:$0xff]
        %v3165 = vld [vmem:[#allocation3 + $0x5e0] sm:$0xff]
        %v3166 = vld [vmem:[#allocation3 + $0x5e8] sm:$0xff]
        %v3167 = vld [vmem:[#allocation3 + $0x5f0] sm:$0xff]
        %v3168 = vld [vmem:[#allocation3 + $0x5f8] sm:$0xff]
        %v3169 = vld [vmem:[#allocation3 + $0x600] sm:$0xff]
        %v3170 = vld [vmem:[#allocation3 + $0x608] sm:$0xff]
        %v3171 = vld [vmem:[#allocation3 + $0x610] sm:$0xff]
        %v3172 = vld [vmem:[#allocation3 + $0x618] sm:$0xff]
        %v3173 = vld [vmem:[#allocation3 + $0x620] sm:$0xff]
        %v3174 = vld [vmem:[#allocation3 + $0x628] sm:$0xff]
        %v3175 = vld [vmem:[#allocation3 + $0x630] sm:$0xff]
        %v3176 = vld [vmem:[#allocation3 + $0x638] sm:$0xff]
        %v3177 = vld [vmem:[%s1] sm:$0xff]
        %v3178 = vld [vmem:[%s1 + $0x8] sm:$0xff]
        %3180 = vset.pattern.permute.xlu0 1
        %3181 = vperm.xlu0 %3180, %v3177
        %v3182 = vpop.permute.xlu0 %3181
        %3185 = vset.pattern.permute.xlu0 1
        %3186 = vperm.xlu0 %3185, %v3178
        %v3187 = vpop.permute.xlu0 %3186
        %v3190 = vsel %vm353, %v2972, 0
        %v3193 = vsel %vm353, %v2976, 0
        %3195 = vmatprep.subr.mxu0 %v2978
        %3196 = vmatpush1.msra.mxu0 %v2977
        %3197 = vmatprep.subr.mxu0 %v2982
        %3198 = vmatpush1.msra.mxu0 %v2981
        %3199 = vmatprep.subr.mxu0 %v2986
        %3200 = vmatpush1.msra.mxu0 %v2985
        %3201 = vmatprep.subr.mxu0 %v2990
        %3202 = vmatpush1.msra.mxu0 %v2989
        %3203 = vmatprep.subr.mxu0 %v2994
        %3204 = vmatpush1.msra.mxu0 %v2993
        %3205 = vmatprep.subr.mxu0 %v2998
        %3206 = vmatpush1.msra.mxu0 %v2997
        %3207 = vmatprep.subr.mxu0 %v3002
        %3208 = vmatpush1.msra.mxu0 %v3001
        %3209 = vmatprep.subr.mxu0 %v3006
        %3210 = vmatpush1.msra.mxu0 %v3005
        %3211 = vmatprep.subr.mxu0 %v3010
        %3212 = vmatpush1.msra.mxu0 %v3009
        %3213 = vmatprep.subr.mxu0 %v3014
        %3214 = vmatpush1.msra.mxu0 %v3013
        %3215 = vmatprep.subr.mxu0 %v3018
        %3216 = vmatpush1.msra.mxu0 %v3017
        %3217 = vmatprep.subr.mxu0 %v3022
        %3218 = vmatpush1.msra.mxu0 %v3021
        %3219 = vmatprep.subr.mxu0 %v3026
        %3220 = vmatpush1.msra.mxu0 %v3025
        %3221 = vmatprep.subr.mxu0 %v3030
        %3222 = vmatpush1.msra.mxu0 %v3029
        %3223 = vmatprep.subr.mxu0 %v3034
        %3224 = vmatpush1.msra.mxu0 %v3033
        %3225 = vmatprep.subr.mxu0 %v3038
        %3226 = vmatpush1.msra.mxu0 %v3037
        %3227 = vmatprep.subr.mxu0 %v3042
        %3228 = vmatpush1.msra.mxu0 %v3041
        %3229 = vmatprep.subr.mxu0 %v3046
        %3230 = vmatpush1.msra.mxu0 %v3045
        %3231 = vmatprep.subr.mxu0 %v3050
        %3232 = vmatpush1.msra.mxu0 %v3049
        %3233 = vmatprep.subr.mxu0 %v3054
        %3234 = vmatpush1.msra.mxu0 %v3053
        %3235 = vmatprep.subr.mxu0 %v3058
        %3236 = vmatpush1.msra.mxu0 %v3057
        %3237 = vmatprep.subr.mxu0 %v3062
        %3238 = vmatpush1.msra.mxu0 %v3061
        %3239 = vmatprep.subr.mxu0 %v3066
        %3240 = vmatpush1.msra.mxu0 %v3065
        %3241 = vmatprep.subr.mxu0 %v3070
        %3242 = vmatpush1.msra.mxu0 %v3069
        %3243 = vmatprep.subr.mxu0 %v3074
        %3244 = vmatpush1.msra.mxu0 %v3073
        %3245 = vmatprep.subr.mxu0 %v3078
        %3246 = vmatpush1.msra.mxu0 %v3077
        %3247 = vmatprep.subr.mxu0 %v3082
        %3248 = vmatpush1.msra.mxu0 %v3081
        %3249 = vmatprep.subr.mxu0 %v3086
        %3250 = vmatpush1.msra.mxu0 %v3085
        %3251 = vmatprep.subr.mxu0 %v3090
        %3252 = vmatpush1.msra.mxu0 %v3089
        %3253 = vmatprep.subr.mxu0 %v3094
        %3254 = vmatpush1.msra.mxu0 %v3093
        %3255 = vmatprep.subr.mxu0 %v3098
        %3256 = vmatpush1.msra.mxu0 %v3097
        %3257 = vmatprep.subr.mxu0 %v3102
        %3258 = vmatpush1.msra.mxu0 %v3101
        %3259 = vmatprep.mubr.f32.mxu0 %v2970
        %3260 = vmatmul.mubr.f32.gmra.mrb[0].mxu0 %v2969
        %v3261 = vpop.f32.mrb[0].mxu0
        %v3262 = vadd.f32 %v3182, %v3261
        %v3263 = vpop.f32.mrb[0].mxu0
        %v3264 = vadd.f32 %v3182, %v3263
        %3265 = vmatprep.mubr.f32.mxu0 %v2974
        %3266 = vmatmul.mubr.f32.gmra.mrb[0].mxu0 %v2973
        %v3267 = vpop.f32.mrb[0].mxu0
        %v3268 = vadd.f32 %v3187, %v3267
        %v3269 = vpop.f32.mrb[0].mxu0
        %v3270 = vadd.f32 %v3187, %v3269
        %3271 = vdwg.mxu0
        %3272 = vmatprep.subr.mxu0 %v3106
        %3273 = vmatpush1.msra.mxu0 %v3105
        %3274 = vmatprep.subr.mxu0 %v3110
        %3275 = vmatpush1.msra.mxu0 %v3109
        %3276 = vmatprep.subr.mxu0 %v3114
        %3277 = vmatpush1.msra.mxu0 %v3113
        %3278 = vmatprep.subr.mxu0 %v3118
        %3279 = vmatpush1.msra.mxu0 %v3117
        %3280 = vmatprep.subr.mxu0 %v3122
        %3281 = vmatpush1.msra.mxu0 %v3121
        %3282 = vmatprep.subr.mxu0 %v3126
        %3283 = vmatpush1.msra.mxu0 %v3125
        %3284 = vmatprep.subr.mxu0 %v3130
        %3285 = vmatpush1.msra.mxu0 %v3129
        %3286 = vmatprep.subr.mxu0 %v3134
        %3287 = vmatpush1.msra.mxu0 %v3133
        %3288 = vmatprep.subr.mxu0 %v3138
        %3289 = vmatpush1.msra.mxu0 %v3137
        %3290 = vmatprep.subr.mxu0 %v3142
        %3291 = vmatpush1.msra.mxu0 %v3141
        %3292 = vmatprep.subr.mxu0 %v3146
        %3293 = vmatpush1.msra.mxu0 %v3145
        %3294 = vmatprep.subr.mxu0 %v3150
        %3295 = vmatpush1.msra.mxu0 %v3149
        %3296 = vmatprep.subr.mxu0 %v3154
        %3297 = vmatpush1.msra.mxu0 %v3153
        %3298 = vmatprep.subr.mxu0 %v3158
        %3299 = vmatpush1.msra.mxu0 %v3157
        %3300 = vmatprep.subr.mxu0 %v3162
        %3301 = vmatpush1.msra.mxu0 %v3161
        %3302 = vmatprep.subr.mxu0 %v3166
        %3303 = vmatpush1.msra.mxu0 %v3165
        %3304 = vmatprep.subr.mxu0 %v3170
        %3305 = vmatpush1.msra.mxu0 %v3169
        %3306 = vmatprep.subr.mxu0 %v3174
        %3307 = vmatpush1.msra.mxu0 %v3173
        %3308 = vmatprep.subr.mxu0 0.0
        %3309 = vmatpush1.msra.mxu0 0.0
        %3310 = vmatprep.subr.mxu0 0.0
        %3311 = vmatpush1.msra.mxu0 0.0
        %3312 = vmatprep.subr.mxu0 0.0
        %3313 = vmatpush1.msra.mxu0 0.0
        %3314 = vmatprep.subr.mxu0 0.0
        %3315 = vmatpush1.msra.mxu0 0.0
        %3316 = vmatprep.subr.mxu0 0.0
        %3317 = vmatpush1.msra.mxu0 0.0
        %3318 = vmatprep.subr.mxu0 0.0
        %3319 = vmatpush1.msra.mxu0 0.0
        %3320 = vmatprep.subr.mxu0 0.0
        %3321 = vmatpush1.msra.mxu0 0.0
        %3322 = vmatprep.subr.mxu0 0.0
        %3323 = vmatpush1.msra.mxu0 0.0
        %3324 = vmatprep.subr.mxu0 0.0
        %3325 = vmatpush1.msra.mxu0 0.0
        %3326 = vmatprep.subr.mxu0 0.0
        %3327 = vmatpush1.msra.mxu0 0.0
        %3328 = vmatprep.subr.mxu0 0.0
        %3329 = vmatpush1.msra.mxu0 0.0
        %3330 = vmatprep.subr.mxu0 0.0
        %3331 = vmatpush1.msra.mxu0 0.0
        %3332 = vmatprep.subr.mxu0 0.0
        %3333 = vmatpush1.msra.mxu0 0.0
        %3334 = vmatprep.subr.mxu0 0.0
        %3335 = vmatpush1.msra.mxu0 0.0
        %3336 = vmatprep.mubr.f32.mxu0 %v3190
        %3337 = vmatmul.mubr.f32.gmra.mrb[0].mxu0 %v2971
        %v3338 = vpop.f32.mrb[0].mxu0
        %v3339 = vadd.f32 %v3262, %v3338
        %v3340 = vpop.f32.mrb[0].mxu0
        %v3341 = vadd.f32 %v3264, %v3340
        %3342 = vmatprep.mubr.f32.mxu0 %v3193
        %3343 = vmatmul.mubr.f32.gmra.mrb[0].mxu0 %v2975
        %v3344 = vpop.f32.mrb[0].mxu0
        %v3345 = vadd.f32 %v3268, %v3344
        %v3346 = vpop.f32.mrb[0].mxu0
        %v3347 = vadd.f32 %v3270, %v3346
        %3348 = vdwg.mxu0
        %3349 = vmatprep.subr.mxu0 %v2980
        %3350 = vmatpush1.msra.mxu0 %v2979
        %3351 = vmatprep.subr.mxu0 %v2984
        %3352 = vmatpush1.msra.mxu0 %v2983
        %3353 = vmatprep.subr.mxu0 %v2988
        %3354 = vmatpush1.msra.mxu0 %v2987
        %3355 = vmatprep.subr.mxu0 %v2992
        %3356 = vmatpush1.msra.mxu0 %v2991
        %3357 = vmatprep.subr.mxu0 %v2996
        %3358 = vmatpush1.msra.mxu0 %v2995
        %3359 = vmatprep.subr.mxu0 %v3000
        %3360 = vmatpush1.msra.mxu0 %v2999
        %3361 = vmatprep.subr.mxu0 %v3004
        %3362 = vmatpush1.msra.mxu0 %v3003
        %3363 = vmatprep.subr.mxu0 %v3008
        %3364 = vmatpush1.msra.mxu0 %v3007
        %3365 = vmatprep.subr.mxu0 %v3012
        %3366 = vmatpush1.msra.mxu0 %v3011
        %3367 = vmatprep.subr.mxu0 %v3016
        %3368 = vmatpush1.msra.mxu0 %v3015
        %3369 = vmatprep.subr.mxu0 %v3020
        %3370 = vmatpush1.msra.mxu0 %v3019
        %3371 = vmatprep.subr.mxu0 %v3024
        %3372 = vmatpush1.msra.mxu0 %v3023
        %3373 = vmatprep.subr.mxu0 %v3028
        %3374 = vmatpush1.msra.mxu0 %v3027
        %3375 = vmatprep.subr.mxu0 %v3032
        %3376 = vmatpush1.msra.mxu0 %v3031
        %3377 = vmatprep.subr.mxu0 %v3036
        %3378 = vmatpush1.msra.mxu0 %v3035
        %3379 = vmatprep.subr.mxu0 %v3040
        %3380 = vmatpush1.msra.mxu0 %v3039
        %3381 = vmatprep.subr.mxu0 %v3044
        %3382 = vmatpush1.msra.mxu0 %v3043
        %3383 = vmatprep.subr.mxu0 %v3048
        %3384 = vmatpush1.msra.mxu0 %v3047
        %3385 = vmatprep.subr.mxu0 %v3052
        %3386 = vmatpush1.msra.mxu0 %v3051
        %3387 = vmatprep.subr.mxu0 %v3056
        %3388 = vmatpush1.msra.mxu0 %v3055
        %3389 = vmatprep.subr.mxu0 %v3060
        %3390 = vmatpush1.msra.mxu0 %v3059
        %3391 = vmatprep.subr.mxu0 %v3064
        %3392 = vmatpush1.msra.mxu0 %v3063
        %3393 = vmatprep.subr.mxu0 %v3068
        %3394 = vmatpush1.msra.mxu0 %v3067
        %3395 = vmatprep.subr.mxu0 %v3072
        %3396 = vmatpush1.msra.mxu0 %v3071
        %3397 = vmatprep.subr.mxu0 %v3076
        %3398 = vmatpush1.msra.mxu0 %v3075
        %3399 = vmatprep.subr.mxu0 %v3080
        %3400 = vmatpush1.msra.mxu0 %v3079
        %3401 = vmatprep.subr.mxu0 %v3084
        %3402 = vmatpush1.msra.mxu0 %v3083
        %3403 = vmatprep.subr.mxu0 %v3088
        %3404 = vmatpush1.msra.mxu0 %v3087
        %3405 = vmatprep.subr.mxu0 %v3092
        %3406 = vmatpush1.msra.mxu0 %v3091
        %3407 = vmatprep.subr.mxu0 %v3096
        %3408 = vmatpush1.msra.mxu0 %v3095
        %3409 = vmatprep.subr.mxu0 %v3100
        %3410 = vmatpush1.msra.mxu0 %v3099
        %3411 = vmatprep.subr.mxu0 %v3104
        %3412 = vmatpush1.msra.mxu0 %v3103
        %3413 = vmatprep.mubr.f32.mxu0 %v2970
        %3414 = vmatmul.mubr.f32.gmra.mrb[0].mxu0 %v2969
        %v3415 = vpop.f32.mrb[0].mxu0
        %v3416 = vadd.f32 %v3182, %v3415
        %v3417 = vpop.f32.mrb[0].mxu0
        %v3418 = vadd.f32 %v3182, %v3417
        %3419 = vmatprep.mubr.f32.mxu0 %v2974
        %3420 = vmatmul.mubr.f32.gmra.mrb[0].mxu0 %v2973
        %v3421 = vpop.f32.mrb[0].mxu0
        %v3422 = vadd.f32 %v3187, %v3421
        %v3423 = vpop.f32.mrb[0].mxu0
        %v3424 = vadd.f32 %v3187, %v3423
        %3425 = vdwg.mxu0
        %3426 = vmatprep.subr.mxu0 %v3108
        %3427 = vmatpush1.msra.mxu0 %v3107
        %3428 = vmatprep.subr.mxu0 %v3112
        %3429 = vmatpush1.msra.mxu0 %v3111
        %3430 = vmatprep.subr.mxu0 %v3116
        %3431 = vmatpush1.msra.mxu0 %v3115
        %3432 = vmatprep.subr.mxu0 %v3120
        %3433 = vmatpush1.msra.mxu0 %v3119
        %3434 = vmatprep.subr.mxu0 %v3124
        %3435 = vmatpush1.msra.mxu0 %v3123
        %3436 = vmatprep.subr.mxu0 %v3128
        %3437 = vmatpush1.msra.mxu0 %v3127
        %3438 = vmatprep.subr.mxu0 %v3132
        %3439 = vmatpush1.msra.mxu0 %v3131
        %3440 = vmatprep.subr.mxu0 %v3136
        %3441 = vmatpush1.msra.mxu0 %v3135
        %3442 = vmatprep.subr.mxu0 %v3140
        %3443 = vmatpush1.msra.mxu0 %v3139
        %3444 = vmatprep.subr.mxu0 %v3144
        %3445 = vmatpush1.msra.mxu0 %v3143
        %3446 = vmatprep.subr.mxu0 %v3148
        %3447 = vmatpush1.msra.mxu0 %v3147
        %3448 = vmatprep.subr.mxu0 %v3152
        %3449 = vmatpush1.msra.mxu0 %v3151
        %3450 = vmatprep.subr.mxu0 %v3156
        %3451 = vmatpush1.msra.mxu0 %v3155
        %3452 = vmatprep.subr.mxu0 %v3160
        %3453 = vmatpush1.msra.mxu0 %v3159
        %3454 = vmatprep.subr.mxu0 %v3164
        %3455 = vmatpush1.msra.mxu0 %v3163
        %3456 = vmatprep.subr.mxu0 %v3168
        %3457 = vmatpush1.msra.mxu0 %v3167
        %3458 = vmatprep.subr.mxu0 %v3172
        %3459 = vmatpush1.msra.mxu0 %v3171
        %3460 = vmatprep.subr.mxu0 %v3176
        %3461 = vmatpush1.msra.mxu0 %v3175
        %3462 = vmatprep.subr.mxu0 0.0
        %3463 = vmatpush1.msra.mxu0 0.0
        %3464 = vmatprep.subr.mxu0 0.0
        %3465 = vmatpush1.msra.mxu0 0.0
        %3466 = vmatprep.subr.mxu0 0.0
        %3467 = vmatpush1.msra.mxu0 0.0
        %3468 = vmatprep.subr.mxu0 0.0
        %3469 = vmatpush1.msra.mxu0 0.0
        %3470 = vmatprep.subr.mxu0 0.0
        %3471 = vmatpush1.msra.mxu0 0.0
        %3472 = vmatprep.subr.mxu0 0.0
        %3473 = vmatpush1.msra.mxu0 0.0
        %3474 = vmatprep.subr.mxu0 0.0
        %3475 = vmatpush1.msra.mxu0 0.0
        %3476 = vmatprep.subr.mxu0 0.0
        %3477 = vmatpush1.msra.mxu0 0.0
        %3478 = vmatprep.subr.mxu0 0.0
        %3479 = vmatpush1.msra.mxu0 0.0
        %3480 = vmatprep.subr.mxu0 0.0
        %3481 = vmatpush1.msra.mxu0 0.0
        %3482 = vmatprep.subr.mxu0 0.0
        %3483 = vmatpush1.msra.mxu0 0.0
        %3484 = vmatprep.subr.mxu0 0.0
        %3485 = vmatpush1.msra.mxu0 0.0
        %3486 = vmatprep.subr.mxu0 0.0
        %3487 = vmatpush1.msra.mxu0 0.0
        %3488 = vmatprep.subr.mxu0 0.0
        %3489 = vmatpush1.msra.mxu0 0.0
        %3490 = vmatprep.mubr.f32.mxu0 %v3190
        %3491 = vmatmul.mubr.f32.gmra.mrb[0].mxu0 %v2971
        %v3492 = vpop.f32.mrb[0].mxu0
        %v3493 = vadd.f32 %v3416, %v3492
        %v3494 = vpop.f32.mrb[0].mxu0
        %v3495 = vadd.f32 %v3418, %v3494
        %3496 = vmatprep.mubr.f32.mxu0 %v3193
        %3497 = vmatmul.mubr.f32.gmra.mrb[0].mxu0 %v2975
        %v3498 = vpop.f32.mrb[0].mxu0
        %v3499 = vadd.f32 %v3422, %v3498
        %v3500 = vpop.f32.mrb[0].mxu0
        %v3501 = vadd.f32 %v3424, %v3500
        %3502 = vdwg.mxu0
        %v3503 = vld [vmem:[%s3 + $0x10] sm:$0xff]
        %v3504 = vld [vmem:[%s3 + $0x18] sm:$0xff]
        %v3505 = vadd.f32 %v3339, %v3341
        %v3506 = vadd.f32 %v3505, %v3493
        %v3507 = vadd.f32 %v3506, %v3495
        %3508 = vadd.xlane.f32.xlu0 %v3507
        %v3509 = vpop.xlane.xlu0 %3508
        %v3510 = vadd.f32 %v3345, %v3347
        %v3511 = vadd.f32 %v3510, %v3499
        %v3512 = vadd.f32 %v3511, %v3501
        %3513 = vadd.xlane.f32.xlu0 %v3512
        %v3514 = vpop.xlane.xlu0 %3513
        %v3516 = vsel %vm353, %v3503, 0
        %v3519 = vsel %vm353, %v3504, 0
        %3521 = vmatprep.subr.mxu0 0.0
        %3522 = vmatpush1.msra.mxu0 %v3509
        %3523 = vmatprep.subr.mxu0 0.0
        %3524 = vmatpush1.msra.mxu0 %v3514
        %3525 = vmatprep.subr.mxu0 0.0
        %3526 = vmatpush1.msra.mxu0 0.0
        %3527 = vmatprep.subr.mxu0 0.0
        %3528 = vmatpush1.msra.mxu0 0.0
        %3529 = vmatprep.subr.mxu0 0.0
        %3530 = vmatpush1.msra.mxu0 0.0
        %3531 = vmatprep.subr.mxu0 0.0
        %3532 = vmatpush1.msra.mxu0 0.0
        %3533 = vmatprep.subr.mxu0 0.0
        %3534 = vmatpush1.msra.mxu0 0.0
        %3535 = vmatprep.subr.mxu0 0.0
        %3536 = vmatpush1.msra.mxu0 0.0
        %3537 = vmatprep.subr.mxu0 0.0
        %3538 = vmatpush1.msra.mxu0 0.0
        %3539 = vmatprep.subr.mxu0 0.0
        %3540 = vmatpush1.msra.mxu0 0.0
        %3541 = vmatprep.subr.mxu0 0.0
        %3542 = vmatpush1.msra.mxu0 0.0
        %3543 = vmatprep.subr.mxu0 0.0
        %3544 = vmatpush1.msra.mxu0 0.0
        %3545 = vmatprep.subr.mxu0 0.0
        %3546 = vmatpush1.msra.mxu0 0.0
        %3547 = vmatprep.subr.mxu0 0.0
        %3548 = vmatpush1.msra.mxu0 0.0
        %3549 = vmatprep.subr.mxu0 0.0
        %3550 = vmatpush1.msra.mxu0 0.0
        %3551 = vmatprep.subr.mxu0 0.0
        %3552 = vmatpush1.msra.mxu0 0.0
        %3553 = vmatprep.subr.mxu0 0.0
        %3554 = vmatpush1.msra.mxu0 0.0
        %3555 = vmatprep.subr.mxu0 0.0
        %3556 = vmatpush1.msra.mxu0 0.0
        %3557 = vmatprep.subr.mxu0 0.0
        %3558 = vmatpush1.msra.mxu0 0.0
        %3559 = vmatprep.subr.mxu0 0.0
        %3560 = vmatpush1.msra.mxu0 0.0
        %3561 = vmatprep.subr.mxu0 0.0
        %3562 = vmatpush1.msra.mxu0 0.0
        %3563 = vmatprep.subr.mxu0 0.0
        %3564 = vmatpush1.msra.mxu0 0.0
        %3565 = vmatprep.subr.mxu0 0.0
        %3566 = vmatpush1.msra.mxu0 0.0
        %3567 = vmatprep.subr.mxu0 0.0
        %3568 = vmatpush1.msra.mxu0 0.0
        %3569 = vmatprep.subr.mxu0 0.0
        %3570 = vmatpush1.msra.mxu0 0.0
        %3571 = vmatprep.subr.mxu0 0.0
        %3572 = vmatpush1.msra.mxu0 0.0
        %3573 = vmatprep.subr.mxu0 0.0
        %3574 = vmatpush1.msra.mxu0 0.0
        %3575 = vmatprep.subr.mxu0 0.0
        %3576 = vmatpush1.msra.mxu0 0.0
        %3577 = vmatprep.subr.mxu0 0.0
        %3578 = vmatpush1.msra.mxu0 0.0
        %3579 = vmatprep.subr.mxu0 0.0
        %3580 = vmatpush1.msra.mxu0 0.0
        %3581 = vmatprep.subr.mxu0 0.0
        %3582 = vmatpush1.msra.mxu0 0.0
        %3583 = vmatprep.subr.mxu0 0.0
        %3584 = vmatpush1.msra.mxu0 0.0
        %3585 = vmatprep.mubr.f32.mxu0 0.0
        %3586 = vmatmul.mubr.f32.gmra.mrb[0].mxu0 %v3516
        %v3587 = vpop.f32.mrb[0].mxu0
        %v3588 = vadd.f32 0.0, %v3587
        %v3589 = vpop.f32.mrb[0].mxu0
        %3590 = vmatprep.mubr.f32.mxu0 0.0
        %3591 = vmatmul.mubr.f32.gmra.mrb[0].mxu0 %v3519
        %v3592 = vpop.f32.mrb[0].mxu0
        %v3593 = vadd.f32 0.0, %v3592
        %v3594 = vpop.f32.mrb[0].mxu0
        %3595 = vdwg.mxu0
        %v3596 = vmul.f32 %v3588, 0.0009765625
        %v3597 = vmul.f32 %v3593, 0.0009765625
        %3599 = vset.pattern.permute.xlu0 0
        %3600 = vperm.xlu0 %3599, %v3596
        %v3601 = vpop.permute.xlu0 %3600
        %3604 = vset.pattern.permute.xlu0 0
        %3605 = vperm.xlu0 %3604, %v3597
        %v3606 = vpop.permute.xlu0 %3605
        %v3608 = vsub.f32 %v3339, %v3601
        %v3609 = vsub.f32 %v3341, %v3601
        %v3610 = vsub.f32 %v3493, %v3601
        %v3611 = vsub.f32 %v3495, %v3601
        %v3612 = vsub.f32 %v3345, %v3606
        %v3613 = vsub.f32 %v3347, %v3606
        %v3614 = vsub.f32 %v3499, %v3606
        %v3615 = vsub.f32 %v3501, %v3606
        %v3616 = vmul.f32 %v3608, %v3608
        %v3617 = vmul.f32 %v3609, %v3609
        %v3618 = vmul.f32 %v3610, %v3610
        %v3619 = vmul.f32 %v3611, %v3611
        %v3620 = vmul.f32 %v3612, %v3612
        %v3621 = vmul.f32 %v3613, %v3613
        %v3622 = vmul.f32 %v3614, %v3614
        %v3623 = vmul.f32 %v3615, %v3615
        %v3624 = vadd.f32 %v3616, %v3617
        %v3625 = vadd.f32 %v3624, %v3618
        %v3626 = vadd.f32 %v3625, %v3619
        %3627 = vadd.xlane.f32.xlu0 %v3626
        %v3628 = vpop.xlane.xlu0 %3627
        %v3629 = vadd.f32 %v3620, %v3621
        %v3630 = vadd.f32 %v3629, %v3622
        %v3631 = vadd.f32 %v3630, %v3623
        %3632 = vadd.xlane.f32.xlu0 %v3631
        %v3633 = vpop.xlane.xlu0 %3632
        %3634 = vmatprep.subr.mxu0 0.0
        %3635 = vmatpush1.msra.mxu0 %v3628
        %3636 = vmatprep.subr.mxu0 0.0
        %3637 = vmatpush1.msra.mxu0 %v3633
        %3638 = vmatprep.subr.mxu0 0.0
        %3639 = vmatpush1.msra.mxu0 0.0
        %3640 = vmatprep.subr.mxu0 0.0
        %3641 = vmatpush1.msra.mxu0 0.0
        %3642 = vmatprep.subr.mxu0 0.0
        %3643 = vmatpush1.msra.mxu0 0.0
        %3644 = vmatprep.subr.mxu0 0.0
        %3645 = vmatpush1.msra.mxu0 0.0
        %3646 = vmatprep.subr.mxu0 0.0
        %3647 = vmatpush1.msra.mxu0 0.0
        %3648 = vmatprep.subr.mxu0 0.0
        %3649 = vmatpush1.msra.mxu0 0.0
        %3650 = vmatprep.subr.mxu0 0.0
        %3651 = vmatpush1.msra.mxu0 0.0
        %3652 = vmatprep.subr.mxu0 0.0
        %3653 = vmatpush1.msra.mxu0 0.0
        %3654 = vmatprep.subr.mxu0 0.0
        %3655 = vmatpush1.msra.mxu0 0.0
        %3656 = vmatprep.subr.mxu0 0.0
        %3657 = vmatpush1.msra.mxu0 0.0
        %3658 = vmatprep.subr.mxu0 0.0
        %3659 = vmatpush1.msra.mxu0 0.0
        %3660 = vmatprep.subr.mxu0 0.0
        %3661 = vmatpush1.msra.mxu0 0.0
        %3662 = vmatprep.subr.mxu0 0.0
        %3663 = vmatpush1.msra.mxu0 0.0
        %3664 = vmatprep.subr.mxu0 0.0
        %3665 = vmatpush1.msra.mxu0 0.0
        %3666 = vmatprep.subr.mxu0 0.0
        %3667 = vmatpush1.msra.mxu0 0.0
        %3668 = vmatprep.subr.mxu0 0.0
        %3669 = vmatpush1.msra.mxu0 0.0
        %3670 = vmatprep.subr.mxu0 0.0
        %3671 = vmatpush1.msra.mxu0 0.0
        %3672 = vmatprep.subr.mxu0 0.0
        %3673 = vmatpush1.msra.mxu0 0.0
        %3674 = vmatprep.subr.mxu0 0.0
        %3675 = vmatpush1.msra.mxu0 0.0
        %3676 = vmatprep.subr.mxu0 0.0
        %3677 = vmatpush1.msra.mxu0 0.0
        %3678 = vmatprep.subr.mxu0 0.0
        %3679 = vmatpush1.msra.mxu0 0.0
        %3680 = vmatprep.subr.mxu0 0.0
        %3681 = vmatpush1.msra.mxu0 0.0
        %3682 = vmatprep.subr.mxu0 0.0
        %3683 = vmatpush1.msra.mxu0 0.0
        %3684 = vmatprep.subr.mxu0 0.0
        %3685 = vmatpush1.msra.mxu0 0.0
        %3686 = vmatprep.subr.mxu0 0.0
        %3687 = vmatpush1.msra.mxu0 0.0
        %3688 = vmatprep.subr.mxu0 0.0
        %3689 = vmatpush1.msra.mxu0 0.0
        %3690 = vmatprep.subr.mxu0 0.0
        %3691 = vmatpush1.msra.mxu0 0.0
        %3692 = vmatprep.subr.mxu0 0.0
        %3693 = vmatpush1.msra.mxu0 0.0
        %3694 = vmatprep.subr.mxu0 0.0
        %3695 = vmatpush1.msra.mxu0 0.0
        %3696 = vmatprep.subr.mxu0 0.0
        %3697 = vmatpush1.msra.mxu0 0.0
        %3698 = vmatprep.mubr.f32.mxu0 0.0
        %3699 = vmatmul.mubr.f32.gmra.mrb[0].mxu0 %v3516
        %v3700 = vpop.f32.mrb[0].mxu0
        %v3701 = vadd.f32 0.0, %v3700
        %v3702 = vpop.f32.mrb[0].mxu0
        %3703 = vmatprep.mubr.f32.mxu0 0.0
        %3704 = vmatmul.mubr.f32.gmra.mrb[0].mxu0 %v3519
        %v3705 = vpop.f32.mrb[0].mxu0
        %v3706 = vadd.f32 0.0, %v3705
        %v3707 = vpop.f32.mrb[0].mxu0
        %3708 = vdwg.mxu0
        %v3709 = vmul.f32 %v3701, 0.0009765625
        %v3710 = vmul.f32 %v3706, 0.0009765625
        %v3711 = vadd.f32 %v3709, 1e-05
        %v3712 = vadd.f32 %v3710, 1e-05
        %v3713 = vrsqrt.pop %v3711
        %v3714 = vrsqrt.pop %v3712
        %3715 = vrot.lane.b32.xlu0 %v3177, 126
        %v3716 = vpop.permute.xlu0 %3715
        %3717 = vrot.lane.b32.xlu0 %v3178, 126
        %v3718 = vpop.permute.xlu0 %3717
        %v3721 = vmul.f32 %v3713, %v3716
        %v3722 = vmul.f32 %v3714, %v3718
        %3724 = vset.pattern.permute.xlu0 0
        %3725 = vperm.xlu0 %3724, %v3721
        %v3726 = vpop.permute.xlu0 %3725
        %3729 = vset.pattern.permute.xlu0 0
        %3730 = vperm.xlu0 %3729, %v3722
        %v3731 = vpop.permute.xlu0 %3730
        %v3733 = vmul.f32 %v3608, %v3726
        %v3734 = vmul.f32 %v3609, %v3726
        %v3735 = vmul.f32 %v3610, %v3726
        %v3736 = vmul.f32 %v3611, %v3726
        %v3737 = vmul.f32 %v3612, %v3731
        %v3738 = vmul.f32 %v3613, %v3731
        %v3739 = vmul.f32 %v3614, %v3731
        %v3740 = vmul.f32 %v3615, %v3731
        %3741 = vset.pattern.permute.xlu0 3
        %3742 = vperm.xlu0 %3741, %v3177
        %v3743 = vpop.permute.xlu0 %3742
        %3745 = vset.pattern.permute.xlu0 3
        %3746 = vperm.xlu0 %3745, %v3178
        %v3747 = vpop.permute.xlu0 %3746
        %v3749 = vadd.f32 %v3733, %v3743
        %v3750 = vadd.f32 %v3734, %v3743
        %v3751 = vadd.f32 %v3735, %v3743
        %v3752 = vadd.f32 %v3736, %v3743
        %v3753 = vadd.f32 %v3737, %v3747
        %v3754 = vadd.f32 %v3738, %v3747
        %v3755 = vadd.f32 %v3739, %v3747
        %v3756 = vadd.f32 %v3740, %v3747
        %v3757 = vmax.f32 %v3749, 0.0
        %v3758 = vmax.f32 %v3750, 0.0
        %v3759 = vmax.f32 %v3751, 0.0
        %v3760 = vmax.f32 %v3752, 0.0
        %v3761 = vmax.f32 %v3753, 0.0
        %v3762 = vmax.f32 %v3754, 0.0
        %v3763 = vmax.f32 %v3755, 0.0
        %v3764 = vmax.f32 %v3756, 0.0
        %3769 = vrot.lane.b32.xlu0 %v3757, 34
        %v3770 = vpop.permute.xlu0 %3769
        %3771 = vrot.lane.b32.xlu0 %v3758, 34
        %v3772 = vpop.permute.xlu0 %3771
        %3773 = vrot.lane.b32.xlu0 %v3761, 34
        %v3774 = vpop.permute.xlu0 %3773
        %3775 = vrot.lane.b32.xlu0 %v3762, 34
        %v3776 = vpop.permute.xlu0 %3775
        %v3777 = vsel %vm274, %v3770, %v3772
        %v3778 = vsel %vm274, %v3774, %v3776
        %3785 = vst.msk [vmem:[#allocation2] sm:$0xff] %vm534, %v3770
        %3786 = vst [vmem:[#allocation2 + $0x8] sm:$0xff] %v3777
        %3787 = vst.msk [vmem:[#allocation2 + $0x10] sm:$0xff] %vm274, %v3772
        %3788 = vst.msk [vmem:[#allocation2 + $0x30] sm:$0xff] %vm534, %v3774
        %3789 = vst [vmem:[#allocation2 + $0x38] sm:$0xff] %v3778
        %3790 = vst.msk [vmem:[#allocation2 + $0x40] sm:$0xff] %vm274, %v3776
        %3795 = vrot.lane.b32.xlu0 %v3759, 102
        %v3796 = vpop.permute.xlu0 %3795
        %3797 = vrot.lane.b32.xlu0 %v3760, 102
        %v3798 = vpop.permute.xlu0 %3797
        %3799 = vrot.lane.b32.xlu0 %v3763, 102
        %v3800 = vpop.permute.xlu0 %3799
        %3801 = vrot.lane.b32.xlu0 %v3764, 102
        %v3802 = vpop.permute.xlu0 %3801
        %v3803 = vsel %vm553, %v3796, %v3798
        %v3804 = vsel %vm553, %v3800, %v3802
        %3811 = vst.msk [vmem:[#allocation2 + $0x10] sm:$0xff] %vm280, %v3796
        %3812 = vst [vmem:[#allocation2 + $0x18] sm:$0xff] %v3803
        %3813 = vst.msk [vmem:[#allocation2 + $0x20] sm:$0xff] %vm553, %v3798
        %3814 = vst.msk [vmem:[#allocation2 + $0x40] sm:$0xff] %vm280, %v3800
        %3815 = vst [vmem:[#allocation2 + $0x48] sm:$0xff] %v3804
        %3816 = vst.msk [vmem:[#allocation2 + $0x50] sm:$0xff] %vm553, %v3802
        %v3817 = vld [vmem:[#allocation2] sm:$0xff]
        %v3818 = vld [vmem:[#allocation2 + $0x8] sm:$0xff]
        %v3819 = vld [vmem:[#allocation2 + $0x30] sm:$0xff]
        %v3820 = vld [vmem:[#allocation2 + $0x38] sm:$0xff]
        %v3821 = vmul.f32 %v3817, %v291
        %v3822 = vmul.f32 %v3818, %v295
        %v3823 = vmul.f32 %v3819, %v291
        %v3824 = vmul.f32 %v3820, %v295
        %3825 = vst [vmem:[#allocation3] sm:$0xff] %v3821
        %3826 = vst [vmem:[#allocation3 + $0x8] sm:$0xff] %v3822
        %3827 = vst [vmem:[#allocation3 + $0x20] sm:$0xff] %v3823
        %3828 = vst [vmem:[#allocation3 + $0x28] sm:$0xff] %v3824
        %v3829 = vld [vmem:[#allocation2 + $0x10] sm:$0xff]
        %v3830 = vld [vmem:[#allocation2 + $0x18] sm:$0xff]
        %v3831 = vld [vmem:[#allocation2 + $0x20] sm:$0xff]
        %v3832 = vld [vmem:[#allocation2 + $0x40] sm:$0xff]
        %v3833 = vld [vmem:[#allocation2 + $0x48] sm:$0xff]
        %v3834 = vld [vmem:[#allocation2 + $0x50] sm:$0xff]
        %v3835 = vmul.f32 %v3829, %v587
        %v3836 = vmul.f32 %v3830, %v591
        %v3837 = vmul.f32 %v3831, %v589
        %v3838 = vmul.f32 %v3832, %v587
        %v3839 = vmul.f32 %v3833, %v591
        %v3840 = vmul.f32 %v3834, %v589
        %3847 = vrot.lane.b32.xlu0 %v3835, 60
        %v3848 = vpop.permute.xlu0 %3847
        %3849 = vrot.lane.b32.xlu0 %v3836, 60
        %v3850 = vpop.permute.xlu0 %3849
        %3851 = vrot.lane.b32.xlu0 %v3837, 60
        %v3852 = vpop.permute.xlu0 %3851
        %3853 = vrot.lane.b32.xlu0 %v3838, 60
        %v3854 = vpop.permute.xlu0 %3853
        %3855 = vrot.lane.b32.xlu0 %v3839, 60
        %v3856 = vpop.permute.xlu0 %3855
        %3857 = vrot.lane.b32.xlu0 %v3840, 60
        %v3858 = vpop.permute.xlu0 %3857
        %v3859 = vsel %vm619, %v3848, %v3850
        %v3860 = vsel %vm619, %v3850, %v3852
        %v3861 = vsel %vm619, %v3854, %v3856
        %v3862 = vsel %vm619, %v3856, %v3858
        %3867 = vst [vmem:[#allocation3 + $0x10] sm:$0xff] %v3859
        %3868 = vst [vmem:[#allocation3 + $0x18] sm:$0xff] %v3860
        %3869 = vst [vmem:[#allocation3 + $0x30] sm:$0xff] %v3861
        %3870 = vst [vmem:[#allocation3 + $0x38] sm:$0xff] %v3862
        %v3871 = vld [vmem:[#allocation2] sm:$0xff]
        %v3872 = vld [vmem:[#allocation2 + $0x8] sm:$0xff]
        %v3873 = vld [vmem:[#allocation2 + $0x10] sm:$0xff]
        %v3874 = vld [vmem:[#allocation2 + $0x30] sm:$0xff]
        %v3875 = vld [vmem:[#allocation2 + $0x38] sm:$0xff]
        %v3876 = vld [vmem:[#allocation2 + $0x40] sm:$0xff]
        %v3877 = vmul.f32 %v3871, %v639
        %v3878 = vmul.f32 %v3872, %v643
        %v3879 = vmul.f32 %v3873, %v641
        %v3880 = vmul.f32 %v3874, %v639
        %v3881 = vmul.f32 %v3875, %v643
        %v3882 = vmul.f32 %v3876, %v641
        %3889 = vrot.lane.b32.xlu0 %v3877, 127
        %v3890 = vpop.permute.xlu0 %3889
        %3891 = vrot.lane.b32.xlu0 %v3878, 127
        %v3892 = vpop.permute.xlu0 %3891
        %3893 = vrot.lane.b32.xlu0 %v3879, 127
        %v3894 = vpop.permute.xlu0 %3893
        %3895 = vrot.lane.b32.xlu0 %v3880, 127
        %v3896 = vpop.permute.xlu0 %3895
        %3897 = vrot.lane.b32.xlu0 %v3881, 127
        %v3898 = vpop.permute.xlu0 %3897
        %3899 = vrot.lane.b32.xlu0 %v3882, 127
        %v3900 = vpop.permute.xlu0 %3899
        %v3901 = vsel %vm671, %v3890, %v3892
        %v3902 = vsel %vm671, %v3892, %v3894
        %v3903 = vsel %vm671, %v3896, %v3898
        %v3904 = vsel %vm671, %v3898, %v3900
        %3909 = vst [vmem:[#allocation3 + $0x40] sm:$0xff] %v3901
        %3910 = vst [vmem:[#allocation3 + $0x48] sm:$0xff] %v3902
        %3911 = vst [vmem:[#allocation3 + $0x60] sm:$0xff] %v3903
        %3912 = vst [vmem:[#allocation3 + $0x68] sm:$0xff] %v3904
        %v3913 = vld [vmem:[#allocation2 + $0x10] sm:$0xff]
        %v3914 = vld [vmem:[#allocation2 + $0x18] sm:$0xff]
        %v3915 = vld [vmem:[#allocation2 + $0x20] sm:$0xff]
        %v3916 = vld [vmem:[#allocation2 + $0x40] sm:$0xff]
        %v3917 = vld [vmem:[#allocation2 + $0x48] sm:$0xff]
        %v3918 = vld [vmem:[#allocation2 + $0x50] sm:$0xff]
        %v3919 = vmul.f32 %v3913, %v691
        %v3920 = vmul.f32 %v3914, %v695
        %v3921 = vmul.f32 %v3915, %v693
        %v3922 = vmul.f32 %v3916, %v691
        %v3923 = vmul.f32 %v3917, %v695
        %v3924 = vmul.f32 %v3918, %v693
        %3931 = vrot.lane.b32.xlu0 %v3919, 59
        %v3932 = vpop.permute.xlu0 %3931
        %3933 = vrot.lane.b32.xlu0 %v3920, 59
        %v3934 = vpop.permute.xlu0 %3933
        %3935 = vrot.lane.b32.xlu0 %v3921, 59
        %v3936 = vpop.permute.xlu0 %3935
        %3937 = vrot.lane.b32.xlu0 %v3922, 59
        %v3938 = vpop.permute.xlu0 %3937
        %3939 = vrot.lane.b32.xlu0 %v3923, 59
        %v3940 = vpop.permute.xlu0 %3939
        %3941 = vrot.lane.b32.xlu0 %v3924, 59
        %v3942 = vpop.permute.xlu0 %3941
        %v3943 = vsel %vm723, %v3932, %v3934
        %v3944 = vsel %vm723, %v3934, %v3936
        %v3945 = vsel %vm723, %v3938, %v3940
        %v3946 = vsel %vm723, %v3940, %v3942
        %3951 = vst [vmem:[#allocation3 + $0x50] sm:$0xff] %v3943
        %3952 = vst [vmem:[#allocation3 + $0x58] sm:$0xff] %v3944
        %3953 = vst [vmem:[#allocation3 + $0x70] sm:$0xff] %v3945
        %3954 = vst [vmem:[#allocation3 + $0x78] sm:$0xff] %v3946
        %v3955 = vld [vmem:[#allocation2] sm:$0xff]
        %v3956 = vld [vmem:[#allocation2 + $0x8] sm:$0xff]
        %v3957 = vld [vmem:[#allocation2 + $0x10] sm:$0xff]
        %v3958 = vld [vmem:[#allocation2 + $0x30] sm:$0xff]
        %v3959 = vld [vmem:[#allocation2 + $0x38] sm:$0xff]
        %v3960 = vld [vmem:[#allocation2 + $0x40] sm:$0xff]
        %3967 = vrot.lane.b32.xlu0 %v3955, 126
        %v3968 = vpop.permute.xlu0 %3967
        %3969 = vrot.lane.b32.xlu0 %v3956, 126
        %v3970 = vpop.permute.xlu0 %3969
        %3971 = vrot.lane.b32.xlu0 %v3957, 126
        %v3972 = vpop.permute.xlu0 %3971
        %3973 = vrot.lane.b32.xlu0 %v3958, 126
        %v3974 = vpop.permute.xlu0 %3973
        %3975 = vrot.lane.b32.xlu0 %v3959, 126
        %v3976 = vpop.permute.xlu0 %3975
        %3977 = vrot.lane.b32.xlu0 %v3960, 126
        %v3978 = vpop.permute.xlu0 %3977
        %v3979 = vsel %vm760, %v3968, %v3970
        %v3980 = vsel %vm760, %v3970, %v3972
        %v3981 = vsel %vm760, %v3974, %v3976
        %v3982 = vsel %vm760, %v3976, %v3978
        %3987 = vst [vmem:[#allocation3 + $0x80] sm:$0xff] %v3979
        %3988 = vst [vmem:[#allocation3 + $0x88] sm:$0xff] %v3980
        %3989 = vst [vmem:[#allocation3 + $0xa0] sm:$0xff] %v3981
        %3990 = vst [vmem:[#allocation3 + $0xa8] sm:$0xff] %v3982
        %v3991 = vld [vmem:[#allocation2 + $0x10] sm:$0xff]
        %v3992 = vld [vmem:[#allocation2 + $0x18] sm:$0xff]
        %v3993 = vld [vmem:[#allocation2 + $0x20] sm:$0xff]
        %v3994 = vld [vmem:[#allocation2 + $0x40] sm:$0xff]
        %v3995 = vld [vmem:[#allocation2 + $0x48] sm:$0xff]
        %v3996 = vld [vmem:[#allocation2 + $0x50] sm:$0xff]
        %4003 = vrot.lane.b32.xlu0 %v3991, 58
        %v4004 = vpop.permute.xlu0 %4003
        %4005 = vrot.lane.b32.xlu0 %v3992, 58
        %v4006 = vpop.permute.xlu0 %4005
        %4007 = vrot.lane.b32.xlu0 %v3993, 58
        %v4008 = vpop.permute.xlu0 %4007
        %4009 = vrot.lane.b32.xlu0 %v3994, 58
        %v4010 = vpop.permute.xlu0 %4009
        %4011 = vrot.lane.b32.xlu0 %v3995, 58
        %v4012 = vpop.permute.xlu0 %4011
        %4013 = vrot.lane.b32.xlu0 %v3996, 58
        %v4014 = vpop.permute.xlu0 %4013
        %v4015 = vsel %vm797, %v4004, %v4006
        %v4016 = vsel %vm797, %v4006, %v4008
        %v4017 = vsel %vm797, %v4010, %v4012
        %v4018 = vsel %vm797, %v4012, %v4014
        %4023 = vst [vmem:[#allocation3 + $0x90] sm:$0xff] %v4015
        %4024 = vst [vmem:[#allocation3 + $0x98] sm:$0xff] %v4016
        %4025 = vst [vmem:[#allocation3 + $0xb0] sm:$0xff] %v4017
        %4026 = vst [vmem:[#allocation3 + $0xb8] sm:$0xff] %v4018
        %v4027 = vld [vmem:[#allocation2] sm:$0xff]
        %v4028 = vld [vmem:[#allocation2 + $0x8] sm:$0xff]
        %v4029 = vld [vmem:[#allocation2 + $0x10] sm:$0xff]
        %v4030 = vld [vmem:[#allocation2 + $0x30] sm:$0xff]
        %v4031 = vld [vmem:[#allocation2 + $0x38] sm:$0xff]
        %v4032 = vld [vmem:[#allocation2 + $0x40] sm:$0xff]
        %v4033 = vmul.f32 %v4027, %v817
        %v4034 = vmul.f32 %v4028, %v821
        %v4035 = vmul.f32 %v4029, %v819
        %v4036 = vmul.f32 %v4030, %v817
        %v4037 = vmul.f32 %v4031, %v821
        %v4038 = vmul.f32 %v4032, %v819
        %4045 = vrot.lane.b32.xlu0 %v4033, 125
        %v4046 = vpop.permute.xlu0 %4045
        %4047 = vrot.lane.b32.xlu0 %v4034, 125
        %v4048 = vpop.permute.xlu0 %4047
        %4049 = vrot.lane.b32.xlu0 %v4035, 125
        %v4050 = vpop.permute.xlu0 %4049
        %4051 = vrot.lane.b32.xlu0 %v4036, 125
        %v4052 = vpop.permute.xlu0 %4051
        %4053 = vrot.lane.b32.xlu0 %v4037, 125
        %v4054 = vpop.permute.xlu0 %4053
        %4055 = vrot.lane.b32.xlu0 %v4038, 125
        %v4056 = vpop.permute.xlu0 %4055
        %v4057 = vsel %vm849, %v4046, %v4048
        %v4058 = vsel %vm849, %v4048, %v4050
        %v4059 = vsel %vm849, %v4052, %v4054
        %v4060 = vsel %vm849, %v4054, %v4056
        %4065 = vst [vmem:[#allocation3 + $0xc0] sm:$0xff] %v4057
        %4066 = vst [vmem:[#allocation3 + $0xc8] sm:$0xff] %v4058
        %4067 = vst [vmem:[#allocation3 + $0xe0] sm:$0xff] %v4059
        %4068 = vst [vmem:[#allocation3 + $0xe8] sm:$0xff] %v4060
        %v4069 = vld [vmem:[#allocation2 + $0x10] sm:$0xff]
        %v4070 = vld [vmem:[#allocation2 + $0x18] sm:$0xff]
        %v4071 = vld [vmem:[#allocation2 + $0x20] sm:$0xff]
        %v4072 = vld [vmem:[#allocation2 + $0x40] sm:$0xff]
        %v4073 = vld [vmem:[#allocation2 + $0x48] sm:$0xff]
        %v4074 = vld [vmem:[#allocation2 + $0x50] sm:$0xff]
        %v4075 = vmul.f32 %v4069, %v869
        %v4076 = vmul.f32 %v4070, %v873
        %v4077 = vmul.f32 %v4071, %v871
        %v4078 = vmul.f32 %v4072, %v869
        %v4079 = vmul.f32 %v4073, %v873
        %v4080 = vmul.f32 %v4074, %v871
        %4087 = vrot.lane.b32.xlu0 %v4075, 57
        %v4088 = vpop.permute.xlu0 %4087
        %4089 = vrot.lane.b32.xlu0 %v4076, 57
        %v4090 = vpop.permute.xlu0 %4089
        %4091 = vrot.lane.b32.xlu0 %v4077, 57
        %v4092 = vpop.permute.xlu0 %4091
        %4093 = vrot.lane.b32.xlu0 %v4078, 57
        %v4094 = vpop.permute.xlu0 %4093
        %4095 = vrot.lane.b32.xlu0 %v4079, 57
        %v4096 = vpop.permute.xlu0 %4095
        %4097 = vrot.lane.b32.xlu0 %v4080, 57
        %v4098 = vpop.permute.xlu0 %4097
        %v4099 = vsel %vm901, %v4088, %v4090
        %v4100 = vsel %vm901, %v4090, %v4092
        %v4101 = vsel %vm901, %v4094, %v4096
        %v4102 = vsel %vm901, %v4096, %v4098
        %4107 = vst [vmem:[#allocation3 + $0xd0] sm:$0xff] %v4099
        %4108 = vst [vmem:[#allocation3 + $0xd8] sm:$0xff] %v4100
        %4109 = vst [vmem:[#allocation3 + $0xf0] sm:$0xff] %v4101
        %4110 = vst [vmem:[#allocation3 + $0xf8] sm:$0xff] %v4102
        %v4111 = vld [vmem:[#allocation2] sm:$0xff]
        %v4112 = vld [vmem:[#allocation2 + $0x8] sm:$0xff]
        %v4113 = vld [vmem:[#allocation2 + $0x10] sm:$0xff]
        %v4114 = vld [vmem:[#allocation2 + $0x30] sm:$0xff]
        %v4115 = vld [vmem:[#allocation2 + $0x38] sm:$0xff]
        %v4116 = vld [vmem:[#allocation2 + $0x40] sm:$0xff]
        %v4117 = vmul.f32 %v4111, %v921
        %v4118 = vmul.f32 %v4112, %v925
        %v4119 = vmul.f32 %v4113, %v923
        %v4120 = vmul.f32 %v4114, %v921
        %v4121 = vmul.f32 %v4115, %v925
        %v4122 = vmul.f32 %v4116, %v923
        %4129 = vrot.lane.b32.xlu0 %v4117, 124
        %v4130 = vpop.permute.xlu0 %4129
        %4131 = vrot.lane.b32.xlu0 %v4118, 124
        %v4132 = vpop.permute.xlu0 %4131
        %4133 = vrot.lane.b32.xlu0 %v4119, 124
        %v4134 = vpop.permute.xlu0 %4133
        %4135 = vrot.lane.b32.xlu0 %v4120, 124
        %v4136 = vpop.permute.xlu0 %4135
        %4137 = vrot.lane.b32.xlu0 %v4121, 124
        %v4138 = vpop.permute.xlu0 %4137
        %4139 = vrot.lane.b32.xlu0 %v4122, 124
        %v4140 = vpop.permute.xlu0 %4139
        %v4141 = vsel %vm953, %v4130, %v4132
        %v4142 = vsel %vm953, %v4132, %v4134
        %v4143 = vsel %vm953, %v4136, %v4138
        %v4144 = vsel %vm953, %v4138, %v4140
        %4149 = vst [vmem:[#allocation3 + $0x100] sm:$0xff] %v4141
        %4150 = vst [vmem:[#allocation3 + $0x108] sm:$0xff] %v4142
        %4151 = vst [vmem:[#allocation3 + $0x120] sm:$0xff] %v4143
        %4152 = vst [vmem:[#allocation3 + $0x128] sm:$0xff] %v4144
        %v4153 = vld [vmem:[#allocation2 + $0x10] sm:$0xff]
        %v4154 = vld [vmem:[#allocation2 + $0x18] sm:$0xff]
        %v4155 = vld [vmem:[#allocation2 + $0x20] sm:$0xff]
        %v4156 = vld [vmem:[#allocation2 + $0x40] sm:$0xff]
        %v4157 = vld [vmem:[#allocation2 + $0x48] sm:$0xff]
        %v4158 = vld [vmem:[#allocation2 + $0x50] sm:$0xff]
        %v4159 = vmul.f32 %v4153, %v973
        %v4160 = vmul.f32 %v4154, %v977
        %v4161 = vmul.f32 %v4155, %v975
        %v4162 = vmul.f32 %v4156, %v973
        %v4163 = vmul.f32 %v4157, %v977
        %v4164 = vmul.f32 %v4158, %v975
        %4171 = vrot.lane.b32.xlu0 %v4159, 56
        %v4172 = vpop.permute.xlu0 %4171
        %4173 = vrot.lane.b32.xlu0 %v4160, 56
        %v4174 = vpop.permute.xlu0 %4173
        %4175 = vrot.lane.b32.xlu0 %v4161, 56
        %v4176 = vpop.permute.xlu0 %4175
        %4177 = vrot.lane.b32.xlu0 %v4162, 56
        %v4178 = vpop.permute.xlu0 %4177
        %4179 = vrot.lane.b32.xlu0 %v4163, 56
        %v4180 = vpop.permute.xlu0 %4179
        %4181 = vrot.lane.b32.xlu0 %v4164, 56
        %v4182 = vpop.permute.xlu0 %4181
        %v4183 = vsel %vm1005, %v4172, %v4174
        %v4184 = vsel %vm1005, %v4174, %v4176
        %v4185 = vsel %vm1005, %v4178, %v4180
        %v4186 = vsel %vm1005, %v4180, %v4182
        %4191 = vst [vmem:[#allocation3 + $0x110] sm:$0xff] %v4183
        %4192 = vst [vmem:[#allocation3 + $0x118] sm:$0xff] %v4184
        %4193 = vst [vmem:[#allocation3 + $0x130] sm:$0xff] %v4185
        %4194 = vst [vmem:[#allocation3 + $0x138] sm:$0xff] %v4186
        %v4195 = vld [vmem:[#allocation2] sm:$0xff]
        %v4196 = vld [vmem:[#allocation2 + $0x8] sm:$0xff]
        %v4197 = vld [vmem:[#allocation2 + $0x10] sm:$0xff]
        %v4198 = vld [vmem:[#allocation2 + $0x30] sm:$0xff]
        %v4199 = vld [vmem:[#allocation2 + $0x38] sm:$0xff]
        %v4200 = vld [vmem:[#allocation2 + $0x40] sm:$0xff]
        %v4201 = vmul.f32 %v4195, %v1025
        %v4202 = vmul.f32 %v4196, %v1028
        %v4203 = vmul.f32 %v4197, %v1027
        %v4204 = vmul.f32 %v4198, %v1025
        %v4205 = vmul.f32 %v4199, %v1028
        %v4206 = vmul.f32 %v4200, %v1027
        %4213 = vrot.lane.b32.xlu0 %v4201, 112
        %v4214 = vpop.permute.xlu0 %4213
        %4215 = vrot.lane.b32.xlu0 %v4202, 112
        %v4216 = vpop.permute.xlu0 %4215
        %4217 = vrot.lane.b32.xlu0 %v4203, 112
        %v4218 = vpop.permute.xlu0 %4217
        %4219 = vrot.lane.b32.xlu0 %v4204, 112
        %v4220 = vpop.permute.xlu0 %4219
        %4221 = vrot.lane.b32.xlu0 %v4205, 112
        %v4222 = vpop.permute.xlu0 %4221
        %4223 = vrot.lane.b32.xlu0 %v4206, 112
        %v4224 = vpop.permute.xlu0 %4223
        %v4225 = vsel %vm1056, %v4214, %v4216
        %v4226 = vsel %vm1056, %v4216, %v4218
        %v4227 = vsel %vm1056, %v4220, %v4222
        %v4228 = vsel %vm1056, %v4222, %v4224
        %4233 = vst [vmem:[#allocation3 + $0x140] sm:$0xff] %v4225
        %4234 = vst [vmem:[#allocation3 + $0x148] sm:$0xff] %v4226
        %4235 = vst [vmem:[#allocation3 + $0x160] sm:$0xff] %v4227
        %4236 = vst [vmem:[#allocation3 + $0x168] sm:$0xff] %v4228
        %v4237 = vld [vmem:[#allocation2 + $0x10] sm:$0xff]
        %v4238 = vld [vmem:[#allocation2 + $0x18] sm:$0xff]
        %v4239 = vld [vmem:[#allocation2 + $0x20] sm:$0xff]
        %v4240 = vld [vmem:[#allocation2 + $0x40] sm:$0xff]
        %v4241 = vld [vmem:[#allocation2 + $0x48] sm:$0xff]
        %v4242 = vld [vmem:[#allocation2 + $0x50] sm:$0xff]
        %v4243 = vmul.f32 %v4237, %v1076
        %v4244 = vmul.f32 %v4238, %v1080
        %v4245 = vmul.f32 %v4239, %v1078
        %v4246 = vmul.f32 %v4240, %v1076
        %v4247 = vmul.f32 %v4241, %v1080
        %v4248 = vmul.f32 %v4242, %v1078
        %4255 = vrot.lane.b32.xlu0 %v4243, 44
        %v4256 = vpop.permute.xlu0 %4255
        %4257 = vrot.lane.b32.xlu0 %v4244, 44
        %v4258 = vpop.permute.xlu0 %4257
        %4259 = vrot.lane.b32.xlu0 %v4245, 44
        %v4260 = vpop.permute.xlu0 %4259
        %4261 = vrot.lane.b32.xlu0 %v4246, 44
        %v4262 = vpop.permute.xlu0 %4261
        %4263 = vrot.lane.b32.xlu0 %v4247, 44
        %v4264 = vpop.permute.xlu0 %4263
        %4265 = vrot.lane.b32.xlu0 %v4248, 44
        %v4266 = vpop.permute.xlu0 %4265
        %v4267 = vsel %vm1108, %v4256, %v4258
        %v4268 = vsel %vm1108, %v4258, %v4260
        %v4269 = vsel %vm1108, %v4262, %v4264
        %v4270 = vsel %vm1108, %v4264, %v4266
        %4275 = vst [vmem:[#allocation3 + $0x150] sm:$0xff] %v4267
        %4276 = vst [vmem:[#allocation3 + $0x158] sm:$0xff] %v4268
        %4277 = vst [vmem:[#allocation3 + $0x170] sm:$0xff] %v4269
        %4278 = vst [vmem:[#allocation3 + $0x178] sm:$0xff] %v4270
        %v4279 = vld [vmem:[#allocation2] sm:$0xff]
        %v4280 = vld [vmem:[#allocation2 + $0x8] sm:$0xff]
        %v4281 = vld [vmem:[#allocation2 + $0x10] sm:$0xff]
        %v4282 = vld [vmem:[#allocation2 + $0x30] sm:$0xff]
        %v4283 = vld [vmem:[#allocation2 + $0x38] sm:$0xff]
        %v4284 = vld [vmem:[#allocation2 + $0x40] sm:$0xff]
        %v4285 = vmul.f32 %v4279, %v1128
        %v4286 = vmul.f32 %v4280, %v1132
        %v4287 = vmul.f32 %v4281, %v1130
        %v4288 = vmul.f32 %v4282, %v1128
        %v4289 = vmul.f32 %v4283, %v1132
        %v4290 = vmul.f32 %v4284, %v1130
        %4297 = vrot.lane.b32.xlu0 %v4285, 111
        %v4298 = vpop.permute.xlu0 %4297
        %4299 = vrot.lane.b32.xlu0 %v4286, 111
        %v4300 = vpop.permute.xlu0 %4299
        %4301 = vrot.lane.b32.xlu0 %v4287, 111
        %v4302 = vpop.permute.xlu0 %4301
        %4303 = vrot.lane.b32.xlu0 %v4288, 111
        %v4304 = vpop.permute.xlu0 %4303
        %4305 = vrot.lane.b32.xlu0 %v4289, 111
        %v4306 = vpop.permute.xlu0 %4305
        %4307 = vrot.lane.b32.xlu0 %v4290, 111
        %v4308 = vpop.permute.xlu0 %4307
        %v4309 = vsel %vm1160, %v4298, %v4300
        %v4310 = vsel %vm1160, %v4300, %v4302
        %v4311 = vsel %vm1160, %v4304, %v4306
        %v4312 = vsel %vm1160, %v4306, %v4308
        %4317 = vst [vmem:[#allocation3 + $0x180] sm:$0xff] %v4309
        %4318 = vst [vmem:[#allocation3 + $0x188] sm:$0xff] %v4310
        %4319 = vst [vmem:[#allocation3 + $0x1a0] sm:$0xff] %v4311
        %4320 = vst [vmem:[#allocation3 + $0x1a8] sm:$0xff] %v4312
        %v4321 = vld [vmem:[#allocation2 + $0x10] sm:$0xff]
        %v4322 = vld [vmem:[#allocation2 + $0x18] sm:$0xff]
        %v4323 = vld [vmem:[#allocation2 + $0x20] sm:$0xff]
        %v4324 = vld [vmem:[#allocation2 + $0x40] sm:$0xff]
        %v4325 = vld [vmem:[#allocation2 + $0x48] sm:$0xff]
        %v4326 = vld [vmem:[#allocation2 + $0x50] sm:$0xff]
        %v4327 = vmul.f32 %v4321, %v1180
        %v4328 = vmul.f32 %v4322, %v1184
        %v4329 = vmul.f32 %v4323, %v1182
        %v4330 = vmul.f32 %v4324, %v1180
        %v4331 = vmul.f32 %v4325, %v1184
        %v4332 = vmul.f32 %v4326, %v1182
        %4339 = vrot.lane.b32.xlu0 %v4327, 43
        %v4340 = vpop.permute.xlu0 %4339
        %4341 = vrot.lane.b32.xlu0 %v4328, 43
        %v4342 = vpop.permute.xlu0 %4341
        %4343 = vrot.lane.b32.xlu0 %v4329, 43
        %v4344 = vpop.permute.xlu0 %4343
        %4345 = vrot.lane.b32.xlu0 %v4330, 43
        %v4346 = vpop.permute.xlu0 %4345
        %4347 = vrot.lane.b32.xlu0 %v4331, 43
        %v4348 = vpop.permute.xlu0 %4347
        %4349 = vrot.lane.b32.xlu0 %v4332, 43
        %v4350 = vpop.permute.xlu0 %4349
        %v4351 = vsel %vm1212, %v4340, %v4342
        %v4352 = vsel %vm1212, %v4342, %v4344
        %v4353 = vsel %vm1212, %v4346, %v4348
        %v4354 = vsel %vm1212, %v4348, %v4350
        %4359 = vst [vmem:[#allocation3 + $0x190] sm:$0xff] %v4351
        %4360 = vst [vmem:[#allocation3 + $0x198] sm:$0xff] %v4352
        %4361 = vst [vmem:[#allocation3 + $0x1b0] sm:$0xff] %v4353
        %4362 = vst [vmem:[#allocation3 + $0x1b8] sm:$0xff] %v4354
        %v4363 = vld [vmem:[#allocation2] sm:$0xff]
        %v4364 = vld [vmem:[#allocation2 + $0x8] sm:$0xff]
        %v4365 = vld [vmem:[#allocation2 + $0x10] sm:$0xff]
        %v4366 = vld [vmem:[#allocation2 + $0x30] sm:$0xff]
        %v4367 = vld [vmem:[#allocation2 + $0x38] sm:$0xff]
        %v4368 = vld [vmem:[#allocation2 + $0x40] sm:$0xff]
        %4375 = vrot.lane.b32.xlu0 %v4363, 110
        %v4376 = vpop.permute.xlu0 %4375
        %4377 = vrot.lane.b32.xlu0 %v4364, 110
        %v4378 = vpop.permute.xlu0 %4377
        %4379 = vrot.lane.b32.xlu0 %v4365, 110
        %v4380 = vpop.permute.xlu0 %4379
        %4381 = vrot.lane.b32.xlu0 %v4366, 110
        %v4382 = vpop.permute.xlu0 %4381
        %4383 = vrot.lane.b32.xlu0 %v4367, 110
        %v4384 = vpop.permute.xlu0 %4383
        %4385 = vrot.lane.b32.xlu0 %v4368, 110
        %v4386 = vpop.permute.xlu0 %4385
        %v4387 = vsel %vm1249, %v4376, %v4378
        %v4388 = vsel %vm1249, %v4378, %v4380
        %v4389 = vsel %vm1249, %v4382, %v4384
        %v4390 = vsel %vm1249, %v4384, %v4386
        %4395 = vst [vmem:[#allocation3 + $0x1c0] sm:$0xff] %v4387
        %4396 = vst [vmem:[#allocation3 + $0x1c8] sm:$0xff] %v4388
        %4397 = vst [vmem:[#allocation3 + $0x1e0] sm:$0xff] %v4389
        %4398 = vst [vmem:[#allocation3 + $0x1e8] sm:$0xff] %v4390
        %v4399 = vld [vmem:[#allocation2 + $0x10] sm:$0xff]
        %v4400 = vld [vmem:[#allocation2 + $0x18] sm:$0xff]
        %v4401 = vld [vmem:[#allocation2 + $0x20] sm:$0xff]
        %v4402 = vld [vmem:[#allocation2 + $0x40] sm:$0xff]
        %v4403 = vld [vmem:[#allocation2 + $0x48] sm:$0xff]
        %v4404 = vld [vmem:[#allocation2 + $0x50] sm:$0xff]
        %4411 = vrot.lane.b32.xlu0 %v4399, 42
        %v4412 = vpop.permute.xlu0 %4411
        %4413 = vrot.lane.b32.xlu0 %v4400, 42
        %v4414 = vpop.permute.xlu0 %4413
        %4415 = vrot.lane.b32.xlu0 %v4401, 42
        %v4416 = vpop.permute.xlu0 %4415
        %4417 = vrot.lane.b32.xlu0 %v4402, 42
        %v4418 = vpop.permute.xlu0 %4417
        %4419 = vrot.lane.b32.xlu0 %v4403, 42
        %v4420 = vpop.permute.xlu0 %4419
        %4421 = vrot.lane.b32.xlu0 %v4404, 42
        %v4422 = vpop.permute.xlu0 %4421
        %v4423 = vsel %vm1286, %v4412, %v4414
        %v4424 = vsel %vm1286, %v4414, %v4416
        %v4425 = vsel %vm1286, %v4418, %v4420
        %v4426 = vsel %vm1286, %v4420, %v4422
        %4431 = vst [vmem:[#allocation3 + $0x1d0] sm:$0xff] %v4423
        %4432 = vst [vmem:[#allocation3 + $0x1d8] sm:$0xff] %v4424
        %4433 = vst [vmem:[#allocation3 + $0x1f0] sm:$0xff] %v4425
        %4434 = vst [vmem:[#allocation3 + $0x1f8] sm:$0xff] %v4426
        %v4435 = vld [vmem:[#allocation2] sm:$0xff]
        %v4436 = vld [vmem:[#allocation2 + $0x8] sm:$0xff]
        %v4437 = vld [vmem:[#allocation2 + $0x10] sm:$0xff]
        %v4438 = vld [vmem:[#allocation2 + $0x30] sm:$0xff]
        %v4439 = vld [vmem:[#allocation2 + $0x38] sm:$0xff]
        %v4440 = vld [vmem:[#allocation2 + $0x40] sm:$0xff]
        %v4441 = vmul.f32 %v4435, %v1306
        %v4442 = vmul.f32 %v4436, %v1310
        %v4443 = vmul.f32 %v4437, %v1308
        %v4444 = vmul.f32 %v4438, %v1306
        %v4445 = vmul.f32 %v4439, %v1310
        %v4446 = vmul.f32 %v4440, %v1308
        %4453 = vrot.lane.b32.xlu0 %v4441, 109
        %v4454 = vpop.permute.xlu0 %4453
        %4455 = vrot.lane.b32.xlu0 %v4442, 109
        %v4456 = vpop.permute.xlu0 %4455
        %4457 = vrot.lane.b32.xlu0 %v4443, 109
        %v4458 = vpop.permute.xlu0 %4457
        %4459 = vrot.lane.b32.xlu0 %v4444, 109
        %v4460 = vpop.permute.xlu0 %4459
        %4461 = vrot.lane.b32.xlu0 %v4445, 109
        %v4462 = vpop.permute.xlu0 %4461
        %4463 = vrot.lane.b32.xlu0 %v4446, 109
        %v4464 = vpop.permute.xlu0 %4463
        %v4465 = vsel %vm1338, %v4454, %v4456
        %v4466 = vsel %vm1338, %v4456, %v4458
        %v4467 = vsel %vm1338, %v4460, %v4462
        %v4468 = vsel %vm1338, %v4462, %v4464
        %4473 = vst [vmem:[#allocation3 + $0x200] sm:$0xff] %v4465
        %4474 = vst [vmem:[#allocation3 + $0x208] sm:$0xff] %v4466
        %4475 = vst [vmem:[#allocation3 + $0x220] sm:$0xff] %v4467
        %4476 = vst [vmem:[#allocation3 + $0x228] sm:$0xff] %v4468
        %v4477 = vld [vmem:[#allocation2 + $0x10] sm:$0xff]
        %v4478 = vld [vmem:[#allocation2 + $0x18] sm:$0xff]
        %v4479 = vld [vmem:[#allocation2 + $0x20] sm:$0xff]
        %v4480 = vld [vmem:[#allocation2 + $0x40] sm:$0xff]
        %v4481 = vld [vmem:[#allocation2 + $0x48] sm:$0xff]
        %v4482 = vld [vmem:[#allocation2 + $0x50] sm:$0xff]
        %v4483 = vmul.f32 %v4477, %v1358
        %v4484 = vmul.f32 %v4478, %v1362
        %v4485 = vmul.f32 %v4479, %v1360
        %v4486 = vmul.f32 %v4480, %v1358
        %v4487 = vmul.f32 %v4481, %v1362
        %v4488 = vmul.f32 %v4482, %v1360
        %4495 = vrot.lane.b32.xlu0 %v4483, 41
        %v4496 = vpop.permute.xlu0 %4495
        %4497 = vrot.lane.b32.xlu0 %v4484, 41
        %v4498 = vpop.permute.xlu0 %4497
        %4499 = vrot.lane.b32.xlu0 %v4485, 41
        %v4500 = vpop.permute.xlu0 %4499
        %4501 = vrot.lane.b32.xlu0 %v4486, 41
        %v4502 = vpop.permute.xlu0 %4501
        %4503 = vrot.lane.b32.xlu0 %v4487, 41
        %v4504 = vpop.permute.xlu0 %4503
        %4505 = vrot.lane.b32.xlu0 %v4488, 41
        %v4506 = vpop.permute.xlu0 %4505
        %v4507 = vsel %vm1390, %v4496, %v4498
        %v4508 = vsel %vm1390, %v4498, %v4500
        %v4509 = vsel %vm1390, %v4502, %v4504
        %v4510 = vsel %vm1390, %v4504, %v4506
        %4515 = vst [vmem:[#allocation3 + $0x210] sm:$0xff] %v4507
        %4516 = vst [vmem:[#allocation3 + $0x218] sm:$0xff] %v4508
        %4517 = vst [vmem:[#allocation3 + $0x230] sm:$0xff] %v4509
        %4518 = vst [vmem:[#allocation3 + $0x238] sm:$0xff] %v4510
        %v4519 = vld [vmem:[#allocation2] sm:$0xff]
        %v4520 = vld [vmem:[#allocation2 + $0x8] sm:$0xff]
        %v4521 = vld [vmem:[#allocation2 + $0x10] sm:$0xff]
        %v4522 = vld [vmem:[#allocation2 + $0x30] sm:$0xff]
        %v4523 = vld [vmem:[#allocation2 + $0x38] sm:$0xff]
        %v4524 = vld [vmem:[#allocation2 + $0x40] sm:$0xff]
        %v4525 = vmul.f32 %v4519, %v1410
        %v4526 = vmul.f32 %v4520, %v1414
        %v4527 = vmul.f32 %v4521, %v1412
        %v4528 = vmul.f32 %v4522, %v1410
        %v4529 = vmul.f32 %v4523, %v1414
        %v4530 = vmul.f32 %v4524, %v1412
        %4537 = vrot.lane.b32.xlu0 %v4525, 108
        %v4538 = vpop.permute.xlu0 %4537
        %4539 = vrot.lane.b32.xlu0 %v4526, 108
        %v4540 = vpop.permute.xlu0 %4539
        %4541 = vrot.lane.b32.xlu0 %v4527, 108
        %v4542 = vpop.permute.xlu0 %4541
        %4543 = vrot.lane.b32.xlu0 %v4528, 108
        %v4544 = vpop.permute.xlu0 %4543
        %4545 = vrot.lane.b32.xlu0 %v4529, 108
        %v4546 = vpop.permute.xlu0 %4545
        %4547 = vrot.lane.b32.xlu0 %v4530, 108
        %v4548 = vpop.permute.xlu0 %4547
        %v4549 = vsel %vm1442, %v4538, %v4540
        %v4550 = vsel %vm1442, %v4540, %v4542
        %v4551 = vsel %vm1442, %v4544, %v4546
        %v4552 = vsel %vm1442, %v4546, %v4548
        %4557 = vst [vmem:[#allocation3 + $0x240] sm:$0xff] %v4549
        %4558 = vst [vmem:[#allocation3 + $0x248] sm:$0xff] %v4550
        %4559 = vst [vmem:[#allocation3 + $0x260] sm:$0xff] %v4551
        %4560 = vst [vmem:[#allocation3 + $0x268] sm:$0xff] %v4552
        %v4561 = vld [vmem:[#allocation2 + $0x10] sm:$0xff]
        %v4562 = vld [vmem:[#allocation2 + $0x18] sm:$0xff]
        %v4563 = vld [vmem:[#allocation2 + $0x20] sm:$0xff]
        %v4564 = vld [vmem:[#allocation2 + $0x40] sm:$0xff]
        %v4565 = vld [vmem:[#allocation2 + $0x48] sm:$0xff]
        %v4566 = vld [vmem:[#allocation2 + $0x50] sm:$0xff]
        %v4567 = vmul.f32 %v4561, %v1462
        %v4568 = vmul.f32 %v4562, %v1466
        %v4569 = vmul.f32 %v4563, %v1464
        %v4570 = vmul.f32 %v4564, %v1462
        %v4571 = vmul.f32 %v4565, %v1466
        %v4572 = vmul.f32 %v4566, %v1464
        %4579 = vrot.lane.b32.xlu0 %v4567, 40
        %v4580 = vpop.permute.xlu0 %4579
        %4581 = vrot.lane.b32.xlu0 %v4568, 40
        %v4582 = vpop.permute.xlu0 %4581
        %4583 = vrot.lane.b32.xlu0 %v4569, 40
        %v4584 = vpop.permute.xlu0 %4583
        %4585 = vrot.lane.b32.xlu0 %v4570, 40
        %v4586 = vpop.permute.xlu0 %4585
        %4587 = vrot.lane.b32.xlu0 %v4571, 40
        %v4588 = vpop.permute.xlu0 %4587
        %4589 = vrot.lane.b32.xlu0 %v4572, 40
        %v4590 = vpop.permute.xlu0 %4589
        %v4591 = vsel %vm1494, %v4580, %v4582
        %v4592 = vsel %vm1494, %v4582, %v4584
        %v4593 = vsel %vm1494, %v4586, %v4588
        %v4594 = vsel %vm1494, %v4588, %v4590
        %4599 = vst [vmem:[#allocation3 + $0x250] sm:$0xff] %v4591
        %4600 = vst [vmem:[#allocation3 + $0x258] sm:$0xff] %v4592
        %4601 = vst [vmem:[#allocation3 + $0x270] sm:$0xff] %v4593
        %4602 = vst [vmem:[#allocation3 + $0x278] sm:$0xff] %v4594
        %v4603 = vld [vmem:[#allocation2] sm:$0xff]
        %v4604 = vld [vmem:[#allocation2 + $0x8] sm:$0xff]
        %v4605 = vld [vmem:[#allocation2 + $0x10] sm:$0xff]
        %v4606 = vld [vmem:[#allocation2 + $0x30] sm:$0xff]
        %v4607 = vld [vmem:[#allocation2 + $0x38] sm:$0xff]
        %v4608 = vld [vmem:[#allocation2 + $0x40] sm:$0xff]
        %v4609 = vmul.f32 %v4603, %v1514
        %v4610 = vmul.f32 %v4604, %v1518
        %v4611 = vmul.f32 %v4605, %v1516
        %v4612 = vmul.f32 %v4606, %v1514
        %v4613 = vmul.f32 %v4607, %v1518
        %v4614 = vmul.f32 %v4608, %v1516
        %4621 = vrot.lane.b32.xlu0 %v4609, 96
        %v4622 = vpop.permute.xlu0 %4621
        %4623 = vrot.lane.b32.xlu0 %v4610, 96
        %v4624 = vpop.permute.xlu0 %4623
        %4625 = vrot.lane.b32.xlu0 %v4611, 96
        %v4626 = vpop.permute.xlu0 %4625
        %4627 = vrot.lane.b32.xlu0 %v4612, 96
        %v4628 = vpop.permute.xlu0 %4627
        %4629 = vrot.lane.b32.xlu0 %v4613, 96
        %v4630 = vpop.permute.xlu0 %4629
        %4631 = vrot.lane.b32.xlu0 %v4614, 96
        %v4632 = vpop.permute.xlu0 %4631
        %v4633 = vsel %vm1546, %v4622, %v4624
        %v4634 = vsel %vm1546, %v4624, %v4626
        %v4635 = vsel %vm1546, %v4628, %v4630
        %v4636 = vsel %vm1546, %v4630, %v4632
        %4641 = vst [vmem:[#allocation3 + $0x280] sm:$0xff] %v4633
        %4642 = vst [vmem:[#allocation3 + $0x288] sm:$0xff] %v4634
        %4643 = vst [vmem:[#allocation3 + $0x2a0] sm:$0xff] %v4635
        %4644 = vst [vmem:[#allocation3 + $0x2a8] sm:$0xff] %v4636
        %v4645 = vld [vmem:[#allocation2 + $0x10] sm:$0xff]
        %v4646 = vld [vmem:[#allocation2 + $0x18] sm:$0xff]
        %v4647 = vld [vmem:[#allocation2 + $0x20] sm:$0xff]
        %v4648 = vld [vmem:[#allocation2 + $0x40] sm:$0xff]
        %v4649 = vld [vmem:[#allocation2 + $0x48] sm:$0xff]
        %v4650 = vld [vmem:[#allocation2 + $0x50] sm:$0xff]
        %v4651 = vmul.f32 %v4645, %v1566
        %v4652 = vmul.f32 %v4646, %v1570
        %v4653 = vmul.f32 %v4647, %v1568
        %v4654 = vmul.f32 %v4648, %v1566
        %v4655 = vmul.f32 %v4649, %v1570
        %v4656 = vmul.f32 %v4650, %v1568
        %4663 = vrot.lane.b32.xlu0 %v4651, 28
        %v4664 = vpop.permute.xlu0 %4663
        %4665 = vrot.lane.b32.xlu0 %v4652, 28
        %v4666 = vpop.permute.xlu0 %4665
        %4667 = vrot.lane.b32.xlu0 %v4653, 28
        %v4668 = vpop.permute.xlu0 %4667
        %4669 = vrot.lane.b32.xlu0 %v4654, 28
        %v4670 = vpop.permute.xlu0 %4669
        %4671 = vrot.lane.b32.xlu0 %v4655, 28
        %v4672 = vpop.permute.xlu0 %4671
        %4673 = vrot.lane.b32.xlu0 %v4656, 28
        %v4674 = vpop.permute.xlu0 %4673
        %v4675 = vsel %vm1598, %v4664, %v4666
        %v4676 = vsel %vm1598, %v4666, %v4668
        %v4677 = vsel %vm1598, %v4670, %v4672
        %v4678 = vsel %vm1598, %v4672, %v4674
        %4683 = vst [vmem:[#allocation3 + $0x290] sm:$0xff] %v4675
        %4684 = vst [vmem:[#allocation3 + $0x298] sm:$0xff] %v4676
        %4685 = vst [vmem:[#allocation3 + $0x2b0] sm:$0xff] %v4677
        %4686 = vst [vmem:[#allocation3 + $0x2b8] sm:$0xff] %v4678
        %v4687 = vld [vmem:[#allocation2] sm:$0xff]
        %v4688 = vld [vmem:[#allocation2 + $0x8] sm:$0xff]
        %v4689 = vld [vmem:[#allocation2 + $0x10] sm:$0xff]
        %v4690 = vld [vmem:[#allocation2 + $0x30] sm:$0xff]
        %v4691 = vld [vmem:[#allocation2 + $0x38] sm:$0xff]
        %v4692 = vld [vmem:[#allocation2 + $0x40] sm:$0xff]
        %v4693 = vmul.f32 %v4687, %v1618
        %v4694 = vmul.f32 %v4688, %v1622
        %v4695 = vmul.f32 %v4689, %v1620
        %v4696 = vmul.f32 %v4690, %v1618
        %v4697 = vmul.f32 %v4691, %v1622
        %v4698 = vmul.f32 %v4692, %v1620
        %4705 = vrot.lane.b32.xlu0 %v4693, 95
        %v4706 = vpop.permute.xlu0 %4705
        %4707 = vrot.lane.b32.xlu0 %v4694, 95
        %v4708 = vpop.permute.xlu0 %4707
        %4709 = vrot.lane.b32.xlu0 %v4695, 95
        %v4710 = vpop.permute.xlu0 %4709
        %4711 = vrot.lane.b32.xlu0 %v4696, 95
        %v4712 = vpop.permute.xlu0 %4711
        %4713 = vrot.lane.b32.xlu0 %v4697, 95
        %v4714 = vpop.permute.xlu0 %4713
        %4715 = vrot.lane.b32.xlu0 %v4698, 95
        %v4716 = vpop.permute.xlu0 %4715
        %v4717 = vsel %vm1650, %v4706, %v4708
        %v4718 = vsel %vm1650, %v4708, %v4710
        %v4719 = vsel %vm1650, %v4712, %v4714
        %v4720 = vsel %vm1650, %v4714, %v4716
        %4725 = vst [vmem:[#allocation3 + $0x2c0] sm:$0xff] %v4717
        %4726 = vst [vmem:[#allocation3 + $0x2c8] sm:$0xff] %v4718
        %4727 = vst [vmem:[#allocation3 + $0x2e0] sm:$0xff] %v4719
        %4728 = vst [vmem:[#allocation3 + $0x2e8] sm:$0xff] %v4720
        %v4729 = vld [vmem:[#allocation2 + $0x10] sm:$0xff]
        %v4730 = vld [vmem:[#allocation2 + $0x18] sm:$0xff]
        %v4731 = vld [vmem:[#allocation2 + $0x20] sm:$0xff]
        %v4732 = vld [vmem:[#allocation2 + $0x40] sm:$0xff]
        %v4733 = vld [vmem:[#allocation2 + $0x48] sm:$0xff]
        %v4734 = vld [vmem:[#allocation2 + $0x50] sm:$0xff]
        %v4735 = vmul.f32 %v4729, %v1670
        %v4736 = vmul.f32 %v4730, %v1674
        %v4737 = vmul.f32 %v4731, %v1672
        %v4738 = vmul.f32 %v4732, %v1670
        %v4739 = vmul.f32 %v4733, %v1674
        %v4740 = vmul.f32 %v4734, %v1672
        %4747 = vrot.lane.b32.xlu0 %v4735, 27
        %v4748 = vpop.permute.xlu0 %4747
        %4749 = vrot.lane.b32.xlu0 %v4736, 27
        %v4750 = vpop.permute.xlu0 %4749
        %4751 = vrot.lane.b32.xlu0 %v4737, 27
        %v4752 = vpop.permute.xlu0 %4751
        %4753 = vrot.lane.b32.xlu0 %v4738, 27
        %v4754 = vpop.permute.xlu0 %4753
        %4755 = vrot.lane.b32.xlu0 %v4739, 27
        %v4756 = vpop.permute.xlu0 %4755
        %4757 = vrot.lane.b32.xlu0 %v4740, 27
        %v4758 = vpop.permute.xlu0 %4757
        %v4759 = vsel %vm1702, %v4748, %v4750
        %v4760 = vsel %vm1702, %v4750, %v4752
        %v4761 = vsel %vm1702, %v4754, %v4756
        %v4762 = vsel %vm1702, %v4756, %v4758
        %4767 = vst [vmem:[#allocation3 + $0x2d0] sm:$0xff] %v4759
        %4768 = vst [vmem:[#allocation3 + $0x2d8] sm:$0xff] %v4760
        %4769 = vst [vmem:[#allocation3 + $0x2f0] sm:$0xff] %v4761
        %4770 = vst [vmem:[#allocation3 + $0x2f8] sm:$0xff] %v4762
        %v4771 = vld [vmem:[#allocation2] sm:$0xff]
        %v4772 = vld [vmem:[#allocation2 + $0x8] sm:$0xff]
        %v4773 = vld [vmem:[#allocation2 + $0x10] sm:$0xff]
        %v4774 = vld [vmem:[#allocation2 + $0x30] sm:$0xff]
        %v4775 = vld [vmem:[#allocation2 + $0x38] sm:$0xff]
        %v4776 = vld [vmem:[#allocation2 + $0x40] sm:$0xff]
        %4783 = vrot.lane.b32.xlu0 %v4771, 94
        %v4784 = vpop.permute.xlu0 %4783
        %4785 = vrot.lane.b32.xlu0 %v4772, 94
        %v4786 = vpop.permute.xlu0 %4785
        %4787 = vrot.lane.b32.xlu0 %v4773, 94
        %v4788 = vpop.permute.xlu0 %4787
        %4789 = vrot.lane.b32.xlu0 %v4774, 94
        %v4790 = vpop.permute.xlu0 %4789
        %4791 = vrot.lane.b32.xlu0 %v4775, 94
        %v4792 = vpop.permute.xlu0 %4791
        %4793 = vrot.lane.b32.xlu0 %v4776, 94
        %v4794 = vpop.permute.xlu0 %4793
        %v4795 = vsel %vm1739, %v4784, %v4786
        %v4796 = vsel %vm1739, %v4786, %v4788
        %v4797 = vsel %vm1739, %v4790, %v4792
        %v4798 = vsel %vm1739, %v4792, %v4794
        %4803 = vst [vmem:[#allocation3 + $0x300] sm:$0xff] %v4795
        %4804 = vst [vmem:[#allocation3 + $0x308] sm:$0xff] %v4796
        %4805 = vst [vmem:[#allocation3 + $0x320] sm:$0xff] %v4797
        %4806 = vst [vmem:[#allocation3 + $0x328] sm:$0xff] %v4798
        %v4807 = vld [vmem:[#allocation2 + $0x10] sm:$0xff]
        %v4808 = vld [vmem:[#allocation2 + $0x18] sm:$0xff]
        %v4809 = vld [vmem:[#allocation2 + $0x20] sm:$0xff]
        %v4810 = vld [vmem:[#allocation2 + $0x40] sm:$0xff]
        %v4811 = vld [vmem:[#allocation2 + $0x48] sm:$0xff]
        %v4812 = vld [vmem:[#allocation2 + $0x50] sm:$0xff]
        %4819 = vrot.lane.b32.xlu0 %v4807, 26
        %v4820 = vpop.permute.xlu0 %4819
        %4821 = vrot.lane.b32.xlu0 %v4808, 26
        %v4822 = vpop.permute.xlu0 %4821
        %4823 = vrot.lane.b32.xlu0 %v4809, 26
        %v4824 = vpop.permute.xlu0 %4823
        %4825 = vrot.lane.b32.xlu0 %v4810, 26
        %v4826 = vpop.permute.xlu0 %4825
        %4827 = vrot.lane.b32.xlu0 %v4811, 26
        %v4828 = vpop.permute.xlu0 %4827
        %4829 = vrot.lane.b32.xlu0 %v4812, 26
        %v4830 = vpop.permute.xlu0 %4829
        %v4831 = vsel %vm1776, %v4820, %v4822
        %v4832 = vsel %vm1776, %v4822, %v4824
        %v4833 = vsel %vm1776, %v4826, %v4828
        %v4834 = vsel %vm1776, %v4828, %v4830
        %4839 = vst [vmem:[#allocation3 + $0x310] sm:$0xff] %v4831
        %4840 = vst [vmem:[#allocation3 + $0x318] sm:$0xff] %v4832
        %4841 = vst [vmem:[#allocation3 + $0x330] sm:$0xff] %v4833
        %4842 = vst [vmem:[#allocation3 + $0x338] sm:$0xff] %v4834
        %v4843 = vld [vmem:[#allocation2] sm:$0xff]
        %v4844 = vld [vmem:[#allocation2 + $0x8] sm:$0xff]
        %v4845 = vld [vmem:[#allocation2 + $0x10] sm:$0xff]
        %v4846 = vld [vmem:[#allocation2 + $0x30] sm:$0xff]
        %v4847 = vld [vmem:[#allocation2 + $0x38] sm:$0xff]
        %v4848 = vld [vmem:[#allocation2 + $0x40] sm:$0xff]
        %v4849 = vmul.f32 %v4843, %v1796
        %v4850 = vmul.f32 %v4844, %v1800
        %v4851 = vmul.f32 %v4845, %v1798
        %v4852 = vmul.f32 %v4846, %v1796
        %v4853 = vmul.f32 %v4847, %v1800
        %v4854 = vmul.f32 %v4848, %v1798
        %4861 = vrot.lane.b32.xlu0 %v4849, 93
        %v4862 = vpop.permute.xlu0 %4861
        %4863 = vrot.lane.b32.xlu0 %v4850, 93
        %v4864 = vpop.permute.xlu0 %4863
        %4865 = vrot.lane.b32.xlu0 %v4851, 93
        %v4866 = vpop.permute.xlu0 %4865
        %4867 = vrot.lane.b32.xlu0 %v4852, 93
        %v4868 = vpop.permute.xlu0 %4867
        %4869 = vrot.lane.b32.xlu0 %v4853, 93
        %v4870 = vpop.permute.xlu0 %4869
        %4871 = vrot.lane.b32.xlu0 %v4854, 93
        %v4872 = vpop.permute.xlu0 %4871
        %v4873 = vsel %vm1828, %v4862, %v4864
        %v4874 = vsel %vm1828, %v4864, %v4866
        %v4875 = vsel %vm1828, %v4868, %v4870
        %v4876 = vsel %vm1828, %v4870, %v4872
        %4881 = vst [vmem:[#allocation3 + $0x340] sm:$0xff] %v4873
        %4882 = vst [vmem:[#allocation3 + $0x348] sm:$0xff] %v4874
        %4883 = vst [vmem:[#allocation3 + $0x360] sm:$0xff] %v4875
        %4884 = vst [vmem:[#allocation3 + $0x368] sm:$0xff] %v4876
        %v4885 = vld [vmem:[#allocation2 + $0x10] sm:$0xff]
        %v4886 = vld [vmem:[#allocation2 + $0x18] sm:$0xff]
        %v4887 = vld [vmem:[#allocation2 + $0x20] sm:$0xff]
        %v4888 = vld [vmem:[#allocation2 + $0x40] sm:$0xff]
        %v4889 = vld [vmem:[#allocation2 + $0x48] sm:$0xff]
        %v4890 = vld [vmem:[#allocation2 + $0x50] sm:$0xff]
        %v4891 = vmul.f32 %v4885, %v1848
        %v4892 = vmul.f32 %v4886, %v1852
        %v4893 = vmul.f32 %v4887, %v1850
        %v4894 = vmul.f32 %v4888, %v1848
        %v4895 = vmul.f32 %v4889, %v1852
        %v4896 = vmul.f32 %v4890, %v1850
        %4903 = vrot.lane.b32.xlu0 %v4891, 25
        %v4904 = vpop.permute.xlu0 %4903
        %4905 = vrot.lane.b32.xlu0 %v4892, 25
        %v4906 = vpop.permute.xlu0 %4905
        %4907 = vrot.lane.b32.xlu0 %v4893, 25
        %v4908 = vpop.permute.xlu0 %4907
        %4909 = vrot.lane.b32.xlu0 %v4894, 25
        %v4910 = vpop.permute.xlu0 %4909
        %4911 = vrot.lane.b32.xlu0 %v4895, 25
        %v4912 = vpop.permute.xlu0 %4911
        %4913 = vrot.lane.b32.xlu0 %v4896, 25
        %v4914 = vpop.permute.xlu0 %4913
        %v4915 = vsel %vm1880, %v4904, %v4906
        %v4916 = vsel %vm1880, %v4906, %v4908
        %v4917 = vsel %vm1880, %v4910, %v4912
        %v4918 = vsel %vm1880, %v4912, %v4914
        %4923 = vst [vmem:[#allocation3 + $0x350] sm:$0xff] %v4915
        %4924 = vst [vmem:[#allocation3 + $0x358] sm:$0xff] %v4916
        %4925 = vst [vmem:[#allocation3 + $0x370] sm:$0xff] %v4917
        %4926 = vst [vmem:[#allocation3 + $0x378] sm:$0xff] %v4918
        %v4927 = vld [vmem:[#allocation2] sm:$0xff]
        %v4928 = vld [vmem:[#allocation2 + $0x8] sm:$0xff]
        %v4929 = vld [vmem:[#allocation2 + $0x10] sm:$0xff]
        %v4930 = vld [vmem:[#allocation2 + $0x30] sm:$0xff]
        %v4931 = vld [vmem:[#allocation2 + $0x38] sm:$0xff]
        %v4932 = vld [vmem:[#allocation2 + $0x40] sm:$0xff]
        %v4933 = vmul.f32 %v4927, %v1900
        %v4934 = vmul.f32 %v4928, %v1904
        %v4935 = vmul.f32 %v4929, %v1902
        %v4936 = vmul.f32 %v4930, %v1900
        %v4937 = vmul.f32 %v4931, %v1904
        %v4938 = vmul.f32 %v4932, %v1902
        %4945 = vrot.lane.b32.xlu0 %v4933, 92
        %v4946 = vpop.permute.xlu0 %4945
        %4947 = vrot.lane.b32.xlu0 %v4934, 92
        %v4948 = vpop.permute.xlu0 %4947
        %4949 = vrot.lane.b32.xlu0 %v4935, 92
        %v4950 = vpop.permute.xlu0 %4949
        %4951 = vrot.lane.b32.xlu0 %v4936, 92
        %v4952 = vpop.permute.xlu0 %4951
        %4953 = vrot.lane.b32.xlu0 %v4937, 92
        %v4954 = vpop.permute.xlu0 %4953
        %4955 = vrot.lane.b32.xlu0 %v4938, 92
        %v4956 = vpop.permute.xlu0 %4955
        %v4957 = vsel %vm1932, %v4946, %v4948
        %v4958 = vsel %vm1932, %v4948, %v4950
        %v4959 = vsel %vm1932, %v4952, %v4954
        %v4960 = vsel %vm1932, %v4954, %v4956
        %4965 = vst [vmem:[#allocation3 + $0x380] sm:$0xff] %v4957
        %4966 = vst [vmem:[#allocation3 + $0x388] sm:$0xff] %v4958
        %4967 = vst [vmem:[#allocation3 + $0x3a0] sm:$0xff] %v4959
        %4968 = vst [vmem:[#allocation3 + $0x3a8] sm:$0xff] %v4960
        %v4969 = vld [vmem:[#allocation2 + $0x10] sm:$0xff]
        %v4970 = vld [vmem:[#allocation2 + $0x18] sm:$0xff]
        %v4971 = vld [vmem:[#allocation2 + $0x20] sm:$0xff]
        %v4972 = vld [vmem:[#allocation2 + $0x40] sm:$0xff]
        %v4973 = vld [vmem:[#allocation2 + $0x48] sm:$0xff]
        %v4974 = vld [vmem:[#allocation2 + $0x50] sm:$0xff]
        %v4975 = vmul.f32 %v4969, %v1952
        %v4976 = vmul.f32 %v4970, %v1956
        %v4977 = vmul.f32 %v4971, %v1954
        %v4978 = vmul.f32 %v4972, %v1952
        %v4979 = vmul.f32 %v4973, %v1956
        %v4980 = vmul.f32 %v4974, %v1954
        %4987 = vrot.lane.b32.xlu0 %v4975, 24
        %v4988 = vpop.permute.xlu0 %4987
        %4989 = vrot.lane.b32.xlu0 %v4976, 24
        %v4990 = vpop.permute.xlu0 %4989
        %4991 = vrot.lane.b32.xlu0 %v4977, 24
        %v4992 = vpop.permute.xlu0 %4991
        %4993 = vrot.lane.b32.xlu0 %v4978, 24
        %v4994 = vpop.permute.xlu0 %4993
        %4995 = vrot.lane.b32.xlu0 %v4979, 24
        %v4996 = vpop.permute.xlu0 %4995
        %4997 = vrot.lane.b32.xlu0 %v4980, 24
        %v4998 = vpop.permute.xlu0 %4997
        %v4999 = vsel %vm1984, %v4988, %v4990
        %v5000 = vsel %vm1984, %v4990, %v4992
        %v5001 = vsel %vm1984, %v4994, %v4996
        %v5002 = vsel %vm1984, %v4996, %v4998
        %5007 = vst [vmem:[#allocation3 + $0x390] sm:$0xff] %v4999
        %5008 = vst [vmem:[#allocation3 + $0x398] sm:$0xff] %v5000
        %5009 = vst [vmem:[#allocation3 + $0x3b0] sm:$0xff] %v5001
        %5010 = vst [vmem:[#allocation3 + $0x3b8] sm:$0xff] %v5002
        %v5011 = vld [vmem:[#allocation2] sm:$0xff]
        %v5012 = vld [vmem:[#allocation2 + $0x8] sm:$0xff]
        %v5013 = vld [vmem:[#allocation2 + $0x10] sm:$0xff]
        %v5014 = vld [vmem:[#allocation2 + $0x30] sm:$0xff]
        %v5015 = vld [vmem:[#allocation2 + $0x38] sm:$0xff]
        %v5016 = vld [vmem:[#allocation2 + $0x40] sm:$0xff]
        %v5017 = vmul.f32 %v5011, %v2004
        %v5018 = vmul.f32 %v5012, %v2008
        %v5019 = vmul.f32 %v5013, %v2006
        %v5020 = vmul.f32 %v5014, %v2004
        %v5021 = vmul.f32 %v5015, %v2008
        %v5022 = vmul.f32 %v5016, %v2006
        %5029 = vrot.lane.b32.xlu0 %v5017, 80
        %v5030 = vpop.permute.xlu0 %5029
        %5031 = vrot.lane.b32.xlu0 %v5018, 80
        %v5032 = vpop.permute.xlu0 %5031
        %5033 = vrot.lane.b32.xlu0 %v5019, 80
        %v5034 = vpop.permute.xlu0 %5033
        %5035 = vrot.lane.b32.xlu0 %v5020, 80
        %v5036 = vpop.permute.xlu0 %5035
        %5037 = vrot.lane.b32.xlu0 %v5021, 80
        %v5038 = vpop.permute.xlu0 %5037
        %5039 = vrot.lane.b32.xlu0 %v5022, 80
        %v5040 = vpop.permute.xlu0 %5039
        %v5041 = vsel %vm2036, %v5030, %v5032
        %v5042 = vsel %vm2036, %v5032, %v5034
        %v5043 = vsel %vm2036, %v5036, %v5038
        %v5044 = vsel %vm2036, %v5038, %v5040
        %5049 = vst [vmem:[#allocation3 + $0x3c0] sm:$0xff] %v5041
        %5050 = vst [vmem:[#allocation3 + $0x3c8] sm:$0xff] %v5042
        %5051 = vst [vmem:[#allocation3 + $0x3e0] sm:$0xff] %v5043
        %5052 = vst [vmem:[#allocation3 + $0x3e8] sm:$0xff] %v5044
        %v5053 = vld [vmem:[#allocation2 + $0x10] sm:$0xff]
        %v5054 = vld [vmem:[#allocation2 + $0x18] sm:$0xff]
        %v5055 = vld [vmem:[#allocation2 + $0x20] sm:$0xff]
        %v5056 = vld [vmem:[#allocation2 + $0x40] sm:$0xff]
        %v5057 = vld [vmem:[#allocation2 + $0x48] sm:$0xff]
        %v5058 = vld [vmem:[#allocation2 + $0x50] sm:$0xff]
        %v5059 = vmul.f32 %v5053, %v2056
        %v5060 = vmul.f32 %v5054, %v2060
        %v5061 = vmul.f32 %v5055, %v2058
        %v5062 = vmul.f32 %v5056, %v2056
        %v5063 = vmul.f32 %v5057, %v2060
        %v5064 = vmul.f32 %v5058, %v2058
        %5071 = vrot.lane.b32.xlu0 %v5059, 12
        %v5072 = vpop.permute.xlu0 %5071
        %5073 = vrot.lane.b32.xlu0 %v5060, 12
        %v5074 = vpop.permute.xlu0 %5073
        %5075 = vrot.lane.b32.xlu0 %v5061, 12
        %v5076 = vpop.permute.xlu0 %5075
        %5077 = vrot.lane.b32.xlu0 %v5062, 12
        %v5078 = vpop.permute.xlu0 %5077
        %5079 = vrot.lane.b32.xlu0 %v5063, 12
        %v5080 = vpop.permute.xlu0 %5079
        %5081 = vrot.lane.b32.xlu0 %v5064, 12
        %v5082 = vpop.permute.xlu0 %5081
        %v5083 = vsel %vm2088, %v5072, %v5074
        %v5084 = vsel %vm2088, %v5074, %v5076
        %v5085 = vsel %vm2088, %v5078, %v5080
        %v5086 = vsel %vm2088, %v5080, %v5082
        %5091 = vst [vmem:[#allocation3 + $0x3d0] sm:$0xff] %v5083
        %5092 = vst [vmem:[#allocation3 + $0x3d8] sm:$0xff] %v5084
        %5093 = vst [vmem:[#allocation3 + $0x3f0] sm:$0xff] %v5085
        %5094 = vst [vmem:[#allocation3 + $0x3f8] sm:$0xff] %v5086
        %v5095 = vld [vmem:[#allocation2] sm:$0xff]
        %v5096 = vld [vmem:[#allocation2 + $0x8] sm:$0xff]
        %v5097 = vld [vmem:[#allocation2 + $0x10] sm:$0xff]
        %v5098 = vld [vmem:[#allocation2 + $0x30] sm:$0xff]
        %v5099 = vld [vmem:[#allocation2 + $0x38] sm:$0xff]
        %v5100 = vld [vmem:[#allocation2 + $0x40] sm:$0xff]
        %v5101 = vmul.f32 %v5095, %v2108
        %v5102 = vmul.f32 %v5096, %v2112
        %v5103 = vmul.f32 %v5097, %v2110
        %v5104 = vmul.f32 %v5098, %v2108
        %v5105 = vmul.f32 %v5099, %v2112
        %v5106 = vmul.f32 %v5100, %v2110
        %5113 = vrot.lane.b32.xlu0 %v5101, 79
        %v5114 = vpop.permute.xlu0 %5113
        %5115 = vrot.lane.b32.xlu0 %v5102, 79
        %v5116 = vpop.permute.xlu0 %5115
        %5117 = vrot.lane.b32.xlu0 %v5103, 79
        %v5118 = vpop.permute.xlu0 %5117
        %5119 = vrot.lane.b32.xlu0 %v5104, 79
        %v5120 = vpop.permute.xlu0 %5119
        %5121 = vrot.lane.b32.xlu0 %v5105, 79
        %v5122 = vpop.permute.xlu0 %5121
        %5123 = vrot.lane.b32.xlu0 %v5106, 79
        %v5124 = vpop.permute.xlu0 %5123
        %v5125 = vsel %vm2140, %v5114, %v5116
        %v5126 = vsel %vm2140, %v5116, %v5118
        %v5127 = vsel %vm2140, %v5120, %v5122
        %v5128 = vsel %vm2140, %v5122, %v5124
        %5133 = vst [vmem:[#allocation3 + $0x400] sm:$0xff] %v5125
        %5134 = vst [vmem:[#allocation3 + $0x408] sm:$0xff] %v5126
        %5135 = vst [vmem:[#allocation3 + $0x420] sm:$0xff] %v5127
        %5136 = vst [vmem:[#allocation3 + $0x428] sm:$0xff] %v5128
        %v5137 = vld [vmem:[#allocation2 + $0x10] sm:$0xff]
        %v5138 = vld [vmem:[#allocation2 + $0x18] sm:$0xff]
        %v5139 = vld [vmem:[#allocation2 + $0x20] sm:$0xff]
        %v5140 = vld [vmem:[#allocation2 + $0x40] sm:$0xff]
        %v5141 = vld [vmem:[#allocation2 + $0x48] sm:$0xff]
        %v5142 = vld [vmem:[#allocation2 + $0x50] sm:$0xff]
        %v5143 = vmul.f32 %v5137, %v2160
        %v5144 = vmul.f32 %v5138, %v2164
        %v5145 = vmul.f32 %v5139, %v2162
        %v5146 = vmul.f32 %v5140, %v2160
        %v5147 = vmul.f32 %v5141, %v2164
        %v5148 = vmul.f32 %v5142, %v2162
        %5155 = vrot.lane.b32.xlu0 %v5143, 11
        %v5156 = vpop.permute.xlu0 %5155
        %5157 = vrot.lane.b32.xlu0 %v5144, 11
        %v5158 = vpop.permute.xlu0 %5157
        %5159 = vrot.lane.b32.xlu0 %v5145, 11
        %v5160 = vpop.permute.xlu0 %5159
        %5161 = vrot.lane.b32.xlu0 %v5146, 11
        %v5162 = vpop.permute.xlu0 %5161
        %5163 = vrot.lane.b32.xlu0 %v5147, 11
        %v5164 = vpop.permute.xlu0 %5163
        %5165 = vrot.lane.b32.xlu0 %v5148, 11
        %v5166 = vpop.permute.xlu0 %5165
        %v5167 = vsel %vm2192, %v5156, %v5158
        %v5168 = vsel %vm2192, %v5158, %v5160
        %v5169 = vsel %vm2192, %v5162, %v5164
        %v5170 = vsel %vm2192, %v5164, %v5166
        %5175 = vst [vmem:[#allocation3 + $0x410] sm:$0xff] %v5167
        %5176 = vst [vmem:[#allocation3 + $0x418] sm:$0xff] %v5168
        %5177 = vst [vmem:[#allocation3 + $0x430] sm:$0xff] %v5169
        %5178 = vst [vmem:[#allocation3 + $0x438] sm:$0xff] %v5170
        %v5179 = vld [vmem:[#allocation2] sm:$0xff]
        %v5180 = vld [vmem:[#allocation2 + $0x8] sm:$0xff]
        %v5181 = vld [vmem:[#allocation2 + $0x10] sm:$0xff]
        %v5182 = vld [vmem:[#allocation2 + $0x30] sm:$0xff]
        %v5183 = vld [vmem:[#allocation2 + $0x38] sm:$0xff]
        %v5184 = vld [vmem:[#allocation2 + $0x40] sm:$0xff]
        %5191 = vrot.lane.b32.xlu0 %v5179, 78
        %v5192 = vpop.permute.xlu0 %5191
        %5193 = vrot.lane.b32.xlu0 %v5180, 78
        %v5194 = vpop.permute.xlu0 %5193
        %5195 = vrot.lane.b32.xlu0 %v5181, 78
        %v5196 = vpop.permute.xlu0 %5195
        %5197 = vrot.lane.b32.xlu0 %v5182, 78
        %v5198 = vpop.permute.xlu0 %5197
        %5199 = vrot.lane.b32.xlu0 %v5183, 78
        %v5200 = vpop.permute.xlu0 %5199
        %5201 = vrot.lane.b32.xlu0 %v5184, 78
        %v5202 = vpop.permute.xlu0 %5201
        %v5203 = vsel %vm2229, %v5192, %v5194
        %v5204 = vsel %vm2229, %v5194, %v5196
        %v5205 = vsel %vm2229, %v5198, %v5200
        %v5206 = vsel %vm2229, %v5200, %v5202
        %5211 = vst [vmem:[#allocation3 + $0x440] sm:$0xff] %v5203
        %5212 = vst [vmem:[#allocation3 + $0x448] sm:$0xff] %v5204
        %5213 = vst [vmem:[#allocation3 + $0x460] sm:$0xff] %v5205
        %5214 = vst [vmem:[#allocation3 + $0x468] sm:$0xff] %v5206
        %v5215 = vld [vmem:[#allocation2 + $0x10] sm:$0xff]
        %v5216 = vld [vmem:[#allocation2 + $0x18] sm:$0xff]
        %v5217 = vld [vmem:[#allocation2 + $0x20] sm:$0xff]
        %v5218 = vld [vmem:[#allocation2 + $0x40] sm:$0xff]
        %v5219 = vld [vmem:[#allocation2 + $0x48] sm:$0xff]
        %v5220 = vld [vmem:[#allocation2 + $0x50] sm:$0xff]
        %5227 = vrot.lane.b32.xlu0 %v5215, 10
        %v5228 = vpop.permute.xlu0 %5227
        %5229 = vrot.lane.b32.xlu0 %v5216, 10
        %v5230 = vpop.permute.xlu0 %5229
        %5231 = vrot.lane.b32.xlu0 %v5217, 10
        %v5232 = vpop.permute.xlu0 %5231
        %5233 = vrot.lane.b32.xlu0 %v5218, 10
        %v5234 = vpop.permute.xlu0 %5233
        %5235 = vrot.lane.b32.xlu0 %v5219, 10
        %v5236 = vpop.permute.xlu0 %5235
        %5237 = vrot.lane.b32.xlu0 %v5220, 10
        %v5238 = vpop.permute.xlu0 %5237
        %v5239 = vsel %vm2266, %v5228, %v5230
        %v5240 = vsel %vm2266, %v5230, %v5232
        %v5241 = vsel %vm2266, %v5234, %v5236
        %v5242 = vsel %vm2266, %v5236, %v5238
        %5247 = vst [vmem:[#allocation3 + $0x450] sm:$0xff] %v5239
        %5248 = vst [vmem:[#allocation3 + $0x458] sm:$0xff] %v5240
        %5249 = vst [vmem:[#allocation3 + $0x470] sm:$0xff] %v5241
        %5250 = vst [vmem:[#allocation3 + $0x478] sm:$0xff] %v5242
        %v5251 = vld [vmem:[#allocation2] sm:$0xff]
        %v5252 = vld [vmem:[#allocation2 + $0x8] sm:$0xff]
        %v5253 = vld [vmem:[#allocation2 + $0x10] sm:$0xff]
        %v5254 = vld [vmem:[#allocation2 + $0x30] sm:$0xff]
        %v5255 = vld [vmem:[#allocation2 + $0x38] sm:$0xff]
        %v5256 = vld [vmem:[#allocation2 + $0x40] sm:$0xff]
        %v5257 = vmul.f32 %v5251, %v2286
        %v5258 = vmul.f32 %v5252, %v2290
        %v5259 = vmul.f32 %v5253, %v2288
        %v5260 = vmul.f32 %v5254, %v2286
        %v5261 = vmul.f32 %v5255, %v2290
        %v5262 = vmul.f32 %v5256, %v2288
        %5269 = vrot.lane.b32.xlu0 %v5257, 77
        %v5270 = vpop.permute.xlu0 %5269
        %5271 = vrot.lane.b32.xlu0 %v5258, 77
        %v5272 = vpop.permute.xlu0 %5271
        %5273 = vrot.lane.b32.xlu0 %v5259, 77
        %v5274 = vpop.permute.xlu0 %5273
        %5275 = vrot.lane.b32.xlu0 %v5260, 77
        %v5276 = vpop.permute.xlu0 %5275
        %5277 = vrot.lane.b32.xlu0 %v5261, 77
        %v5278 = vpop.permute.xlu0 %5277
        %5279 = vrot.lane.b32.xlu0 %v5262, 77
        %v5280 = vpop.permute.xlu0 %5279
        %v5281 = vsel %vm2318, %v5270, %v5272
        %v5282 = vsel %vm2318, %v5272, %v5274
        %v5283 = vsel %vm2318, %v5276, %v5278
        %v5284 = vsel %vm2318, %v5278, %v5280
        %5289 = vst [vmem:[#allocation3 + $0x480] sm:$0xff] %v5281
        %5290 = vst [vmem:[#allocation3 + $0x488] sm:$0xff] %v5282
        %5291 = vst [vmem:[#allocation3 + $0x4a0] sm:$0xff] %v5283
        %5292 = vst [vmem:[#allocation3 + $0x4a8] sm:$0xff] %v5284
        %v5293 = vld [vmem:[#allocation2 + $0x10] sm:$0xff]
        %v5294 = vld [vmem:[#allocation2 + $0x18] sm:$0xff]
        %v5295 = vld [vmem:[#allocation2 + $0x20] sm:$0xff]
        %v5296 = vld [vmem:[#allocation2 + $0x40] sm:$0xff]
        %v5297 = vld [vmem:[#allocation2 + $0x48] sm:$0xff]
        %v5298 = vld [vmem:[#allocation2 + $0x50] sm:$0xff]
        %v5299 = vmul.f32 %v5293, %v2338
        %v5300 = vmul.f32 %v5294, %v2342
        %v5301 = vmul.f32 %v5295, %v2340
        %v5302 = vmul.f32 %v5296, %v2338
        %v5303 = vmul.f32 %v5297, %v2342
        %v5304 = vmul.f32 %v5298, %v2340
        %5311 = vrot.lane.b32.xlu0 %v5299, 9
        %v5312 = vpop.permute.xlu0 %5311
        %5313 = vrot.lane.b32.xlu0 %v5300, 9
        %v5314 = vpop.permute.xlu0 %5313
        %5315 = vrot.lane.b32.xlu0 %v5301, 9
        %v5316 = vpop.permute.xlu0 %5315
        %5317 = vrot.lane.b32.xlu0 %v5302, 9
        %v5318 = vpop.permute.xlu0 %5317
        %5319 = vrot.lane.b32.xlu0 %v5303, 9
        %v5320 = vpop.permute.xlu0 %5319
        %5321 = vrot.lane.b32.xlu0 %v5304, 9
        %v5322 = vpop.permute.xlu0 %5321
        %v5323 = vsel %vm2370, %v5312, %v5314
        %v5324 = vsel %vm2370, %v5314, %v5316
        %v5325 = vsel %vm2370, %v5318, %v5320
        %v5326 = vsel %vm2370, %v5320, %v5322
        %5331 = vst [vmem:[#allocation3 + $0x490] sm:$0xff] %v5323
        %5332 = vst [vmem:[#allocation3 + $0x498] sm:$0xff] %v5324
        %5333 = vst [vmem:[#allocation3 + $0x4b0] sm:$0xff] %v5325
        %5334 = vst [vmem:[#allocation3 + $0x4b8] sm:$0xff] %v5326
        %v5335 = vld [vmem:[#allocation2] sm:$0xff]
        %v5336 = vld [vmem:[#allocation2 + $0x8] sm:$0xff]
        %v5337 = vld [vmem:[#allocation2 + $0x10] sm:$0xff]
        %v5338 = vld [vmem:[#allocation2 + $0x30] sm:$0xff]
        %v5339 = vld [vmem:[#allocation2 + $0x38] sm:$0xff]
        %v5340 = vld [vmem:[#allocation2 + $0x40] sm:$0xff]
        %v5341 = vmul.f32 %v5335, %v2390
        %v5342 = vmul.f32 %v5336, %v2394
        %v5343 = vmul.f32 %v5337, %v2392
        %v5344 = vmul.f32 %v5338, %v2390
        %v5345 = vmul.f32 %v5339, %v2394
        %v5346 = vmul.f32 %v5340, %v2392
        %5353 = vrot.lane.b32.xlu0 %v5341, 76
        %v5354 = vpop.permute.xlu0 %5353
        %5355 = vrot.lane.b32.xlu0 %v5342, 76
        %v5356 = vpop.permute.xlu0 %5355
        %5357 = vrot.lane.b32.xlu0 %v5343, 76
        %v5358 = vpop.permute.xlu0 %5357
        %5359 = vrot.lane.b32.xlu0 %v5344, 76
        %v5360 = vpop.permute.xlu0 %5359
        %5361 = vrot.lane.b32.xlu0 %v5345, 76
        %v5362 = vpop.permute.xlu0 %5361
        %5363 = vrot.lane.b32.xlu0 %v5346, 76
        %v5364 = vpop.permute.xlu0 %5363
        %v5365 = vsel %vm2422, %v5354, %v5356
        %v5366 = vsel %vm2422, %v5356, %v5358
        %v5367 = vsel %vm2422, %v5360, %v5362
        %v5368 = vsel %vm2422, %v5362, %v5364
        %5373 = vst [vmem:[#allocation3 + $0x4c0] sm:$0xff] %v5365
        %5374 = vst [vmem:[#allocation3 + $0x4c8] sm:$0xff] %v5366
        %5375 = vst [vmem:[#allocation3 + $0x4e0] sm:$0xff] %v5367
        %5376 = vst [vmem:[#allocation3 + $0x4e8] sm:$0xff] %v5368
        %v5377 = vld [vmem:[#allocation2 + $0x10] sm:$0xff]
        %v5378 = vld [vmem:[#allocation2 + $0x18] sm:$0xff]
        %v5379 = vld [vmem:[#allocation2 + $0x20] sm:$0xff]
        %v5380 = vld [vmem:[#allocation2 + $0x40] sm:$0xff]
        %v5381 = vld [vmem:[#allocation2 + $0x48] sm:$0xff]
        %v5382 = vld [vmem:[#allocation2 + $0x50] sm:$0xff]
        %v5383 = vmul.f32 %v5377, %v2442
        %v5384 = vmul.f32 %v5378, %v2446
        %v5385 = vmul.f32 %v5379, %v2444
        %v5386 = vmul.f32 %v5380, %v2442
        %v5387 = vmul.f32 %v5381, %v2446
        %v5388 = vmul.f32 %v5382, %v2444
        %5395 = vrot.lane.b32.xlu0 %v5383, 8
        %v5396 = vpop.permute.xlu0 %5395
        %5397 = vrot.lane.b32.xlu0 %v5384, 8
        %v5398 = vpop.permute.xlu0 %5397
        %5399 = vrot.lane.b32.xlu0 %v5385, 8
        %v5400 = vpop.permute.xlu0 %5399
        %5401 = vrot.lane.b32.xlu0 %v5386, 8
        %v5402 = vpop.permute.xlu0 %5401
        %5403 = vrot.lane.b32.xlu0 %v5387, 8
        %v5404 = vpop.permute.xlu0 %5403
        %5405 = vrot.lane.b32.xlu0 %v5388, 8
        %v5406 = vpop.permute.xlu0 %5405
        %v5407 = vsel %vm282, %v5396, %v5398
        %v5408 = vsel %vm282, %v5398, %v5400
        %v5409 = vsel %vm282, %v5402, %v5404
        %v5410 = vsel %vm282, %v5404, %v5406
        %5415 = vst [vmem:[#allocation3 + $0x4d0] sm:$0xff] %v5407
        %5416 = vst [vmem:[#allocation3 + $0x4d8] sm:$0xff] %v5408
        %5417 = vst [vmem:[#allocation3 + $0x4f0] sm:$0xff] %v5409
        %5418 = vst [vmem:[#allocation3 + $0x4f8] sm:$0xff] %v5410
        %v5419 = vld [vmem:[#allocation2] sm:$0xff]
        %v5420 = vld [vmem:[#allocation2 + $0x8] sm:$0xff]
        %v5421 = vld [vmem:[#allocation2 + $0x10] sm:$0xff]
        %v5422 = vld [vmem:[#allocation2 + $0x30] sm:$0xff]
        %v5423 = vld [vmem:[#allocation2 + $0x38] sm:$0xff]
        %v5424 = vld [vmem:[#allocation2 + $0x40] sm:$0xff]
        %v5425 = vmul.f32 %v5419, %v2493
        %v5426 = vmul.f32 %v5420, %v2497
        %v5427 = vmul.f32 %v5421, %v2495
        %v5428 = vmul.f32 %v5422, %v2493
        %v5429 = vmul.f32 %v5423, %v2497
        %v5430 = vmul.f32 %v5424, %v2495
        %5437 = vrot.lane.b32.xlu0 %v5425, 64
        %v5438 = vpop.permute.xlu0 %5437
        %5439 = vrot.lane.b32.xlu0 %v5426, 64
        %v5440 = vpop.permute.xlu0 %5439
        %5441 = vrot.lane.b32.xlu0 %v5427, 64
        %v5442 = vpop.permute.xlu0 %5441
        %5443 = vrot.lane.b32.xlu0 %v5428, 64
        %v5444 = vpop.permute.xlu0 %5443
        %5445 = vrot.lane.b32.xlu0 %v5429, 64
        %v5446 = vpop.permute.xlu0 %5445
        %5447 = vrot.lane.b32.xlu0 %v5430, 64
        %v5448 = vpop.permute.xlu0 %5447
        %v5449 = vsel %vm2496, %v5438, %v5440
        %v5450 = vsel %vm2496, %v5440, %v5442
        %v5451 = vsel %vm2496, %v5444, %v5446
        %v5452 = vsel %vm2496, %v5446, %v5448
        %5457 = vst [vmem:[#allocation3 + $0x500] sm:$0xff] %v5449
        %5458 = vst [vmem:[#allocation3 + $0x508] sm:$0xff] %v5450
        %5459 = vst [vmem:[#allocation3 + $0x520] sm:$0xff] %v5451
        %5460 = vst [vmem:[#allocation3 + $0x528] sm:$0xff] %v5452
        %v5461 = vld [vmem:[#allocation2 + $0x18] sm:$0xff]
        %v5462 = vld [vmem:[#allocation2 + $0x20] sm:$0xff]
        %v5463 = vld [vmem:[#allocation2 + $0x28] sm:$0xff]
        %v5464 = vld [vmem:[#allocation2 + $0x48] sm:$0xff]
        %v5465 = vld [vmem:[#allocation2 + $0x50] sm:$0xff]
        %v5466 = vld [vmem:[#allocation2 + $0x58] sm:$0xff]
        %v5467 = vmul.f32 %v5461, %v2544
        %v5468 = vmul.f32 %v5462, %v2547
        %v5469 = vmul.f32 %v5463, %v2546
        %v5470 = vmul.f32 %v5464, %v2544
        %v5471 = vmul.f32 %v5465, %v2547
        %v5472 = vmul.f32 %v5466, %v2546
        %5479 = vrot.lane.b32.xlu0 %v5467, 124
        %v5480 = vpop.permute.xlu0 %5479
        %5481 = vrot.lane.b32.xlu0 %v5468, 124
        %v5482 = vpop.permute.xlu0 %5481
        %5483 = vrot.lane.b32.xlu0 %v5469, 124
        %v5484 = vpop.permute.xlu0 %5483
        %5485 = vrot.lane.b32.xlu0 %v5470, 124
        %v5486 = vpop.permute.xlu0 %5485
        %5487 = vrot.lane.b32.xlu0 %v5471, 124
        %v5488 = vpop.permute.xlu0 %5487
        %5489 = vrot.lane.b32.xlu0 %v5472, 124
        %v5490 = vpop.permute.xlu0 %5489
        %v5491 = vsel %vm953, %v5480, %v5482
        %v5492 = vsel %vm953, %v5482, %v5484
        %v5493 = vsel %vm953, %v5486, %v5488
        %v5494 = vsel %vm953, %v5488, %v5490
        %5499 = vst [vmem:[#allocation3 + $0x510] sm:$0xff] %v5491
        %5500 = vst [vmem:[#allocation3 + $0x518] sm:$0xff] %v5492
        %5501 = vst [vmem:[#allocation3 + $0x530] sm:$0xff] %v5493
        %5502 = vst [vmem:[#allocation3 + $0x538] sm:$0xff] %v5494
        %v5503 = vld [vmem:[#allocation2] sm:$0xff]
        %v5504 = vld [vmem:[#allocation2 + $0x8] sm:$0xff]
        %v5505 = vld [vmem:[#allocation2 + $0x10] sm:$0xff]
        %v5506 = vld [vmem:[#allocation2 + $0x30] sm:$0xff]
        %v5507 = vld [vmem:[#allocation2 + $0x38] sm:$0xff]
        %v5508 = vld [vmem:[#allocation2 + $0x40] sm:$0xff]
        %v5509 = vmul.f32 %v5503, %v2594
        %v5510 = vmul.f32 %v5504, %v2598
        %v5511 = vmul.f32 %v5505, %v2596
        %v5512 = vmul.f32 %v5506, %v2594
        %v5513 = vmul.f32 %v5507, %v2598
        %v5514 = vmul.f32 %v5508, %v2596
        %5521 = vrot.lane.b32.xlu0 %v5509, 63
        %v5522 = vpop.permute.xlu0 %5521
        %5523 = vrot.lane.b32.xlu0 %v5510, 63
        %v5524 = vpop.permute.xlu0 %5523
        %5525 = vrot.lane.b32.xlu0 %v5511, 63
        %v5526 = vpop.permute.xlu0 %5525
        %5527 = vrot.lane.b32.xlu0 %v5512, 63
        %v5528 = vpop.permute.xlu0 %5527
        %5529 = vrot.lane.b32.xlu0 %v5513, 63
        %v5530 = vpop.permute.xlu0 %5529
        %5531 = vrot.lane.b32.xlu0 %v5514, 63
        %v5532 = vpop.permute.xlu0 %5531
        %v5533 = vsel %vm2626, %v5522, %v5524
        %v5534 = vsel %vm2626, %v5524, %v5526
        %v5535 = vsel %vm2626, %v5528, %v5530
        %v5536 = vsel %vm2626, %v5530, %v5532
        %5541 = vst [vmem:[#allocation3 + $0x540] sm:$0xff] %v5533
        %5542 = vst [vmem:[#allocation3 + $0x548] sm:$0xff] %v5534
        %5543 = vst [vmem:[#allocation3 + $0x560] sm:$0xff] %v5535
        %5544 = vst [vmem:[#allocation3 + $0x568] sm:$0xff] %v5536
        %v5545 = vld [vmem:[#allocation2 + $0x18] sm:$0xff]
        %v5546 = vld [vmem:[#allocation2 + $0x20] sm:$0xff]
        %v5547 = vld [vmem:[#allocation2 + $0x28] sm:$0xff]
        %v5548 = vld [vmem:[#allocation2 + $0x48] sm:$0xff]
        %v5549 = vld [vmem:[#allocation2 + $0x50] sm:$0xff]
        %v5550 = vld [vmem:[#allocation2 + $0x58] sm:$0xff]
        %v5551 = vmul.f32 %v5545, %v2646
        %v5552 = vmul.f32 %v5546, %v2650
        %v5553 = vmul.f32 %v5547, %v2648
        %v5554 = vmul.f32 %v5548, %v2646
        %v5555 = vmul.f32 %v5549, %v2650
        %v5556 = vmul.f32 %v5550, %v2648
        %5563 = vrot.lane.b32.xlu0 %v5551, 123
        %v5564 = vpop.permute.xlu0 %5563
        %5565 = vrot.lane.b32.xlu0 %v5552, 123
        %v5566 = vpop.permute.xlu0 %5565
        %5567 = vrot.lane.b32.xlu0 %v5553, 123
        %v5568 = vpop.permute.xlu0 %5567
        %5569 = vrot.lane.b32.xlu0 %v5554, 123
        %v5570 = vpop.permute.xlu0 %5569
        %5571 = vrot.lane.b32.xlu0 %v5555, 123
        %v5572 = vpop.permute.xlu0 %5571
        %5573 = vrot.lane.b32.xlu0 %v5556, 123
        %v5574 = vpop.permute.xlu0 %5573
        %v5575 = vsel %vm2678, %v5564, %v5566
        %v5576 = vsel %vm2678, %v5566, %v5568
        %v5577 = vsel %vm2678, %v5570, %v5572
        %v5578 = vsel %vm2678, %v5572, %v5574
        %5583 = vst [vmem:[#allocation3 + $0x550] sm:$0xff] %v5575
        %5584 = vst [vmem:[#allocation3 + $0x558] sm:$0xff] %v5576
        %5585 = vst [vmem:[#allocation3 + $0x570] sm:$0xff] %v5577
        %5586 = vst [vmem:[#allocation3 + $0x578] sm:$0xff] %v5578
        %v5587 = vld [vmem:[#allocation2] sm:$0xff]
        %v5588 = vld [vmem:[#allocation2 + $0x8] sm:$0xff]
        %v5589 = vld [vmem:[#allocation2 + $0x10] sm:$0xff]
        %v5590 = vld [vmem:[#allocation2 + $0x30] sm:$0xff]
        %v5591 = vld [vmem:[#allocation2 + $0x38] sm:$0xff]
        %v5592 = vld [vmem:[#allocation2 + $0x40] sm:$0xff]
        %5599 = vrot.lane.b32.xlu0 %v5587, 62
        %v5600 = vpop.permute.xlu0 %5599
        %5601 = vrot.lane.b32.xlu0 %v5588, 62
        %v5602 = vpop.permute.xlu0 %5601
        %5603 = vrot.lane.b32.xlu0 %v5589, 62
        %v5604 = vpop.permute.xlu0 %5603
        %5605 = vrot.lane.b32.xlu0 %v5590, 62
        %v5606 = vpop.permute.xlu0 %5605
        %5607 = vrot.lane.b32.xlu0 %v5591, 62
        %v5608 = vpop.permute.xlu0 %5607
        %5609 = vrot.lane.b32.xlu0 %v5592, 62
        %v5610 = vpop.permute.xlu0 %5609
        %v5611 = vsel %vm2715, %v5600, %v5602
        %v5612 = vsel %vm2715, %v5602, %v5604
        %v5613 = vsel %vm2715, %v5606, %v5608
        %v5614 = vsel %vm2715, %v5608, %v5610
        %5619 = vst [vmem:[#allocation3 + $0x580] sm:$0xff] %v5611
        %5620 = vst [vmem:[#allocation3 + $0x588] sm:$0xff] %v5612
        %5621 = vst [vmem:[#allocation3 + $0x5a0] sm:$0xff] %v5613
        %5622 = vst [vmem:[#allocation3 + $0x5a8] sm:$0xff] %v5614
        %v5623 = vld [vmem:[#allocation2 + $0x18] sm:$0xff]
        %v5624 = vld [vmem:[#allocation2 + $0x20] sm:$0xff]
        %v5625 = vld [vmem:[#allocation2 + $0x28] sm:$0xff]
        %v5626 = vld [vmem:[#allocation2 + $0x48] sm:$0xff]
        %v5627 = vld [vmem:[#allocation2 + $0x50] sm:$0xff]
        %v5628 = vld [vmem:[#allocation2 + $0x58] sm:$0xff]
        %5635 = vrot.lane.b32.xlu0 %v5623, 122
        %v5636 = vpop.permute.xlu0 %5635
        %5637 = vrot.lane.b32.xlu0 %v5624, 122
        %v5638 = vpop.permute.xlu0 %5637
        %5639 = vrot.lane.b32.xlu0 %v5625, 122
        %v5640 = vpop.permute.xlu0 %5639
        %5641 = vrot.lane.b32.xlu0 %v5626, 122
        %v5642 = vpop.permute.xlu0 %5641
        %5643 = vrot.lane.b32.xlu0 %v5627, 122
        %v5644 = vpop.permute.xlu0 %5643
        %5645 = vrot.lane.b32.xlu0 %v5628, 122
        %v5646 = vpop.permute.xlu0 %5645
        %v5647 = vsel %vm2752, %v5636, %v5638
        %v5648 = vsel %vm2752, %v5638, %v5640
        %v5649 = vsel %vm2752, %v5642, %v5644
        %v5650 = vsel %vm2752, %v5644, %v5646
        %5655 = vst [vmem:[#allocation3 + $0x590] sm:$0xff] %v5647
        %5656 = vst [vmem:[#allocation3 + $0x598] sm:$0xff] %v5648
        %5657 = vst [vmem:[#allocation3 + $0x5b0] sm:$0xff] %v5649
        %5658 = vst [vmem:[#allocation3 + $0x5b8] sm:$0xff] %v5650
        %v5659 = vld [vmem:[#allocation2] sm:$0xff]
        %v5660 = vld [vmem:[#allocation2 + $0x8] sm:$0xff]
        %v5661 = vld [vmem:[#allocation2 + $0x10] sm:$0xff]
        %v5662 = vld [vmem:[#allocation2 + $0x30] sm:$0xff]
        %v5663 = vld [vmem:[#allocation2 + $0x38] sm:$0xff]
        %v5664 = vld [vmem:[#allocation2 + $0x40] sm:$0xff]
        %v5665 = vmul.f32 %v5659, %v2772
        %v5666 = vmul.f32 %v5660, %v2776
        %v5667 = vmul.f32 %v5661, %v2774
        %v5668 = vmul.f32 %v5662, %v2772
        %v5669 = vmul.f32 %v5663, %v2776
        %v5670 = vmul.f32 %v5664, %v2774
        %5677 = vrot.lane.b32.xlu0 %v5665, 61
        %v5678 = vpop.permute.xlu0 %5677
        %5679 = vrot.lane.b32.xlu0 %v5666, 61
        %v5680 = vpop.permute.xlu0 %5679
        %5681 = vrot.lane.b32.xlu0 %v5667, 61
        %v5682 = vpop.permute.xlu0 %5681
        %5683 = vrot.lane.b32.xlu0 %v5668, 61
        %v5684 = vpop.permute.xlu0 %5683
        %5685 = vrot.lane.b32.xlu0 %v5669, 61
        %v5686 = vpop.permute.xlu0 %5685
        %5687 = vrot.lane.b32.xlu0 %v5670, 61
        %v5688 = vpop.permute.xlu0 %5687
        %v5689 = vsel %vm2804, %v5678, %v5680
        %v5690 = vsel %vm2804, %v5680, %v5682
        %v5691 = vsel %vm2804, %v5684, %v5686
        %v5692 = vsel %vm2804, %v5686, %v5688
        %5697 = vst [vmem:[#allocation3 + $0x5c0] sm:$0xff] %v5689
        %5698 = vst [vmem:[#allocation3 + $0x5c8] sm:$0xff] %v5690
        %5699 = vst [vmem:[#allocation3 + $0x5e0] sm:$0xff] %v5691
        %5700 = vst [vmem:[#allocation3 + $0x5e8] sm:$0xff] %v5692
        %v5701 = vld [vmem:[#allocation2 + $0x18] sm:$0xff]
        %v5702 = vld [vmem:[#allocation2 + $0x20] sm:$0xff]
        %v5703 = vld [vmem:[#allocation2 + $0x28] sm:$0xff]
        %v5704 = vld [vmem:[#allocation2 + $0x48] sm:$0xff]
        %v5705 = vld [vmem:[#allocation2 + $0x50] sm:$0xff]
        %v5706 = vld [vmem:[#allocation2 + $0x58] sm:$0xff]
        %v5707 = vmul.f32 %v5701, %v2824
        %v5708 = vmul.f32 %v5702, %v2828
        %v5709 = vmul.f32 %v5703, %v2826
        %v5710 = vmul.f32 %v5704, %v2824
        %v5711 = vmul.f32 %v5705, %v2828
        %v5712 = vmul.f32 %v5706, %v2826
        %5719 = vrot.lane.b32.xlu0 %v5707, 121
        %v5720 = vpop.permute.xlu0 %5719
        %5721 = vrot.lane.b32.xlu0 %v5708, 121
        %v5722 = vpop.permute.xlu0 %5721
        %5723 = vrot.lane.b32.xlu0 %v5709, 121
        %v5724 = vpop.permute.xlu0 %5723
        %5725 = vrot.lane.b32.xlu0 %v5710, 121
        %v5726 = vpop.permute.xlu0 %5725
        %5727 = vrot.lane.b32.xlu0 %v5711, 121
        %v5728 = vpop.permute.xlu0 %5727
        %5729 = vrot.lane.b32.xlu0 %v5712, 121
        %v5730 = vpop.permute.xlu0 %5729
        %v5731 = vsel %vm2856, %v5720, %v5722
        %v5732 = vsel %vm2856, %v5722, %v5724
        %v5733 = vsel %vm2856, %v5726, %v5728
        %v5734 = vsel %vm2856, %v5728, %v5730
        %5739 = vst [vmem:[#allocation3 + $0x5d0] sm:$0xff] %v5731
        %5740 = vst [vmem:[#allocation3 + $0x5d8] sm:$0xff] %v5732
        %5741 = vst [vmem:[#allocation3 + $0x5f0] sm:$0xff] %v5733
        %5742 = vst [vmem:[#allocation3 + $0x5f8] sm:$0xff] %v5734
        %v5743 = vld [vmem:[#allocation2] sm:$0xff]
        %v5744 = vld [vmem:[#allocation2 + $0x8] sm:$0xff]
        %v5745 = vld [vmem:[#allocation2 + $0x10] sm:$0xff]
        %v5746 = vld [vmem:[#allocation2 + $0x30] sm:$0xff]
        %v5747 = vld [vmem:[#allocation2 + $0x38] sm:$0xff]
        %v5748 = vld [vmem:[#allocation2 + $0x40] sm:$0xff]
        %v5749 = vmul.f32 %v5743, %v2876
        %v5750 = vmul.f32 %v5744, %v2879
        %v5751 = vmul.f32 %v5745, %v2878
        %v5752 = vmul.f32 %v5746, %v2876
        %v5753 = vmul.f32 %v5747, %v2879
        %v5754 = vmul.f32 %v5748, %v2878
        %5761 = vrot.lane.b32.xlu0 %v5749, 60
        %v5762 = vpop.permute.xlu0 %5761
        %5763 = vrot.lane.b32.xlu0 %v5750, 60
        %v5764 = vpop.permute.xlu0 %5763
        %5765 = vrot.lane.b32.xlu0 %v5751, 60
        %v5766 = vpop.permute.xlu0 %5765
        %5767 = vrot.lane.b32.xlu0 %v5752, 60
        %v5768 = vpop.permute.xlu0 %5767
        %5769 = vrot.lane.b32.xlu0 %v5753, 60
        %v5770 = vpop.permute.xlu0 %5769
        %5771 = vrot.lane.b32.xlu0 %v5754, 60
        %v5772 = vpop.permute.xlu0 %5771
        %v5773 = vsel %vm619, %v5762, %v5764
        %v5774 = vsel %vm619, %v5764, %v5766
        %v5775 = vsel %vm619, %v5768, %v5770
        %v5776 = vsel %vm619, %v5770, %v5772
        %5781 = vst [vmem:[#allocation3 + $0x600] sm:$0xff] %v5773
        %5782 = vst [vmem:[#allocation3 + $0x608] sm:$0xff] %v5774
        %5783 = vst [vmem:[#allocation3 + $0x620] sm:$0xff] %v5775
        %5784 = vst [vmem:[#allocation3 + $0x628] sm:$0xff] %v5776
        %v5785 = vld [vmem:[#allocation2 + $0x18] sm:$0xff]
        %v5786 = vld [vmem:[#allocation2 + $0x20] sm:$0xff]
        %v5787 = vld [vmem:[#allocation2 + $0x28] sm:$0xff]
        %v5788 = vld [vmem:[#allocation2 + $0x48] sm:$0xff]
        %v5789 = vld [vmem:[#allocation2 + $0x50] sm:$0xff]
        %v5790 = vld [vmem:[#allocation2 + $0x58] sm:$0xff]
        %v5791 = vmul.f32 %v5785, %v2926
        %v5792 = vmul.f32 %v5786, %v2929
        %v5793 = vmul.f32 %v5787, %v2928
        %v5794 = vmul.f32 %v5788, %v2926
        %v5795 = vmul.f32 %v5789, %v2929
        %v5796 = vmul.f32 %v5790, %v2928
        %5803 = vrot.lane.b32.xlu0 %v5791, 120
        %v5804 = vpop.permute.xlu0 %5803
        %5805 = vrot.lane.b32.xlu0 %v5792, 120
        %v5806 = vpop.permute.xlu0 %5805
        %5807 = vrot.lane.b32.xlu0 %v5793, 120
        %v5808 = vpop.permute.xlu0 %5807
        %5809 = vrot.lane.b32.xlu0 %v5794, 120
        %v5810 = vpop.permute.xlu0 %5809
        %5811 = vrot.lane.b32.xlu0 %v5795, 120
        %v5812 = vpop.permute.xlu0 %5811
        %5813 = vrot.lane.b32.xlu0 %v5796, 120
        %v5814 = vpop.permute.xlu0 %5813
        %v5815 = vsel %vm2445, %v5804, %v5806
        %v5816 = vsel %vm2445, %v5806, %v5808
        %v5817 = vsel %vm2445, %v5810, %v5812
        %v5818 = vsel %vm2445, %v5812, %v5814
        %5823 = vst [vmem:[#allocation3 + $0x610] sm:$0xff] %v5815
        %5824 = vst [vmem:[#allocation3 + $0x618] sm:$0xff] %v5816
        %5825 = vst [vmem:[#allocation3 + $0x630] sm:$0xff] %v5817
        %5826 = vst [vmem:[#allocation3 + $0x638] sm:$0xff] %v5818
        %v5827 = vld [vmem:[#allocation6 + $0x40] sm:$0xff]
        %v5828 = vld [vmem:[#allocation6 + $0x48] sm:$0xff]
        %v5829 = vld [vmem:[#allocation6 + $0x50] sm:$0xff]
        %v5830 = vld [vmem:[#allocation6 + $0x58] sm:$0xff]
        %v5831 = vld [vmem:[#allocation6 + $0x60] sm:$0xff]
        %v5832 = vld [vmem:[#allocation6 + $0x68] sm:$0xff]
        %v5833 = vld [vmem:[#allocation6 + $0x70] sm:$0xff]
        %v5834 = vld [vmem:[#allocation6 + $0x78] sm:$0xff]
        %v5835 = vld [vmem:[#allocation3] sm:$0xff]
        %v5836 = vld [vmem:[#allocation3 + $0x8] sm:$0xff]
        %v5837 = vld [vmem:[#allocation3 + $0x20] sm:$0xff]
        %v5838 = vld [vmem:[#allocation3 + $0x28] sm:$0xff]
        %v5839 = vld [vmem:[#allocation3 + $0x40] sm:$0xff]
        %v5840 = vld [vmem:[#allocation3 + $0x48] sm:$0xff]
        %v5841 = vld [vmem:[#allocation3 + $0x60] sm:$0xff]
        %v5842 = vld [vmem:[#allocation3 + $0x68] sm:$0xff]
        %v5843 = vld [vmem:[#allocation3 + $0x80] sm:$0xff]
        %v5844 = vld [vmem:[#allocation3 + $0x88] sm:$0xff]
        %v5845 = vld [vmem:[#allocation3 + $0xa0] sm:$0xff]
        %v5846 = vld [vmem:[#allocation3 + $0xa8] sm:$0xff]
        %v5847 = vld [vmem:[#allocation3 + $0xc0] sm:$0xff]
        %v5848 = vld [vmem:[#allocation3 + $0xc8] sm:$0xff]
        %v5849 = vld [vmem:[#allocation3 + $0xe0] sm:$0xff]
        %v5850 = vld [vmem:[#allocation3 + $0xe8] sm:$0xff]
        %v5851 = vld [vmem:[#allocation3 + $0x100] sm:$0xff]
        %v5852 = vld [vmem:[#allocation3 + $0x108] sm:$0xff]
        %v5853 = vld [vmem:[#allocation3 + $0x120] sm:$0xff]
        %v5854 = vld [vmem:[#allocation3 + $0x128] sm:$0xff]
        %v5855 = vld [vmem:[#allocation3 + $0x140] sm:$0xff]
        %v5856 = vld [vmem:[#allocation3 + $0x148] sm:$0xff]
        %v5857 = vld [vmem:[#allocation3 + $0x160] sm:$0xff]
        %v5858 = vld [vmem:[#allocation3 + $0x168] sm:$0xff]
        %v5859 = vld [vmem:[#allocation3 + $0x180] sm:$0xff]
        %v5860 = vld [vmem:[#allocation3 + $0x188] sm:$0xff]
        %v5861 = vld [vmem:[#allocation3 + $0x1a0] sm:$0xff]
        %v5862 = vld [vmem:[#allocation3 + $0x1a8] sm:$0xff]
        %v5863 = vld [vmem:[#allocation3 + $0x1c0] sm:$0xff]
        %v5864 = vld [vmem:[#allocation3 + $0x1c8] sm:$0xff]
        %v5865 = vld [vmem:[#allocation3 + $0x1e0] sm:$0xff]
        %v5866 = vld [vmem:[#allocation3 + $0x1e8] sm:$0xff]
        %v5867 = vld [vmem:[#allocation3 + $0x200] sm:$0xff]
        %v5868 = vld [vmem:[#allocation3 + $0x208] sm:$0xff]
        %v5869 = vld [vmem:[#allocation3 + $0x220] sm:$0xff]
        %v5870 = vld [vmem:[#allocation3 + $0x228] sm:$0xff]
        %v5871 = vld [vmem:[#allocation3 + $0x240] sm:$0xff]
        %v5872 = vld [vmem:[#allocation3 + $0x248] sm:$0xff]
        %v5873 = vld [vmem:[#allocation3 + $0x260] sm:$0xff]
        %v5874 = vld [vmem:[#allocation3 + $0x268] sm:$0xff]
        %v5875 = vld [vmem:[#allocation3 + $0x280] sm:$0xff]
        %v5876 = vld [vmem:[#allocation3 + $0x288] sm:$0xff]
        %v5877 = vld [vmem:[#allocation3 + $0x2a0] sm:$0xff]
        %v5878 = vld [vmem:[#allocation3 + $0x2a8] sm:$0xff]
        %v5879 = vld [vmem:[#allocation3 + $0x2c0] sm:$0xff]
        %v5880 = vld [vmem:[#allocation3 + $0x2c8] sm:$0xff]
        %v5881 = vld [vmem:[#allocation3 + $0x2e0] sm:$0xff]
        %v5882 = vld [vmem:[#allocation3 + $0x2e8] sm:$0xff]
        %v5883 = vld [vmem:[#allocation3 + $0x300] sm:$0xff]
        %v5884 = vld [vmem:[#allocation3 + $0x308] sm:$0xff]
        %v5885 = vld [vmem:[#allocation3 + $0x320] sm:$0xff]
        %v5886 = vld [vmem:[#allocation3 + $0x328] sm:$0xff]
        %v5887 = vld [vmem:[#allocation3 + $0x340] sm:$0xff]
        %v5888 = vld [vmem:[#allocation3 + $0x348] sm:$0xff]
        %v5889 = vld [vmem:[#allocation3 + $0x360] sm:$0xff]
        %v5890 = vld [vmem:[#allocation3 + $0x368] sm:$0xff]
        %v5891 = vld [vmem:[#allocation3 + $0x380] sm:$0xff]
        %v5892 = vld [vmem:[#allocation3 + $0x388] sm:$0xff]
        %v5893 = vld [vmem:[#allocation3 + $0x3a0] sm:$0xff]
        %v5894 = vld [vmem:[#allocation3 + $0x3a8] sm:$0xff]
        %v5895 = vld [vmem:[#allocation3 + $0x3c0] sm:$0xff]
        %v5896 = vld [vmem:[#allocation3 + $0x3c8] sm:$0xff]
        %v5897 = vld [vmem:[#allocation3 + $0x3e0] sm:$0xff]
        %v5898 = vld [vmem:[#allocation3 + $0x3e8] sm:$0xff]
        %v5899 = vld [vmem:[#allocation3 + $0x400] sm:$0xff]
        %v5900 = vld [vmem:[#allocation3 + $0x408] sm:$0xff]
        %v5901 = vld [vmem:[#allocation3 + $0x420] sm:$0xff]
        %v5902 = vld [vmem:[#allocation3 + $0x428] sm:$0xff]
        %v5903 = vld [vmem:[#allocation3 + $0x440] sm:$0xff]
        %v5904 = vld [vmem:[#allocation3 + $0x448] sm:$0xff]
        %v5905 = vld [vmem:[#allocation3 + $0x460] sm:$0xff]
        %v5906 = vld [vmem:[#allocation3 + $0x468] sm:$0xff]
        %v5907 = vld [vmem:[#allocation3 + $0x480] sm:$0xff]
        %v5908 = vld [vmem:[#allocation3 + $0x488] sm:$0xff]
        %v5909 = vld [vmem:[#allocation3 + $0x4a0] sm:$0xff]
        %v5910 = vld [vmem:[#allocation3 + $0x4a8] sm:$0xff]
        %v5911 = vld [vmem:[#allocation3 + $0x4c0] sm:$0xff]
        %v5912 = vld [vmem:[#allocation3 + $0x4c8] sm:$0xff]
        %v5913 = vld [vmem:[#allocation3 + $0x4e0] sm:$0xff]
        %v5914 = vld [vmem:[#allocation3 + $0x4e8] sm:$0xff]
        %v5915 = vld [vmem:[#allocation3 + $0x500] sm:$0xff]
        %v5916 = vld [vmem:[#allocation3 + $0x508] sm:$0xff]
        %v5917 = vld [vmem:[#allocation3 + $0x520] sm:$0xff]
        %v5918 = vld [vmem:[#allocation3 + $0x528] sm:$0xff]
        %v5919 = vld [vmem:[#allocation3 + $0x540] sm:$0xff]
        %v5920 = vld [vmem:[#allocation3 + $0x548] sm:$0xff]
        %v5921 = vld [vmem:[#allocation3 + $0x560] sm:$0xff]
        %v5922 = vld [vmem:[#allocation3 + $0x568] sm:$0xff]
        %v5923 = vld [vmem:[#allocation3 + $0x580] sm:$0xff]
        %v5924 = vld [vmem:[#allocation3 + $0x588] sm:$0xff]
        %v5925 = vld [vmem:[#allocation3 + $0x5a0] sm:$0xff]
        %v5926 = vld [vmem:[#allocation3 + $0x5a8] sm:$0xff]
        %v5927 = vld [vmem:[#allocation3 + $0x5c0] sm:$0xff]
        %v5928 = vld [vmem:[#allocation3 + $0x5c8] sm:$0xff]
        %v5929 = vld [vmem:[#allocation3 + $0x5e0] sm:$0xff]
        %v5930 = vld [vmem:[#allocation3 + $0x5e8] sm:$0xff]
        %v5931 = vld [vmem:[#allocation3 + $0x600] sm:$0xff]
        %v5932 = vld [vmem:[#allocation3 + $0x608] sm:$0xff]
        %v5933 = vld [vmem:[#allocation3 + $0x620] sm:$0xff]
        %v5934 = vld [vmem:[#allocation3 + $0x628] sm:$0xff]
        %v5935 = vld [vmem:[#allocation6 + $0x80] sm:$0xff]
        %v5936 = vld [vmem:[#allocation6 + $0x88] sm:$0xff]
        %v5937 = vld [vmem:[#allocation6 + $0x90] sm:$0xff]
        %v5938 = vld [vmem:[#allocation6 + $0x98] sm:$0xff]
        %v5939 = vld [vmem:[#allocation6 + $0xa0] sm:$0xff]
        %v5940 = vld [vmem:[#allocation6 + $0xa8] sm:$0xff]
        %v5941 = vld [vmem:[#allocation6 + $0xb0] sm:$0xff]
        %v5942 = vld [vmem:[#allocation6 + $0xb8] sm:$0xff]
        %v5943 = vld [vmem:[#allocation3 + $0x10] sm:$0xff]
        %v5944 = vld [vmem:[#allocation3 + $0x18] sm:$0xff]
        %v5945 = vld [vmem:[#allocation3 + $0x30] sm:$0xff]
        %v5946 = vld [vmem:[#allocation3 + $0x38] sm:$0xff]
        %v5947 = vld [vmem:[#allocation3 + $0x50] sm:$0xff]
        %v5948 = vld [vmem:[#allocation3 + $0x58] sm:$0xff]
        %v5949 = vld [vmem:[#allocation3 + $0x70] sm:$0xff]
        %v5950 = vld [vmem:[#allocation3 + $0x78] sm:$0xff]
        %v5951 = vld [vmem:[#allocation3 + $0x90] sm:$0xff]
        %v5952 = vld [vmem:[#allocation3 + $0x98] sm:$0xff]
        %v5953 = vld [vmem:[#allocation3 + $0xb0] sm:$0xff]
        %v5954 = vld [vmem:[#allocation3 + $0xb8] sm:$0xff]
        %v5955 = vld [vmem:[#allocation3 + $0xd0] sm:$0xff]
        %v5956 = vld [vmem:[#allocation3 + $0xd8] sm:$0xff]
        %v5957 = vld [vmem:[#allocation3 + $0xf0] sm:$0xff]
        %v5958 = vld [vmem:[#allocation3 + $0xf8] sm:$0xff]
        %v5959 = vld [vmem:[#allocation3 + $0x110] sm:$0xff]
        %v5960 = vld [vmem:[#allocation3 + $0x118] sm:$0xff]
        %v5961 = vld [vmem:[#allocation3 + $0x130] sm:$0xff]
        %v5962 = vld [vmem:[#allocation3 + $0x138] sm:$0xff]
        %v5963 = vld [vmem:[#allocation3 + $0x150] sm:$0xff]
        %v5964 = vld [vmem:[#allocation3 + $0x158] sm:$0xff]
        %v5965 = vld [vmem:[#allocation3 + $0x170] sm:$0xff]
        %v5966 = vld [vmem:[#allocation3 + $0x178] sm:$0xff]
        %v5967 = vld [vmem:[#allocation3 + $0x190] sm:$0xff]
        %v5968 = vld [vmem:[#allocation3 + $0x198] sm:$0xff]
        %v5969 = vld [vmem:[#allocation3 + $0x1b0] sm:$0xff]
        %v5970 = vld [vmem:[#allocation3 + $0x1b8] sm:$0xff]
        %v5971 = vld [vmem:[#allocation3 + $0x1d0] sm:$0xff]
        %v5972 = vld [vmem:[#allocation3 + $0x1d8] sm:$0xff]
        %v5973 = vld [vmem:[#allocation3 + $0x1f0] sm:$0xff]
        %v5974 = vld [vmem:[#allocation3 + $0x1f8] sm:$0xff]
        %v5975 = vld [vmem:[#allocation3 + $0x210] sm:$0xff]
        %v5976 = vld [vmem:[#allocation3 + $0x218] sm:$0xff]
        %v5977 = vld [vmem:[#allocation3 + $0x230] sm:$0xff]
        %v5978 = vld [vmem:[#allocation3 + $0x238] sm:$0xff]
        %v5979 = vld [vmem:[#allocation3 + $0x250] sm:$0xff]
        %v5980 = vld [vmem:[#allocation3 + $0x258] sm:$0xff]
        %v5981 = vld [vmem:[#allocation3 + $0x270] sm:$0xff]
        %v5982 = vld [vmem:[#allocation3 + $0x278] sm:$0xff]
        %v5983 = vld [vmem:[#allocation3 + $0x290] sm:$0xff]
        %v5984 = vld [vmem:[#allocation3 + $0x298] sm:$0xff]
        %v5985 = vld [vmem:[#allocation3 + $0x2b0] sm:$0xff]
        %v5986 = vld [vmem:[#allocation3 + $0x2b8] sm:$0xff]
        %v5987 = vld [vmem:[#allocation3 + $0x2d0] sm:$0xff]
        %v5988 = vld [vmem:[#allocation3 + $0x2d8] sm:$0xff]
        %v5989 = vld [vmem:[#allocation3 + $0x2f0] sm:$0xff]
        %v5990 = vld [vmem:[#allocation3 + $0x2f8] sm:$0xff]
        %v5991 = vld [vmem:[#allocation3 + $0x310] sm:$0xff]
        %v5992 = vld [vmem:[#allocation3 + $0x318] sm:$0xff]
        %v5993 = vld [vmem:[#allocation3 + $0x330] sm:$0xff]
        %v5994 = vld [vmem:[#allocation3 + $0x338] sm:$0xff]
        %v5995 = vld [vmem:[#allocation3 + $0x350] sm:$0xff]
        %v5996 = vld [vmem:[#allocation3 + $0x358] sm:$0xff]
        %v5997 = vld [vmem:[#allocation3 + $0x370] sm:$0xff]
        %v5998 = vld [vmem:[#allocation3 + $0x378] sm:$0xff]
        %v5999 = vld [vmem:[#allocation3 + $0x390] sm:$0xff]
        %v6000 = vld [vmem:[#allocation3 + $0x398] sm:$0xff]
        %v6001 = vld [vmem:[#allocation3 + $0x3b0] sm:$0xff]
        %v6002 = vld [vmem:[#allocation3 + $0x3b8] sm:$0xff]
        %v6003 = vld [vmem:[#allocation3 + $0x3d0] sm:$0xff]
        %v6004 = vld [vmem:[#allocation3 + $0x3d8] sm:$0xff]
        %v6005 = vld [vmem:[#allocation3 + $0x3f0] sm:$0xff]
        %v6006 = vld [vmem:[#allocation3 + $0x3f8] sm:$0xff]
        %v6007 = vld [vmem:[#allocation3 + $0x410] sm:$0xff]
        %v6008 = vld [vmem:[#allocation3 + $0x418] sm:$0xff]
        %v6009 = vld [vmem:[#allocation3 + $0x430] sm:$0xff]
        %v6010 = vld [vmem:[#allocation3 + $0x438] sm:$0xff]
        %v6011 = vld [vmem:[#allocation3 + $0x450] sm:$0xff]
        %v6012 = vld [vmem:[#allocation3 + $0x458] sm:$0xff]
        %v6013 = vld [vmem:[#allocation3 + $0x470] sm:$0xff]
        %v6014 = vld [vmem:[#allocation3 + $0x478] sm:$0xff]
        %v6015 = vld [vmem:[#allocation3 + $0x490] sm:$0xff]
        %v6016 = vld [vmem:[#allocation3 + $0x498] sm:$0xff]
        %v6017 = vld [vmem:[#allocation3 + $0x4b0] sm:$0xff]
        %v6018 = vld [vmem:[#allocation3 + $0x4b8] sm:$0xff]
        %v6019 = vld [vmem:[#allocation3 + $0x4d0] sm:$0xff]
        %v6020 = vld [vmem:[#allocation3 + $0x4d8] sm:$0xff]
        %v6021 = vld [vmem:[#allocation3 + $0x4f0] sm:$0xff]
        %v6022 = vld [vmem:[#allocation3 + $0x4f8] sm:$0xff]
        %v6023 = vld [vmem:[#allocation3 + $0x510] sm:$0xff]
        %v6024 = vld [vmem:[#allocation3 + $0x518] sm:$0xff]
        %v6025 = vld [vmem:[#allocation3 + $0x530] sm:$0xff]
        %v6026 = vld [vmem:[#allocation3 + $0x538] sm:$0xff]
        %v6027 = vld [vmem:[#allocation3 + $0x550] sm:$0xff]
        %v6028 = vld [vmem:[#allocation3 + $0x558] sm:$0xff]
        %v6029 = vld [vmem:[#allocation3 + $0x570] sm:$0xff]
        %v6030 = vld [vmem:[#allocation3 + $0x578] sm:$0xff]
        %v6031 = vld [vmem:[#allocation3 + $0x590] sm:$0xff]
        %v6032 = vld [vmem:[#allocation3 + $0x598] sm:$0xff]
        %v6033 = vld [vmem:[#allocation3 + $0x5b0] sm:$0xff]
        %v6034 = vld [vmem:[#allocation3 + $0x5b8] sm:$0xff]
        %v6035 = vld [vmem:[#allocation3 + $0x5d0] sm:$0xff]
        %v6036 = vld [vmem:[#allocation3 + $0x5d8] sm:$0xff]
        %v6037 = vld [vmem:[#allocation3 + $0x5f0] sm:$0xff]
        %v6038 = vld [vmem:[#allocation3 + $0x5f8] sm:$0xff]
        %v6039 = vld [vmem:[#allocation3 + $0x610] sm:$0xff]
        %v6040 = vld [vmem:[#allocation3 + $0x618] sm:$0xff]
        %v6041 = vld [vmem:[#allocation3 + $0x630] sm:$0xff]
        %v6042 = vld [vmem:[#allocation3 + $0x638] sm:$0xff]
        %v6044 = vsel %vm353, %v5938, 0
        %v6047 = vsel %vm353, %v5942, 0
        %6049 = vmatprep.subr.mxu0 %v5944
        %6050 = vmatpush1.msra.mxu0 %v5943
        %6051 = vmatprep.subr.mxu0 %v5946
        %6052 = vmatpush1.msra.mxu0 %v5945
        %6053 = vmatprep.subr.mxu0 %v5948
        %6054 = vmatpush1.msra.mxu0 %v5947
        %6055 = vmatprep.subr.mxu0 %v5950
        %6056 = vmatpush1.msra.mxu0 %v5949
        %6057 = vmatprep.subr.mxu0 %v5952
        %6058 = vmatpush1.msra.mxu0 %v5951
        %6059 = vmatprep.subr.mxu0 %v5954
        %6060 = vmatpush1.msra.mxu0 %v5953
        %6061 = vmatprep.subr.mxu0 %v5956
        %6062 = vmatpush1.msra.mxu0 %v5955
        %6063 = vmatprep.subr.mxu0 %v5958
        %6064 = vmatpush1.msra.mxu0 %v5957
        %6065 = vmatprep.subr.mxu0 %v5960
        %6066 = vmatpush1.msra.mxu0 %v5959
        %6067 = vmatprep.subr.mxu0 %v5962
        %6068 = vmatpush1.msra.mxu0 %v5961
        %6069 = vmatprep.subr.mxu0 %v5964
        %6070 = vmatpush1.msra.mxu0 %v5963
        %6071 = vmatprep.subr.mxu0 %v5966
        %6072 = vmatpush1.msra.mxu0 %v5965
        %6073 = vmatprep.subr.mxu0 %v5968
        %6074 = vmatpush1.msra.mxu0 %v5967
        %6075 = vmatprep.subr.mxu0 %v5970
        %6076 = vmatpush1.msra.mxu0 %v5969
        %6077 = vmatprep.subr.mxu0 %v5972
        %6078 = vmatpush1.msra.mxu0 %v5971
        %6079 = vmatprep.subr.mxu0 %v5974
        %6080 = vmatpush1.msra.mxu0 %v5973
        %6081 = vmatprep.subr.mxu0 %v5976
        %6082 = vmatpush1.msra.mxu0 %v5975
        %6083 = vmatprep.subr.mxu0 %v5978
        %6084 = vmatpush1.msra.mxu0 %v5977
        %6085 = vmatprep.subr.mxu0 %v5980
        %6086 = vmatpush1.msra.mxu0 %v5979
        %6087 = vmatprep.subr.mxu0 %v5982
        %6088 = vmatpush1.msra.mxu0 %v5981
        %6089 = vmatprep.subr.mxu0 %v5984
        %6090 = vmatpush1.msra.mxu0 %v5983
        %6091 = vmatprep.subr.mxu0 %v5986
        %6092 = vmatpush1.msra.mxu0 %v5985
        %6093 = vmatprep.subr.mxu0 %v5988
        %6094 = vmatpush1.msra.mxu0 %v5987
        %6095 = vmatprep.subr.mxu0 %v5990
        %6096 = vmatpush1.msra.mxu0 %v5989
        %6097 = vmatprep.subr.mxu0 %v5992
        %6098 = vmatpush1.msra.mxu0 %v5991
        %6099 = vmatprep.subr.mxu0 %v5994
        %6100 = vmatpush1.msra.mxu0 %v5993
        %6101 = vmatprep.subr.mxu0 %v5996
        %6102 = vmatpush1.msra.mxu0 %v5995
        %6103 = vmatprep.subr.mxu0 %v5998
        %6104 = vmatpush1.msra.mxu0 %v5997
        %6105 = vmatprep.subr.mxu0 %v6000
        %6106 = vmatpush1.msra.mxu0 %v5999
        %6107 = vmatprep.subr.mxu0 %v6002
        %6108 = vmatpush1.msra.mxu0 %v6001
        %6109 = vmatprep.subr.mxu0 %v6004
        %6110 = vmatpush1.msra.mxu0 %v6003
        %6111 = vmatprep.subr.mxu0 %v6006
        %6112 = vmatpush1.msra.mxu0 %v6005
        %6113 = vmatprep.mubr.f32.mxu0 %v5936
        %6114 = vmatmul.mubr.f32.gmra.mrb[0].mxu0 %v5935
        %v6115 = vpop.f32.mrb[0].mxu0
        %v6116 = vadd.f32 0.0, %v6115
        %v6117 = vpop.f32.mrb[0].mxu0
        %v6118 = vadd.f32 0.0, %v6117
        %6119 = vmatprep.mubr.f32.mxu0 %v5940
        %6120 = vmatmul.mubr.f32.gmra.mrb[0].mxu0 %v5939
        %v6121 = vpop.f32.mrb[0].mxu0
        %v6122 = vadd.f32 0.0, %v6121
        %v6123 = vpop.f32.mrb[0].mxu0
        %v6124 = vadd.f32 0.0, %v6123
        %6125 = vdwg.mxu0
        %6126 = vmatprep.subr.mxu0 %v6008
        %6127 = vmatpush1.msra.mxu0 %v6007
        %6128 = vmatprep.subr.mxu0 %v6010
        %6129 = vmatpush1.msra.mxu0 %v6009
        %6130 = vmatprep.subr.mxu0 %v6012
        %6131 = vmatpush1.msra.mxu0 %v6011
        %6132 = vmatprep.subr.mxu0 %v6014
        %6133 = vmatpush1.msra.mxu0 %v6013
        %6134 = vmatprep.subr.mxu0 %v6016
        %6135 = vmatpush1.msra.mxu0 %v6015
        %6136 = vmatprep.subr.mxu0 %v6018
        %6137 = vmatpush1.msra.mxu0 %v6017
        %6138 = vmatprep.subr.mxu0 %v6020
        %6139 = vmatpush1.msra.mxu0 %v6019
        %6140 = vmatprep.subr.mxu0 %v6022
        %6141 = vmatpush1.msra.mxu0 %v6021
        %6142 = vmatprep.subr.mxu0 %v6024
        %6143 = vmatpush1.msra.mxu0 %v6023
        %6144 = vmatprep.subr.mxu0 %v6026
        %6145 = vmatpush1.msra.mxu0 %v6025
        %6146 = vmatprep.subr.mxu0 %v6028
        %6147 = vmatpush1.msra.mxu0 %v6027
        %6148 = vmatprep.subr.mxu0 %v6030
        %6149 = vmatpush1.msra.mxu0 %v6029
        %6150 = vmatprep.subr.mxu0 %v6032
        %6151 = vmatpush1.msra.mxu0 %v6031
        %6152 = vmatprep.subr.mxu0 %v6034
        %6153 = vmatpush1.msra.mxu0 %v6033
        %6154 = vmatprep.subr.mxu0 %v6036
        %6155 = vmatpush1.msra.mxu0 %v6035
        %6156 = vmatprep.subr.mxu0 %v6038
        %6157 = vmatpush1.msra.mxu0 %v6037
        %6158 = vmatprep.subr.mxu0 %v6040
        %6159 = vmatpush1.msra.mxu0 %v6039
        %6160 = vmatprep.subr.mxu0 %v6042
        %6161 = vmatpush1.msra.mxu0 %v6041
        %6162 = vmatprep.subr.mxu0 0.0
        %6163 = vmatpush1.msra.mxu0 0.0
        %6164 = vmatprep.subr.mxu0 0.0
        %6165 = vmatpush1.msra.mxu0 0.0
        %6166 = vmatprep.subr.mxu0 0.0
        %6167 = vmatpush1.msra.mxu0 0.0
        %6168 = vmatprep.subr.mxu0 0.0
        %6169 = vmatpush1.msra.mxu0 0.0
        %6170 = vmatprep.subr.mxu0 0.0
        %6171 = vmatpush1.msra.mxu0 0.0
        %6172 = vmatprep.subr.mxu0 0.0
        %6173 = vmatpush1.msra.mxu0 0.0
        %6174 = vmatprep.subr.mxu0 0.0
        %6175 = vmatpush1.msra.mxu0 0.0
        %6176 = vmatprep.subr.mxu0 0.0
        %6177 = vmatpush1.msra.mxu0 0.0
        %6178 = vmatprep.subr.mxu0 0.0
        %6179 = vmatpush1.msra.mxu0 0.0
        %6180 = vmatprep.subr.mxu0 0.0
        %6181 = vmatpush1.msra.mxu0 0.0
        %6182 = vmatprep.subr.mxu0 0.0
        %6183 = vmatpush1.msra.mxu0 0.0
        %6184 = vmatprep.subr.mxu0 0.0
        %6185 = vmatpush1.msra.mxu0 0.0
        %6186 = vmatprep.subr.mxu0 0.0
        %6187 = vmatpush1.msra.mxu0 0.0
        %6188 = vmatprep.subr.mxu0 0.0
        %6189 = vmatpush1.msra.mxu0 0.0
        %6190 = vmatprep.mubr.f32.mxu0 %v6044
        %6191 = vmatmul.mubr.f32.gmra.mrb[0].mxu0 %v5937
        %v6192 = vpop.f32.mrb[0].mxu0
        %v6193 = vadd.f32 %v6116, %v6192
        %v6194 = vpop.f32.mrb[0].mxu0
        %v6195 = vadd.f32 %v6118, %v6194
        %6196 = vmatprep.mubr.f32.mxu0 %v6047
        %6197 = vmatmul.mubr.f32.gmra.mrb[0].mxu0 %v5941
        %v6198 = vpop.f32.mrb[0].mxu0
        %v6199 = vadd.f32 %v6122, %v6198
        %v6200 = vpop.f32.mrb[0].mxu0
        %v6201 = vadd.f32 %v6124, %v6200
        %6202 = vdwg.mxu0
        %v6204 = vsel %vm353, %v5830, 0
        %v6207 = vsel %vm353, %v5834, 0
        %6209 = vmatprep.subr.mxu0 %v5836
        %6210 = vmatpush1.msra.mxu0 %v5835
        %6211 = vmatprep.subr.mxu0 %v5838
        %6212 = vmatpush1.msra.mxu0 %v5837
        %6213 = vmatprep.subr.mxu0 %v5840
        %6214 = vmatpush1.msra.mxu0 %v5839
        %6215 = vmatprep.subr.mxu0 %v5842
        %6216 = vmatpush1.msra.mxu0 %v5841
        %6217 = vmatprep.subr.mxu0 %v5844
        %6218 = vmatpush1.msra.mxu0 %v5843
        %6219 = vmatprep.subr.mxu0 %v5846
        %6220 = vmatpush1.msra.mxu0 %v5845
        %6221 = vmatprep.subr.mxu0 %v5848
        %6222 = vmatpush1.msra.mxu0 %v5847
        %6223 = vmatprep.subr.mxu0 %v5850
        %6224 = vmatpush1.msra.mxu0 %v5849
        %6225 = vmatprep.subr.mxu0 %v5852
        %6226 = vmatpush1.msra.mxu0 %v5851
        %6227 = vmatprep.subr.mxu0 %v5854
        %6228 = vmatpush1.msra.mxu0 %v5853
        %6229 = vmatprep.subr.mxu0 %v5856
        %6230 = vmatpush1.msra.mxu0 %v5855
        %6231 = vmatprep.subr.mxu0 %v5858
        %6232 = vmatpush1.msra.mxu0 %v5857
        %6233 = vmatprep.subr.mxu0 %v5860
        %6234 = vmatpush1.msra.mxu0 %v5859
        %6235 = vmatprep.subr.mxu0 %v5862
        %6236 = vmatpush1.msra.mxu0 %v5861
        %6237 = vmatprep.subr.mxu0 %v5864
        %6238 = vmatpush1.msra.mxu0 %v5863
        %6239 = vmatprep.subr.mxu0 %v5866
        %6240 = vmatpush1.msra.mxu0 %v5865
        %6241 = vmatprep.subr.mxu0 %v5868
        %6242 = vmatpush1.msra.mxu0 %v5867
        %6243 = vmatprep.subr.mxu0 %v5870
        %6244 = vmatpush1.msra.mxu0 %v5869
        %6245 = vmatprep.subr.mxu0 %v5872
        %6246 = vmatpush1.msra.mxu0 %v5871
        %6247 = vmatprep.subr.mxu0 %v5874
        %6248 = vmatpush1.msra.mxu0 %v5873
        %6249 = vmatprep.subr.mxu0 %v5876
        %6250 = vmatpush1.msra.mxu0 %v5875
        %6251 = vmatprep.subr.mxu0 %v5878
        %6252 = vmatpush1.msra.mxu0 %v5877
        %6253 = vmatprep.subr.mxu0 %v5880
        %6254 = vmatpush1.msra.mxu0 %v5879
        %6255 = vmatprep.subr.mxu0 %v5882
        %6256 = vmatpush1.msra.mxu0 %v5881
        %6257 = vmatprep.subr.mxu0 %v5884
        %6258 = vmatpush1.msra.mxu0 %v5883
        %6259 = vmatprep.subr.mxu0 %v5886
        %6260 = vmatpush1.msra.mxu0 %v5885
        %6261 = vmatprep.subr.mxu0 %v5888
        %6262 = vmatpush1.msra.mxu0 %v5887
        %6263 = vmatprep.subr.mxu0 %v5890
        %6264 = vmatpush1.msra.mxu0 %v5889
        %6265 = vmatprep.subr.mxu0 %v5892
        %6266 = vmatpush1.msra.mxu0 %v5891
        %6267 = vmatprep.subr.mxu0 %v5894
        %6268 = vmatpush1.msra.mxu0 %v5893
        %6269 = vmatprep.subr.mxu0 %v5896
        %6270 = vmatpush1.msra.mxu0 %v5895
        %6271 = vmatprep.subr.mxu0 %v5898
        %6272 = vmatpush1.msra.mxu0 %v5897
        %6273 = vmatprep.mubr.f32.mxu0 %v5828
        %6274 = vmatmul.mubr.f32.gmra.mrb[0].mxu0 %v5827
        %v6275 = vpop.f32.mrb[0].mxu0
        %v6276 = vadd.f32 %v6193, %v6275
        %v6277 = vpop.f32.mrb[0].mxu0
        %v6278 = vadd.f32 %v6195, %v6277
        %6279 = vmatprep.mubr.f32.mxu0 %v5832
        %6280 = vmatmul.mubr.f32.gmra.mrb[0].mxu0 %v5831
        %v6281 = vpop.f32.mrb[0].mxu0
        %v6282 = vadd.f32 %v6199, %v6281
        %v6283 = vpop.f32.mrb[0].mxu0
        %v6284 = vadd.f32 %v6201, %v6283
        %6285 = vdwg.mxu0
        %6286 = vmatprep.subr.mxu0 %v5900
        %6287 = vmatpush1.msra.mxu0 %v5899
        %6288 = vmatprep.subr.mxu0 %v5902
        %6289 = vmatpush1.msra.mxu0 %v5901
        %6290 = vmatprep.subr.mxu0 %v5904
        %6291 = vmatpush1.msra.mxu0 %v5903
        %6292 = vmatprep.subr.mxu0 %v5906
        %6293 = vmatpush1.msra.mxu0 %v5905
        %6294 = vmatprep.subr.mxu0 %v5908
        %6295 = vmatpush1.msra.mxu0 %v5907
        %6296 = vmatprep.subr.mxu0 %v5910
        %6297 = vmatpush1.msra.mxu0 %v5909
        %6298 = vmatprep.subr.mxu0 %v5912
        %6299 = vmatpush1.msra.mxu0 %v5911
        %6300 = vmatprep.subr.mxu0 %v5914
        %6301 = vmatpush1.msra.mxu0 %v5913
        %6302 = vmatprep.subr.mxu0 %v5916
        %6303 = vmatpush1.msra.mxu0 %v5915
        %6304 = vmatprep.subr.mxu0 %v5918
        %6305 = vmatpush1.msra.mxu0 %v5917
        %6306 = vmatprep.subr.mxu0 %v5920
        %6307 = vmatpush1.msra.mxu0 %v5919
        %6308 = vmatprep.subr.mxu0 %v5922
        %6309 = vmatpush1.msra.mxu0 %v5921
        %6310 = vmatprep.subr.mxu0 %v5924
        %6311 = vmatpush1.msra.mxu0 %v5923
        %6312 = vmatprep.subr.mxu0 %v5926
        %6313 = vmatpush1.msra.mxu0 %v5925
        %6314 = vmatprep.subr.mxu0 %v5928
        %6315 = vmatpush1.msra.mxu0 %v5927
        %6316 = vmatprep.subr.mxu0 %v5930
        %6317 = vmatpush1.msra.mxu0 %v5929
        %6318 = vmatprep.subr.mxu0 %v5932
        %6319 = vmatpush1.msra.mxu0 %v5931
        %6320 = vmatprep.subr.mxu0 %v5934
        %6321 = vmatpush1.msra.mxu0 %v5933
        %6322 = vmatprep.subr.mxu0 0.0
        %6323 = vmatpush1.msra.mxu0 0.0
        %6324 = vmatprep.subr.mxu0 0.0
        %6325 = vmatpush1.msra.mxu0 0.0
        %6326 = vmatprep.subr.mxu0 0.0
        %6327 = vmatpush1.msra.mxu0 0.0
        %6328 = vmatprep.subr.mxu0 0.0
        %6329 = vmatpush1.msra.mxu0 0.0
        %6330 = vmatprep.subr.mxu0 0.0
        %6331 = vmatpush1.msra.mxu0 0.0
        %6332 = vmatprep.subr.mxu0 0.0
        %6333 = vmatpush1.msra.mxu0 0.0
        %6334 = vmatprep.subr.mxu0 0.0
        %6335 = vmatpush1.msra.mxu0 0.0
        %6336 = vmatprep.subr.mxu0 0.0
        %6337 = vmatpush1.msra.mxu0 0.0
        %6338 = vmatprep.subr.mxu0 0.0
        %6339 = vmatpush1.msra.mxu0 0.0
        %6340 = vmatprep.subr.mxu0 0.0
        %6341 = vmatpush1.msra.mxu0 0.0
        %6342 = vmatprep.subr.mxu0 0.0
        %6343 = vmatpush1.msra.mxu0 0.0
        %6344 = vmatprep.subr.mxu0 0.0
        %6345 = vmatpush1.msra.mxu0 0.0
        %6346 = vmatprep.subr.mxu0 0.0
        %6347 = vmatpush1.msra.mxu0 0.0
        %6348 = vmatprep.subr.mxu0 0.0
        %6349 = vmatpush1.msra.mxu0 0.0
        %6350 = vmatprep.mubr.f32.mxu0 %v6204
        %6351 = vmatmul.mubr.f32.gmra.mrb[0].mxu0 %v5829
        %v6352 = vpop.f32.mrb[0].mxu0
        %v6353 = vadd.f32 %v6276, %v6352
        %v6354 = vpop.f32.mrb[0].mxu0
        %v6355 = vadd.f32 %v6278, %v6354
        %6356 = vmatprep.mubr.f32.mxu0 %v6207
        %6357 = vmatmul.mubr.f32.gmra.mrb[0].mxu0 %v5833
        %v6358 = vpop.f32.mrb[0].mxu0
        %v6359 = vadd.f32 %v6282, %v6358
        %v6360 = vpop.f32.mrb[0].mxu0
        %v6361 = vadd.f32 %v6284, %v6360
        %6362 = vdwg.mxu0
        %v6363 = vld [vmem:[%s1] sm:$0xff]
        %v6364 = vld [vmem:[%s1 + $0x8] sm:$0xff]
        %6366 = vset.pattern.permute.xlu0 4
        %6367 = vperm.xlu0 %6366, %v6363
        %v6368 = vpop.permute.xlu0 %6367
        %6371 = vset.pattern.permute.xlu0 4
        %6372 = vperm.xlu0 %6371, %v6364
        %v6373 = vpop.permute.xlu0 %6372
        %v6375 = vadd.f32 %v6353, %v6368
        %v6376 = vadd.f32 %v6355, %v6368
        %v6377 = vadd.f32 %v6359, %v6373
        %v6378 = vadd.f32 %v6361, %v6373
        %v6379 = vld [vmem:[%s3 + $0x10] sm:$0xff]
        %v6380 = vld [vmem:[%s3 + $0x18] sm:$0xff]
        %v6381 = vadd.f32 %v6375, %v6376
        %6382 = vadd.xlane.f32.xlu0 %v6381
        %v6383 = vpop.xlane.xlu0 %6382
        %v6384 = vadd.f32 %v6377, %v6378
        %6385 = vadd.xlane.f32.xlu0 %v6384
        %v6386 = vpop.xlane.xlu0 %6385
        %v6388 = vsel %vm353, %v6379, 0
        %v6391 = vsel %vm353, %v6380, 0
        %6393 = vmatprep.subr.mxu0 0.0
        %6394 = vmatpush1.msra.mxu0 %v6383
        %6395 = vmatprep.subr.mxu0 0.0
        %6396 = vmatpush1.msra.mxu0 %v6386
        %6397 = vmatprep.subr.mxu0 0.0
        %6398 = vmatpush1.msra.mxu0 0.0
        %6399 = vmatprep.subr.mxu0 0.0
        %6400 = vmatpush1.msra.mxu0 0.0
        %6401 = vmatprep.subr.mxu0 0.0
        %6402 = vmatpush1.msra.mxu0 0.0
        %6403 = vmatprep.subr.mxu0 0.0
        %6404 = vmatpush1.msra.mxu0 0.0
        %6405 = vmatprep.subr.mxu0 0.0
        %6406 = vmatpush1.msra.mxu0 0.0
        %6407 = vmatprep.subr.mxu0 0.0
        %6408 = vmatpush1.msra.mxu0 0.0
        %6409 = vmatprep.subr.mxu0 0.0
        %6410 = vmatpush1.msra.mxu0 0.0
        %6411 = vmatprep.subr.mxu0 0.0
        %6412 = vmatpush1.msra.mxu0 0.0
        %6413 = vmatprep.subr.mxu0 0.0
        %6414 = vmatpush1.msra.mxu0 0.0
        %6415 = vmatprep.subr.mxu0 0.0
        %6416 = vmatpush1.msra.mxu0 0.0
        %6417 = vmatprep.subr.mxu0 0.0
        %6418 = vmatpush1.msra.mxu0 0.0
        %6419 = vmatprep.subr.mxu0 0.0
        %6420 = vmatpush1.msra.mxu0 0.0
        %6421 = vmatprep.subr.mxu0 0.0
        %6422 = vmatpush1.msra.mxu0 0.0
        %6423 = vmatprep.subr.mxu0 0.0
        %6424 = vmatpush1.msra.mxu0 0.0
        %6425 = vmatprep.subr.mxu0 0.0
        %6426 = vmatpush1.msra.mxu0 0.0
        %6427 = vmatprep.subr.mxu0 0.0
        %6428 = vmatpush1.msra.mxu0 0.0
        %6429 = vmatprep.subr.mxu0 0.0
        %6430 = vmatpush1.msra.mxu0 0.0
        %6431 = vmatprep.subr.mxu0 0.0
        %6432 = vmatpush1.msra.mxu0 0.0
        %6433 = vmatprep.subr.mxu0 0.0
        %6434 = vmatpush1.msra.mxu0 0.0
        %6435 = vmatprep.subr.mxu0 0.0
        %6436 = vmatpush1.msra.mxu0 0.0
        %6437 = vmatprep.subr.mxu0 0.0
        %6438 = vmatpush1.msra.mxu0 0.0
        %6439 = vmatprep.subr.mxu0 0.0
        %6440 = vmatpush1.msra.mxu0 0.0
        %6441 = vmatprep.subr.mxu0 0.0
        %6442 = vmatpush1.msra.mxu0 0.0
        %6443 = vmatprep.subr.mxu0 0.0
        %6444 = vmatpush1.msra.mxu0 0.0
        %6445 = vmatprep.subr.mxu0 0.0
        %6446 = vmatpush1.msra.mxu0 0.0
        %6447 = vmatprep.subr.mxu0 0.0
        %6448 = vmatpush1.msra.mxu0 0.0
        %6449 = vmatprep.subr.mxu0 0.0
        %6450 = vmatpush1.msra.mxu0 0.0
        %6451 = vmatprep.subr.mxu0 0.0
        %6452 = vmatpush1.msra.mxu0 0.0
        %6453 = vmatprep.subr.mxu0 0.0
        %6454 = vmatpush1.msra.mxu0 0.0
        %6455 = vmatprep.subr.mxu0 0.0
        %6456 = vmatpush1.msra.mxu0 0.0
        %6457 = vmatprep.mubr.f32.mxu0 0.0
        %6458 = vmatmul.mubr.f32.gmra.mrb[0].mxu0 %v6388
        %v6459 = vpop.f32.mrb[0].mxu0
        %v6460 = vadd.f32 0.0, %v6459
        %v6461 = vpop.f32.mrb[0].mxu0
        %6462 = vmatprep.mubr.f32.mxu0 0.0
        %6463 = vmatmul.mubr.f32.gmra.mrb[0].mxu0 %v6391
        %v6464 = vpop.f32.mrb[0].mxu0
        %v6465 = vadd.f32 0.0, %v6464
        %v6466 = vpop.f32.mrb[0].mxu0
        %6467 = vdwg.mxu0
        %v6468 = vmul.f32 %v6460, 0.001953125
        %v6469 = vmul.f32 %v6465, 0.001953125
        %6471 = vset.pattern.permute.xlu0 0
        %6472 = vperm.xlu0 %6471, %v6468
        %v6473 = vpop.permute.xlu0 %6472
        %6476 = vset.pattern.permute.xlu0 0
        %6477 = vperm.xlu0 %6476, %v6469
        %v6478 = vpop.permute.xlu0 %6477
        %v6480 = vsub.f32 %v6375, %v6473
        %v6481 = vsub.f32 %v6376, %v6473
        %v6482 = vsub.f32 %v6377, %v6478
        %v6483 = vsub.f32 %v6378, %v6478
        %v6484 = vmul.f32 %v6480, %v6480
        %v6485 = vmul.f32 %v6481, %v6481
        %v6486 = vmul.f32 %v6482, %v6482
        %v6487 = vmul.f32 %v6483, %v6483
        %v6488 = vadd.f32 %v6484, %v6485
        %6489 = vadd.xlane.f32.xlu0 %v6488
        %v6490 = vpop.xlane.xlu0 %6489
        %v6491 = vadd.f32 %v6486, %v6487
        %6492 = vadd.xlane.f32.xlu0 %v6491
        %v6493 = vpop.xlane.xlu0 %6492
        %6494 = vmatprep.subr.mxu0 0.0
        %6495 = vmatpush1.msra.mxu0 %v6490
        %6496 = vmatprep.subr.mxu0 0.0
        %6497 = vmatpush1.msra.mxu0 %v6493
        %6498 = vmatprep.subr.mxu0 0.0
        %6499 = vmatpush1.msra.mxu0 0.0
        %6500 = vmatprep.subr.mxu0 0.0
        %6501 = vmatpush1.msra.mxu0 0.0
        %6502 = vmatprep.subr.mxu0 0.0
        %6503 = vmatpush1.msra.mxu0 0.0
        %6504 = vmatprep.subr.mxu0 0.0
        %6505 = vmatpush1.msra.mxu0 0.0
        %6506 = vmatprep.subr.mxu0 0.0
        %6507 = vmatpush1.msra.mxu0 0.0
        %6508 = vmatprep.subr.mxu0 0.0
        %6509 = vmatpush1.msra.mxu0 0.0
        %6510 = vmatprep.subr.mxu0 0.0
        %6511 = vmatpush1.msra.mxu0 0.0
        %6512 = vmatprep.subr.mxu0 0.0
        %6513 = vmatpush1.msra.mxu0 0.0
        %6514 = vmatprep.subr.mxu0 0.0
        %6515 = vmatpush1.msra.mxu0 0.0
        %6516 = vmatprep.subr.mxu0 0.0
        %6517 = vmatpush1.msra.mxu0 0.0
        %6518 = vmatprep.subr.mxu0 0.0
        %6519 = vmatpush1.msra.mxu0 0.0
        %6520 = vmatprep.subr.mxu0 0.0
        %6521 = vmatpush1.msra.mxu0 0.0
        %6522 = vmatprep.subr.mxu0 0.0
        %6523 = vmatpush1.msra.mxu0 0.0
        %6524 = vmatprep.subr.mxu0 0.0
        %6525 = vmatpush1.msra.mxu0 0.0
        %6526 = vmatprep.subr.mxu0 0.0
        %6527 = vmatpush1.msra.mxu0 0.0
        %6528 = vmatprep.subr.mxu0 0.0
        %6529 = vmatpush1.msra.mxu0 0.0
        %6530 = vmatprep.subr.mxu0 0.0
        %6531 = vmatpush1.msra.mxu0 0.0
        %6532 = vmatprep.subr.mxu0 0.0
        %6533 = vmatpush1.msra.mxu0 0.0
        %6534 = vmatprep.subr.mxu0 0.0
        %6535 = vmatpush1.msra.mxu0 0.0
        %6536 = vmatprep.subr.mxu0 0.0
        %6537 = vmatpush1.msra.mxu0 0.0
        %6538 = vmatprep.subr.mxu0 0.0
        %6539 = vmatpush1.msra.mxu0 0.0
        %6540 = vmatprep.subr.mxu0 0.0
        %6541 = vmatpush1.msra.mxu0 0.0
        %6542 = vmatprep.subr.mxu0 0.0
        %6543 = vmatpush1.msra.mxu0 0.0
        %6544 = vmatprep.subr.mxu0 0.0
        %6545 = vmatpush1.msra.mxu0 0.0
        %6546 = vmatprep.subr.mxu0 0.0
        %6547 = vmatpush1.msra.mxu0 0.0
        %6548 = vmatprep.subr.mxu0 0.0
        %6549 = vmatpush1.msra.mxu0 0.0
        %6550 = vmatprep.subr.mxu0 0.0
        %6551 = vmatpush1.msra.mxu0 0.0
        %6552 = vmatprep.subr.mxu0 0.0
        %6553 = vmatpush1.msra.mxu0 0.0
        %6554 = vmatprep.subr.mxu0 0.0
        %6555 = vmatpush1.msra.mxu0 0.0
        %6556 = vmatprep.subr.mxu0 0.0
        %6557 = vmatpush1.msra.mxu0 0.0
        %6558 = vmatprep.mubr.f32.mxu0 0.0
        %6559 = vmatmul.mubr.f32.gmra.mrb[0].mxu0 %v6388
        %v6560 = vpop.f32.mrb[0].mxu0
        %v6561 = vadd.f32 0.0, %v6560
        %v6562 = vpop.f32.mrb[0].mxu0
        %6563 = vmatprep.mubr.f32.mxu0 0.0
        %6564 = vmatmul.mubr.f32.gmra.mrb[0].mxu0 %v6391
        %v6565 = vpop.f32.mrb[0].mxu0
        %v6566 = vadd.f32 0.0, %v6565
        %v6567 = vpop.f32.mrb[0].mxu0
        %6568 = vdwg.mxu0
        %v6569 = vmul.f32 %v6561, 0.001953125
        %v6570 = vmul.f32 %v6566, 0.001953125
        %v6571 = vadd.f32 %v6569, 1e-05
        %v6572 = vadd.f32 %v6570, 1e-05
        %v6573 = vrsqrt.pop %v6571
        %v6574 = vrsqrt.pop %v6572
        %6575 = vrot.lane.b32.xlu0 %v6363, 123
        %v6576 = vpop.permute.xlu0 %6575
        %6577 = vrot.lane.b32.xlu0 %v6364, 123
        %v6578 = vpop.permute.xlu0 %6577
        %v6581 = vmul.f32 %v6573, %v6576
        %v6582 = vmul.f32 %v6574, %v6578
        %6584 = vset.pattern.permute.xlu0 0
        %6585 = vperm.xlu0 %6584, %v6581
        %v6586 = vpop.permute.xlu0 %6585
        %6589 = vset.pattern.permute.xlu0 0
        %6590 = vperm.xlu0 %6589, %v6582
        %v6591 = vpop.permute.xlu0 %6590
        %v6593 = vmul.f32 %v6480, %v6586
        %v6594 = vmul.f32 %v6481, %v6586
        %v6595 = vmul.f32 %v6482, %v6591
        %v6596 = vmul.f32 %v6483, %v6591
        %6597 = vset.pattern.permute.xlu0 6
        %6598 = vperm.xlu0 %6597, %v6363
        %v6599 = vpop.permute.xlu0 %6598
        %6601 = vset.pattern.permute.xlu0 6
        %6602 = vperm.xlu0 %6601, %v6364
        %v6603 = vpop.permute.xlu0 %6602
        %v6605 = vadd.f32 %v6593, %v6599
        %v6606 = vadd.f32 %v6594, %v6599
        %v6607 = vadd.f32 %v6595, %v6603
        %v6608 = vadd.f32 %v6596, %v6603
        %v6609 = vmax.f32 %v6605, 0.0
        %v6610 = vmax.f32 %v6606, 0.0
        %v6611 = vmax.f32 %v6607, 0.0
        %v6612 = vmax.f32 %v6608, 0.0
        %v6613 = vadd.f32 %v331, %v333
        %v6614 = vadd.f32 %v332, %v334
        %v6615 = vadd.f32 %v335, %v337
        %v6616 = vadd.f32 %v336, %v338
        %6621 = vrot.lane.b32.xlu0 %v6613, 34
        %v6622 = vpop.permute.xlu0 %6621
        %6623 = vrot.lane.b32.xlu0 %v6614, 34
        %v6624 = vpop.permute.xlu0 %6623
        %6625 = vrot.lane.b32.xlu0 %v6615, 34
        %v6626 = vpop.permute.xlu0 %6625
        %6627 = vrot.lane.b32.xlu0 %v6616, 34
        %v6628 = vpop.permute.xlu0 %6627
        %v6629 = vsel %vm274, %v6622, %v6624
        %v6630 = vsel %vm274, %v6626, %v6628
        %6637 = vst.msk [vmem:[#allocation2] sm:$0xff] %vm534, %v6622
        %6638 = vst [vmem:[#allocation2 + $0x8] sm:$0xff] %v6629
        %6639 = vst.msk [vmem:[#allocation2 + $0x10] sm:$0xff] %vm274, %v6624
        %6640 = vst.msk [vmem:[#allocation2 + $0x30] sm:$0xff] %vm534, %v6626
        %6641 = vst [vmem:[#allocation2 + $0x38] sm:$0xff] %v6630
        %6642 = vst.msk [vmem:[#allocation2 + $0x40] sm:$0xff] %vm274, %v6628
        %v6643 = vld [vmem:[#allocation2] sm:$0xff]
        %v6644 = vld [vmem:[#allocation2 + $0x8] sm:$0xff]
        %v6645 = vld [vmem:[#allocation2 + $0x30] sm:$0xff]
        %v6646 = vld [vmem:[#allocation2 + $0x38] sm:$0xff]
        %v6647 = vmul.f32 %v6643, %v291
        %v6648 = vmul.f32 %v6644, %v295
        %v6649 = vmul.f32 %v6645, %v291
        %v6650 = vmul.f32 %v6646, %v295
        %6651 = vst [vmem:[#allocation3] sm:$0xff] %v6647
        %6652 = vst [vmem:[#allocation3 + $0x8] sm:$0xff] %v6648
        %6653 = vst [vmem:[#allocation3 + $0x20] sm:$0xff] %v6649
        %6654 = vst [vmem:[#allocation3 + $0x28] sm:$0xff] %v6650
        %v6655 = vld [vmem:[#allocation2] sm:$0xff]
        %v6656 = vld [vmem:[#allocation2 + $0x8] sm:$0xff]
        %v6657 = vld [vmem:[#allocation2 + $0x10] sm:$0xff]
        %v6658 = vld [vmem:[#allocation2 + $0x30] sm:$0xff]
        %v6659 = vld [vmem:[#allocation2 + $0x38] sm:$0xff]
        %v6660 = vld [vmem:[#allocation2 + $0x40] sm:$0xff]
        %v6661 = vmul.f32 %v6655, %v639
        %v6662 = vmul.f32 %v6656, %v643
        %v6663 = vmul.f32 %v6657, %v641
        %v6664 = vmul.f32 %v6658, %v639
        %v6665 = vmul.f32 %v6659, %v643
        %v6666 = vmul.f32 %v6660, %v641
        %6673 = vrot.lane.b32.xlu0 %v6661, 127
        %v6674 = vpop.permute.xlu0 %6673
        %6675 = vrot.lane.b32.xlu0 %v6662, 127
        %v6676 = vpop.permute.xlu0 %6675
        %6677 = vrot.lane.b32.xlu0 %v6663, 127
        %v6678 = vpop.permute.xlu0 %6677
        %6679 = vrot.lane.b32.xlu0 %v6664, 127
        %v6680 = vpop.permute.xlu0 %6679
        %6681 = vrot.lane.b32.xlu0 %v6665, 127
        %v6682 = vpop.permute.xlu0 %6681
        %6683 = vrot.lane.b32.xlu0 %v6666, 127
        %v6684 = vpop.permute.xlu0 %6683
        %v6685 = vsel %vm671, %v6674, %v6676
        %v6686 = vsel %vm671, %v6676, %v6678
        %v6687 = vsel %vm671, %v6680, %v6682
        %v6688 = vsel %vm671, %v6682, %v6684
        %6693 = vst [vmem:[#allocation3 + $0x40] sm:$0xff] %v6685
        %6694 = vst [vmem:[#allocation3 + $0x48] sm:$0xff] %v6686
        %6695 = vst [vmem:[#allocation3 + $0x60] sm:$0xff] %v6687
        %6696 = vst [vmem:[#allocation3 + $0x68] sm:$0xff] %v6688
        %v6697 = vld [vmem:[#allocation2] sm:$0xff]
        %v6698 = vld [vmem:[#allocation2 + $0x8] sm:$0xff]
        %v6699 = vld [vmem:[#allocation2 + $0x10] sm:$0xff]
        %v6700 = vld [vmem:[#allocation2 + $0x30] sm:$0xff]
        %v6701 = vld [vmem:[#allocation2 + $0x38] sm:$0xff]
        %v6702 = vld [vmem:[#allocation2 + $0x40] sm:$0xff]
        %6709 = vrot.lane.b32.xlu0 %v6697, 126
        %v6710 = vpop.permute.xlu0 %6709
        %6711 = vrot.lane.b32.xlu0 %v6698, 126
        %v6712 = vpop.permute.xlu0 %6711
        %6713 = vrot.lane.b32.xlu0 %v6699, 126
        %v6714 = vpop.permute.xlu0 %6713
        %6715 = vrot.lane.b32.xlu0 %v6700, 126
        %v6716 = vpop.permute.xlu0 %6715
        %6717 = vrot.lane.b32.xlu0 %v6701, 126
        %v6718 = vpop.permute.xlu0 %6717
        %6719 = vrot.lane.b32.xlu0 %v6702, 126
        %v6720 = vpop.permute.xlu0 %6719
        %v6721 = vsel %vm760, %v6710, %v6712
        %v6722 = vsel %vm760, %v6712, %v6714
        %v6723 = vsel %vm760, %v6716, %v6718
        %v6724 = vsel %vm760, %v6718, %v6720
        %6729 = vst [vmem:[#allocation3 + $0x80] sm:$0xff] %v6721
        %6730 = vst [vmem:[#allocation3 + $0x88] sm:$0xff] %v6722
        %6731 = vst [vmem:[#allocation3 + $0xa0] sm:$0xff] %v6723
        %6732 = vst [vmem:[#allocation3 + $0xa8] sm:$0xff] %v6724
        %v6733 = vld [vmem:[#allocation2] sm:$0xff]
        %v6734 = vld [vmem:[#allocation2 + $0x8] sm:$0xff]
        %v6735 = vld [vmem:[#allocation2 + $0x10] sm:$0xff]
        %v6736 = vld [vmem:[#allocation2 + $0x30] sm:$0xff]
        %v6737 = vld [vmem:[#allocation2 + $0x38] sm:$0xff]
        %v6738 = vld [vmem:[#allocation2 + $0x40] sm:$0xff]
        %v6739 = vmul.f32 %v6733, %v817
        %v6740 = vmul.f32 %v6734, %v821
        %v6741 = vmul.f32 %v6735, %v819
        %v6742 = vmul.f32 %v6736, %v817
        %v6743 = vmul.f32 %v6737, %v821
        %v6744 = vmul.f32 %v6738, %v819
        %6751 = vrot.lane.b32.xlu0 %v6739, 125
        %v6752 = vpop.permute.xlu0 %6751
        %6753 = vrot.lane.b32.xlu0 %v6740, 125
        %v6754 = vpop.permute.xlu0 %6753
        %6755 = vrot.lane.b32.xlu0 %v6741, 125
        %v6756 = vpop.permute.xlu0 %6755
        %6757 = vrot.lane.b32.xlu0 %v6742, 125
        %v6758 = vpop.permute.xlu0 %6757
        %6759 = vrot.lane.b32.xlu0 %v6743, 125
        %v6760 = vpop.permute.xlu0 %6759
        %6761 = vrot.lane.b32.xlu0 %v6744, 125
        %v6762 = vpop.permute.xlu0 %6761
        %v6763 = vsel %vm849, %v6752, %v6754
        %v6764 = vsel %vm849, %v6754, %v6756
        %v6765 = vsel %vm849, %v6758, %v6760
        %v6766 = vsel %vm849, %v6760, %v6762
        %6771 = vst [vmem:[#allocation3 + $0xc0] sm:$0xff] %v6763
        %6772 = vst [vmem:[#allocation3 + $0xc8] sm:$0xff] %v6764
        %6773 = vst [vmem:[#allocation3 + $0xe0] sm:$0xff] %v6765
        %6774 = vst [vmem:[#allocation3 + $0xe8] sm:$0xff] %v6766
        %v6775 = vld [vmem:[#allocation2] sm:$0xff]
        %v6776 = vld [vmem:[#allocation2 + $0x8] sm:$0xff]
        %v6777 = vld [vmem:[#allocation2 + $0x10] sm:$0xff]
        %v6778 = vld [vmem:[#allocation2 + $0x30] sm:$0xff]
        %v6779 = vld [vmem:[#allocation2 + $0x38] sm:$0xff]
        %v6780 = vld [vmem:[#allocation2 + $0x40] sm:$0xff]
        %v6781 = vmul.f32 %v6775, %v921
        %v6782 = vmul.f32 %v6776, %v925
        %v6783 = vmul.f32 %v6777, %v923
        %v6784 = vmul.f32 %v6778, %v921
        %v6785 = vmul.f32 %v6779, %v925
        %v6786 = vmul.f32 %v6780, %v923
        %6793 = vrot.lane.b32.xlu0 %v6781, 124
        %v6794 = vpop.permute.xlu0 %6793
        %6795 = vrot.lane.b32.xlu0 %v6782, 124
        %v6796 = vpop.permute.xlu0 %6795
        %6797 = vrot.lane.b32.xlu0 %v6783, 124
        %v6798 = vpop.permute.xlu0 %6797
        %6799 = vrot.lane.b32.xlu0 %v6784, 124
        %v6800 = vpop.permute.xlu0 %6799
        %6801 = vrot.lane.b32.xlu0 %v6785, 124
        %v6802 = vpop.permute.xlu0 %6801
        %6803 = vrot.lane.b32.xlu0 %v6786, 124
        %v6804 = vpop.permute.xlu0 %6803
        %v6805 = vsel %vm953, %v6794, %v6796
        %v6806 = vsel %vm953, %v6796, %v6798
        %v6807 = vsel %vm953, %v6800, %v6802
        %v6808 = vsel %vm953, %v6802, %v6804
        %6813 = vst [vmem:[#allocation3 + $0x100] sm:$0xff] %v6805
        %6814 = vst [vmem:[#allocation3 + $0x108] sm:$0xff] %v6806
        %6815 = vst [vmem:[#allocation3 + $0x120] sm:$0xff] %v6807
        %6816 = vst [vmem:[#allocation3 + $0x128] sm:$0xff] %v6808
        %v6817 = vld [vmem:[#allocation2] sm:$0xff]
        %v6818 = vld [vmem:[#allocation2 + $0x8] sm:$0xff]
        %v6819 = vld [vmem:[#allocation2 + $0x10] sm:$0xff]
        %v6820 = vld [vmem:[#allocation2 + $0x30] sm:$0xff]
        %v6821 = vld [vmem:[#allocation2 + $0x38] sm:$0xff]
        %v6822 = vld [vmem:[#allocation2 + $0x40] sm:$0xff]
        %v6823 = vmul.f32 %v6817, %v1025
        %v6824 = vmul.f32 %v6818, %v1028
        %v6825 = vmul.f32 %v6819, %v1027
        %v6826 = vmul.f32 %v6820, %v1025
        %v6827 = vmul.f32 %v6821, %v1028
        %v6828 = vmul.f32 %v6822, %v1027
        %6835 = vrot.lane.b32.xlu0 %v6823, 112
        %v6836 = vpop.permute.xlu0 %6835
        %6837 = vrot.lane.b32.xlu0 %v6824, 112
        %v6838 = vpop.permute.xlu0 %6837
        %6839 = vrot.lane.b32.xlu0 %v6825, 112
        %v6840 = vpop.permute.xlu0 %6839
        %6841 = vrot.lane.b32.xlu0 %v6826, 112
        %v6842 = vpop.permute.xlu0 %6841
        %6843 = vrot.lane.b32.xlu0 %v6827, 112
        %v6844 = vpop.permute.xlu0 %6843
        %6845 = vrot.lane.b32.xlu0 %v6828, 112
        %v6846 = vpop.permute.xlu0 %6845
        %v6847 = vsel %vm1056, %v6836, %v6838
        %v6848 = vsel %vm1056, %v6838, %v6840
        %v6849 = vsel %vm1056, %v6842, %v6844
        %v6850 = vsel %vm1056, %v6844, %v6846
        %6855 = vst [vmem:[#allocation3 + $0x140] sm:$0xff] %v6847
        %6856 = vst [vmem:[#allocation3 + $0x148] sm:$0xff] %v6848
        %6857 = vst [vmem:[#allocation3 + $0x160] sm:$0xff] %v6849
        %6858 = vst [vmem:[#allocation3 + $0x168] sm:$0xff] %v6850
        %v6859 = vld [vmem:[#allocation2] sm:$0xff]
        %v6860 = vld [vmem:[#allocation2 + $0x8] sm:$0xff]
        %v6861 = vld [vmem:[#allocation2 + $0x10] sm:$0xff]
        %v6862 = vld [vmem:[#allocation2 + $0x30] sm:$0xff]
        %v6863 = vld [vmem:[#allocation2 + $0x38] sm:$0xff]
        %v6864 = vld [vmem:[#allocation2 + $0x40] sm:$0xff]
        %v6865 = vmul.f32 %v6859, %v1128
        %v6866 = vmul.f32 %v6860, %v1132
        %v6867 = vmul.f32 %v6861, %v1130
        %v6868 = vmul.f32 %v6862, %v1128
        %v6869 = vmul.f32 %v6863, %v1132
        %v6870 = vmul.f32 %v6864, %v1130
        %6877 = vrot.lane.b32.xlu0 %v6865, 111
        %v6878 = vpop.permute.xlu0 %6877
        %6879 = vrot.lane.b32.xlu0 %v6866, 111
        %v6880 = vpop.permute.xlu0 %6879
        %6881 = vrot.lane.b32.xlu0 %v6867, 111
        %v6882 = vpop.permute.xlu0 %6881
        %6883 = vrot.lane.b32.xlu0 %v6868, 111
        %v6884 = vpop.permute.xlu0 %6883
        %6885 = vrot.lane.b32.xlu0 %v6869, 111
        %v6886 = vpop.permute.xlu0 %6885
        %6887 = vrot.lane.b32.xlu0 %v6870, 111
        %v6888 = vpop.permute.xlu0 %6887
        %v6889 = vsel %vm1160, %v6878, %v6880
        %v6890 = vsel %vm1160, %v6880, %v6882
        %v6891 = vsel %vm1160, %v6884, %v6886
        %v6892 = vsel %vm1160, %v6886, %v6888
        %6897 = vst [vmem:[#allocation3 + $0x180] sm:$0xff] %v6889
        %6898 = vst [vmem:[#allocation3 + $0x188] sm:$0xff] %v6890
        %6899 = vst [vmem:[#allocation3 + $0x1a0] sm:$0xff] %v6891
        %6900 = vst [vmem:[#allocation3 + $0x1a8] sm:$0xff] %v6892
        %v6901 = vld [vmem:[#allocation2] sm:$0xff]
        %v6902 = vld [vmem:[#allocation2 + $0x8] sm:$0xff]
        %v6903 = vld [vmem:[#allocation2 + $0x10] sm:$0xff]
        %v6904 = vld [vmem:[#allocation2 + $0x30] sm:$0xff]
        %v6905 = vld [vmem:[#allocation2 + $0x38] sm:$0xff]
        %v6906 = vld [vmem:[#allocation2 + $0x40] sm:$0xff]
        %6913 = vrot.lane.b32.xlu0 %v6901, 110
        %v6914 = vpop.permute.xlu0 %6913
        %6915 = vrot.lane.b32.xlu0 %v6902, 110
        %v6916 = vpop.permute.xlu0 %6915
        %6917 = vrot.lane.b32.xlu0 %v6903, 110
        %v6918 = vpop.permute.xlu0 %6917
        %6919 = vrot.lane.b32.xlu0 %v6904, 110
        %v6920 = vpop.permute.xlu0 %6919
        %6921 = vrot.lane.b32.xlu0 %v6905, 110
        %v6922 = vpop.permute.xlu0 %6921
        %6923 = vrot.lane.b32.xlu0 %v6906, 110
        %v6924 = vpop.permute.xlu0 %6923
        %v6925 = vsel %vm1249, %v6914, %v6916
        %v6926 = vsel %vm1249, %v6916, %v6918
        %v6927 = vsel %vm1249, %v6920, %v6922
        %v6928 = vsel %vm1249, %v6922, %v6924
        %6933 = vst [vmem:[#allocation3 + $0x1c0] sm:$0xff] %v6925
        %6934 = vst [vmem:[#allocation3 + $0x1c8] sm:$0xff] %v6926
        %6935 = vst [vmem:[#allocation3 + $0x1e0] sm:$0xff] %v6927
        %6936 = vst [vmem:[#allocation3 + $0x1e8] sm:$0xff] %v6928
        %v6937 = vld [vmem:[#allocation2] sm:$0xff]
        %v6938 = vld [vmem:[#allocation2 + $0x8] sm:$0xff]
        %v6939 = vld [vmem:[#allocation2 + $0x10] sm:$0xff]
        %v6940 = vld [vmem:[#allocation2 + $0x30] sm:$0xff]
        %v6941 = vld [vmem:[#allocation2 + $0x38] sm:$0xff]
        %v6942 = vld [vmem:[#allocation2 + $0x40] sm:$0xff]
        %v6943 = vmul.f32 %v6937, %v1306
        %v6944 = vmul.f32 %v6938, %v1310
        %v6945 = vmul.f32 %v6939, %v1308
        %v6946 = vmul.f32 %v6940, %v1306
        %v6947 = vmul.f32 %v6941, %v1310
        %v6948 = vmul.f32 %v6942, %v1308
        %6955 = vrot.lane.b32.xlu0 %v6943, 109
        %v6956 = vpop.permute.xlu0 %6955
        %6957 = vrot.lane.b32.xlu0 %v6944, 109
        %v6958 = vpop.permute.xlu0 %6957
        %6959 = vrot.lane.b32.xlu0 %v6945, 109
        %v6960 = vpop.permute.xlu0 %6959
        %6961 = vrot.lane.b32.xlu0 %v6946, 109
        %v6962 = vpop.permute.xlu0 %6961
        %6963 = vrot.lane.b32.xlu0 %v6947, 109
        %v6964 = vpop.permute.xlu0 %6963
        %6965 = vrot.lane.b32.xlu0 %v6948, 109
        %v6966 = vpop.permute.xlu0 %6965
        %v6967 = vsel %vm1338, %v6956, %v6958
        %v6968 = vsel %vm1338, %v6958, %v6960
        %v6969 = vsel %vm1338, %v6962, %v6964
        %v6970 = vsel %vm1338, %v6964, %v6966
        %6975 = vst [vmem:[#allocation3 + $0x200] sm:$0xff] %v6967
        %6976 = vst [vmem:[#allocation3 + $0x208] sm:$0xff] %v6968
        %6977 = vst [vmem:[#allocation3 + $0x220] sm:$0xff] %v6969
        %6978 = vst [vmem:[#allocation3 + $0x228] sm:$0xff] %v6970
        %v6979 = vld [vmem:[#allocation2] sm:$0xff]
        %v6980 = vld [vmem:[#allocation2 + $0x8] sm:$0xff]
        %v6981 = vld [vmem:[#allocation2 + $0x10] sm:$0xff]
        %v6982 = vld [vmem:[#allocation2 + $0x30] sm:$0xff]
        %v6983 = vld [vmem:[#allocation2 + $0x38] sm:$0xff]
        %v6984 = vld [vmem:[#allocation2 + $0x40] sm:$0xff]
        %v6985 = vmul.f32 %v6979, %v1410
        %v6986 = vmul.f32 %v6980, %v1414
        %v6987 = vmul.f32 %v6981, %v1412
        %v6988 = vmul.f32 %v6982, %v1410
        %v6989 = vmul.f32 %v6983, %v1414
        %v6990 = vmul.f32 %v6984, %v1412
        %6997 = vrot.lane.b32.xlu0 %v6985, 108
        %v6998 = vpop.permute.xlu0 %6997
        %6999 = vrot.lane.b32.xlu0 %v6986, 108
        %v7000 = vpop.permute.xlu0 %6999
        %7001 = vrot.lane.b32.xlu0 %v6987, 108
        %v7002 = vpop.permute.xlu0 %7001
        %7003 = vrot.lane.b32.xlu0 %v6988, 108
        %v7004 = vpop.permute.xlu0 %7003
        %7005 = vrot.lane.b32.xlu0 %v6989, 108
        %v7006 = vpop.permute.xlu0 %7005
        %7007 = vrot.lane.b32.xlu0 %v6990, 108
        %v7008 = vpop.permute.xlu0 %7007
        %v7009 = vsel %vm1442, %v6998, %v7000
        %v7010 = vsel %vm1442, %v7000, %v7002
        %v7011 = vsel %vm1442, %v7004, %v7006
        %v7012 = vsel %vm1442, %v7006, %v7008
        %7017 = vst [vmem:[#allocation3 + $0x240] sm:$0xff] %v7009
        %7018 = vst [vmem:[#allocation3 + $0x248] sm:$0xff] %v7010
        %7019 = vst [vmem:[#allocation3 + $0x260] sm:$0xff] %v7011
        %7020 = vst [vmem:[#allocation3 + $0x268] sm:$0xff] %v7012
        %v7021 = vld [vmem:[#allocation2] sm:$0xff]
        %v7022 = vld [vmem:[#allocation2 + $0x8] sm:$0xff]
        %v7023 = vld [vmem:[#allocation2 + $0x10] sm:$0xff]
        %v7024 = vld [vmem:[#allocation2 + $0x30] sm:$0xff]
        %v7025 = vld [vmem:[#allocation2 + $0x38] sm:$0xff]
        %v7026 = vld [vmem:[#allocation2 + $0x40] sm:$0xff]
        %v7027 = vmul.f32 %v7021, %v1514
        %v7028 = vmul.f32 %v7022, %v1518
        %v7029 = vmul.f32 %v7023, %v1516
        %v7030 = vmul.f32 %v7024, %v1514
        %v7031 = vmul.f32 %v7025, %v1518
        %v7032 = vmul.f32 %v7026, %v1516
        %7039 = vrot.lane.b32.xlu0 %v7027, 96
        %v7040 = vpop.permute.xlu0 %7039
        %7041 = vrot.lane.b32.xlu0 %v7028, 96
        %v7042 = vpop.permute.xlu0 %7041
        %7043 = vrot.lane.b32.xlu0 %v7029, 96
        %v7044 = vpop.permute.xlu0 %7043
        %7045 = vrot.lane.b32.xlu0 %v7030, 96
        %v7046 = vpop.permute.xlu0 %7045
        %7047 = vrot.lane.b32.xlu0 %v7031, 96
        %v7048 = vpop.permute.xlu0 %7047
        %7049 = vrot.lane.b32.xlu0 %v7032, 96
        %v7050 = vpop.permute.xlu0 %7049
        %v7051 = vsel %vm1546, %v7040, %v7042
        %v7052 = vsel %vm1546, %v7042, %v7044
        %v7053 = vsel %vm1546, %v7046, %v7048
        %v7054 = vsel %vm1546, %v7048, %v7050
        %7059 = vst [vmem:[#allocation3 + $0x280] sm:$0xff] %v7051
        %7060 = vst [vmem:[#allocation3 + $0x288] sm:$0xff] %v7052
        %7061 = vst [vmem:[#allocation3 + $0x2a0] sm:$0xff] %v7053
        %7062 = vst [vmem:[#allocation3 + $0x2a8] sm:$0xff] %v7054
        %v7063 = vld [vmem:[#allocation2] sm:$0xff]
        %v7064 = vld [vmem:[#allocation2 + $0x8] sm:$0xff]
        %v7065 = vld [vmem:[#allocation2 + $0x10] sm:$0xff]
        %v7066 = vld [vmem:[#allocation2 + $0x30] sm:$0xff]
        %v7067 = vld [vmem:[#allocation2 + $0x38] sm:$0xff]
        %v7068 = vld [vmem:[#allocation2 + $0x40] sm:$0xff]
        %v7069 = vmul.f32 %v7063, %v1618
        %v7070 = vmul.f32 %v7064, %v1622
        %v7071 = vmul.f32 %v7065, %v1620
        %v7072 = vmul.f32 %v7066, %v1618
        %v7073 = vmul.f32 %v7067, %v1622
        %v7074 = vmul.f32 %v7068, %v1620
        %7081 = vrot.lane.b32.xlu0 %v7069, 95
        %v7082 = vpop.permute.xlu0 %7081
        %7083 = vrot.lane.b32.xlu0 %v7070, 95
        %v7084 = vpop.permute.xlu0 %7083
        %7085 = vrot.lane.b32.xlu0 %v7071, 95
        %v7086 = vpop.permute.xlu0 %7085
        %7087 = vrot.lane.b32.xlu0 %v7072, 95
        %v7088 = vpop.permute.xlu0 %7087
        %7089 = vrot.lane.b32.xlu0 %v7073, 95
        %v7090 = vpop.permute.xlu0 %7089
        %7091 = vrot.lane.b32.xlu0 %v7074, 95
        %v7092 = vpop.permute.xlu0 %7091
        %v7093 = vsel %vm1650, %v7082, %v7084
        %v7094 = vsel %vm1650, %v7084, %v7086
        %v7095 = vsel %vm1650, %v7088, %v7090
        %v7096 = vsel %vm1650, %v7090, %v7092
        %7101 = vst [vmem:[#allocation3 + $0x2c0] sm:$0xff] %v7093
        %7102 = vst [vmem:[#allocation3 + $0x2c8] sm:$0xff] %v7094
        %7103 = vst [vmem:[#allocation3 + $0x2e0] sm:$0xff] %v7095
        %7104 = vst [vmem:[#allocation3 + $0x2e8] sm:$0xff] %v7096
        %v7105 = vld [vmem:[#allocation2] sm:$0xff]
        %v7106 = vld [vmem:[#allocation2 + $0x8] sm:$0xff]
        %v7107 = vld [vmem:[#allocation2 + $0x10] sm:$0xff]
        %v7108 = vld [vmem:[#allocation2 + $0x30] sm:$0xff]
        %v7109 = vld [vmem:[#allocation2 + $0x38] sm:$0xff]
        %v7110 = vld [vmem:[#allocation2 + $0x40] sm:$0xff]
        %7117 = vrot.lane.b32.xlu0 %v7105, 94
        %v7118 = vpop.permute.xlu0 %7117
        %7119 = vrot.lane.b32.xlu0 %v7106, 94
        %v7120 = vpop.permute.xlu0 %7119
        %7121 = vrot.lane.b32.xlu0 %v7107, 94
        %v7122 = vpop.permute.xlu0 %7121
        %7123 = vrot.lane.b32.xlu0 %v7108, 94
        %v7124 = vpop.permute.xlu0 %7123
        %7125 = vrot.lane.b32.xlu0 %v7109, 94
        %v7126 = vpop.permute.xlu0 %7125
        %7127 = vrot.lane.b32.xlu0 %v7110, 94
        %v7128 = vpop.permute.xlu0 %7127
        %v7129 = vsel %vm1739, %v7118, %v7120
        %v7130 = vsel %vm1739, %v7120, %v7122
        %v7131 = vsel %vm1739, %v7124, %v7126
        %v7132 = vsel %vm1739, %v7126, %v7128
        %7137 = vst [vmem:[#allocation3 + $0x300] sm:$0xff] %v7129
        %7138 = vst [vmem:[#allocation3 + $0x308] sm:$0xff] %v7130
        %7139 = vst [vmem:[#allocation3 + $0x320] sm:$0xff] %v7131
        %7140 = vst [vmem:[#allocation3 + $0x328] sm:$0xff] %v7132
        %v7141 = vld [vmem:[#allocation2] sm:$0xff]
        %v7142 = vld [vmem:[#allocation2 + $0x8] sm:$0xff]
        %v7143 = vld [vmem:[#allocation2 + $0x10] sm:$0xff]
        %v7144 = vld [vmem:[#allocation2 + $0x30] sm:$0xff]
        %v7145 = vld [vmem:[#allocation2 + $0x38] sm:$0xff]
        %v7146 = vld [vmem:[#allocation2 + $0x40] sm:$0xff]
        %v7147 = vmul.f32 %v7141, %v1796
        %v7148 = vmul.f32 %v7142, %v1800
        %v7149 = vmul.f32 %v7143, %v1798
        %v7150 = vmul.f32 %v7144, %v1796
        %v7151 = vmul.f32 %v7145, %v1800
        %v7152 = vmul.f32 %v7146, %v1798
        %7159 = vrot.lane.b32.xlu0 %v7147, 93
        %v7160 = vpop.permute.xlu0 %7159
        %7161 = vrot.lane.b32.xlu0 %v7148, 93
        %v7162 = vpop.permute.xlu0 %7161
        %7163 = vrot.lane.b32.xlu0 %v7149, 93
        %v7164 = vpop.permute.xlu0 %7163
        %7165 = vrot.lane.b32.xlu0 %v7150, 93
        %v7166 = vpop.permute.xlu0 %7165
        %7167 = vrot.lane.b32.xlu0 %v7151, 93
        %v7168 = vpop.permute.xlu0 %7167
        %7169 = vrot.lane.b32.xlu0 %v7152, 93
        %v7170 = vpop.permute.xlu0 %7169
        %v7171 = vsel %vm1828, %v7160, %v7162
        %v7172 = vsel %vm1828, %v7162, %v7164
        %v7173 = vsel %vm1828, %v7166, %v7168
        %v7174 = vsel %vm1828, %v7168, %v7170
        %7179 = vst [vmem:[#allocation3 + $0x340] sm:$0xff] %v7171
        %7180 = vst [vmem:[#allocation3 + $0x348] sm:$0xff] %v7172
        %7181 = vst [vmem:[#allocation3 + $0x360] sm:$0xff] %v7173
        %7182 = vst [vmem:[#allocation3 + $0x368] sm:$0xff] %v7174
        %v7183 = vld [vmem:[#allocation2] sm:$0xff]
        %v7184 = vld [vmem:[#allocation2 + $0x8] sm:$0xff]
        %v7185 = vld [vmem:[#allocation2 + $0x10] sm:$0xff]
        %v7186 = vld [vmem:[#allocation2 + $0x30] sm:$0xff]
        %v7187 = vld [vmem:[#allocation2 + $0x38] sm:$0xff]
        %v7188 = vld [vmem:[#allocation2 + $0x40] sm:$0xff]
        %v7189 = vmul.f32 %v7183, %v1900
        %v7190 = vmul.f32 %v7184, %v1904
        %v7191 = vmul.f32 %v7185, %v1902
        %v7192 = vmul.f32 %v7186, %v1900
        %v7193 = vmul.f32 %v7187, %v1904
        %v7194 = vmul.f32 %v7188, %v1902
        %7201 = vrot.lane.b32.xlu0 %v7189, 92
        %v7202 = vpop.permute.xlu0 %7201
        %7203 = vrot.lane.b32.xlu0 %v7190, 92
        %v7204 = vpop.permute.xlu0 %7203
        %7205 = vrot.lane.b32.xlu0 %v7191, 92
        %v7206 = vpop.permute.xlu0 %7205
        %7207 = vrot.lane.b32.xlu0 %v7192, 92
        %v7208 = vpop.permute.xlu0 %7207
        %7209 = vrot.lane.b32.xlu0 %v7193, 92
        %v7210 = vpop.permute.xlu0 %7209
        %7211 = vrot.lane.b32.xlu0 %v7194, 92
        %v7212 = vpop.permute.xlu0 %7211
        %v7213 = vsel %vm1932, %v7202, %v7204
        %v7214 = vsel %vm1932, %v7204, %v7206
        %v7215 = vsel %vm1932, %v7208, %v7210
        %v7216 = vsel %vm1932, %v7210, %v7212
        %7221 = vst [vmem:[#allocation3 + $0x380] sm:$0xff] %v7213
        %7222 = vst [vmem:[#allocation3 + $0x388] sm:$0xff] %v7214
        %7223 = vst [vmem:[#allocation3 + $0x3a0] sm:$0xff] %v7215
        %7224 = vst [vmem:[#allocation3 + $0x3a8] sm:$0xff] %v7216
        %v7225 = vld [vmem:[#allocation2] sm:$0xff]
        %v7226 = vld [vmem:[#allocation2 + $0x8] sm:$0xff]
        %v7227 = vld [vmem:[#allocation2 + $0x10] sm:$0xff]
        %v7228 = vld [vmem:[#allocation2 + $0x30] sm:$0xff]
        %v7229 = vld [vmem:[#allocation2 + $0x38] sm:$0xff]
        %v7230 = vld [vmem:[#allocation2 + $0x40] sm:$0xff]
        %v7231 = vmul.f32 %v7225, %v2004
        %v7232 = vmul.f32 %v7226, %v2008
        %v7233 = vmul.f32 %v7227, %v2006
        %v7234 = vmul.f32 %v7228, %v2004
        %v7235 = vmul.f32 %v7229, %v2008
        %v7236 = vmul.f32 %v7230, %v2006
        %7243 = vrot.lane.b32.xlu0 %v7231, 80
        %v7244 = vpop.permute.xlu0 %7243
        %7245 = vrot.lane.b32.xlu0 %v7232, 80
        %v7246 = vpop.permute.xlu0 %7245
        %7247 = vrot.lane.b32.xlu0 %v7233, 80
        %v7248 = vpop.permute.xlu0 %7247
        %7249 = vrot.lane.b32.xlu0 %v7234, 80
        %v7250 = vpop.permute.xlu0 %7249
        %7251 = vrot.lane.b32.xlu0 %v7235, 80
        %v7252 = vpop.permute.xlu0 %7251
        %7253 = vrot.lane.b32.xlu0 %v7236, 80
        %v7254 = vpop.permute.xlu0 %7253
        %v7255 = vsel %vm2036, %v7244, %v7246
        %v7256 = vsel %vm2036, %v7246, %v7248
        %v7257 = vsel %vm2036, %v7250, %v7252
        %v7258 = vsel %vm2036, %v7252, %v7254
        %7263 = vst [vmem:[#allocation3 + $0x3c0] sm:$0xff] %v7255
        %7264 = vst [vmem:[#allocation3 + $0x3c8] sm:$0xff] %v7256
        %7265 = vst [vmem:[#allocation3 + $0x3e0] sm:$0xff] %v7257
        %7266 = vst [vmem:[#allocation3 + $0x3e8] sm:$0xff] %v7258
        %v7267 = vld [vmem:[#allocation2] sm:$0xff]
        %v7268 = vld [vmem:[#allocation2 + $0x8] sm:$0xff]
        %v7269 = vld [vmem:[#allocation2 + $0x10] sm:$0xff]
        %v7270 = vld [vmem:[#allocation2 + $0x30] sm:$0xff]
        %v7271 = vld [vmem:[#allocation2 + $0x38] sm:$0xff]
        %v7272 = vld [vmem:[#allocation2 + $0x40] sm:$0xff]
        %v7273 = vmul.f32 %v7267, %v2108
        %v7274 = vmul.f32 %v7268, %v2112
        %v7275 = vmul.f32 %v7269, %v2110
        %v7276 = vmul.f32 %v7270, %v2108
        %v7277 = vmul.f32 %v7271, %v2112
        %v7278 = vmul.f32 %v7272, %v2110
        %7285 = vrot.lane.b32.xlu0 %v7273, 79
        %v7286 = vpop.permute.xlu0 %7285
        %7287 = vrot.lane.b32.xlu0 %v7274, 79
        %v7288 = vpop.permute.xlu0 %7287
        %7289 = vrot.lane.b32.xlu0 %v7275, 79
        %v7290 = vpop.permute.xlu0 %7289
        %7291 = vrot.lane.b32.xlu0 %v7276, 79
        %v7292 = vpop.permute.xlu0 %7291
        %7293 = vrot.lane.b32.xlu0 %v7277, 79
        %v7294 = vpop.permute.xlu0 %7293
        %7295 = vrot.lane.b32.xlu0 %v7278, 79
        %v7296 = vpop.permute.xlu0 %7295
        %v7297 = vsel %vm2140, %v7286, %v7288
        %v7298 = vsel %vm2140, %v7288, %v7290
        %v7299 = vsel %vm2140, %v7292, %v7294
        %v7300 = vsel %vm2140, %v7294, %v7296
        %7305 = vst [vmem:[#allocation3 + $0x400] sm:$0xff] %v7297
        %7306 = vst [vmem:[#allocation3 + $0x408] sm:$0xff] %v7298
        %7307 = vst [vmem:[#allocation3 + $0x420] sm:$0xff] %v7299
        %7308 = vst [vmem:[#allocation3 + $0x428] sm:$0xff] %v7300
        %v7309 = vld [vmem:[#allocation2] sm:$0xff]
        %v7310 = vld [vmem:[#allocation2 + $0x8] sm:$0xff]
        %v7311 = vld [vmem:[#allocation2 + $0x10] sm:$0xff]
        %v7312 = vld [vmem:[#allocation2 + $0x30] sm:$0xff]
        %v7313 = vld [vmem:[#allocation2 + $0x38] sm:$0xff]
        %v7314 = vld [vmem:[#allocation2 + $0x40] sm:$0xff]
        %7321 = vrot.lane.b32.xlu0 %v7309, 78
        %v7322 = vpop.permute.xlu0 %7321
        %7323 = vrot.lane.b32.xlu0 %v7310, 78
        %v7324 = vpop.permute.xlu0 %7323
        %7325 = vrot.lane.b32.xlu0 %v7311, 78
        %v7326 = vpop.permute.xlu0 %7325
        %7327 = vrot.lane.b32.xlu0 %v7312, 78
        %v7328 = vpop.permute.xlu0 %7327
        %7329 = vrot.lane.b32.xlu0 %v7313, 78
        %v7330 = vpop.permute.xlu0 %7329
        %7331 = vrot.lane.b32.xlu0 %v7314, 78
        %v7332 = vpop.permute.xlu0 %7331
        %v7333 = vsel %vm2229, %v7322, %v7324
        %v7334 = vsel %vm2229, %v7324, %v7326
        %v7335 = vsel %vm2229, %v7328, %v7330
        %v7336 = vsel %vm2229, %v7330, %v7332
        %7341 = vst [vmem:[#allocation3 + $0x440] sm:$0xff] %v7333
        %7342 = vst [vmem:[#allocation3 + $0x448] sm:$0xff] %v7334
        %7343 = vst [vmem:[#allocation3 + $0x460] sm:$0xff] %v7335
        %7344 = vst [vmem:[#allocation3 + $0x468] sm:$0xff] %v7336
        %v7345 = vld [vmem:[#allocation2] sm:$0xff]
        %v7346 = vld [vmem:[#allocation2 + $0x8] sm:$0xff]
        %v7347 = vld [vmem:[#allocation2 + $0x10] sm:$0xff]
        %v7348 = vld [vmem:[#allocation2 + $0x30] sm:$0xff]
        %v7349 = vld [vmem:[#allocation2 + $0x38] sm:$0xff]
        %v7350 = vld [vmem:[#allocation2 + $0x40] sm:$0xff]
        %v7351 = vmul.f32 %v7345, %v2286
        %v7352 = vmul.f32 %v7346, %v2290
        %v7353 = vmul.f32 %v7347, %v2288
        %v7354 = vmul.f32 %v7348, %v2286
        %v7355 = vmul.f32 %v7349, %v2290
        %v7356 = vmul.f32 %v7350, %v2288
        %7363 = vrot.lane.b32.xlu0 %v7351, 77
        %v7364 = vpop.permute.xlu0 %7363
        %7365 = vrot.lane.b32.xlu0 %v7352, 77
        %v7366 = vpop.permute.xlu0 %7365
        %7367 = vrot.lane.b32.xlu0 %v7353, 77
        %v7368 = vpop.permute.xlu0 %7367
        %7369 = vrot.lane.b32.xlu0 %v7354, 77
        %v7370 = vpop.permute.xlu0 %7369
        %7371 = vrot.lane.b32.xlu0 %v7355, 77
        %v7372 = vpop.permute.xlu0 %7371
        %7373 = vrot.lane.b32.xlu0 %v7356, 77
        %v7374 = vpop.permute.xlu0 %7373
        %v7375 = vsel %vm2318, %v7364, %v7366
        %v7376 = vsel %vm2318, %v7366, %v7368
        %v7377 = vsel %vm2318, %v7370, %v7372
        %v7378 = vsel %vm2318, %v7372, %v7374
        %7383 = vst [vmem:[#allocation3 + $0x480] sm:$0xff] %v7375
        %7384 = vst [vmem:[#allocation3 + $0x488] sm:$0xff] %v7376
        %7385 = vst [vmem:[#allocation3 + $0x4a0] sm:$0xff] %v7377
        %7386 = vst [vmem:[#allocation3 + $0x4a8] sm:$0xff] %v7378
        %v7387 = vld [vmem:[#allocation2] sm:$0xff]
        %v7388 = vld [vmem:[#allocation2 + $0x8] sm:$0xff]
        %v7389 = vld [vmem:[#allocation2 + $0x10] sm:$0xff]
        %v7390 = vld [vmem:[#allocation2 + $0x30] sm:$0xff]
        %v7391 = vld [vmem:[#allocation2 + $0x38] sm:$0xff]
        %v7392 = vld [vmem:[#allocation2 + $0x40] sm:$0xff]
        %v7393 = vmul.f32 %v7387, %v2390
        %v7394 = vmul.f32 %v7388, %v2394
        %v7395 = vmul.f32 %v7389, %v2392
        %v7396 = vmul.f32 %v7390, %v2390
        %v7397 = vmul.f32 %v7391, %v2394
        %v7398 = vmul.f32 %v7392, %v2392
        %7405 = vrot.lane.b32.xlu0 %v7393, 76
        %v7406 = vpop.permute.xlu0 %7405
        %7407 = vrot.lane.b32.xlu0 %v7394, 76
        %v7408 = vpop.permute.xlu0 %7407
        %7409 = vrot.lane.b32.xlu0 %v7395, 76
        %v7410 = vpop.permute.xlu0 %7409
        %7411 = vrot.lane.b32.xlu0 %v7396, 76
        %v7412 = vpop.permute.xlu0 %7411
        %7413 = vrot.lane.b32.xlu0 %v7397, 76
        %v7414 = vpop.permute.xlu0 %7413
        %7415 = vrot.lane.b32.xlu0 %v7398, 76
        %v7416 = vpop.permute.xlu0 %7415
        %v7417 = vsel %vm2422, %v7406, %v7408
        %v7418 = vsel %vm2422, %v7408, %v7410
        %v7419 = vsel %vm2422, %v7412, %v7414
        %v7420 = vsel %vm2422, %v7414, %v7416
        %7425 = vst [vmem:[#allocation3 + $0x4c0] sm:$0xff] %v7417
        %7426 = vst [vmem:[#allocation3 + $0x4c8] sm:$0xff] %v7418
        %7427 = vst [vmem:[#allocation3 + $0x4e0] sm:$0xff] %v7419
        %7428 = vst [vmem:[#allocation3 + $0x4e8] sm:$0xff] %v7420
        %v7429 = vld [vmem:[#allocation2] sm:$0xff]
        %v7430 = vld [vmem:[#allocation2 + $0x8] sm:$0xff]
        %v7431 = vld [vmem:[#allocation2 + $0x10] sm:$0xff]
        %v7432 = vld [vmem:[#allocation2 + $0x30] sm:$0xff]
        %v7433 = vld [vmem:[#allocation2 + $0x38] sm:$0xff]
        %v7434 = vld [vmem:[#allocation2 + $0x40] sm:$0xff]
        %v7435 = vmul.f32 %v7429, %v2493
        %v7436 = vmul.f32 %v7430, %v2497
        %v7437 = vmul.f32 %v7431, %v2495
        %v7438 = vmul.f32 %v7432, %v2493
        %v7439 = vmul.f32 %v7433, %v2497
        %v7440 = vmul.f32 %v7434, %v2495
        %7447 = vrot.lane.b32.xlu0 %v7435, 64
        %v7448 = vpop.permute.xlu0 %7447
        %7449 = vrot.lane.b32.xlu0 %v7436, 64
        %v7450 = vpop.permute.xlu0 %7449
        %7451 = vrot.lane.b32.xlu0 %v7437, 64
        %v7452 = vpop.permute.xlu0 %7451
        %7453 = vrot.lane.b32.xlu0 %v7438, 64
        %v7454 = vpop.permute.xlu0 %7453
        %7455 = vrot.lane.b32.xlu0 %v7439, 64
        %v7456 = vpop.permute.xlu0 %7455
        %7457 = vrot.lane.b32.xlu0 %v7440, 64
        %v7458 = vpop.permute.xlu0 %7457
        %v7459 = vsel %vm2496, %v7448, %v7450
        %v7460 = vsel %vm2496, %v7450, %v7452
        %v7461 = vsel %vm2496, %v7454, %v7456
        %v7462 = vsel %vm2496, %v7456, %v7458
        %7467 = vst [vmem:[#allocation3 + $0x500] sm:$0xff] %v7459
        %7468 = vst [vmem:[#allocation3 + $0x508] sm:$0xff] %v7460
        %7469 = vst [vmem:[#allocation3 + $0x520] sm:$0xff] %v7461
        %7470 = vst [vmem:[#allocation3 + $0x528] sm:$0xff] %v7462
        %v7471 = vld [vmem:[#allocation2] sm:$0xff]
        %v7472 = vld [vmem:[#allocation2 + $0x8] sm:$0xff]
        %v7473 = vld [vmem:[#allocation2 + $0x10] sm:$0xff]
        %v7474 = vld [vmem:[#allocation2 + $0x30] sm:$0xff]
        %v7475 = vld [vmem:[#allocation2 + $0x38] sm:$0xff]
        %v7476 = vld [vmem:[#allocation2 + $0x40] sm:$0xff]
        %v7477 = vmul.f32 %v7471, %v2594
        %v7478 = vmul.f32 %v7472, %v2598
        %v7479 = vmul.f32 %v7473, %v2596
        %v7480 = vmul.f32 %v7474, %v2594
        %v7481 = vmul.f32 %v7475, %v2598
        %v7482 = vmul.f32 %v7476, %v2596
        %7489 = vrot.lane.b32.xlu0 %v7477, 63
        %v7490 = vpop.permute.xlu0 %7489
        %7491 = vrot.lane.b32.xlu0 %v7478, 63
        %v7492 = vpop.permute.xlu0 %7491
        %7493 = vrot.lane.b32.xlu0 %v7479, 63
        %v7494 = vpop.permute.xlu0 %7493
        %7495 = vrot.lane.b32.xlu0 %v7480, 63
        %v7496 = vpop.permute.xlu0 %7495
        %7497 = vrot.lane.b32.xlu0 %v7481, 63
        %v7498 = vpop.permute.xlu0 %7497
        %7499 = vrot.lane.b32.xlu0 %v7482, 63
        %v7500 = vpop.permute.xlu0 %7499
        %v7501 = vsel %vm2626, %v7490, %v7492
        %v7502 = vsel %vm2626, %v7492, %v7494
        %v7503 = vsel %vm2626, %v7496, %v7498
        %v7504 = vsel %vm2626, %v7498, %v7500
        %7509 = vst [vmem:[#allocation3 + $0x540] sm:$0xff] %v7501
        %7510 = vst [vmem:[#allocation3 + $0x548] sm:$0xff] %v7502
        %7511 = vst [vmem:[#allocation3 + $0x560] sm:$0xff] %v7503
        %7512 = vst [vmem:[#allocation3 + $0x568] sm:$0xff] %v7504
        %v7513 = vld [vmem:[#allocation2] sm:$0xff]
        %v7514 = vld [vmem:[#allocation2 + $0x8] sm:$0xff]
        %v7515 = vld [vmem:[#allocation2 + $0x10] sm:$0xff]
        %v7516 = vld [vmem:[#allocation2 + $0x30] sm:$0xff]
        %v7517 = vld [vmem:[#allocation2 + $0x38] sm:$0xff]
        %v7518 = vld [vmem:[#allocation2 + $0x40] sm:$0xff]
        %7525 = vrot.lane.b32.xlu0 %v7513, 62
        %v7526 = vpop.permute.xlu0 %7525
        %7527 = vrot.lane.b32.xlu0 %v7514, 62
        %v7528 = vpop.permute.xlu0 %7527
        %7529 = vrot.lane.b32.xlu0 %v7515, 62
        %v7530 = vpop.permute.xlu0 %7529
        %7531 = vrot.lane.b32.xlu0 %v7516, 62
        %v7532 = vpop.permute.xlu0 %7531
        %7533 = vrot.lane.b32.xlu0 %v7517, 62
        %v7534 = vpop.permute.xlu0 %7533
        %7535 = vrot.lane.b32.xlu0 %v7518, 62
        %v7536 = vpop.permute.xlu0 %7535
        %v7537 = vsel %vm2715, %v7526, %v7528
        %v7538 = vsel %vm2715, %v7528, %v7530
        %v7539 = vsel %vm2715, %v7532, %v7534
        %v7540 = vsel %vm2715, %v7534, %v7536
        %7545 = vst [vmem:[#allocation3 + $0x580] sm:$0xff] %v7537
        %7546 = vst [vmem:[#allocation3 + $0x588] sm:$0xff] %v7538
        %7547 = vst [vmem:[#allocation3 + $0x5a0] sm:$0xff] %v7539
        %7548 = vst [vmem:[#allocation3 + $0x5a8] sm:$0xff] %v7540
        %v7549 = vld [vmem:[#allocation2] sm:$0xff]
        %v7550 = vld [vmem:[#allocation2 + $0x8] sm:$0xff]
        %v7551 = vld [vmem:[#allocation2 + $0x10] sm:$0xff]
        %v7552 = vld [vmem:[#allocation2 + $0x30] sm:$0xff]
        %v7553 = vld [vmem:[#allocation2 + $0x38] sm:$0xff]
        %v7554 = vld [vmem:[#allocation2 + $0x40] sm:$0xff]
        %v7555 = vmul.f32 %v7549, %v2772
        %v7556 = vmul.f32 %v7550, %v2776
        %v7557 = vmul.f32 %v7551, %v2774
        %v7558 = vmul.f32 %v7552, %v2772
        %v7559 = vmul.f32 %v7553, %v2776
        %v7560 = vmul.f32 %v7554, %v2774
        %7567 = vrot.lane.b32.xlu0 %v7555, 61
        %v7568 = vpop.permute.xlu0 %7567
        %7569 = vrot.lane.b32.xlu0 %v7556, 61
        %v7570 = vpop.permute.xlu0 %7569
        %7571 = vrot.lane.b32.xlu0 %v7557, 61
        %v7572 = vpop.permute.xlu0 %7571
        %7573 = vrot.lane.b32.xlu0 %v7558, 61
        %v7574 = vpop.permute.xlu0 %7573
        %7575 = vrot.lane.b32.xlu0 %v7559, 61
        %v7576 = vpop.permute.xlu0 %7575
        %7577 = vrot.lane.b32.xlu0 %v7560, 61
        %v7578 = vpop.permute.xlu0 %7577
        %v7579 = vsel %vm2804, %v7568, %v7570
        %v7580 = vsel %vm2804, %v7570, %v7572
        %v7581 = vsel %vm2804, %v7574, %v7576
        %v7582 = vsel %vm2804, %v7576, %v7578
        %7587 = vst [vmem:[#allocation3 + $0x5c0] sm:$0xff] %v7579
        %7588 = vst [vmem:[#allocation3 + $0x5c8] sm:$0xff] %v7580
        %7589 = vst [vmem:[#allocation3 + $0x5e0] sm:$0xff] %v7581
        %7590 = vst [vmem:[#allocation3 + $0x5e8] sm:$0xff] %v7582
        %v7591 = vld [vmem:[#allocation2] sm:$0xff]
        %v7592 = vld [vmem:[#allocation2 + $0x8] sm:$0xff]
        %v7593 = vld [vmem:[#allocation2 + $0x10] sm:$0xff]
        %v7594 = vld [vmem:[#allocation2 + $0x30] sm:$0xff]
        %v7595 = vld [vmem:[#allocation2 + $0x38] sm:$0xff]
        %v7596 = vld [vmem:[#allocation2 + $0x40] sm:$0xff]
        %v7597 = vmul.f32 %v7591, %v2876
        %v7598 = vmul.f32 %v7592, %v2879
        %v7599 = vmul.f32 %v7593, %v2878
        %v7600 = vmul.f32 %v7594, %v2876
        %v7601 = vmul.f32 %v7595, %v2879
        %v7602 = vmul.f32 %v7596, %v2878
        %7609 = vrot.lane.b32.xlu0 %v7597, 60
        %v7610 = vpop.permute.xlu0 %7609
        %7611 = vrot.lane.b32.xlu0 %v7598, 60
        %v7612 = vpop.permute.xlu0 %7611
        %7613 = vrot.lane.b32.xlu0 %v7599, 60
        %v7614 = vpop.permute.xlu0 %7613
        %7615 = vrot.lane.b32.xlu0 %v7600, 60
        %v7616 = vpop.permute.xlu0 %7615
        %7617 = vrot.lane.b32.xlu0 %v7601, 60
        %v7618 = vpop.permute.xlu0 %7617
        %7619 = vrot.lane.b32.xlu0 %v7602, 60
        %v7620 = vpop.permute.xlu0 %7619
        %v7621 = vsel %vm619, %v7610, %v7612
        %v7622 = vsel %vm619, %v7612, %v7614
        %v7623 = vsel %vm619, %v7616, %v7618
        %v7624 = vsel %vm619, %v7618, %v7620
        %7629 = vst [vmem:[#allocation3 + $0x600] sm:$0xff] %v7621
        %7630 = vst [vmem:[#allocation3 + $0x608] sm:$0xff] %v7622
        %7631 = vst [vmem:[#allocation3 + $0x620] sm:$0xff] %v7623
        %7632 = vst [vmem:[#allocation3 + $0x628] sm:$0xff] %v7624
        %v7633 = vld [vmem:[#allocation6 + $0xc0] sm:$0xff]
        %v7634 = vld [vmem:[#allocation6 + $0xc8] sm:$0xff]
        %v7635 = vld [vmem:[#allocation6 + $0xd0] sm:$0xff]
        %v7636 = vld [vmem:[#allocation6 + $0xd8] sm:$0xff]
        %v7637 = vld [vmem:[#allocation6 + $0xe0] sm:$0xff]
        %v7638 = vld [vmem:[#allocation6 + $0xe8] sm:$0xff]
        %v7639 = vld [vmem:[#allocation6 + $0xf0] sm:$0xff]
        %v7640 = vld [vmem:[#allocation6 + $0xf8] sm:$0xff]
        %v7641 = vld [vmem:[#allocation6 + $0x100] sm:$0xff]
        %v7642 = vld [vmem:[#allocation6 + $0x108] sm:$0xff]
        %v7643 = vld [vmem:[#allocation6 + $0x110] sm:$0xff]
        %v7644 = vld [vmem:[#allocation6 + $0x118] sm:$0xff]
        %v7645 = vld [vmem:[#allocation6 + $0x120] sm:$0xff]
        %v7646 = vld [vmem:[#allocation6 + $0x128] sm:$0xff]
        %v7647 = vld [vmem:[#allocation6 + $0x130] sm:$0xff]
        %v7648 = vld [vmem:[#allocation6 + $0x138] sm:$0xff]
        %v7649 = vld [vmem:[#allocation6 + $0x140] sm:$0xff]
        %v7650 = vld [vmem:[#allocation6 + $0x148] sm:$0xff]
        %v7651 = vld [vmem:[#allocation6 + $0x150] sm:$0xff]
        %v7652 = vld [vmem:[#allocation6 + $0x158] sm:$0xff]
        %v7653 = vld [vmem:[#allocation6 + $0x160] sm:$0xff]
        %v7654 = vld [vmem:[#allocation6 + $0x168] sm:$0xff]
        %v7655 = vld [vmem:[#allocation6 + $0x170] sm:$0xff]
        %v7656 = vld [vmem:[#allocation6 + $0x178] sm:$0xff]
        %v7657 = vld [vmem:[#allocation3] sm:$0xff]
        %v7658 = vld [vmem:[#allocation3 + $0x8] sm:$0xff]
        %v7659 = vld [vmem:[#allocation3 + $0x20] sm:$0xff]
        %v7660 = vld [vmem:[#allocation3 + $0x28] sm:$0xff]
        %v7661 = vld [vmem:[#allocation3 + $0x40] sm:$0xff]
        %v7662 = vld [vmem:[#allocation3 + $0x48] sm:$0xff]
        %v7663 = vld [vmem:[#allocation3 + $0x60] sm:$0xff]
        %v7664 = vld [vmem:[#allocation3 + $0x68] sm:$0xff]
        %v7665 = vld [vmem:[#allocation3 + $0x80] sm:$0xff]
        %v7666 = vld [vmem:[#allocation3 + $0x88] sm:$0xff]
        %v7667 = vld [vmem:[#allocation3 + $0xa0] sm:$0xff]
        %v7668 = vld [vmem:[#allocation3 + $0xa8] sm:$0xff]
        %v7669 = vld [vmem:[#allocation3 + $0xc0] sm:$0xff]
        %v7670 = vld [vmem:[#allocation3 + $0xc8] sm:$0xff]
        %v7671 = vld [vmem:[#allocation3 + $0xe0] sm:$0xff]
        %v7672 = vld [vmem:[#allocation3 + $0xe8] sm:$0xff]
        %v7673 = vld [vmem:[#allocation3 + $0x100] sm:$0xff]
        %v7674 = vld [vmem:[#allocation3 + $0x108] sm:$0xff]
        %v7675 = vld [vmem:[#allocation3 + $0x120] sm:$0xff]
        %v7676 = vld [vmem:[#allocation3 + $0x128] sm:$0xff]
        %v7677 = vld [vmem:[#allocation3 + $0x140] sm:$0xff]
        %v7678 = vld [vmem:[#allocation3 + $0x148] sm:$0xff]
        %v7679 = vld [vmem:[#allocation3 + $0x160] sm:$0xff]
        %v7680 = vld [vmem:[#allocation3 + $0x168] sm:$0xff]
        %v7681 = vld [vmem:[#allocation3 + $0x180] sm:$0xff]
        %v7682 = vld [vmem:[#allocation3 + $0x188] sm:$0xff]
        %v7683 = vld [vmem:[#allocation3 + $0x1a0] sm:$0xff]
        %v7684 = vld [vmem:[#allocation3 + $0x1a8] sm:$0xff]
        %v7685 = vld [vmem:[#allocation3 + $0x1c0] sm:$0xff]
        %v7686 = vld [vmem:[#allocation3 + $0x1c8] sm:$0xff]
        %v7687 = vld [vmem:[#allocation3 + $0x1e0] sm:$0xff]
        %v7688 = vld [vmem:[#allocation3 + $0x1e8] sm:$0xff]
        %v7689 = vld [vmem:[#allocation3 + $0x200] sm:$0xff]
        %v7690 = vld [vmem:[#allocation3 + $0x208] sm:$0xff]
        %v7691 = vld [vmem:[#allocation3 + $0x220] sm:$0xff]
        %v7692 = vld [vmem:[#allocation3 + $0x228] sm:$0xff]
        %v7693 = vld [vmem:[#allocation3 + $0x240] sm:$0xff]
        %v7694 = vld [vmem:[#allocation3 + $0x248] sm:$0xff]
        %v7695 = vld [vmem:[#allocation3 + $0x260] sm:$0xff]
        %v7696 = vld [vmem:[#allocation3 + $0x268] sm:$0xff]
        %v7697 = vld [vmem:[#allocation3 + $0x280] sm:$0xff]
        %v7698 = vld [vmem:[#allocation3 + $0x288] sm:$0xff]
        %v7699 = vld [vmem:[#allocation3 + $0x2a0] sm:$0xff]
        %v7700 = vld [vmem:[#allocation3 + $0x2a8] sm:$0xff]
        %v7701 = vld [vmem:[#allocation3 + $0x2c0] sm:$0xff]
        %v7702 = vld [vmem:[#allocation3 + $0x2c8] sm:$0xff]
        %v7703 = vld [vmem:[#allocation3 + $0x2e0] sm:$0xff]
        %v7704 = vld [vmem:[#allocation3 + $0x2e8] sm:$0xff]
        %v7705 = vld [vmem:[#allocation3 + $0x300] sm:$0xff]
        %v7706 = vld [vmem:[#allocation3 + $0x308] sm:$0xff]
        %v7707 = vld [vmem:[#allocation3 + $0x320] sm:$0xff]
        %v7708 = vld [vmem:[#allocation3 + $0x328] sm:$0xff]
        %v7709 = vld [vmem:[#allocation3 + $0x340] sm:$0xff]
        %v7710 = vld [vmem:[#allocation3 + $0x348] sm:$0xff]
        %v7711 = vld [vmem:[#allocation3 + $0x360] sm:$0xff]
        %v7712 = vld [vmem:[#allocation3 + $0x368] sm:$0xff]
        %v7713 = vld [vmem:[#allocation3 + $0x380] sm:$0xff]
        %v7714 = vld [vmem:[#allocation3 + $0x388] sm:$0xff]
        %v7715 = vld [vmem:[#allocation3 + $0x3a0] sm:$0xff]
        %v7716 = vld [vmem:[#allocation3 + $0x3a8] sm:$0xff]
        %v7717 = vld [vmem:[#allocation3 + $0x3c0] sm:$0xff]
        %v7718 = vld [vmem:[#allocation3 + $0x3c8] sm:$0xff]
        %v7719 = vld [vmem:[#allocation3 + $0x3e0] sm:$0xff]
        %v7720 = vld [vmem:[#allocation3 + $0x3e8] sm:$0xff]
        %v7721 = vld [vmem:[#allocation3 + $0x400] sm:$0xff]
        %v7722 = vld [vmem:[#allocation3 + $0x408] sm:$0xff]
        %v7723 = vld [vmem:[#allocation3 + $0x420] sm:$0xff]
        %v7724 = vld [vmem:[#allocation3 + $0x428] sm:$0xff]
        %v7725 = vld [vmem:[#allocation3 + $0x440] sm:$0xff]
        %v7726 = vld [vmem:[#allocation3 + $0x448] sm:$0xff]
        %v7727 = vld [vmem:[#allocation3 + $0x460] sm:$0xff]
        %v7728 = vld [vmem:[#allocation3 + $0x468] sm:$0xff]
        %v7729 = vld [vmem:[#allocation3 + $0x480] sm:$0xff]
        %v7730 = vld [vmem:[#allocation3 + $0x488] sm:$0xff]
        %v7731 = vld [vmem:[#allocation3 + $0x4a0] sm:$0xff]
        %v7732 = vld [vmem:[#allocation3 + $0x4a8] sm:$0xff]
        %v7733 = vld [vmem:[#allocation3 + $0x4c0] sm:$0xff]
        %v7734 = vld [vmem:[#allocation3 + $0x4c8] sm:$0xff]
        %v7735 = vld [vmem:[#allocation3 + $0x4e0] sm:$0xff]
        %v7736 = vld [vmem:[#allocation3 + $0x4e8] sm:$0xff]
        %v7737 = vld [vmem:[#allocation3 + $0x500] sm:$0xff]
        %v7738 = vld [vmem:[#allocation3 + $0x508] sm:$0xff]
        %v7739 = vld [vmem:[#allocation3 + $0x520] sm:$0xff]
        %v7740 = vld [vmem:[#allocation3 + $0x528] sm:$0xff]
        %v7741 = vld [vmem:[#allocation3 + $0x540] sm:$0xff]
        %v7742 = vld [vmem:[#allocation3 + $0x548] sm:$0xff]
        %v7743 = vld [vmem:[#allocation3 + $0x560] sm:$0xff]
        %v7744 = vld [vmem:[#allocation3 + $0x568] sm:$0xff]
        %v7745 = vld [vmem:[#allocation3 + $0x580] sm:$0xff]
        %v7746 = vld [vmem:[#allocation3 + $0x588] sm:$0xff]
        %v7747 = vld [vmem:[#allocation3 + $0x5a0] sm:$0xff]
        %v7748 = vld [vmem:[#allocation3 + $0x5a8] sm:$0xff]
        %v7749 = vld [vmem:[#allocation3 + $0x5c0] sm:$0xff]
        %v7750 = vld [vmem:[#allocation3 + $0x5c8] sm:$0xff]
        %v7751 = vld [vmem:[#allocation3 + $0x5e0] sm:$0xff]
        %v7752 = vld [vmem:[#allocation3 + $0x5e8] sm:$0xff]
        %v7753 = vld [vmem:[#allocation3 + $0x600] sm:$0xff]
        %v7754 = vld [vmem:[#allocation3 + $0x608] sm:$0xff]
        %v7755 = vld [vmem:[#allocation3 + $0x620] sm:$0xff]
        %v7756 = vld [vmem:[#allocation3 + $0x628] sm:$0xff]
        %v7758 = vsel %vm353, %v7636, 0
        %v7761 = vsel %vm353, %v7640, 0
        %v7764 = vsel %vm353, %v7644, 0
        %v7767 = vsel %vm353, %v7648, 0
        %v7770 = vsel %vm353, %v7652, 0
        %v7773 = vsel %vm353, %v7656, 0
        %7775 = vmatprep.subr.mxu0 %v7658
        %7776 = vmatpush1.msra.mxu0 %v7657
        %7777 = vmatprep.subr.mxu0 %v7660
        %7778 = vmatpush1.msra.mxu0 %v7659
        %7779 = vmatprep.subr.mxu0 %v7662
        %7780 = vmatpush1.msra.mxu0 %v7661
        %7781 = vmatprep.subr.mxu0 %v7664
        %7782 = vmatpush1.msra.mxu0 %v7663
        %7783 = vmatprep.subr.mxu0 %v7666
        %7784 = vmatpush1.msra.mxu0 %v7665
        %7785 = vmatprep.subr.mxu0 %v7668
        %7786 = vmatpush1.msra.mxu0 %v7667
        %7787 = vmatprep.subr.mxu0 %v7670
        %7788 = vmatpush1.msra.mxu0 %v7669
        %7789 = vmatprep.subr.mxu0 %v7672
        %7790 = vmatpush1.msra.mxu0 %v7671
        %7791 = vmatprep.subr.mxu0 %v7674
        %7792 = vmatpush1.msra.mxu0 %v7673
        %7793 = vmatprep.subr.mxu0 %v7676
        %7794 = vmatpush1.msra.mxu0 %v7675
        %7795 = vmatprep.subr.mxu0 %v7678
        %7796 = vmatpush1.msra.mxu0 %v7677
        %7797 = vmatprep.subr.mxu0 %v7680
        %7798 = vmatpush1.msra.mxu0 %v7679
        %7799 = vmatprep.subr.mxu0 %v7682
        %7800 = vmatpush1.msra.mxu0 %v7681
        %7801 = vmatprep.subr.mxu0 %v7684
        %7802 = vmatpush1.msra.mxu0 %v7683
        %7803 = vmatprep.subr.mxu0 %v7686
        %7804 = vmatpush1.msra.mxu0 %v7685
        %7805 = vmatprep.subr.mxu0 %v7688
        %7806 = vmatpush1.msra.mxu0 %v7687
        %7807 = vmatprep.subr.mxu0 %v7690
        %7808 = vmatpush1.msra.mxu0 %v7689
        %7809 = vmatprep.subr.mxu0 %v7692
        %7810 = vmatpush1.msra.mxu0 %v7691
        %7811 = vmatprep.subr.mxu0 %v7694
        %7812 = vmatpush1.msra.mxu0 %v7693
        %7813 = vmatprep.subr.mxu0 %v7696
        %7814 = vmatpush1.msra.mxu0 %v7695
        %7815 = vmatprep.subr.mxu0 %v7698
        %7816 = vmatpush1.msra.mxu0 %v7697
        %7817 = vmatprep.subr.mxu0 %v7700
        %7818 = vmatpush1.msra.mxu0 %v7699
        %7819 = vmatprep.subr.mxu0 %v7702
        %7820 = vmatpush1.msra.mxu0 %v7701
        %7821 = vmatprep.subr.mxu0 %v7704
        %7822 = vmatpush1.msra.mxu0 %v7703
        %7823 = vmatprep.subr.mxu0 %v7706
        %7824 = vmatpush1.msra.mxu0 %v7705
        %7825 = vmatprep.subr.mxu0 %v7708
        %7826 = vmatpush1.msra.mxu0 %v7707
        %7827 = vmatprep.subr.mxu0 %v7710
        %7828 = vmatpush1.msra.mxu0 %v7709
        %7829 = vmatprep.subr.mxu0 %v7712
        %7830 = vmatpush1.msra.mxu0 %v7711
        %7831 = vmatprep.subr.mxu0 %v7714
        %7832 = vmatpush1.msra.mxu0 %v7713
        %7833 = vmatprep.subr.mxu0 %v7716
        %7834 = vmatpush1.msra.mxu0 %v7715
        %7835 = vmatprep.subr.mxu0 %v7718
        %7836 = vmatpush1.msra.mxu0 %v7717
        %7837 = vmatprep.subr.mxu0 %v7720
        %7838 = vmatpush1.msra.mxu0 %v7719
        %7839 = vmatprep.mubr.f32.mxu0 %v7634
        %7840 = vmatmul.mubr.f32.gmra.mrb[0].mxu0 %v7633
        %v7841 = vpop.f32.mrb[0].mxu0
        %v7842 = vadd.f32 0.0, %v7841
        %v7843 = vpop.f32.mrb[0].mxu0
        %v7844 = vadd.f32 0.0, %v7843
        %7845 = vmatprep.mubr.f32.mxu0 %v7638
        %7846 = vmatmul.mubr.f32.gmra.mrb[0].mxu0 %v7637
        %v7847 = vpop.f32.mrb[0].mxu0
        %v7848 = vadd.f32 0.0, %v7847
        %v7849 = vpop.f32.mrb[0].mxu0
        %v7850 = vadd.f32 0.0, %v7849
        %7851 = vmatprep.mubr.f32.mxu0 %v7642
        %7852 = vmatmul.mubr.f32.gmra.mrb[0].mxu0 %v7641
        %v7853 = vpop.f32.mrb[0].mxu0
        %v7854 = vadd.f32 0.0, %v7853
        %v7855 = vpop.f32.mrb[0].mxu0
        %v7856 = vadd.f32 0.0, %v7855
        %7857 = vmatprep.mubr.f32.mxu0 %v7646
        %7858 = vmatmul.mubr.f32.gmra.mrb[0].mxu0 %v7645
        %v7859 = vpop.f32.mrb[0].mxu0
        %v7860 = vadd.f32 0.0, %v7859
        %v7861 = vpop.f32.mrb[0].mxu0
        %v7862 = vadd.f32 0.0, %v7861
        %7863 = vmatprep.mubr.f32.mxu0 %v7650
        %7864 = vmatmul.mubr.f32.gmra.mrb[0].mxu0 %v7649
        %v7865 = vpop.f32.mrb[0].mxu0
        %v7866 = vadd.f32 0.0, %v7865
        %v7867 = vpop.f32.mrb[0].mxu0
        %v7868 = vadd.f32 0.0, %v7867
        %7869 = vmatprep.mubr.f32.mxu0 %v7654
        %7870 = vmatmul.mubr.f32.gmra.mrb[0].mxu0 %v7653
        %v7871 = vpop.f32.mrb[0].mxu0
        %v7872 = vadd.f32 0.0, %v7871
        %v7873 = vpop.f32.mrb[0].mxu0
        %v7874 = vadd.f32 0.0, %v7873
        %7875 = vdwg.mxu0
        %7876 = vmatprep.subr.mxu0 %v7722
        %7877 = vmatpush1.msra.mxu0 %v7721
        %7878 = vmatprep.subr.mxu0 %v7724
        %7879 = vmatpush1.msra.mxu0 %v7723
        %7880 = vmatprep.subr.mxu0 %v7726
        %7881 = vmatpush1.msra.mxu0 %v7725
        %7882 = vmatprep.subr.mxu0 %v7728
        %7883 = vmatpush1.msra.mxu0 %v7727
        %7884 = vmatprep.subr.mxu0 %v7730
        %7885 = vmatpush1.msra.mxu0 %v7729
        %7886 = vmatprep.subr.mxu0 %v7732
        %7887 = vmatpush1.msra.mxu0 %v7731
        %7888 = vmatprep.subr.mxu0 %v7734
        %7889 = vmatpush1.msra.mxu0 %v7733
        %7890 = vmatprep.subr.mxu0 %v7736
        %7891 = vmatpush1.msra.mxu0 %v7735
        %7892 = vmatprep.subr.mxu0 %v7738
        %7893 = vmatpush1.msra.mxu0 %v7737
        %7894 = vmatprep.subr.mxu0 %v7740
        %7895 = vmatpush1.msra.mxu0 %v7739
        %7896 = vmatprep.subr.mxu0 %v7742
        %7897 = vmatpush1.msra.mxu0 %v7741
        %7898 = vmatprep.subr.mxu0 %v7744
        %7899 = vmatpush1.msra.mxu0 %v7743
        %7900 = vmatprep.subr.mxu0 %v7746
        %7901 = vmatpush1.msra.mxu0 %v7745
        %7902 = vmatprep.subr.mxu0 %v7748
        %7903 = vmatpush1.msra.mxu0 %v7747
        %7904 = vmatprep.subr.mxu0 %v7750
        %7905 = vmatpush1.msra.mxu0 %v7749
        %7906 = vmatprep.subr.mxu0 %v7752
        %7907 = vmatpush1.msra.mxu0 %v7751
        %7908 = vmatprep.subr.mxu0 %v7754
        %7909 = vmatpush1.msra.mxu0 %v7753
        %7910 = vmatprep.subr.mxu0 %v7756
        %7911 = vmatpush1.msra.mxu0 %v7755
        %7912 = vmatprep.subr.mxu0 0.0
        %7913 = vmatpush1.msra.mxu0 0.0
        %7914 = vmatprep.subr.mxu0 0.0
        %7915 = vmatpush1.msra.mxu0 0.0
        %7916 = vmatprep.subr.mxu0 0.0
        %7917 = vmatpush1.msra.mxu0 0.0
        %7918 = vmatprep.subr.mxu0 0.0
        %7919 = vmatpush1.msra.mxu0 0.0
        %7920 = vmatprep.subr.mxu0 0.0
        %7921 = vmatpush1.msra.mxu0 0.0
        %7922 = vmatprep.subr.mxu0 0.0
        %7923 = vmatpush1.msra.mxu0 0.0
        %7924 = vmatprep.subr.mxu0 0.0
        %7925 = vmatpush1.msra.mxu0 0.0
        %7926 = vmatprep.subr.mxu0 0.0
        %7927 = vmatpush1.msra.mxu0 0.0
        %7928 = vmatprep.subr.mxu0 0.0
        %7929 = vmatpush1.msra.mxu0 0.0
        %7930 = vmatprep.subr.mxu0 0.0
        %7931 = vmatpush1.msra.mxu0 0.0
        %7932 = vmatprep.subr.mxu0 0.0
        %7933 = vmatpush1.msra.mxu0 0.0
        %7934 = vmatprep.subr.mxu0 0.0
        %7935 = vmatpush1.msra.mxu0 0.0
        %7936 = vmatprep.subr.mxu0 0.0
        %7937 = vmatpush1.msra.mxu0 0.0
        %7938 = vmatprep.subr.mxu0 0.0
        %7939 = vmatpush1.msra.mxu0 0.0
        %7940 = vmatprep.mubr.f32.mxu0 %v7758
        %7941 = vmatmul.mubr.f32.gmra.mrb[0].mxu0 %v7635
        %v7942 = vpop.f32.mrb[0].mxu0
        %v7943 = vadd.f32 %v7842, %v7942
        %v7944 = vpop.f32.mrb[0].mxu0
        %v7945 = vadd.f32 %v7844, %v7944
        %7946 = vmatprep.mubr.f32.mxu0 %v7761
        %7947 = vmatmul.mubr.f32.gmra.mrb[0].mxu0 %v7639
        %v7948 = vpop.f32.mrb[0].mxu0
        %v7949 = vadd.f32 %v7848, %v7948
        %v7950 = vpop.f32.mrb[0].mxu0
        %v7951 = vadd.f32 %v7850, %v7950
        %7952 = vmatprep.mubr.f32.mxu0 %v7764
        %7953 = vmatmul.mubr.f32.gmra.mrb[0].mxu0 %v7643
        %v7954 = vpop.f32.mrb[0].mxu0
        %v7955 = vadd.f32 %v7854, %v7954
        %v7956 = vpop.f32.mrb[0].mxu0
        %v7957 = vadd.f32 %v7856, %v7956
        %7958 = vmatprep.mubr.f32.mxu0 %v7767
        %7959 = vmatmul.mubr.f32.gmra.mrb[0].mxu0 %v7647
        %v7960 = vpop.f32.mrb[0].mxu0
        %v7961 = vadd.f32 %v7860, %v7960
        %v7962 = vpop.f32.mrb[0].mxu0
        %v7963 = vadd.f32 %v7862, %v7962
        %7964 = vmatprep.mubr.f32.mxu0 %v7770
        %7965 = vmatmul.mubr.f32.gmra.mrb[0].mxu0 %v7651
        %v7966 = vpop.f32.mrb[0].mxu0
        %v7967 = vadd.f32 %v7866, %v7966
        %v7968 = vpop.f32.mrb[0].mxu0
        %v7969 = vadd.f32 %v7868, %v7968
        %7970 = vmatprep.mubr.f32.mxu0 %v7773
        %7971 = vmatmul.mubr.f32.gmra.mrb[0].mxu0 %v7655
        %v7972 = vpop.f32.mrb[0].mxu0
        %v7973 = vadd.f32 %v7872, %v7972
        %v7974 = vpop.f32.mrb[0].mxu0
        %v7975 = vadd.f32 %v7874, %v7974
        %7976 = vdwg.mxu0
        %v7977 = vld [vmem:[%s3 + $0x20] sm:$0xff]
        %v7978 = vld [vmem:[%s3 + $0x28] sm:$0xf]
        %v7980 = vsel %vm353, %v7977, 0
        %v7983 = vsel %vm353, %v7978, 0
        %7985 = vmatprep.subr.mxu0 %v6610
        %7986 = vmatpush1.msra.mxu0 %v6609
        %7987 = vmatprep.subr.mxu0 %v6612
        %7988 = vmatpush1.msra.mxu0 %v6611
        %7989 = vmatprep.subr.mxu0 0.0
        %7990 = vmatpush1.msra.mxu0 0.0
        %7991 = vmatprep.subr.mxu0 0.0
        %7992 = vmatpush1.msra.mxu0 0.0
        %7993 = vmatprep.subr.mxu0 0.0
        %7994 = vmatpush1.msra.mxu0 0.0
        %7995 = vmatprep.subr.mxu0 0.0
        %7996 = vmatpush1.msra.mxu0 0.0
        %7997 = vmatprep.subr.mxu0 0.0
        %7998 = vmatpush1.msra.mxu0 0.0
        %7999 = vmatprep.subr.mxu0 0.0
        %8000 = vmatpush1.msra.mxu0 0.0
        %8001 = vmatprep.subr.mxu0 0.0
        %8002 = vmatpush1.msra.mxu0 0.0
        %8003 = vmatprep.subr.mxu0 0.0
        %8004 = vmatpush1.msra.mxu0 0.0
        %8005 = vmatprep.subr.mxu0 0.0
        %8006 = vmatpush1.msra.mxu0 0.0
        %8007 = vmatprep.subr.mxu0 0.0
        %8008 = vmatpush1.msra.mxu0 0.0
        %8009 = vmatprep.subr.mxu0 0.0
        %8010 = vmatpush1.msra.mxu0 0.0
        %8011 = vmatprep.subr.mxu0 0.0
        %8012 = vmatpush1.msra.mxu0 0.0
        %8013 = vmatprep.subr.mxu0 0.0
        %8014 = vmatpush1.msra.mxu0 0.0
        %8015 = vmatprep.subr.mxu0 0.0
        %8016 = vmatpush1.msra.mxu0 0.0
        %8017 = vmatprep.subr.mxu0 0.0
        %8018 = vmatpush1.msra.mxu0 0.0
        %8019 = vmatprep.subr.mxu0 0.0
        %8020 = vmatpush1.msra.mxu0 0.0
        %8021 = vmatprep.subr.mxu0 0.0
        %8022 = vmatpush1.msra.mxu0 0.0
        %8023 = vmatprep.subr.mxu0 0.0
        %8024 = vmatpush1.msra.mxu0 0.0
        %8025 = vmatprep.subr.mxu0 0.0
        %8026 = vmatpush1.msra.mxu0 0.0
        %8027 = vmatprep.subr.mxu0 0.0
        %8028 = vmatpush1.msra.mxu0 0.0
        %8029 = vmatprep.subr.mxu0 0.0
        %8030 = vmatpush1.msra.mxu0 0.0
        %8031 = vmatprep.subr.mxu0 0.0
        %8032 = vmatpush1.msra.mxu0 0.0
        %8033 = vmatprep.subr.mxu0 0.0
        %8034 = vmatpush1.msra.mxu0 0.0
        %8035 = vmatprep.subr.mxu0 0.0
        %8036 = vmatpush1.msra.mxu0 0.0
        %8037 = vmatprep.subr.mxu0 0.0
        %8038 = vmatpush1.msra.mxu0 0.0
        %8039 = vmatprep.subr.mxu0 0.0
        %8040 = vmatpush1.msra.mxu0 0.0
        %8041 = vmatprep.subr.mxu0 0.0
        %8042 = vmatpush1.msra.mxu0 0.0
        %8043 = vmatprep.subr.mxu0 0.0
        %8044 = vmatpush1.msra.mxu0 0.0
        %8045 = vmatprep.subr.mxu0 0.0
        %8046 = vmatpush1.msra.mxu0 0.0
        %8047 = vmatprep.subr.mxu0 0.0
        %8048 = vmatpush1.msra.mxu0 0.0
        %8049 = vmatprep.mubr.f32.mxu0 0.0
        %8050 = vmatmul.mubr.f32.gmra.mrb[0].mxu0 %v7980
        %v8051 = vpop.f32.mrb[0].mxu0
        %v8052 = vadd.f32 %v7943, %v8051
        %v8053 = vpop.f32.mrb[0].mxu0
        %v8054 = vadd.f32 %v7945, %v8053
        %8055 = vmatprep.mubr.f32.mxu0 0.0
        %8056 = vmatmul.mubr.f32.gmra.mrb[0].mxu0 %v7983
        %v8057 = vpop.f32.mrb[0].mxu0
        %v8058 = vadd.f32 %v7949, %v8057
        %v8059 = vpop.f32.mrb[0].mxu0
        %v8060 = vadd.f32 %v7951, %v8059
        %8061 = vdwg.mxu0
        %v8062 = vld [vmem:[#allocation8 + $0x10] sm:$0xff]
        %v8063 = vld [vmem:[#allocation8 + $0x18] sm:$0xff]
        %v8064 = vld [vmem:[#allocation8 + $0x20] sm:$0xff]
        %v8065 = vld [vmem:[#allocation8 + $0x28] sm:$0xff]
        %v8066 = vld [vmem:[#allocation8 + $0x30] sm:$0xff]
        %v8067 = vld [vmem:[#allocation8 + $0x38] sm:$0xff]
        %v8068 = vld [vmem:[#allocation8 + $0x40] sm:$0xff]
        %v8069 = vld [vmem:[#allocation8 + $0x48] sm:$0xff]
        %v8070 = vld [vmem:[#allocation8 + $0x50] sm:$0xff]
        %v8071 = vld [vmem:[#allocation8 + $0x58] sm:$0xff]
        %v8072 = vld [vmem:[#allocation8 + $0x60] sm:$0xff]
        %v8073 = vld [vmem:[#allocation8 + $0x68] sm:$0xff]
        %v8074 = vld [vmem:[#allocation8 + $0x70] sm:$0xff]
        %v8075 = vld [vmem:[#allocation8 + $0x78] sm:$0xff]
        %v8076 = vld [vmem:[#allocation8 + $0x80] sm:$0xff]
        %v8077 = vld [vmem:[#allocation8 + $0x88] sm:$0xff]
        %v8078 = vld [vmem:[#allocation8 + $0x90] sm:$0xff]
        %v8079 = vld [vmem:[#allocation8 + $0x98] sm:$0xff]
        %v8080 = vld [vmem:[#allocation8 + $0xa0] sm:$0xff]
        %v8081 = vld [vmem:[#allocation8 + $0xa8] sm:$0xff]
        %v8082 = vld [vmem:[#allocation8 + $0xb0] sm:$0xff]
        %v8083 = vld [vmem:[#allocation8 + $0xb8] sm:$0xff]
        %v8084 = vld [vmem:[#allocation8 + $0xc0] sm:$0xff]
        %v8085 = vld [vmem:[#allocation8 + $0xc8] sm:$0xff]
        %v8086 = vld [vmem:[#allocation8 + $0xd0] sm:$0xff]
        %v8087 = vld [vmem:[#allocation8 + $0xd8] sm:$0xff]
        %v8088 = vld [vmem:[#allocation8 + $0xe0] sm:$0xff]
        %v8089 = vld [vmem:[#allocation8 + $0xe8] sm:$0xff]
        %v8090 = vld [vmem:[#allocation8 + $0xf0] sm:$0xff]
        %v8091 = vld [vmem:[#allocation8 + $0xf8] sm:$0xff]
        %v8092 = vld [vmem:[#allocation8 + $0x100] sm:$0xff]
        %v8093 = vld [vmem:[#allocation8 + $0x108] sm:$0xff]
        %v8094 = vld [vmem:[#allocation8 + $0x110] sm:$0xff]
        %v8095 = vld [vmem:[#allocation8 + $0x118] sm:$0xff]
        %v8096 = vld [vmem:[#allocation8 + $0x120] sm:$0xff]
        %v8097 = vld [vmem:[#allocation8 + $0x128] sm:$0xff]
        %v8098 = vld [vmem:[#allocation8 + $0x130] sm:$0xff]
        %v8099 = vld [vmem:[#allocation8 + $0x138] sm:$0xff]
        %v8100 = vld [vmem:[#allocation8 + $0x140] sm:$0xff]
        %v8101 = vld [vmem:[#allocation8 + $0x148] sm:$0xff]
        %v8102 = vld [vmem:[#allocation8 + $0x150] sm:$0xff]
        %v8103 = vld [vmem:[#allocation8 + $0x158] sm:$0xff]
        %v8104 = vld [vmem:[#allocation8 + $0x160] sm:$0xff]
        %v8105 = vld [vmem:[#allocation8 + $0x168] sm:$0xff]
        %v8106 = vld [vmem:[#allocation8 + $0x170] sm:$0xff]
        %v8107 = vld [vmem:[#allocation8 + $0x178] sm:$0xff]
        %v8108 = vld [vmem:[#allocation8 + $0x180] sm:$0xff]
        %v8109 = vld [vmem:[#allocation8 + $0x188] sm:$0xff]
        %v8110 = vld [vmem:[#allocation8 + $0x190] sm:$0xff]
        %v8111 = vld [vmem:[#allocation8 + $0x198] sm:$0xff]
        %v8112 = vld [vmem:[#allocation8 + $0x1a0] sm:$0xff]
        %v8113 = vld [vmem:[#allocation8 + $0x1a8] sm:$0xff]
        %v8114 = vld [vmem:[#allocation8 + $0x1b0] sm:$0xff]
        %v8115 = vld [vmem:[#allocation8 + $0x1b8] sm:$0xff]
        %v8116 = vld [vmem:[#allocation8 + $0x1c0] sm:$0xff]
        %v8117 = vld [vmem:[#allocation8 + $0x1c8] sm:$0xff]
        %v8118 = vld [vmem:[#allocation8 + $0x1d0] sm:$0xff]
        %v8119 = vld [vmem:[#allocation8 + $0x1d8] sm:$0xff]
        %v8120 = vld [vmem:[#allocation8 + $0x1e0] sm:$0xff]
        %v8121 = vld [vmem:[#allocation8 + $0x1e8] sm:$0xff]
        %v8122 = vld [vmem:[#allocation8 + $0x1f0] sm:$0xff]
        %v8123 = vld [vmem:[#allocation8 + $0x1f8] sm:$0xff]
        %v8124 = vld [vmem:[#allocation8 + $0x200] sm:$0xff]
        %v8125 = vld [vmem:[#allocation8 + $0x208] sm:$0xff]
        %8126 = vmatprep.subr.mxu0 %v8063
        %8127 = vmatpush1.msra.mxu0 %v8062
        %8128 = vmatprep.subr.mxu0 %v8065
        %8129 = vmatpush1.msra.mxu0 %v8064
        %8130 = vmatprep.subr.mxu0 %v8067
        %8131 = vmatpush1.msra.mxu0 %v8066
        %8132 = vmatprep.subr.mxu0 %v8069
        %8133 = vmatpush1.msra.mxu0 %v8068
        %8134 = vmatprep.subr.mxu0 %v8071
        %8135 = vmatpush1.msra.mxu0 %v8070
        %8136 = vmatprep.subr.mxu0 %v8073
        %8137 = vmatpush1.msra.mxu0 %v8072
        %8138 = vmatprep.subr.mxu0 %v8075
        %8139 = vmatpush1.msra.mxu0 %v8074
        %8140 = vmatprep.subr.mxu0 %v8077
        %8141 = vmatpush1.msra.mxu0 %v8076
        %8142 = vmatprep.subr.mxu0 %v8079
        %8143 = vmatpush1.msra.mxu0 %v8078
        %8144 = vmatprep.subr.mxu0 %v8081
        %8145 = vmatpush1.msra.mxu0 %v8080
        %8146 = vmatprep.subr.mxu0 %v8083
        %8147 = vmatpush1.msra.mxu0 %v8082
        %8148 = vmatprep.subr.mxu0 %v8085
        %8149 = vmatpush1.msra.mxu0 %v8084
        %8150 = vmatprep.subr.mxu0 %v8087
        %8151 = vmatpush1.msra.mxu0 %v8086
        %8152 = vmatprep.subr.mxu0 %v8089
        %8153 = vmatpush1.msra.mxu0 %v8088
        %8154 = vmatprep.subr.mxu0 %v8091
        %8155 = vmatpush1.msra.mxu0 %v8090
        %8156 = vmatprep.subr.mxu0 %v8093
        %8157 = vmatpush1.msra.mxu0 %v8092
        %8158 = vmatprep.subr.mxu0 %v8095
        %8159 = vmatpush1.msra.mxu0 %v8094
        %8160 = vmatprep.subr.mxu0 %v8097
        %8161 = vmatpush1.msra.mxu0 %v8096
        %8162 = vmatprep.subr.mxu0 %v8099
        %8163 = vmatpush1.msra.mxu0 %v8098
        %8164 = vmatprep.subr.mxu0 %v8101
        %8165 = vmatpush1.msra.mxu0 %v8100
        %8166 = vmatprep.subr.mxu0 %v8103
        %8167 = vmatpush1.msra.mxu0 %v8102
        %8168 = vmatprep.subr.mxu0 %v8105
        %8169 = vmatpush1.msra.mxu0 %v8104
        %8170 = vmatprep.subr.mxu0 %v8107
        %8171 = vmatpush1.msra.mxu0 %v8106
        %8172 = vmatprep.subr.mxu0 %v8109
        %8173 = vmatpush1.msra.mxu0 %v8108
        %8174 = vmatprep.subr.mxu0 %v8111
        %8175 = vmatpush1.msra.mxu0 %v8110
        %8176 = vmatprep.subr.mxu0 %v8113
        %8177 = vmatpush1.msra.mxu0 %v8112
        %8178 = vmatprep.subr.mxu0 %v8115
        %8179 = vmatpush1.msra.mxu0 %v8114
        %8180 = vmatprep.subr.mxu0 %v8117
        %8181 = vmatpush1.msra.mxu0 %v8116
        %8182 = vmatprep.subr.mxu0 %v8119
        %8183 = vmatpush1.msra.mxu0 %v8118
        %8184 = vmatprep.subr.mxu0 %v8121
        %8185 = vmatpush1.msra.mxu0 %v8120
        %8186 = vmatprep.subr.mxu0 %v8123
        %8187 = vmatpush1.msra.mxu0 %v8122
        %8188 = vmatprep.subr.mxu0 %v8125
        %8189 = vmatpush1.msra.mxu0 %v8124
        %8190 = vmatprep.mubr.f32.mxu0 %v7957
        %8191 = vmatmul.mubr.f32.gmra.mrb[0].mxu0 %v7955
        %v8192 = vpop.f32.mrb[0].mxu0
        %v8193 = vadd.f32 0.0, %v8192
        %v8194 = vpop.f32.mrb[0].mxu0
        %v8195 = vadd.f32 0.0, %v8194
        %8196 = vmatprep.mubr.f32.mxu0 %v7963
        %8197 = vmatmul.mubr.f32.gmra.mrb[0].mxu0 %v7961
        %v8198 = vpop.f32.mrb[0].mxu0
        %v8199 = vadd.f32 0.0, %v8198
        %v8200 = vpop.f32.mrb[0].mxu0
        %v8201 = vadd.f32 0.0, %v8200
        %8202 = vdwg.mxu0
        %v8203 = vadd.f32 %v8052, %v8193
        %v8204 = vadd.f32 %v8054, %v8195
        %v8205 = vadd.f32 %v8058, %v8199
        %v8206 = vadd.f32 %v8060, %v8201
        %v8207 = vld [vmem:[#allocation8 + $0x210] sm:$0xff]
        %v8208 = vld [vmem:[#allocation8 + $0x218] sm:$0xff]
        %v8209 = vld [vmem:[#allocation8 + $0x220] sm:$0xff]
        %v8210 = vld [vmem:[#allocation8 + $0x228] sm:$0xff]
        %v8211 = vld [vmem:[#allocation8 + $0x230] sm:$0xff]
        %v8212 = vld [vmem:[#allocation8 + $0x238] sm:$0xff]
        %v8213 = vld [vmem:[#allocation8 + $0x240] sm:$0xff]
        %v8214 = vld [vmem:[#allocation8 + $0x248] sm:$0xff]
        %v8215 = vld [vmem:[#allocation8 + $0x250] sm:$0xff]
        %v8216 = vld [vmem:[#allocation8 + $0x258] sm:$0xff]
        %v8217 = vld [vmem:[#allocation8 + $0x260] sm:$0xff]
        %v8218 = vld [vmem:[#allocation8 + $0x268] sm:$0xff]
        %v8219 = vld [vmem:[#allocation8 + $0x270] sm:$0xff]
        %v8220 = vld [vmem:[#allocation8 + $0x278] sm:$0xff]
        %v8221 = vld [vmem:[#allocation8 + $0x280] sm:$0xff]
        %v8222 = vld [vmem:[#allocation8 + $0x288] sm:$0xff]
        %v8223 = vld [vmem:[#allocation8 + $0x290] sm:$0xff]
        %v8224 = vld [vmem:[#allocation8 + $0x298] sm:$0xff]
        %v8225 = vld [vmem:[#allocation8 + $0x2a0] sm:$0xff]
        %v8226 = vld [vmem:[#allocation8 + $0x2a8] sm:$0xff]
        %v8227 = vld [vmem:[#allocation8 + $0x2b0] sm:$0xff]
        %v8228 = vld [vmem:[#allocation8 + $0x2b8] sm:$0xff]
        %v8229 = vld [vmem:[#allocation8 + $0x2c0] sm:$0xff]
        %v8230 = vld [vmem:[#allocation8 + $0x2c8] sm:$0xff]
        %v8231 = vld [vmem:[#allocation8 + $0x2d0] sm:$0xff]
        %v8232 = vld [vmem:[#allocation8 + $0x2d8] sm:$0xff]
        %v8233 = vld [vmem:[#allocation8 + $0x2e0] sm:$0xff]
        %v8234 = vld [vmem:[#allocation8 + $0x2e8] sm:$0xff]
        %v8235 = vld [vmem:[#allocation8 + $0x2f0] sm:$0xff]
        %v8236 = vld [vmem:[#allocation8 + $0x2f8] sm:$0xff]
        %v8237 = vld [vmem:[#allocation8 + $0x300] sm:$0xff]
        %v8238 = vld [vmem:[#allocation8 + $0x308] sm:$0xff]
        %v8239 = vld [vmem:[#allocation8 + $0x310] sm:$0xff]
        %v8240 = vld [vmem:[#allocation8 + $0x318] sm:$0xff]
        %v8241 = vld [vmem:[#allocation8 + $0x320] sm:$0xff]
        %v8242 = vld [vmem:[#allocation8 + $0x328] sm:$0xff]
        %v8243 = vld [vmem:[#allocation8 + $0x330] sm:$0xff]
        %v8244 = vld [vmem:[#allocation8 + $0x338] sm:$0xff]
        %v8245 = vld [vmem:[#allocation8 + $0x340] sm:$0xff]
        %v8246 = vld [vmem:[#allocation8 + $0x348] sm:$0xff]
        %v8247 = vld [vmem:[#allocation8 + $0x350] sm:$0xff]
        %v8248 = vld [vmem:[#allocation8 + $0x358] sm:$0xff]
        %v8249 = vld [vmem:[#allocation8 + $0x360] sm:$0xff]
        %v8250 = vld [vmem:[#allocation8 + $0x368] sm:$0xff]
        %v8251 = vld [vmem:[#allocation8 + $0x370] sm:$0xff]
        %v8252 = vld [vmem:[#allocation8 + $0x378] sm:$0xff]
        %v8253 = vld [vmem:[#allocation8 + $0x380] sm:$0xff]
        %v8254 = vld [vmem:[#allocation8 + $0x388] sm:$0xff]
        %v8255 = vld [vmem:[#allocation8 + $0x390] sm:$0xff]
        %v8256 = vld [vmem:[#allocation8 + $0x398] sm:$0xff]
        %v8257 = vld [vmem:[#allocation8 + $0x3a0] sm:$0xff]
        %v8258 = vld [vmem:[#allocation8 + $0x3a8] sm:$0xff]
        %v8259 = vld [vmem:[#allocation8 + $0x3b0] sm:$0xff]
        %v8260 = vld [vmem:[#allocation8 + $0x3b8] sm:$0xff]
        %v8261 = vld [vmem:[#allocation8 + $0x3c0] sm:$0xff]
        %v8262 = vld [vmem:[#allocation8 + $0x3c8] sm:$0xff]
        %v8263 = vld [vmem:[#allocation8 + $0x3d0] sm:$0xff]
        %v8264 = vld [vmem:[#allocation8 + $0x3d8] sm:$0xff]
        %v8265 = vld [vmem:[#allocation8 + $0x3e0] sm:$0xff]
        %v8266 = vld [vmem:[#allocation8 + $0x3e8] sm:$0xff]
        %v8267 = vld [vmem:[#allocation8 + $0x3f0] sm:$0xff]
        %v8268 = vld [vmem:[#allocation8 + $0x3f8] sm:$0xff]
        %v8269 = vld [vmem:[#allocation8 + $0x400] sm:$0xff]
        %v8270 = vld [vmem:[#allocation8 + $0x408] sm:$0xff]
        %8271 = vmatprep.subr.mxu0 %v8208
        %8272 = vmatpush1.msra.mxu0 %v8207
        %8273 = vmatprep.subr.mxu0 %v8210
        %8274 = vmatpush1.msra.mxu0 %v8209
        %8275 = vmatprep.subr.mxu0 %v8212
        %8276 = vmatpush1.msra.mxu0 %v8211
        %8277 = vmatprep.subr.mxu0 %v8214
        %8278 = vmatpush1.msra.mxu0 %v8213
        %8279 = vmatprep.subr.mxu0 %v8216
        %8280 = vmatpush1.msra.mxu0 %v8215
        %8281 = vmatprep.subr.mxu0 %v8218
        %8282 = vmatpush1.msra.mxu0 %v8217
        %8283 = vmatprep.subr.mxu0 %v8220
        %8284 = vmatpush1.msra.mxu0 %v8219
        %8285 = vmatprep.subr.mxu0 %v8222
        %8286 = vmatpush1.msra.mxu0 %v8221
        %8287 = vmatprep.subr.mxu0 %v8224
        %8288 = vmatpush1.msra.mxu0 %v8223
        %8289 = vmatprep.subr.mxu0 %v8226
        %8290 = vmatpush1.msra.mxu0 %v8225
        %8291 = vmatprep.subr.mxu0 %v8228
        %8292 = vmatpush1.msra.mxu0 %v8227
        %8293 = vmatprep.subr.mxu0 %v8230
        %8294 = vmatpush1.msra.mxu0 %v8229
        %8295 = vmatprep.subr.mxu0 %v8232
        %8296 = vmatpush1.msra.mxu0 %v8231
        %8297 = vmatprep.subr.mxu0 %v8234
        %8298 = vmatpush1.msra.mxu0 %v8233
        %8299 = vmatprep.subr.mxu0 %v8236
        %8300 = vmatpush1.msra.mxu0 %v8235
        %8301 = vmatprep.subr.mxu0 %v8238
        %8302 = vmatpush1.msra.mxu0 %v8237
        %8303 = vmatprep.subr.mxu0 %v8240
        %8304 = vmatpush1.msra.mxu0 %v8239
        %8305 = vmatprep.subr.mxu0 %v8242
        %8306 = vmatpush1.msra.mxu0 %v8241
        %8307 = vmatprep.subr.mxu0 %v8244
        %8308 = vmatpush1.msra.mxu0 %v8243
        %8309 = vmatprep.subr.mxu0 %v8246
        %8310 = vmatpush1.msra.mxu0 %v8245
        %8311 = vmatprep.subr.mxu0 %v8248
        %8312 = vmatpush1.msra.mxu0 %v8247
        %8313 = vmatprep.subr.mxu0 %v8250
        %8314 = vmatpush1.msra.mxu0 %v8249
        %8315 = vmatprep.subr.mxu0 %v8252
        %8316 = vmatpush1.msra.mxu0 %v8251
        %8317 = vmatprep.subr.mxu0 %v8254
        %8318 = vmatpush1.msra.mxu0 %v8253
        %8319 = vmatprep.subr.mxu0 %v8256
        %8320 = vmatpush1.msra.mxu0 %v8255
        %8321 = vmatprep.subr.mxu0 %v8258
        %8322 = vmatpush1.msra.mxu0 %v8257
        %8323 = vmatprep.subr.mxu0 %v8260
        %8324 = vmatpush1.msra.mxu0 %v8259
        %8325 = vmatprep.subr.mxu0 %v8262
        %8326 = vmatpush1.msra.mxu0 %v8261
        %8327 = vmatprep.subr.mxu0 %v8264
        %8328 = vmatpush1.msra.mxu0 %v8263
        %8329 = vmatprep.subr.mxu0 %v8266
        %8330 = vmatpush1.msra.mxu0 %v8265
        %8331 = vmatprep.subr.mxu0 %v8268
        %8332 = vmatpush1.msra.mxu0 %v8267
        %8333 = vmatprep.subr.mxu0 %v8270
        %8334 = vmatpush1.msra.mxu0 %v8269
        %8335 = vmatprep.mubr.f32.mxu0 %v7969
        %8336 = vmatmul.mubr.f32.gmra.mrb[0].mxu0 %v7967
        %v8337 = vpop.f32.mrb[0].mxu0
        %v8338 = vadd.f32 0.0, %v8337
        %v8339 = vpop.f32.mrb[0].mxu0
        %v8340 = vadd.f32 0.0, %v8339
        %8341 = vmatprep.mubr.f32.mxu0 %v7975
        %8342 = vmatmul.mubr.f32.gmra.mrb[0].mxu0 %v7973
        %v8343 = vpop.f32.mrb[0].mxu0
        %v8344 = vadd.f32 0.0, %v8343
        %v8345 = vpop.f32.mrb[0].mxu0
        %v8346 = vadd.f32 0.0, %v8345
        %8347 = vdwg.mxu0
        %v8348 = vadd.f32 %v8203, %v8338
        %v8349 = vadd.f32 %v8204, %v8340
        %v8350 = vadd.f32 %v8205, %v8344
        %v8351 = vadd.f32 %v8206, %v8346
        %v8352 = vld [vmem:[%s1] sm:$0xff]
        %v8353 = vld [vmem:[%s1 + $0x8] sm:$0xf]
        %8355 = vset.pattern.permute.xlu0 7
        %8356 = vperm.xlu0 %8355, %v8352
        %v8357 = vpop.permute.xlu0 %8356
        %8360 = vset.pattern.permute.xlu0 7
        %8361 = vperm.xlu0 %8360, %v8353
        %v8362 = vpop.permute.xlu0 %8361
        %v8364 = vadd.f32 %v8348, %v8357
        %v8365 = vadd.f32 %v8349, %v8357
        %v8366 = vadd.f32 %v8350, %v8362
        %v8367 = vadd.f32 %v8351, %v8362
        %v8368 = vld [vmem:[%s3 + $0x30] sm:$0xff]
        %v8369 = vld [vmem:[%s3 + $0x38] sm:$0xf]
        %v8370 = vadd.f32 %v8364, %v8365
        %8371 = vadd.xlane.f32.xlu0 %v8370
        %v8372 = vpop.xlane.xlu0 %8371
        %vm8373 = vcmask 1043456
        %v8374 = vsel %vm8373, %v8366, 0.0
        %v8375 = vsel %vm8373, %v8367, 0.0
        %v8376 = vadd.f32 %v8374, %v8375
        %8377 = vadd.xlane.f32.xlu0 %v8376
        %v8378 = vpop.xlane.xlu0 %8377
        %v8379 = vrcp.pop 256.0
        %v8380 = vmul.f32 %v8372, %v8379
        %v8381 = vmul.f32 %v8378, %v8379
        %8382 = vrot.lane.b32.xlu0 %v8352, 120
        %v8383 = vpop.permute.xlu0 %8382
        %8384 = vrot.lane.b32.xlu0 %v8353, 120
        %v8385 = vpop.permute.xlu0 %8384
        %v8389 = vsel %vm2088, %v8368, 0
        %v8392 = vsel %vm2088, %v8369, 0
        %v8395 = vsel %vm8373, %v8381, 0
        %8397 = vmatprep.subr.mxu0 0.0
        %8398 = vmatpush1.msra.mxu0 %v8380
        %8399 = vmatprep.subr.mxu0 0.0
        %8400 = vmatpush1.msra.mxu0 %v8395
        %8401 = vmatprep.subr.mxu0 0.0
        %8402 = vmatpush1.msra.mxu0 0.0
        %8403 = vmatprep.subr.mxu0 0.0
        %8404 = vmatpush1.msra.mxu0 0.0
        %8405 = vmatprep.subr.mxu0 0.0
        %8406 = vmatpush1.msra.mxu0 0.0
        %8407 = vmatprep.subr.mxu0 0.0
        %8408 = vmatpush1.msra.mxu0 0.0
        %8409 = vmatprep.subr.mxu0 0.0
        %8410 = vmatpush1.msra.mxu0 0.0
        %8411 = vmatprep.subr.mxu0 0.0
        %8412 = vmatpush1.msra.mxu0 0.0
        %8413 = vmatprep.subr.mxu0 0.0
        %8414 = vmatpush1.msra.mxu0 0.0
        %8415 = vmatprep.subr.mxu0 0.0
        %8416 = vmatpush1.msra.mxu0 0.0
        %8417 = vmatprep.subr.mxu0 0.0
        %8418 = vmatpush1.msra.mxu0 0.0
        %8419 = vmatprep.subr.mxu0 0.0
        %8420 = vmatpush1.msra.mxu0 0.0
        %8421 = vmatprep.subr.mxu0 0.0
        %8422 = vmatpush1.msra.mxu0 0.0
        %8423 = vmatprep.subr.mxu0 0.0
        %8424 = vmatpush1.msra.mxu0 0.0
        %8425 = vmatprep.subr.mxu0 0.0
        %8426 = vmatpush1.msra.mxu0 0.0
        %8427 = vmatprep.subr.mxu0 0.0
        %8428 = vmatpush1.msra.mxu0 0.0
        %8429 = vmatprep.subr.mxu0 0.0
        %8430 = vmatpush1.msra.mxu0 0.0
        %8431 = vmatprep.subr.mxu0 0.0
        %8432 = vmatpush1.msra.mxu0 0.0
        %8433 = vmatprep.subr.mxu0 0.0
        %8434 = vmatpush1.msra.mxu0 0.0
        %8435 = vmatprep.subr.mxu0 0.0
        %8436 = vmatpush1.msra.mxu0 0.0
        %8437 = vmatprep.subr.mxu0 0.0
        %8438 = vmatpush1.msra.mxu0 0.0
        %8439 = vmatprep.subr.mxu0 0.0
        %8440 = vmatpush1.msra.mxu0 0.0
        %8441 = vmatprep.subr.mxu0 0.0
        %8442 = vmatpush1.msra.mxu0 0.0
        %8443 = vmatprep.subr.mxu0 0.0
        %8444 = vmatpush1.msra.mxu0 0.0
        %8445 = vmatprep.subr.mxu0 0.0
        %8446 = vmatpush1.msra.mxu0 0.0
        %8447 = vmatprep.subr.mxu0 0.0
        %8448 = vmatpush1.msra.mxu0 0.0
        %8449 = vmatprep.subr.mxu0 0.0
        %8450 = vmatpush1.msra.mxu0 0.0
        %8451 = vmatprep.subr.mxu0 0.0
        %8452 = vmatpush1.msra.mxu0 0.0
        %8453 = vmatprep.subr.mxu0 0.0
        %8454 = vmatpush1.msra.mxu0 0.0
        %8455 = vmatprep.subr.mxu0 0.0
        %8456 = vmatpush1.msra.mxu0 0.0
        %8457 = vmatprep.subr.mxu0 0.0
        %8458 = vmatpush1.msra.mxu0 0.0
        %8459 = vmatprep.subr.mxu0 0.0
        %8460 = vmatpush1.msra.mxu0 0.0
        %8461 = vmatprep.mubr.f32.mxu0 0.0
        %8462 = vmatmul.mubr.f32.gmra.mrb[0].mxu0 %v8389
        %v8463 = vpop.f32.mrb[0].mxu0
        %v8464 = vadd.f32 %v8383, %v8463
        %v8465 = vpop.f32.mrb[0].mxu0
        %8466 = vmatprep.mubr.f32.mxu0 0.0
        %8467 = vmatmul.mubr.f32.gmra.mrb[0].mxu0 %v8392
        %v8468 = vpop.f32.mrb[0].mxu0
        %v8469 = vadd.f32 %v8385, %v8468
        %v8470 = vpop.f32.mrb[0].mxu0
        %8471 = vdwg.mxu0
        %v8472 = vxor.u32 %v8464, 2147483648
        %v8473 = vxor.u32 %v8469, 2147483648
        %v8474 = vmul.f32 %v8472, 1.442695
        %v8475 = vpow.pop %v8474
        %v8476 = vmul.f32 %v8473, 1.442695
        %v8477 = vpow.pop %v8476
        %v8478 = vadd.f32 %v8475, 1.0
        %v8479 = vadd.f32 %v8477, 1.0
        %v8480 = vrcp.pop %v8478
        %v8481 = vmul.f32 1.0, %v8480
        %v8482 = vrcp.pop %v8479
        %v8483 = vmul.f32 1.0, %v8482
        %8485 = vset.pattern.permute.xlu0 0
        %8486 = vperm.xlu0 %8485, %v8481
        %v8487 = vpop.permute.xlu0 %8486
        %8490 = vset.pattern.permute.xlu0 0
        %8491 = vperm.xlu0 %8490, %v8483
        %v8492 = vpop.permute.xlu0 %8491
        %v8494 = vmul.f32 %v8364, %v8487
        %v8495 = vmul.f32 %v8365, %v8487
        %v8496 = vmul.f32 %v8366, %v8492
        %v8497 = vmul.f32 %v8367, %v8492
        %v8498 = vadd.f32 %v8494, %v333
        %v8499 = vadd.f32 %v8495, %v334
        %v8500 = vadd.f32 %v8496, %v337
        %v8501 = vadd.f32 %v8497, %v338
        %8502 = vst [vmem:[%s273] sm:$0xff] %v8498
        %8503 = vst [vmem:[%s273 + $0x8] sm:$0xff] %v8499
        %8504 = vst [vmem:[%s273 + $0x10] sm:$0xf] %v8500
        %8505 = vst [vmem:[%s273 + $0x18] sm:$0xf] %v8501
        %p8506 = scmp.lt.s32.totalorder %s20, 1
        %s8507 = scalar_select %p8506, %s20, 1
        %s8508 = smul.addr %s8507, 4
        %s8509 = smul.addr %s8508, 8
        %s8510 = scalar_lea.vmem %s5, %s8509
        // Predicated region
        $region53: #{tpu_custom_call.1} parent=39 // pred_check
          %p8511 = pneg %p148
        $region54: #{tpu_custom_call.1} parent=39 // pred_check_branch
          %8513 = sbr.rel (%p8511) target = $region56
        $region55: #{tpu_custom_call.1} parent=39 // pred_region
          _
        $region56: #{tpu_custom_call.1} parent=39 // pred_fallthru
          _
      $region40: #{tpu_custom_call.1} parent=5 // pred_fallthru
        _
      %p8514 = scmp.le.s32.totalorder 2, %s15
      // Predicated region
      $region57: #{tpu_custom_call.1} parent=5 // pred_check
        %p8515 = pneg %p8514
      $region58: #{tpu_custom_call.1} parent=5 // pred_check_branch
        %8517 = sbr.rel (%p8515) target = $region60
      $region59: #{tpu_custom_call.1} parent=5 // pred_region
        %s8518 = ssub.s32 %s15, 2
        // Predicated region
        $region61: #{tpu_custom_call.1} parent=59 // pred_check
          %p8519 = pneg %p154
        $region62: #{tpu_custom_call.1} parent=59 // pred_check_branch
          %8521 = sbr.rel (%p8519) target = $region64
        $region63: #{tpu_custom_call.1} parent=59 // pred_region
          %p8522 = scmp.lt.s32.totalorder %s21, 1
          %s8523 = scalar_select %p8522, %s21, 1
          %s8524 = smul.addr %s8523, 4
          %s8525 = smul.addr %s8524, 8
          %s8526 = scalar_lea.vmem %s5, %s8525
        $region64: #{tpu_custom_call.1} parent=59 // pred_fallthru
          _
      $region60: #{tpu_custom_call.1} parent=5 // pred_fallthru
        _
    $region6: #{tpu_custom_call.1} parent=1 // loop_footer
      %s19 = sadd.s32 1, %s15
    $region7: #{tpu_custom_call.1} parent=1 // loop_footer_branch
      %14 = sbr.rel target = $region3
    $region8: #{tpu_custom_call.1} parent=1 // loop_exit
      _
    %8527 = vsyncpa [#allocation5], 1
    %s8528 = scalar_lea.sflag [#allocation5], 1
    %8529 = vsyncpa %s8528, 1
    %8530 = vsyncpa [#allocation7], 1

</llo_original>
